<compile_context>
chip_gen: v7x
topology: tpu7x:2x2x1
jax: 0.10.0
libtpu: 0.0.40
codegen_flags: <defaults>
</compile_context>

<pallas_src>
import functools

import jax
import jax.numpy as jnp
from jax.experimental import pallas as pl
from jax.experimental.pallas import tpu as pltpu


# ----------------------------------------------------------------------------
# Pallas kernels
# ----------------------------------------------------------------------------
def _conv_gemm_prelu_kernel(x_ref, w_ref, b_ref, a_ref, o_ref):
    """o = PReLU(x @ w + b); bf16 operands, f32 accumulate, bf16 store."""
    y = jnp.dot(x_ref[...], w_ref[...], preferred_element_type=jnp.float32)
    y = y + b_ref[...]                         # (TM, TN) + (1, TN)
    alpha = a_ref[...]                         # (1, TN) per-channel PReLU slope
    y = jnp.where(y >= 0.0, y, alpha * y)
    o_ref[...] = y.astype(o_ref.dtype)


def _fc1_angle_kernel(x_ref, w1_ref, b1_ref, w2_ref, o_ref, cos_ref):
    """Fused FC1 + cosine Anglelayer.

    o   = x @ w1 + b1                                   (emitted, f32)
    cos = clip(normalize_rows(o) @ w2n, -1, 1)          (w2n pre-col-normalized)
    """
    o = jnp.dot(x_ref[...], w1_ref[...], preferred_element_type=jnp.float32)
    o = o + b1_ref[...]
    o_ref[...] = o.astype(o_ref.dtype)
    inv = jax.lax.rsqrt(jnp.sum(o * o, axis=1, keepdims=True) + 1e-12)
    xn = (o * inv).astype(w2_ref.dtype)        # bf16 for the MXU
    cos = jnp.dot(xn, w2_ref[...], preferred_element_type=jnp.float32)
    cos_ref[...] = jnp.clip(cos, -1.0, 1.0).astype(cos_ref.dtype)


# ----------------------------------------------------------------------------
# Tile pickers
# ----------------------------------------------------------------------------
def _pick_m_tile(m, target):
    """Largest row tile <= target that divides m and keeps sublane alignment."""
    if m <= target:
        return m
    t = (target // 8) * 8
    while t >= 8:
        if m % t == 0:
            return t
        t -= 8
    return m


def _pick_n_tile(n, target):
    """Largest lane-aligned (multiple-of-128) tile <= target that divides n."""
    if n <= 128 or n % 128 != 0:
        return n
    t = min((target // 128) * 128, n)
    while t >= 128:
        if n % t == 0:
            return t
        t -= 128
    return n


# ----------------------------------------------------------------------------
# pallas_call wrappers (tiled, pipelined, megacore-parallel grids)
# ----------------------------------------------------------------------------
def _conv_gemm_prelu(x, w, b, alpha, *, m_tile=512, n_tile=256):
    """(M,K)bf16 @ (K,N)bf16 + bias + PReLU -> (M,N)bf16, 2-D parallel grid."""
    M, K = x.shape
    K2, N = w.shape
    assert K == K2
    TM = _pick_m_tile(M, m_tile)
    TN = _pick_n_tile(N, n_tile)
    # If the grid would be a single program, split N so both TensorCores on
    # v7x get work (keep TN a multiple of 128 so stores stay lane-dense).
    if M // TM == 1 and N // TN == 1 and N >= 256:
        TN = _pick_n_tile(N, N // 2)
    grid = (M // TM, N // TN)
    cost = pl.CostEstimate(
        flops=2 * M * K * N,
        transcendentals=0,
        bytes_accessed=(M * K * grid[1] + K * N + M * N) * 2 + 8 * N)
    return pl.pallas_call(
        _conv_gemm_prelu_kernel,
        out_shape=jax.ShapeDtypeStruct((M, N), jnp.bfloat16),
        grid=grid,
        in_specs=[
            pl.BlockSpec((TM, K), lambda i, j: (i, 0)),
            pl.BlockSpec((K, TN), lambda i, j: (0, j)),
            pl.BlockSpec((1, TN), lambda i, j: (0, j)),
            pl.BlockSpec((1, TN), lambda i, j: (0, j)),
        ],
        out_specs=pl.BlockSpec((TM, TN), lambda i, j: (i, j)),
        compiler_params=pltpu.CompilerParams(
            dimension_semantics=("parallel", "parallel"),
            vmem_limit_bytes=32 * 1024 * 1024),
        cost_estimate=cost,
    )(x, w, b.reshape(1, N), alpha.reshape(1, N))


def _fc1_angle(x, w1, b1, w2n, *, b_tile=256):
    """Fused FC1 + cosine layer; batch-tiled parallel grid; lane-dense cos out."""
    B, K = x.shape
    _, N1 = w1.shape
    N2 = w2n.shape[1]
    TB = _pick_m_tile(B, b_tile)
    cost = pl.CostEstimate(
        flops=2 * B * K * N1 + 2 * B * N1 * N2,
        transcendentals=B,
        bytes_accessed=(B * K + K * N1 + N1 * N2) * 2 + B * (N1 + N2) * 4)
    return pl.pallas_call(
        _fc1_angle_kernel,
        out_shape=(jax.ShapeDtypeStruct((B, N1), jnp.float32),
                   jax.ShapeDtypeStruct((B, N2), jnp.float32)),
        grid=(B // TB,),
        in_specs=[
            pl.BlockSpec((TB, K), lambda i: (i, 0)),
            pl.BlockSpec((K, N1), lambda i: (0, 0)),
            pl.BlockSpec((1, N1), lambda i: (0, 0)),
            pl.BlockSpec((N1, N2), lambda i: (0, 0)),
        ],
        out_specs=(pl.BlockSpec((TB, N1), lambda i: (i, 0)),
                   pl.BlockSpec((TB, N2), lambda i: (i, 0))),
        compiler_params=pltpu.CompilerParams(
            dimension_semantics=("parallel",),
            vmem_limit_bytes=32 * 1024 * 1024),
        cost_estimate=cost,
    )(x, w1, b1.reshape(1, N1), w2n)


# ----------------------------------------------------------------------------
# Glue: im2col (wrapper-side layout plumbing, bf16)
# ----------------------------------------------------------------------------
def _im2col(x_nhwc, ksize=3, stride=2, pad=1):
    B, H, W, C = x_nhwc.shape
    xp = jnp.pad(x_nhwc, ((0, 0), (pad, pad), (pad, pad), (0, 0)))
    Ho = (H + 2 * pad - ksize) // stride + 1
    Wo = (W + 2 * pad - ksize) // stride + 1
    cols = []
    for kh in range(ksize):
        for kw in range(ksize):
            cols.append(
                xp[:,
                   kh:kh + (Ho - 1) * stride + 1:stride,
                   kw:kw + (Wo - 1) * stride + 1:stride,
                   :])
    patches = jnp.concatenate(cols, axis=-1)          # (B,Ho,Wo,9C), (kh,kw,ci)
    return patches.reshape(B * Ho * Wo, ksize * ksize * C), Ho, Wo


# ----------------------------------------------------------------------------
# Parameter init (deterministic, mirrors the PyTorch __init__ rules)
# ----------------------------------------------------------------------------
def init_params(key, num_classes=10):
    filters = [1, 64, 128, 256, 512]
    keys = jax.random.split(key, 6)
    params = {}
    for i in range(4):
        cin, cout = filters[i], filters[i + 1]
        fan_out = cout * 3 * 3                         # kaiming_normal_, fan_out
        std = (2.0 / fan_out) ** 0.5
        w = std * jax.random.normal(keys[i], (3, 3, cin, cout), jnp.float32)
        params[f"conv{i}_w"] = w.reshape(9 * cin, cout).astype(jnp.bfloat16)
        params[f"conv{i}_b"] = jnp.zeros((cout,), jnp.float32)
        params[f"conv{i}_alpha"] = jnp.full((cout,), 0.25, jnp.float32)  # PReLU
    # FC1: weight rows are in NHWC (h, w, c) flatten order -- the PyTorch NCHW
    # .view() permutation is folded into the constant weight, not the activation.
    params["fc1_w"] = (0.001 * jax.random.normal(
        keys[4], (512 * 2 * 2, 512), jnp.float32)).astype(jnp.bfloat16)
    params["fc1_b"] = jnp.zeros((512,), jnp.float32)
    # Anglelayer weight: column-normalize ONCE at init (constant at inference)
    # and zero-pad num_classes -> 128 so the cosine output is lane-dense.
    w2 = jax.random.uniform(keys[5], (512, num_classes), jnp.float32, -1.0, 1.0)
    w2n = w2 * jax.lax.rsqrt(jnp.sum(w2 * w2, axis=0, keepdims=True) + 1e-12)
    n_pad = max(128, ((num_classes + 127) // 128) * 128)
    params["fc2_wn"] = jnp.pad(
        w2n, ((0, 0), (0, n_pad - num_classes))).astype(jnp.bfloat16)
    return params


# ----------------------------------------------------------------------------
# Forward
# ----------------------------------------------------------------------------
def sphereface_forward(x_nchw, params, num_classes=10):
    B = x_nchw.shape[0]
    x = jnp.transpose(x_nchw, (0, 2, 3, 1)).astype(jnp.bfloat16)   # NCHW->NHWC
    for i in range(4):
        # TODO(synk): conv0 (Cin=1, K=9) under-fills the MXU contraction dim;
        # it is tiny and kept on the same fused GEMM path for simplicity.
        cols, Ho, Wo = _im2col(x, 3, 2, 1)
        y = _conv_gemm_prelu(cols, params[f"conv{i}_w"], params[f"conv{i}_b"],
                             params[f"conv{i}_alpha"])
        x = y.reshape(B, Ho, Wo, -1)
    flat = x.reshape(B, -1)               # (B, 2*2*512) in (h,w,c) row order
    o, cos_pad = _fc1_angle(flat, params["fc1_w"], params["fc1_b"],
                            params["fc2_wn"])
    return o, cos_pad[:, :num_classes]


if __name__ == "__main__":
    key = jax.random.PRNGKey(0)
    pkey, xkey = jax.random.split(key)
    params = init_params(pkey, num_classes=10)
    x = jax.random.normal(xkey, (2, 1, 32, 32), jnp.float32)   # NCHW input

    fwd = jax.jit(functools.partial(sphereface_forward, num_classes=10))
    o, r = fwd(x, params)
    jax.block_until_ready((o, r))

    assert o.shape == (2, 512) and r.shape == (2, 10)
    assert o.dtype == jnp.float32 and r.dtype == jnp.float32
    assert jnp.all(jnp.isfinite(o)) and jnp.all(jnp.isfinite(r))
    print("KERNEL_OK")
</pallas_src>

<mosaic_0001>
module attributes {stable_mosaic.version = 11 : i64} {
  func.func @_conv_gemm_prelu_kernel(%arg0: i32, %arg1: i32, %arg2: memref<512x9xbf16, #tpu.memory_space<vmem>>, %arg3: memref<9x64xbf16, #tpu.memory_space<vmem>>, %arg4: memref<1x64xf32, #tpu.memory_space<vmem>>, %arg5: memref<1x64xf32, #tpu.memory_space<vmem>>, %arg6: memref<512x64xbf16, #tpu.memory_space<vmem>>) attributes {dimension_semantics = [#tpu.dimension_semantics<parallel>, #tpu.dimension_semantics<parallel>], iteration_bounds = array<i64: 1, 1>, scalar_prefetch = 0 : i64, scratch_operands = 0 : i64, tpu.core_type = #tpu.core_type<tc>, window_params = [{transform_indices = @transform_0, window_bounds = array<i64: 512, 9>}, {transform_indices = @transform_1, window_bounds = array<i64: 9, 64>}, {transform_indices = @transform_2, window_bounds = array<i64: 1, 64>}, {transform_indices = @transform_3, window_bounds = array<i64: 1, 64>}, {transform_indices = @transform_4, window_bounds = array<i64: 512, 64>}]} {
    %c0 = arith.constant 0 : index
    %c0_0 = arith.constant 0 : index
    %0 = vector.load %arg2[%c0, %c0_0] : memref<512x9xbf16, #tpu.memory_space<vmem>>, vector<512x9xbf16>
    %c0_1 = arith.constant 0 : index
    %c0_2 = arith.constant 0 : index
    %1 = vector.load %arg3[%c0_1, %c0_2] : memref<9x64xbf16, #tpu.memory_space<vmem>>, vector<9x64xbf16>
    %cst = arith.constant dense<0.000000e+00> : vector<512x64xf32>
    %2 = tpu.matmul %0, %1, %cst {dimension_numbers = #tpu.dot_dimension_numbers<[1], [0], [0], [1], [0, 0, 1, 1], [], []>} : vector<512x9xbf16>, vector<9x64xbf16>, vector<512x64xf32> -> vector<512x64xf32>
    %c0_3 = arith.constant 0 : index
    %c0_4 = arith.constant 0 : index
    %3 = vector.load %arg4[%c0_3, %c0_4] : memref<1x64xf32, #tpu.memory_space<vmem>>, vector<1x64xf32>
    %4 = vector.broadcast %3 : vector<1x64xf32> to vector<512x64xf32>
    %5 = arith.addf %2, %4 : vector<512x64xf32>
    %c0_5 = arith.constant 0 : index
    %c0_6 = arith.constant 0 : index
    %6 = vector.load %arg5[%c0_5, %c0_6] : memref<1x64xf32, #tpu.memory_space<vmem>>, vector<1x64xf32>
    %cst_7 = arith.constant 0.000000e+00 : f32
    %7 = vector.broadcast %cst_7 : f32 to vector<512x64xf32>
    %8 = arith.cmpf oge, %5, %7 : vector<512x64xf32>
    %9 = vector.broadcast %6 : vector<1x64xf32> to vector<512x64xf32>
    %10 = arith.mulf %9, %5 : vector<512x64xf32>
    %11 = arith.select %8, %5, %10 : vector<512x64xi1>, vector<512x64xf32>
    %12 = arith.truncf %11 : vector<512x64xf32> to vector<512x64xbf16>
    %c0_8 = arith.constant 0 : index
    %c0_9 = arith.constant 0 : index
    %13 = vector.load %arg6[%c0_8, %c0_9] : memref<512x64xbf16, #tpu.memory_space<vmem>>, vector<512x64xbf16>
    tpu.vector_store %arg6[%c0_8, %c0_9], %12 {strides = array<i32>} : memref<512x64xbf16, #tpu.memory_space<vmem>>, vector<512x64xbf16>,
    return
  }
  func.func @transform_0(%arg0: i32, %arg1: i32) -> (i32, i32) {
    %c0_i32 = arith.constant 0 : i32
    %c0_i32_0 = arith.constant 0 : i32
    return %arg0, %c0_i32 : i32, i32
  }
  func.func @transform_1(%arg0: i32, %arg1: i32) -> (i32, i32) {
    %c0_i32 = arith.constant 0 : i32
    %c0_i32_0 = arith.constant 0 : i32
    return %c0_i32, %arg1 : i32, i32
  }
  func.func @transform_2(%arg0: i32, %arg1: i32) -> (i32, i32) {
    %c0_i32 = arith.constant 0 : i32
    %c0_i32_0 = arith.constant 0 : i32
    return %c0_i32, %arg1 : i32, i32
  }
  func.func @transform_3(%arg0: i32, %arg1: i32) -> (i32, i32) {
    %c0_i32 = arith.constant 0 : i32
    %c0_i32_0 = arith.constant 0 : i32
    return %c0_i32, %arg1 : i32, i32
  }
  func.func @transform_4(%arg0: i32, %arg1: i32) -> (i32, i32) {
    %c0_i32 = arith.constant 0 : i32
    return %arg0, %arg1 : i32, i32
  }
}

module attributes {stable_mosaic.version = 11 : i64} {
  func.func @_conv_gemm_prelu_kernel(%arg0: i32, %arg1: i32, %arg2: memref<128x576xbf16, #tpu.memory_space<vmem>>, %arg3: memref<576x128xbf16, #tpu.memory_space<vmem>>, %arg4: memref<1x128xf32, #tpu.memory_space<vmem>>, %arg5: memref<1x128xf32, #tpu.memory_space<vmem>>, %arg6: memref<128x128xbf16, #tpu.memory_space<vmem>>) attributes {dimension_semantics = [#tpu.dimension_semantics<parallel>, #tpu.dimension_semantics<parallel>], iteration_bounds = array<i64: 1, 1>, scalar_prefetch = 0 : i64, scratch_operands = 0 : i64, tpu.core_type = #tpu.core_type<tc>, window_params = [{transform_indices = @transform_0, window_bounds = array<i64: 128, 576>}, {transform_indices = @transform_1, window_bounds = array<i64: 576, 128>}, {transform_indices = @transform_2, window_bounds = array<i64: 1, 128>}, {transform_indices = @transform_3, window_bounds = array<i64: 1, 128>}, {transform_indices = @transform_4, window_bounds = array<i64: 128, 128>}]} {
    %c0 = arith.constant 0 : index
    %c0_0 = arith.constant 0 : index
    %0 = vector.load %arg2[%c0, %c0_0] : memref<128x576xbf16, #tpu.memory_space<vmem>>, vector<128x576xbf16>
    %c0_1 = arith.constant 0 : index
    %c0_2 = arith.constant 0 : index
    %1 = vector.load %arg3[%c0_1, %c0_2] : memref<576x128xbf16, #tpu.memory_space<vmem>>, vector<576x128xbf16>
    %cst = arith.constant dense<0.000000e+00> : vector<128x128xf32>
    %2 = tpu.matmul %0, %1, %cst {dimension_numbers = #tpu.dot_dimension_numbers<[1], [0], [0], [1], [0, 0, 1, 1], [], []>} : vector<128x576xbf16>, vector<576x128xbf16>, vector<128x128xf32> -> vector<128x128xf32>
    %c0_3 = arith.constant 0 : index
    %c0_4 = arith.constant 0 : index
    %3 = vector.load %arg4[%c0_3, %c0_4] : memref<1x128xf32, #tpu.memory_space<vmem>>, vector<1x128xf32>
    %4 = vector.broadcast %3 : vector<1x128xf32> to vector<128x128xf32>
    %5 = arith.addf %2, %4 : vector<128x128xf32>
    %c0_5 = arith.constant 0 : index
    %c0_6 = arith.constant 0 : index
    %6 = vector.load %arg5[%c0_5, %c0_6] : memref<1x128xf32, #tpu.memory_space<vmem>>, vector<1x128xf32>
    %cst_7 = arith.constant 0.000000e+00 : f32
    %7 = vector.broadcast %cst_7 : f32 to vector<128x128xf32>
    %8 = arith.cmpf oge, %5, %7 : vector<128x128xf32>
    %9 = vector.broadcast %6 : vector<1x128xf32> to vector<128x128xf32>
    %10 = arith.mulf %9, %5 : vector<128x128xf32>
    %11 = arith.select %8, %5, %10 : vector<128x128xi1>, vector<128x128xf32>
    %12 = arith.truncf %11 : vector<128x128xf32> to vector<128x128xbf16>
    %c0_8 = arith.constant 0 : index
    %c0_9 = arith.constant 0 : index
    %13 = vector.load %arg6[%c0_8, %c0_9] : memref<128x128xbf16, #tpu.memory_space<vmem>>, vector<128x128xbf16>
    tpu.vector_store %arg6[%c0_8, %c0_9], %12 {strides = array<i32>} : memref<128x128xbf16, #tpu.memory_space<vmem>>, vector<128x128xbf16>,
    return
  }
  func.func @transform_0(%arg0: i32, %arg1: i32) -> (i32, i32) {
    %c0_i32 = arith.constant 0 : i32
    %c0_i32_0 = arith.constant 0 : i32
    return %arg0, %c0_i32 : i32, i32
  }
  func.func @transform_1(%arg0: i32, %arg1: i32) -> (i32, i32) {
    %c0_i32 = arith.constant 0 : i32
    %c0_i32_0 = arith.constant 0 : i32
    return %c0_i32, %arg1 : i32, i32
  }
  func.func @transform_2(%arg0: i32, %arg1: i32) -> (i32, i32) {
    %c0_i32 = arith.constant 0 : i32
    %c0_i32_0 = arith.constant 0 : i32
    return %c0_i32, %arg1 : i32, i32
  }
  func.func @transform_3(%arg0: i32, %arg1: i32) -> (i32, i32) {
    %c0_i32 = arith.constant 0 : i32
    %c0_i32_0 = arith.constant 0 : i32
    return %c0_i32, %arg1 : i32, i32
  }
  func.func @transform_4(%arg0: i32, %arg1: i32) -> (i32, i32) {
    %c0_i32 = arith.constant 0 : i32
    return %arg0, %arg1 : i32, i32
  }
}

module attributes {stable_mosaic.version = 11 : i64} {
  func.func @_conv_gemm_prelu_kernel(%arg0: i32, %arg1: i32, %arg2: memref<32x1152xbf16, #tpu.memory_space<vmem>>, %arg3: memref<1152x128xbf16, #tpu.memory_space<vmem>>, %arg4: memref<1x128xf32, #tpu.memory_space<vmem>>, %arg5: memref<1x128xf32, #tpu.memory_space<vmem>>, %arg6: memref<32x128xbf16, #tpu.memory_space<vmem>>) attributes {dimension_semantics = [#tpu.dimension_semantics<parallel>, #tpu.dimension_semantics<parallel>], iteration_bounds = array<i64: 1, 2>, scalar_prefetch = 0 : i64, scratch_operands = 0 : i64, tpu.core_type = #tpu.core_type<tc>, window_params = [{transform_indices = @transform_0, window_bounds = array<i64: 32, 1152>}, {transform_indices = @transform_1, window_bounds = array<i64: 1152, 128>}, {transform_indices = @transform_2, window_bounds = array<i64: 1, 128>}, {transform_indices = @transform_3, window_bounds = array<i64: 1, 128>}, {transform_indices = @transform_4, window_bounds = array<i64: 32, 128>}]} {
    %c0 = arith.constant 0 : index
    %c0_0 = arith.constant 0 : index
    %0 = vector.load %arg2[%c0, %c0_0] : memref<32x1152xbf16, #tpu.memory_space<vmem>>, vector<32x1152xbf16>
    %c0_1 = arith.constant 0 : index
    %c0_2 = arith.constant 0 : index
    %1 = vector.load %arg3[%c0_1, %c0_2] : memref<1152x128xbf16, #tpu.memory_space<vmem>>, vector<1152x128xbf16>
    %cst = arith.constant dense<0.000000e+00> : vector<32x128xf32>
    %2 = tpu.matmul %0, %1, %cst {dimension_numbers = #tpu.dot_dimension_numbers<[1], [0], [0], [1], [0, 0, 1, 1], [], []>} : vector<32x1152xbf16>, vector<1152x128xbf16>, vector<32x128xf32> -> vector<32x128xf32>
    %c0_3 = arith.constant 0 : index
    %c0_4 = arith.constant 0 : index
    %3 = vector.load %arg4[%c0_3, %c0_4] : memref<1x128xf32, #tpu.memory_space<vmem>>, vector<1x128xf32>
    %4 = vector.broadcast %3 : vector<1x128xf32> to vector<32x128xf32>
    %5 = arith.addf %2, %4 : vector<32x128xf32>
    %c0_5 = arith.constant 0 : index
    %c0_6 = arith.constant 0 : index
    %6 = vector.load %arg5[%c0_5, %c0_6] : memref<1x128xf32, #tpu.memory_space<vmem>>, vector<1x128xf32>
    %cst_7 = arith.constant 0.000000e+00 : f32
    %7 = vector.broadcast %cst_7 : f32 to vector<32x128xf32>
    %8 = arith.cmpf oge, %5, %7 : vector<32x128xf32>
    %9 = vector.broadcast %6 : vector<1x128xf32> to vector<32x128xf32>
    %10 = arith.mulf %9, %5 : vector<32x128xf32>
    %11 = arith.select %8, %5, %10 : vector<32x128xi1>, vector<32x128xf32>
    %12 = arith.truncf %11 : vector<32x128xf32> to vector<32x128xbf16>
    %c0_8 = arith.constant 0 : index
    %c0_9 = arith.constant 0 : index
    %13 = vector.load %arg6[%c0_8, %c0_9] : memref<32x128xbf16, #tpu.memory_space<vmem>>, vector<32x128xbf16>
    tpu.vector_store %arg6[%c0_8, %c0_9], %12 {strides = array<i32>} : memref<32x128xbf16, #tpu.memory_space<vmem>>, vector<32x128xbf16>,
    return
  }
  func.func @transform_0(%arg0: i32, %arg1: i32) -> (i32, i32) {
    %c0_i32 = arith.constant 0 : i32
    %c0_i32_0 = arith.constant 0 : i32
    return %arg0, %c0_i32 : i32, i32
  }
  func.func @transform_1(%arg0: i32, %arg1: i32) -> (i32, i32) {
    %c0_i32 = arith.constant 0 : i32
    %c0_i32_0 = arith.constant 0 : i32
    return %c0_i32, %arg1 : i32, i32
  }
  func.func @transform_2(%arg0: i32, %arg1: i32) -> (i32, i32) {
    %c0_i32 = arith.constant 0 : i32
    %c0_i32_0 = arith.constant 0 : i32
    return %c0_i32, %arg1 : i32, i32
  }
  func.func @transform_3(%arg0: i32, %arg1: i32) -> (i32, i32) {
    %c0_i32 = arith.constant 0 : i32
    %c0_i32_0 = arith.constant 0 : i32
    return %c0_i32, %arg1 : i32, i32
  }
  func.func @transform_4(%arg0: i32, %arg1: i32) -> (i32, i32) {
    %c0_i32 = arith.constant 0 : i32
    return %arg0, %arg1 : i32, i32
  }
}

module attributes {stable_mosaic.version = 11 : i64} {
  func.func @_conv_gemm_prelu_kernel(%arg0: i32, %arg1: i32, %arg2: memref<8x2304xbf16, #tpu.memory_space<vmem>>, %arg3: memref<2304x256xbf16, #tpu.memory_space<vmem>>, %arg4: memref<1x256xf32, #tpu.memory_space<vmem>>, %arg5: memref<1x256xf32, #tpu.memory_space<vmem>>, %arg6: memref<8x256xbf16, #tpu.memory_space<vmem>>) attributes {dimension_semantics = [#tpu.dimension_semantics<parallel>, #tpu.dimension_semantics<parallel>], iteration_bounds = array<i64: 1, 2>, scalar_prefetch = 0 : i64, scratch_operands = 0 : i64, tpu.core_type = #tpu.core_type<tc>, window_params = [{transform_indices = @transform_0, window_bounds = array<i64: 8, 2304>}, {transform_indices = @transform_1, window_bounds = array<i64: 2304, 256>}, {transform_indices = @transform_2, window_bounds = array<i64: 1, 256>}, {transform_indices = @transform_3, window_bounds = array<i64: 1, 256>}, {transform_indices = @transform_4, window_bounds = array<i64: 8, 256>}]} {
    %c0 = arith.constant 0 : index
    %c0_0 = arith.constant 0 : index
    %0 = vector.load %arg2[%c0, %c0_0] : memref<8x2304xbf16, #tpu.memory_space<vmem>>, vector<8x2304xbf16>
    %c0_1 = arith.constant 0 : index
    %c0_2 = arith.constant 0 : index
    %1 = vector.load %arg3[%c0_1, %c0_2] : memref<2304x256xbf16, #tpu.memory_space<vmem>>, vector<2304x256xbf16>
    %cst = arith.constant dense<0.000000e+00> : vector<8x256xf32>
    %2 = tpu.matmul %0, %1, %cst {dimension_numbers = #tpu.dot_dimension_numbers<[1], [0], [0], [1], [0, 0, 1, 1], [], []>} : vector<8x2304xbf16>, vector<2304x256xbf16>, vector<8x256xf32> -> vector<8x256xf32>
    %c0_3 = arith.constant 0 : index
    %c0_4 = arith.constant 0 : index
    %3 = vector.load %arg4[%c0_3, %c0_4] : memref<1x256xf32, #tpu.memory_space<vmem>>, vector<1x256xf32>
    %4 = vector.broadcast %3 : vector<1x256xf32> to vector<8x256xf32>
    %5 = arith.addf %2, %4 : vector<8x256xf32>
    %c0_5 = arith.constant 0 : index
    %c0_6 = arith.constant 0 : index
    %6 = vector.load %arg5[%c0_5, %c0_6] : memref<1x256xf32, #tpu.memory_space<vmem>>, vector<1x256xf32>
    %cst_7 = arith.constant 0.000000e+00 : f32
    %7 = vector.broadcast %cst_7 : f32 to vector<8x256xf32>
    %8 = arith.cmpf oge, %5, %7 : vector<8x256xf32>
    %9 = vector.broadcast %6 : vector<1x256xf32> to vector<8x256xf32>
    %10 = arith.mulf %9, %5 : vector<8x256xf32>
    %11 = arith.select %8, %5, %10 : vector<8x256xi1>, vector<8x256xf32>
    %12 = arith.truncf %11 : vector<8x256xf32> to vector<8x256xbf16>
    %c0_8 = arith.constant 0 : index
    %c0_9 = arith.constant 0 : index
    %13 = vector.load %arg6[%c0_8, %c0_9] : memref<8x256xbf16, #tpu.memory_space<vmem>>, vector<8x256xbf16>
    tpu.vector_store %arg6[%c0_8, %c0_9], %12 {strides = array<i32>} : memref<8x256xbf16, #tpu.memory_space<vmem>>, vector<8x256xbf16>,
    return
  }
  func.func @transform_0(%arg0: i32, %arg1: i32) -> (i32, i32) {
    %c0_i32 = arith.constant 0 : i32
    %c0_i32_0 = arith.constant 0 : i32
    return %arg0, %c0_i32 : i32, i32
  }
  func.func @transform_1(%arg0: i32, %arg1: i32) -> (i32, i32) {
    %c0_i32 = arith.constant 0 : i32
    %c0_i32_0 = arith.constant 0 : i32
    return %c0_i32, %arg1 : i32, i32
  }
  func.func @transform_2(%arg0: i32, %arg1: i32) -> (i32, i32) {
    %c0_i32 = arith.constant 0 : i32
    %c0_i32_0 = arith.constant 0 : i32
    return %c0_i32, %arg1 : i32, i32
  }
  func.func @transform_3(%arg0: i32, %arg1: i32) -> (i32, i32) {
    %c0_i32 = arith.constant 0 : i32
    %c0_i32_0 = arith.constant 0 : i32
    return %c0_i32, %arg1 : i32, i32
  }
  func.func @transform_4(%arg0: i32, %arg1: i32) -> (i32, i32) {
    %c0_i32 = arith.constant 0 : i32
    return %arg0, %arg1 : i32, i32
  }
}

module attributes {stable_mosaic.version = 11 : i64} {
  func.func @_fc1_angle_kernel(%arg0: i32, %arg1: memref<2x2048xbf16, #tpu.memory_space<vmem>>, %arg2: memref<2048x512xbf16, #tpu.memory_space<vmem>>, %arg3: memref<1x512xf32, #tpu.memory_space<vmem>>, %arg4: memref<512x128xbf16, #tpu.memory_space<vmem>>, %arg5: memref<2x512xf32, #tpu.memory_space<vmem>>, %arg6: memref<2x128xf32, #tpu.memory_space<vmem>>) attributes {dimension_semantics = [#tpu.dimension_semantics<parallel>], iteration_bounds = array<i64: 1>, scalar_prefetch = 0 : i64, scratch_operands = 0 : i64, tpu.core_type = #tpu.core_type<tc>, window_params = [{transform_indices = @transform_0, window_bounds = array<i64: 2, 2048>}, {pipeline_mode = #tpu.pipeline_mode<synchronous>, transform_indices = @transform_1, window_bounds = array<i64: 2048, 512>}, {pipeline_mode = #tpu.pipeline_mode<synchronous>, transform_indices = @transform_2, window_bounds = array<i64: 1, 512>}, {pipeline_mode = #tpu.pipeline_mode<synchronous>, transform_indices = @transform_3, window_bounds = array<i64: 512, 128>}, {transform_indices = @transform_4, window_bounds = array<i64: 2, 512>}, {transform_indices = @transform_5, window_bounds = array<i64: 2, 128>}]} {
    %c0 = arith.constant 0 : index
    %c0_0 = arith.constant 0 : index
    %0 = vector.load %arg1[%c0, %c0_0] : memref<2x2048xbf16, #tpu.memory_space<vmem>>, vector<2x2048xbf16>
    %c0_1 = arith.constant 0 : index
    %c0_2 = arith.constant 0 : index
    %1 = vector.load %arg2[%c0_1, %c0_2] : memref<2048x512xbf16, #tpu.memory_space<vmem>>, vector<2048x512xbf16>
    %cst = arith.constant dense<0.000000e+00> : vector<2x512xf32>
    %2 = tpu.matmul %0, %1, %cst {dimension_numbers = #tpu.dot_dimension_numbers<[1], [0], [0], [1], [0, 0, 1, 1], [], []>} : vector<2x2048xbf16>, vector<2048x512xbf16>, vector<2x512xf32> -> vector<2x512xf32>
    %c0_3 = arith.constant 0 : index
    %c0_4 = arith.constant 0 : index
    %3 = vector.load %arg3[%c0_3, %c0_4] : memref<1x512xf32, #tpu.memory_space<vmem>>, vector<1x512xf32>
    %4 = vector.broadcast %3 : vector<1x512xf32> to vector<2x512xf32>
    %5 = arith.addf %2, %4 : vector<2x512xf32>
    %c0_5 = arith.constant 0 : index
    %c0_6 = arith.constant 0 : index
    %6 = vector.load %arg5[%c0_5, %c0_6] : memref<2x512xf32, #tpu.memory_space<vmem>>, vector<2x512xf32>
    tpu.vector_store %arg5[%c0_5, %c0_6], %5 {strides = array<i32>} : memref<2x512xf32, #tpu.memory_space<vmem>>, vector<2x512xf32>,
    %7 = arith.mulf %5, %5 : vector<2x512xf32>
    %cst_7 = arith.constant dense<0.000000e+00> : vector<2xf32>
    %8 = vector.multi_reduction <add>, %7, %cst_7 [1] : vector<2x512xf32> to vector<2xf32>
    %9 = vector.shape_cast %8 : vector<2xf32> to vector<2x1xf32>
    %cst_8 = arith.constant 9.99999996E-13 : f32
    %10 = vector.broadcast %cst_8 : f32 to vector<2x1xf32>
    %11 = arith.addf %9, %10 : vector<2x1xf32>
    %12 = math.rsqrt %11 : vector<2x1xf32>
    %13 = vector.broadcast %12 : vector<2x1xf32> to vector<2x512xf32>
    %14 = arith.mulf %5, %13 : vector<2x512xf32>
    %15 = arith.truncf %14 : vector<2x512xf32> to vector<2x512xbf16>
    %c0_9 = arith.constant 0 : index
    %c0_10 = arith.constant 0 : index
    %16 = vector.load %arg4[%c0_9, %c0_10] : memref<512x128xbf16, #tpu.memory_space<vmem>>, vector<512x128xbf16>
    %cst_11 = arith.constant dense<0.000000e+00> : vector<2x128xf32>
    %17 = tpu.matmul %15, %16, %cst_11 {dimension_numbers = #tpu.dot_dimension_numbers<[1], [0], [0], [1], [0, 0, 1, 1], [], []>} : vector<2x512xbf16>, vector<512x128xbf16>, vector<2x128xf32> -> vector<2x128xf32>
    %cst_12 = arith.constant -1.000000e+00 : f32
    %cst_13 = arith.constant 1.000000e+00 : f32
    %18 = vector.broadcast %cst_12 : f32 to vector<2x128xf32>
    %19 = arith.maximumf %18, %17 : vector<2x128xf32>
    %20 = vector.broadcast %cst_13 : f32 to vector<2x128xf32>
    %21 = arith.minimumf %20, %19 : vector<2x128xf32>
    %c0_14 = arith.constant 0 : index
    %c0_15 = arith.constant 0 : index
    %22 = vector.load %arg6[%c0_14, %c0_15] : memref<2x128xf32, #tpu.memory_space<vmem>>, vector<2x128xf32>
    tpu.vector_store %arg6[%c0_14, %c0_15], %21 {strides = array<i32>} : memref<2x128xf32, #tpu.memory_space<vmem>>, vector<2x128xf32>,
    return
  }
  func.func @transform_0(%arg0: i32) -> (i32, i32) {
    %c0_i32 = arith.constant 0 : i32
    %c0_i32_0 = arith.constant 0 : i32
    return %arg0, %c0_i32 : i32, i32
  }
  func.func @transform_1(%arg0: i32) -> (i32, i32) {
    %c0_i32 = arith.constant 0 : i32
    %c0_i32_0 = arith.constant 0 : i32
    %c0_i32_1 = arith.constant 0 : i32
    return %c0_i32, %c0_i32_0 : i32, i32
  }
  func.func @transform_2(%arg0: i32) -> (i32, i32) {
    %c0_i32 = arith.constant 0 : i32
    %c0_i32_0 = arith.constant 0 : i32
    %c0_i32_1 = arith.constant 0 : i32
    return %c0_i32, %c0_i32_0 : i32, i32
  }
  func.func @transform_3(%arg0: i32) -> (i32, i32) {
    %c0_i32 = arith.constant 0 : i32
    %c0_i32_0 = arith.constant 0 : i32
    %c0_i32_1 = arith.constant 0 : i32
    return %c0_i32, %c0_i32_0 : i32, i32
  }
  func.func @transform_4(%arg0: i32) -> (i32, i32) {
    %c0_i32 = arith.constant 0 : i32
    %c0_i32_0 = arith.constant 0 : i32
    return %arg0, %c0_i32 : i32, i32
  }
  func.func @transform_5(%arg0: i32) -> (i32, i32) {
    %c0_i32 = arith.constant 0 : i32
    %c0_i32_0 = arith.constant 0 : i32
    return %arg0, %c0_i32 : i32, i32
  }
}

</mosaic_0001>

<llo_original>
// kernel: sphereface_forward.5
$region0: #{sphereface_forward.5}
  #allocation0 [shape = 'u32[]', space=smem, size = 0x4, offset = 0x4, fixed_abs, tag = 'smem constant byte address 0x4 - core index']
  #allocation1 [shape = 'u32[144,128]{1,0:T(1,128)}', space=vmem, size = 0x12000, scoped, tag = 'internal scratch']
  %s0 = inlined_call_operand.vmem [shape: bf16[512,9], index: 0, kind: input, shape index: {}]
  %s1 = inlined_call_operand.hbm [shape: bf16[9,64], index: 1, kind: input, shape index: {}]
  %s2 = inlined_call_operand.hbm [shape: f32[1,64], index: 2, kind: input, shape index: {}]
  %s3 = inlined_call_operand.hbm [shape: f32[1,64], index: 3, kind: input, shape index: {}]
  %s4 = inlined_call_operand.vmem [shape: bf16[512,64], index: 4, kind: output, shape index: {}]
  %s5 = sld [smem:[#allocation0]]
  $region38: #{sphereface_forward.5} parent=0
    _
  %s7 = ssub.s32 1, %s5
  %s8 = scalar_select 0, %s7, %s5
  $region1: #{sphereface_forward.5} parent=0
    #allocation2 [shape = 'u8[4096]{0}', space=vmem, size = 0x1000, scoped, tag = 'input window, operand 1, single buffered']
    #allocation3 [shape = 's32[1]{0}', space=sflag, size = 0x4, scoped, tag = 'scoped memory for sphereface_forward.5']
    #allocation4 [shape = 'u8[512]{0}', space=vmem, size = 0x400, scoped, tag = 'input window, operand 2, single buffered']
    #allocation5 [shape = 's32[1]{0}', space=sflag, size = 0x4, scoped, tag = 'scoped memory for sphereface_forward.5']
    #allocation6 [shape = 'u8[512]{0}', space=vmem, size = 0x400, scoped, tag = 'input window, operand 3, single buffered']
    %9 = vsyncpa [#allocation3], 0
    %10 = vsyncpa [#allocation5], 0
    // Predicated region
    $region2: #{sphereface_forward.5} parent=1 // pred_check
      _
    $region3: #{sphereface_forward.5} parent=1 // pred_check_branch
      %12 = sbr.rel (0) target = $region5
    $region4: #{sphereface_forward.5} parent=1 // pred_region
      _
    $region5: #{sphereface_forward.5} parent=1 // pred_fallthru
      _
    // Predicated region
    $region6: #{sphereface_forward.5} parent=1 // pred_check
      _
    $region7: #{sphereface_forward.5} parent=1 // pred_check_branch
      %14 = sbr.rel (0) target = $region9
    $region8: #{sphereface_forward.5} parent=1 // pred_region
      %s16 = ssub.s32 128, 128
      %17 = vsyncadd [#allocation3], %s16
      %s18 = sshll.u32 [#allocation2], 4
      %s19 = int_to_ptr.vmem [resolvable:$true] %s18
      %24 = dma.hbm_to_vmem [thread:$0]  %s1, 128, %s19, [#allocation3], 64, 64, 4
    $region9: #{sphereface_forward.5} parent=1 // pred_fallthru
      _
    // Predicated region
    $region10: #{sphereface_forward.5} parent=1 // pred_check
      _
    $region11: #{sphereface_forward.5} parent=1 // pred_check_branch
      %26 = sbr.rel (0) target = $region13
    $region12: #{sphereface_forward.5} parent=1 // pred_region
      %s28 = ssub.s32 16, 16
      %29 = vsyncadd [#allocation5], %s28
      %s31 = sshll.u32 [#allocation4], 4
      %s32 = int_to_ptr.vmem [resolvable:$true] %s31
      %34 = dma.hbm_to_vmem [thread:$0]  %s2, 16, %s32, [#allocation5]
    $region13: #{sphereface_forward.5} parent=1 // pred_fallthru
      _
    // Predicated region
    $region14: #{sphereface_forward.5} parent=1 // pred_check
      _
    $region15: #{sphereface_forward.5} parent=1 // pred_check_branch
      %36 = sbr.rel (0) target = $region17
    $region16: #{sphereface_forward.5} parent=1 // pred_region
      %s38 = ssub.s32 16, 16
      %39 = vsyncadd [#allocation5], %s38
      %s41 = sshll.u32 [#allocation6], 4
      %s42 = int_to_ptr.vmem [resolvable:$true] %s41
      %44 = dma.hbm_to_vmem [thread:$0]  %s3, 16, %s42, [#allocation5]
    $region17: #{sphereface_forward.5} parent=1 // pred_fallthru
      _
    // Predicated region
    $region18: #{sphereface_forward.5} parent=1 // pred_check
      _
    $region19: #{sphereface_forward.5} parent=1 // pred_check_branch
      %46 = sbr.rel (0) target = $region21
    $region20: #{sphereface_forward.5} parent=1 // pred_region
      %47 = dma.done [#allocation3], 128
    $region21: #{sphereface_forward.5} parent=1 // pred_fallthru
      _
    // Predicated region
    $region22: #{sphereface_forward.5} parent=1 // pred_check
      _
    $region23: #{sphereface_forward.5} parent=1 // pred_check_branch
      %49 = sbr.rel (0) target = $region25
    $region24: #{sphereface_forward.5} parent=1 // pred_region
      %50 = dma.done [#allocation5], 16
    $region25: #{sphereface_forward.5} parent=1 // pred_fallthru
      _
    // Predicated region
    $region26: #{sphereface_forward.5} parent=1 // pred_check
      _
    $region27: #{sphereface_forward.5} parent=1 // pred_check_branch
      %52 = sbr.rel (0) target = $region29
    $region28: #{sphereface_forward.5} parent=1 // pred_region
      %53 = dma.done [#allocation5], 16
    $region29: #{sphereface_forward.5} parent=1 // pred_fallthru
      _
    %v55 = vld [vmem:[%s0] sm:$0xf]
    %v56 = vld [vmem:[%s0 + $0x4] sm:$0xf]
    %v57 = vld [vmem:[%s0 + $0x8] sm:$0xf]
    %v58 = vld [vmem:[%s0 + $0xc] sm:$0xf]
    %v59 = vld [vmem:[%s0 + $0x10] sm:$0xf]
    %v60 = vld [vmem:[%s0 + $0x14] sm:$0xf]
    %v61 = vld [vmem:[%s0 + $0x18] sm:$0xf]
    %v62 = vld [vmem:[%s0 + $0x1c] sm:$0xf]
    %v63 = vld [vmem:[%s0 + $0x20] sm:$0xf]
    %v64 = vld [vmem:[%s0 + $0x24] sm:$0xf]
    %v65 = vld [vmem:[%s0 + $0x28] sm:$0xf]
    %v66 = vld [vmem:[%s0 + $0x2c] sm:$0xf]
    %v67 = vld [vmem:[%s0 + $0x30] sm:$0xf]
    %v68 = vld [vmem:[%s0 + $0x34] sm:$0xf]
    %v69 = vld [vmem:[%s0 + $0x38] sm:$0xf]
    %v70 = vld [vmem:[%s0 + $0x3c] sm:$0xf]
    %v71 = vld [vmem:[%s0 + $0x40] sm:$0xf]
    %v72 = vld [vmem:[%s0 + $0x44] sm:$0xf]
    %v73 = vld [vmem:[%s0 + $0x48] sm:$0xf]
    %v74 = vld [vmem:[%s0 + $0x4c] sm:$0xf]
    %v75 = vld [vmem:[%s0 + $0x50] sm:$0xf]
    %v76 = vld [vmem:[%s0 + $0x54] sm:$0xf]
    %v77 = vld [vmem:[%s0 + $0x58] sm:$0xf]
    %v78 = vld [vmem:[%s0 + $0x5c] sm:$0xf]
    %v79 = vld [vmem:[%s0 + $0x60] sm:$0xf]
    %v80 = vld [vmem:[%s0 + $0x64] sm:$0xf]
    %v81 = vld [vmem:[%s0 + $0x68] sm:$0xf]
    %v82 = vld [vmem:[%s0 + $0x6c] sm:$0xf]
    %v83 = vld [vmem:[%s0 + $0x70] sm:$0xf]
    %v84 = vld [vmem:[%s0 + $0x74] sm:$0xf]
    %v85 = vld [vmem:[%s0 + $0x78] sm:$0xf]
    %v86 = vld [vmem:[%s0 + $0x7c] sm:$0xf]
    %v87 = vld [vmem:[%s0 + $0x80] sm:$0xf]
    %v88 = vld [vmem:[%s0 + $0x84] sm:$0xf]
    %v89 = vld [vmem:[%s0 + $0x88] sm:$0xf]
    %v90 = vld [vmem:[%s0 + $0x8c] sm:$0xf]
    %v91 = vld [vmem:[%s0 + $0x90] sm:$0xf]
    %v92 = vld [vmem:[%s0 + $0x94] sm:$0xf]
    %v93 = vld [vmem:[%s0 + $0x98] sm:$0xf]
    %v94 = vld [vmem:[%s0 + $0x9c] sm:$0xf]
    %v95 = vld [vmem:[%s0 + $0xa0] sm:$0xf]
    %v96 = vld [vmem:[%s0 + $0xa4] sm:$0xf]
    %v97 = vld [vmem:[%s0 + $0xa8] sm:$0xf]
    %v98 = vld [vmem:[%s0 + $0xac] sm:$0xf]
    %v99 = vld [vmem:[%s0 + $0xb0] sm:$0xf]
    %v100 = vld [vmem:[%s0 + $0xb4] sm:$0xf]
    %v101 = vld [vmem:[%s0 + $0xb8] sm:$0xf]
    %v102 = vld [vmem:[%s0 + $0xbc] sm:$0xf]
    %v103 = vld [vmem:[%s0 + $0xc0] sm:$0xf]
    %v104 = vld [vmem:[%s0 + $0xc4] sm:$0xf]
    %v105 = vld [vmem:[%s0 + $0xc8] sm:$0xf]
    %v106 = vld [vmem:[%s0 + $0xcc] sm:$0xf]
    %v107 = vld [vmem:[%s0 + $0xd0] sm:$0xf]
    %v108 = vld [vmem:[%s0 + $0xd4] sm:$0xf]
    %v109 = vld [vmem:[%s0 + $0xd8] sm:$0xf]
    %v110 = vld [vmem:[%s0 + $0xdc] sm:$0xf]
    %v111 = vld [vmem:[%s0 + $0xe0] sm:$0xf]
    %v112 = vld [vmem:[%s0 + $0xe4] sm:$0xf]
    %v113 = vld [vmem:[%s0 + $0xe8] sm:$0xf]
    %v114 = vld [vmem:[%s0 + $0xec] sm:$0xf]
    %v115 = vld [vmem:[%s0 + $0xf0] sm:$0xf]
    %v116 = vld [vmem:[%s0 + $0xf4] sm:$0xf]
    %v117 = vld [vmem:[%s0 + $0xf8] sm:$0xf]
    %v118 = vld [vmem:[%s0 + $0xfc] sm:$0xf]
    %v119 = vld [vmem:[#allocation2] sm:$0xf]
    %v120 = vld [vmem:[#allocation2 + $0x4] sm:$0x1]
    %v121 = vld [vmem:[#allocation4] sm:$0x1]
    %v123 = vlaneseq
    %v124 = vshrl.u32 %v123, 7
    %v125 = vsub.s32 0, %v124
    %v126 = vrot.slane %v121, %v125
    %v192 = vunpack.c.l.b16 %v55
    %v193 = vunpack.c.l.b16 %v56
    %v194 = vunpack.c.l.b16 %v57
    %v195 = vunpack.c.l.b16 %v58
    %v196 = vunpack.c.l.b16 %v59
    %v197 = vunpack.c.l.b16 %v60
    %v198 = vunpack.c.l.b16 %v61
    %v199 = vunpack.c.l.b16 %v62
    %v200 = vunpack.c.l.b16 %v63
    %v201 = vunpack.c.l.b16 %v64
    %v202 = vunpack.c.l.b16 %v65
    %v203 = vunpack.c.l.b16 %v66
    %v204 = vunpack.c.l.b16 %v67
    %v205 = vunpack.c.l.b16 %v68
    %v206 = vunpack.c.l.b16 %v69
    %v207 = vunpack.c.l.b16 %v70
    %v208 = vunpack.c.l.b16 %v71
    %v209 = vunpack.c.l.b16 %v72
    %v210 = vunpack.c.l.b16 %v73
    %v211 = vunpack.c.l.b16 %v74
    %v212 = vunpack.c.l.b16 %v75
    %v213 = vunpack.c.l.b16 %v76
    %v214 = vunpack.c.l.b16 %v77
    %v215 = vunpack.c.l.b16 %v78
    %v216 = vunpack.c.l.b16 %v79
    %v217 = vunpack.c.l.b16 %v80
    %v218 = vunpack.c.l.b16 %v81
    %v219 = vunpack.c.l.b16 %v82
    %v220 = vunpack.c.l.b16 %v83
    %v221 = vunpack.c.l.b16 %v84
    %v222 = vunpack.c.l.b16 %v85
    %v223 = vunpack.c.l.b16 %v86
    %v224 = vunpack.c.l.b16 %v87
    %v225 = vunpack.c.l.b16 %v88
    %v226 = vunpack.c.l.b16 %v89
    %v227 = vunpack.c.l.b16 %v90
    %v228 = vunpack.c.l.b16 %v91
    %v229 = vunpack.c.l.b16 %v92
    %v230 = vunpack.c.l.b16 %v93
    %v231 = vunpack.c.l.b16 %v94
    %v232 = vunpack.c.l.b16 %v95
    %v233 = vunpack.c.l.b16 %v96
    %v234 = vunpack.c.l.b16 %v97
    %v235 = vunpack.c.l.b16 %v98
    %v236 = vunpack.c.l.b16 %v99
    %v237 = vunpack.c.l.b16 %v100
    %v238 = vunpack.c.l.b16 %v101
    %v239 = vunpack.c.l.b16 %v102
    %v240 = vunpack.c.l.b16 %v103
    %v241 = vunpack.c.l.b16 %v104
    %v242 = vunpack.c.l.b16 %v105
    %v243 = vunpack.c.l.b16 %v106
    %v244 = vunpack.c.l.b16 %v107
    %v245 = vunpack.c.l.b16 %v108
    %v246 = vunpack.c.l.b16 %v109
    %v247 = vunpack.c.l.b16 %v110
    %v248 = vunpack.c.l.b16 %v111
    %v249 = vunpack.c.l.b16 %v112
    %v250 = vunpack.c.l.b16 %v113
    %v251 = vunpack.c.l.b16 %v114
    %v252 = vunpack.c.l.b16 %v115
    %v253 = vunpack.c.l.b16 %v116
    %v254 = vunpack.c.l.b16 %v117
    %v255 = vunpack.c.l.b16 %v118
    %v256 = vpack.c.b16 %v193, %v192
    %v257 = vpack.c.b16 %v195, %v194
    %v258 = vpack.c.b16 %v197, %v196
    %v259 = vpack.c.b16 %v199, %v198
    %v260 = vpack.c.b16 %v201, %v200
    %v261 = vpack.c.b16 %v203, %v202
    %v262 = vpack.c.b16 %v205, %v204
    %v263 = vpack.c.b16 %v207, %v206
    %v264 = vpack.c.b16 %v209, %v208
    %v265 = vpack.c.b16 %v211, %v210
    %v266 = vpack.c.b16 %v213, %v212
    %v267 = vpack.c.b16 %v215, %v214
    %v268 = vpack.c.b16 %v217, %v216
    %v269 = vpack.c.b16 %v219, %v218
    %v270 = vpack.c.b16 %v221, %v220
    %v271 = vpack.c.b16 %v223, %v222
    %v272 = vpack.c.b16 %v225, %v224
    %v273 = vpack.c.b16 %v227, %v226
    %v274 = vpack.c.b16 %v229, %v228
    %v275 = vpack.c.b16 %v231, %v230
    %v276 = vpack.c.b16 %v233, %v232
    %v277 = vpack.c.b16 %v235, %v234
    %v278 = vpack.c.b16 %v237, %v236
    %v279 = vpack.c.b16 %v239, %v238
    %v280 = vpack.c.b16 %v241, %v240
    %v281 = vpack.c.b16 %v243, %v242
    %v282 = vpack.c.b16 %v245, %v244
    %v283 = vpack.c.b16 %v247, %v246
    %v284 = vpack.c.b16 %v249, %v248
    %v285 = vpack.c.b16 %v251, %v250
    %v286 = vpack.c.b16 %v253, %v252
    %v287 = vpack.c.b16 %v255, %v254
    %v290 = vunpack.c.l.b16 %v119
    %v291 = vunpack.c.l.b16 %v120
    %v292 = vpack.c.b16 %v291, %v290
    %vm293 = vcmask 72704
    %v295 = vsel %vm293, %v256, 0
    %v298 = vsel %vm293, %v257, 0
    %v301 = vsel %vm293, %v258, 0
    %v304 = vsel %vm293, %v259, 0
    %v307 = vsel %vm293, %v260, 0
    %v310 = vsel %vm293, %v261, 0
    %v313 = vsel %vm293, %v262, 0
    %v316 = vsel %vm293, %v263, 0
    %v319 = vsel %vm293, %v264, 0
    %v322 = vsel %vm293, %v265, 0
    %v325 = vsel %vm293, %v266, 0
    %v328 = vsel %vm293, %v267, 0
    %v331 = vsel %vm293, %v268, 0
    %v334 = vsel %vm293, %v269, 0
    %v337 = vsel %vm293, %v270, 0
    %v340 = vsel %vm293, %v271, 0
    %v343 = vsel %vm293, %v272, 0
    %v346 = vsel %vm293, %v273, 0
    %v349 = vsel %vm293, %v274, 0
    %v352 = vsel %vm293, %v275, 0
    %v355 = vsel %vm293, %v276, 0
    %v358 = vsel %vm293, %v277, 0
    %v361 = vsel %vm293, %v278, 0
    %v364 = vsel %vm293, %v279, 0
    %v367 = vsel %vm293, %v280, 0
    %v370 = vsel %vm293, %v281, 0
    %v373 = vsel %vm293, %v282, 0
    %v376 = vsel %vm293, %v283, 0
    %v379 = vsel %vm293, %v284, 0
    %v382 = vsel %vm293, %v285, 0
    %v385 = vsel %vm293, %v286, 0
    %v388 = vsel %vm293, %v287, 0
    %vm390 = vcmask 1043456
    %vm391 = vcmask 1044480
    %v392 = vsel %vm390, 4294967295, 65535
    %v393 = vsel %vm391, %v392, 0
    %v395 = vand.u32 %v292, %v393
    %397 = vmatprep.subr.bf16.mxu0 0
    %398 = vmatpush1.bf16.msra.mxu0 %v395
    %399 = vmatprep.subr.bf16.mxu0 0
    %400 = vmatpush1.bf16.msra.mxu0 0
    %401 = vmatprep.subr.bf16.mxu0 0
    %402 = vmatpush1.bf16.msra.mxu0 0
    %403 = vmatprep.subr.bf16.mxu0 0
    %404 = vmatpush1.bf16.msra.mxu0 0
    %405 = vmatprep.subr.bf16.mxu0 0
    %406 = vmatpush1.bf16.msra.mxu0 0
    %407 = vmatprep.subr.bf16.mxu0 0
    %408 = vmatpush1.bf16.msra.mxu0 0
    %409 = vmatprep.subr.bf16.mxu0 0
    %410 = vmatpush1.bf16.msra.mxu0 0
    %411 = vmatprep.subr.bf16.mxu0 0
    %412 = vmatpush1.bf16.msra.mxu0 0
    %413 = vmatprep.subr.bf16.mxu0 0
    %414 = vmatpush1.bf16.msra.mxu0 0
    %415 = vmatprep.subr.bf16.mxu0 0
    %416 = vmatpush1.bf16.msra.mxu0 0
    %417 = vmatprep.subr.bf16.mxu0 0
    %418 = vmatpush1.bf16.msra.mxu0 0
    %419 = vmatprep.subr.bf16.mxu0 0
    %420 = vmatpush1.bf16.msra.mxu0 0
    %421 = vmatprep.subr.bf16.mxu0 0
    %422 = vmatpush1.bf16.msra.mxu0 0
    %423 = vmatprep.subr.bf16.mxu0 0
    %424 = vmatpush1.bf16.msra.mxu0 0
    %425 = vmatprep.subr.bf16.mxu0 0
    %426 = vmatpush1.bf16.msra.mxu0 0
    %427 = vmatprep.subr.bf16.mxu0 0
    %428 = vmatpush1.bf16.msra.mxu0 0
    %429 = vmatprep.mubr.bf16.mxu0 0
    %430 = vmatmul.mubr.bf16.gmra.mrb[0].mxu0 %v295
    %v431 = vpop.f32.mrb[0].mxu0
    %v432 = vadd.f32 %v126, %v431
    %v433 = vpop.f32.mrb[0].mxu0
    %v434 = vpop.f32.mrb[0].mxu0
    %v435 = vadd.f32 %v126, %v434
    %v436 = vpop.f32.mrb[0].mxu0
    %437 = vmatprep.mubr.bf16.mxu0 0
    %438 = vmatmul.mubr.bf16.gmra.mrb[0].mxu0 %v298
    %v439 = vpop.f32.mrb[0].mxu0
    %v440 = vadd.f32 %v126, %v439
    %v441 = vpop.f32.mrb[0].mxu0
    %v442 = vpop.f32.mrb[0].mxu0
    %v443 = vadd.f32 %v126, %v442
    %v444 = vpop.f32.mrb[0].mxu0
    %445 = vmatprep.mubr.bf16.mxu0 0
    %446 = vmatmul.mubr.bf16.gmra.mrb[0].mxu0 %v301
    %v447 = vpop.f32.mrb[0].mxu0
    %v448 = vadd.f32 %v126, %v447
    %v449 = vpop.f32.mrb[0].mxu0
    %v450 = vpop.f32.mrb[0].mxu0
    %v451 = vadd.f32 %v126, %v450
    %v452 = vpop.f32.mrb[0].mxu0
    %453 = vmatprep.mubr.bf16.mxu0 0
    %454 = vmatmul.mubr.bf16.gmra.mrb[0].mxu0 %v304
    %v455 = vpop.f32.mrb[0].mxu0
    %v456 = vadd.f32 %v126, %v455
    %v457 = vpop.f32.mrb[0].mxu0
    %v458 = vpop.f32.mrb[0].mxu0
    %v459 = vadd.f32 %v126, %v458
    %v460 = vpop.f32.mrb[0].mxu0
    %461 = vmatprep.mubr.bf16.mxu0 0
    %462 = vmatmul.mubr.bf16.gmra.mrb[0].mxu0 %v307
    %v463 = vpop.f32.mrb[0].mxu0
    %v464 = vadd.f32 %v126, %v463
    %v465 = vpop.f32.mrb[0].mxu0
    %v466 = vpop.f32.mrb[0].mxu0
    %v467 = vadd.f32 %v126, %v466
    %v468 = vpop.f32.mrb[0].mxu0
    %469 = vmatprep.mubr.bf16.mxu0 0
    %470 = vmatmul.mubr.bf16.gmra.mrb[0].mxu0 %v310
    %v471 = vpop.f32.mrb[0].mxu0
    %v472 = vadd.f32 %v126, %v471
    %v473 = vpop.f32.mrb[0].mxu0
    %v474 = vpop.f32.mrb[0].mxu0
    %v475 = vadd.f32 %v126, %v474
    %v476 = vpop.f32.mrb[0].mxu0
    %477 = vmatprep.mubr.bf16.mxu0 0
    %478 = vmatmul.mubr.bf16.gmra.mrb[0].mxu0 %v313
    %v479 = vpop.f32.mrb[0].mxu0
    %v480 = vadd.f32 %v126, %v479
    %v481 = vpop.f32.mrb[0].mxu0
    %v482 = vpop.f32.mrb[0].mxu0
    %v483 = vadd.f32 %v126, %v482
    %v484 = vpop.f32.mrb[0].mxu0
    %485 = vmatprep.mubr.bf16.mxu0 0
    %486 = vmatmul.mubr.bf16.gmra.mrb[0].mxu0 %v316
    %v487 = vpop.f32.mrb[0].mxu0
    %v488 = vadd.f32 %v126, %v487
    %v489 = vpop.f32.mrb[0].mxu0
    %v490 = vpop.f32.mrb[0].mxu0
    %v491 = vadd.f32 %v126, %v490
    %v492 = vpop.f32.mrb[0].mxu0
    %493 = vmatprep.mubr.bf16.mxu0 0
    %494 = vmatmul.mubr.bf16.gmra.mrb[0].mxu0 %v319
    %v495 = vpop.f32.mrb[0].mxu0
    %v496 = vadd.f32 %v126, %v495
    %v497 = vpop.f32.mrb[0].mxu0
    %v498 = vpop.f32.mrb[0].mxu0
    %v499 = vadd.f32 %v126, %v498
    %v500 = vpop.f32.mrb[0].mxu0
    %501 = vmatprep.mubr.bf16.mxu0 0
    %502 = vmatmul.mubr.bf16.gmra.mrb[0].mxu0 %v322
    %v503 = vpop.f32.mrb[0].mxu0
    %v504 = vadd.f32 %v126, %v503
    %v505 = vpop.f32.mrb[0].mxu0
    %v506 = vpop.f32.mrb[0].mxu0
    %v507 = vadd.f32 %v126, %v506
    %v508 = vpop.f32.mrb[0].mxu0
    %509 = vmatprep.mubr.bf16.mxu0 0
    %510 = vmatmul.mubr.bf16.gmra.mrb[0].mxu0 %v325
    %v511 = vpop.f32.mrb[0].mxu0
    %v512 = vadd.f32 %v126, %v511
    %v513 = vpop.f32.mrb[0].mxu0
    %v514 = vpop.f32.mrb[0].mxu0
    %v515 = vadd.f32 %v126, %v514
    %v516 = vpop.f32.mrb[0].mxu0
    %517 = vmatprep.mubr.bf16.mxu0 0
    %518 = vmatmul.mubr.bf16.gmra.mrb[0].mxu0 %v328
    %v519 = vpop.f32.mrb[0].mxu0
    %v520 = vadd.f32 %v126, %v519
    %v521 = vpop.f32.mrb[0].mxu0
    %v522 = vpop.f32.mrb[0].mxu0
    %v523 = vadd.f32 %v126, %v522
    %v524 = vpop.f32.mrb[0].mxu0
    %525 = vmatprep.mubr.bf16.mxu0 0
    %526 = vmatmul.mubr.bf16.gmra.mrb[0].mxu0 %v331
    %v527 = vpop.f32.mrb[0].mxu0
    %v528 = vadd.f32 %v126, %v527
    %v529 = vpop.f32.mrb[0].mxu0
    %v530 = vpop.f32.mrb[0].mxu0
    %v531 = vadd.f32 %v126, %v530
    %v532 = vpop.f32.mrb[0].mxu0
    %533 = vmatprep.mubr.bf16.mxu0 0
    %534 = vmatmul.mubr.bf16.gmra.mrb[0].mxu0 %v334
    %v535 = vpop.f32.mrb[0].mxu0
    %v536 = vadd.f32 %v126, %v535
    %v537 = vpop.f32.mrb[0].mxu0
    %v538 = vpop.f32.mrb[0].mxu0
    %v539 = vadd.f32 %v126, %v538
    %v540 = vpop.f32.mrb[0].mxu0
    %541 = vmatprep.mubr.bf16.mxu0 0
    %542 = vmatmul.mubr.bf16.gmra.mrb[0].mxu0 %v337
    %v543 = vpop.f32.mrb[0].mxu0
    %v544 = vadd.f32 %v126, %v543
    %v545 = vpop.f32.mrb[0].mxu0
    %v546 = vpop.f32.mrb[0].mxu0
    %v547 = vadd.f32 %v126, %v546
    %v548 = vpop.f32.mrb[0].mxu0
    %549 = vmatprep.mubr.bf16.mxu0 0
    %550 = vmatmul.mubr.bf16.gmra.mrb[0].mxu0 %v340
    %v551 = vpop.f32.mrb[0].mxu0
    %v552 = vadd.f32 %v126, %v551
    %v553 = vpop.f32.mrb[0].mxu0
    %v554 = vpop.f32.mrb[0].mxu0
    %v555 = vadd.f32 %v126, %v554
    %v556 = vpop.f32.mrb[0].mxu0
    %557 = vmatprep.mubr.bf16.mxu0 0
    %558 = vmatmul.mubr.bf16.gmra.mrb[0].mxu0 %v343
    %v559 = vpop.f32.mrb[0].mxu0
    %v560 = vadd.f32 %v126, %v559
    %v561 = vpop.f32.mrb[0].mxu0
    %v562 = vpop.f32.mrb[0].mxu0
    %v563 = vadd.f32 %v126, %v562
    %v564 = vpop.f32.mrb[0].mxu0
    %565 = vmatprep.mubr.bf16.mxu0 0
    %566 = vmatmul.mubr.bf16.gmra.mrb[0].mxu0 %v346
    %v567 = vpop.f32.mrb[0].mxu0
    %v568 = vadd.f32 %v126, %v567
    %v569 = vpop.f32.mrb[0].mxu0
    %v570 = vpop.f32.mrb[0].mxu0
    %v571 = vadd.f32 %v126, %v570
    %v572 = vpop.f32.mrb[0].mxu0
    %573 = vmatprep.mubr.bf16.mxu0 0
    %574 = vmatmul.mubr.bf16.gmra.mrb[0].mxu0 %v349
    %v575 = vpop.f32.mrb[0].mxu0
    %v576 = vadd.f32 %v126, %v575
    %v577 = vpop.f32.mrb[0].mxu0
    %v578 = vpop.f32.mrb[0].mxu0
    %v579 = vadd.f32 %v126, %v578
    %v580 = vpop.f32.mrb[0].mxu0
    %581 = vmatprep.mubr.bf16.mxu0 0
    %582 = vmatmul.mubr.bf16.gmra.mrb[0].mxu0 %v352
    %v583 = vpop.f32.mrb[0].mxu0
    %v584 = vadd.f32 %v126, %v583
    %v585 = vpop.f32.mrb[0].mxu0
    %v586 = vpop.f32.mrb[0].mxu0
    %v587 = vadd.f32 %v126, %v586
    %v588 = vpop.f32.mrb[0].mxu0
    %589 = vmatprep.mubr.bf16.mxu0 0
    %590 = vmatmul.mubr.bf16.gmra.mrb[0].mxu0 %v355
    %v591 = vpop.f32.mrb[0].mxu0
    %v592 = vadd.f32 %v126, %v591
    %v593 = vpop.f32.mrb[0].mxu0
    %v594 = vpop.f32.mrb[0].mxu0
    %v595 = vadd.f32 %v126, %v594
    %v596 = vpop.f32.mrb[0].mxu0
    %597 = vmatprep.mubr.bf16.mxu0 0
    %598 = vmatmul.mubr.bf16.gmra.mrb[0].mxu0 %v358
    %v599 = vpop.f32.mrb[0].mxu0
    %v600 = vadd.f32 %v126, %v599
    %v601 = vpop.f32.mrb[0].mxu0
    %v602 = vpop.f32.mrb[0].mxu0
    %v603 = vadd.f32 %v126, %v602
    %v604 = vpop.f32.mrb[0].mxu0
    %605 = vmatprep.mubr.bf16.mxu0 0
    %606 = vmatmul.mubr.bf16.gmra.mrb[0].mxu0 %v361
    %v607 = vpop.f32.mrb[0].mxu0
    %v608 = vadd.f32 %v126, %v607
    %v609 = vpop.f32.mrb[0].mxu0
    %v610 = vpop.f32.mrb[0].mxu0
    %v611 = vadd.f32 %v126, %v610
    %v612 = vpop.f32.mrb[0].mxu0
    %613 = vmatprep.mubr.bf16.mxu0 0
    %614 = vmatmul.mubr.bf16.gmra.mrb[0].mxu0 %v364
    %v615 = vpop.f32.mrb[0].mxu0
    %v616 = vadd.f32 %v126, %v615
    %v617 = vpop.f32.mrb[0].mxu0
    %v618 = vpop.f32.mrb[0].mxu0
    %v619 = vadd.f32 %v126, %v618
    %v620 = vpop.f32.mrb[0].mxu0
    %621 = vmatprep.mubr.bf16.mxu0 0
    %622 = vmatmul.mubr.bf16.gmra.mrb[0].mxu0 %v367
    %v623 = vpop.f32.mrb[0].mxu0
    %v624 = vadd.f32 %v126, %v623
    %v625 = vpop.f32.mrb[0].mxu0
    %v626 = vpop.f32.mrb[0].mxu0
    %v627 = vadd.f32 %v126, %v626
    %v628 = vpop.f32.mrb[0].mxu0
    %629 = vmatprep.mubr.bf16.mxu0 0
    %630 = vmatmul.mubr.bf16.gmra.mrb[0].mxu0 %v370
    %v631 = vpop.f32.mrb[0].mxu0
    %v632 = vadd.f32 %v126, %v631
    %v633 = vpop.f32.mrb[0].mxu0
    %v634 = vpop.f32.mrb[0].mxu0
    %v635 = vadd.f32 %v126, %v634
    %v636 = vpop.f32.mrb[0].mxu0
    %637 = vmatprep.mubr.bf16.mxu0 0
    %638 = vmatmul.mubr.bf16.gmra.mrb[0].mxu0 %v373
    %v639 = vpop.f32.mrb[0].mxu0
    %v640 = vadd.f32 %v126, %v639
    %v641 = vpop.f32.mrb[0].mxu0
    %v642 = vpop.f32.mrb[0].mxu0
    %v643 = vadd.f32 %v126, %v642
    %v644 = vpop.f32.mrb[0].mxu0
    %645 = vmatprep.mubr.bf16.mxu0 0
    %646 = vmatmul.mubr.bf16.gmra.mrb[0].mxu0 %v376
    %v647 = vpop.f32.mrb[0].mxu0
    %v648 = vadd.f32 %v126, %v647
    %v649 = vpop.f32.mrb[0].mxu0
    %v650 = vpop.f32.mrb[0].mxu0
    %v651 = vadd.f32 %v126, %v650
    %v652 = vpop.f32.mrb[0].mxu0
    %653 = vmatprep.mubr.bf16.mxu0 0
    %654 = vmatmul.mubr.bf16.gmra.mrb[0].mxu0 %v379
    %v655 = vpop.f32.mrb[0].mxu0
    %v656 = vadd.f32 %v126, %v655
    %v657 = vpop.f32.mrb[0].mxu0
    %v658 = vpop.f32.mrb[0].mxu0
    %v659 = vadd.f32 %v126, %v658
    %v660 = vpop.f32.mrb[0].mxu0
    %661 = vmatprep.mubr.bf16.mxu0 0
    %662 = vmatmul.mubr.bf16.gmra.mrb[0].mxu0 %v382
    %v663 = vpop.f32.mrb[0].mxu0
    %v664 = vadd.f32 %v126, %v663
    %v665 = vpop.f32.mrb[0].mxu0
    %v666 = vpop.f32.mrb[0].mxu0
    %v667 = vadd.f32 %v126, %v666
    %v668 = vpop.f32.mrb[0].mxu0
    %669 = vmatprep.mubr.bf16.mxu0 0
    %670 = vmatmul.mubr.bf16.gmra.mrb[0].mxu0 %v385
    %v671 = vpop.f32.mrb[0].mxu0
    %v672 = vadd.f32 %v126, %v671
    %v673 = vpop.f32.mrb[0].mxu0
    %v674 = vpop.f32.mrb[0].mxu0
    %v675 = vadd.f32 %v126, %v674
    %v676 = vpop.f32.mrb[0].mxu0
    %677 = vmatprep.mubr.bf16.mxu0 0
    %678 = vmatmul.mubr.bf16.gmra.mrb[0].mxu0 %v388
    %v679 = vpop.f32.mrb[0].mxu0
    %v680 = vadd.f32 %v126, %v679
    %v681 = vpop.f32.mrb[0].mxu0
    %v682 = vpop.f32.mrb[0].mxu0
    %v683 = vadd.f32 %v126, %v682
    %v684 = vpop.f32.mrb[0].mxu0
    %685 = vdwg.mxu0
    %v686 = vld [vmem:[#allocation6] sm:$0x1]
    %vm687 = vcmp.ge.f32.partialorder %v432, 0.0
    %vm688 = vcmp.ge.f32.partialorder %v435, 0.0
    %vm689 = vcmp.ge.f32.partialorder %v440, 0.0
    %vm690 = vcmp.ge.f32.partialorder %v443, 0.0
    %vm691 = vcmp.ge.f32.partialorder %v448, 0.0
    %vm692 = vcmp.ge.f32.partialorder %v451, 0.0
    %vm693 = vcmp.ge.f32.partialorder %v456, 0.0
    %vm694 = vcmp.ge.f32.partialorder %v459, 0.0
    %vm695 = vcmp.ge.f32.partialorder %v464, 0.0
    %vm696 = vcmp.ge.f32.partialorder %v467, 0.0
    %vm697 = vcmp.ge.f32.partialorder %v472, 0.0
    %vm698 = vcmp.ge.f32.partialorder %v475, 0.0
    %vm699 = vcmp.ge.f32.partialorder %v480, 0.0
    %vm700 = vcmp.ge.f32.partialorder %v483, 0.0
    %vm701 = vcmp.ge.f32.partialorder %v488, 0.0
    %vm702 = vcmp.ge.f32.partialorder %v491, 0.0
    %vm703 = vcmp.ge.f32.partialorder %v496, 0.0
    %vm704 = vcmp.ge.f32.partialorder %v499, 0.0
    %vm705 = vcmp.ge.f32.partialorder %v504, 0.0
    %vm706 = vcmp.ge.f32.partialorder %v507, 0.0
    %vm707 = vcmp.ge.f32.partialorder %v512, 0.0
    %vm708 = vcmp.ge.f32.partialorder %v515, 0.0
    %vm709 = vcmp.ge.f32.partialorder %v520, 0.0
    %vm710 = vcmp.ge.f32.partialorder %v523, 0.0
    %vm711 = vcmp.ge.f32.partialorder %v528, 0.0
    %vm712 = vcmp.ge.f32.partialorder %v531, 0.0
    %vm713 = vcmp.ge.f32.partialorder %v536, 0.0
    %vm714 = vcmp.ge.f32.partialorder %v539, 0.0
    %vm715 = vcmp.ge.f32.partialorder %v544, 0.0
    %vm716 = vcmp.ge.f32.partialorder %v547, 0.0
    %vm717 = vcmp.ge.f32.partialorder %v552, 0.0
    %vm718 = vcmp.ge.f32.partialorder %v555, 0.0
    %vm719 = vcmp.ge.f32.partialorder %v560, 0.0
    %vm720 = vcmp.ge.f32.partialorder %v563, 0.0
    %vm721 = vcmp.ge.f32.partialorder %v568, 0.0
    %vm722 = vcmp.ge.f32.partialorder %v571, 0.0
    %vm723 = vcmp.ge.f32.partialorder %v576, 0.0
    %vm724 = vcmp.ge.f32.partialorder %v579, 0.0
    %vm725 = vcmp.ge.f32.partialorder %v584, 0.0
    %vm726 = vcmp.ge.f32.partialorder %v587, 0.0
    %vm727 = vcmp.ge.f32.partialorder %v592, 0.0
    %vm728 = vcmp.ge.f32.partialorder %v595, 0.0
    %vm729 = vcmp.ge.f32.partialorder %v600, 0.0
    %vm730 = vcmp.ge.f32.partialorder %v603, 0.0
    %vm731 = vcmp.ge.f32.partialorder %v608, 0.0
    %vm732 = vcmp.ge.f32.partialorder %v611, 0.0
    %vm733 = vcmp.ge.f32.partialorder %v616, 0.0
    %vm734 = vcmp.ge.f32.partialorder %v619, 0.0
    %vm735 = vcmp.ge.f32.partialorder %v624, 0.0
    %vm736 = vcmp.ge.f32.partialorder %v627, 0.0
    %vm737 = vcmp.ge.f32.partialorder %v632, 0.0
    %vm738 = vcmp.ge.f32.partialorder %v635, 0.0
    %vm739 = vcmp.ge.f32.partialorder %v640, 0.0
    %vm740 = vcmp.ge.f32.partialorder %v643, 0.0
    %vm741 = vcmp.ge.f32.partialorder %v648, 0.0
    %vm742 = vcmp.ge.f32.partialorder %v651, 0.0
    %vm743 = vcmp.ge.f32.partialorder %v656, 0.0
    %vm744 = vcmp.ge.f32.partialorder %v659, 0.0
    %vm745 = vcmp.ge.f32.partialorder %v664, 0.0
    %vm746 = vcmp.ge.f32.partialorder %v667, 0.0
    %vm747 = vcmp.ge.f32.partialorder %v672, 0.0
    %vm748 = vcmp.ge.f32.partialorder %v675, 0.0
    %vm749 = vcmp.ge.f32.partialorder %v680, 0.0
    %vm750 = vcmp.ge.f32.partialorder %v683, 0.0
    %v752 = vlaneseq
    %v753 = vshrl.u32 %v752, 7
    %v754 = vsub.s32 0, %v753
    %v755 = vrot.slane %v686, %v754
    %v757 = vmul.f32 %v755, %v432
    %v758 = vmul.f32 %v755, %v435
    %v759 = vmul.f32 %v755, %v440
    %v760 = vmul.f32 %v755, %v443
    %v761 = vmul.f32 %v755, %v448
    %v762 = vmul.f32 %v755, %v451
    %v763 = vmul.f32 %v755, %v456
    %v764 = vmul.f32 %v755, %v459
    %v765 = vmul.f32 %v755, %v464
    %v766 = vmul.f32 %v755, %v467
    %v767 = vmul.f32 %v755, %v472
    %v768 = vmul.f32 %v755, %v475
    %v769 = vmul.f32 %v755, %v480
    %v770 = vmul.f32 %v755, %v483
    %v771 = vmul.f32 %v755, %v488
    %v772 = vmul.f32 %v755, %v491
    %v773 = vmul.f32 %v755, %v496
    %v774 = vmul.f32 %v755, %v499
    %v775 = vmul.f32 %v755, %v504
    %v776 = vmul.f32 %v755, %v507
    %v777 = vmul.f32 %v755, %v512
    %v778 = vmul.f32 %v755, %v515
    %v779 = vmul.f32 %v755, %v520
    %v780 = vmul.f32 %v755, %v523
    %v781 = vmul.f32 %v755, %v528
    %v782 = vmul.f32 %v755, %v531
    %v783 = vmul.f32 %v755, %v536
    %v784 = vmul.f32 %v755, %v539
    %v785 = vmul.f32 %v755, %v544
    %v786 = vmul.f32 %v755, %v547
    %v787 = vmul.f32 %v755, %v552
    %v788 = vmul.f32 %v755, %v555
    %v789 = vmul.f32 %v755, %v560
    %v790 = vmul.f32 %v755, %v563
    %v791 = vmul.f32 %v755, %v568
    %v792 = vmul.f32 %v755, %v571
    %v793 = vmul.f32 %v755, %v576
    %v794 = vmul.f32 %v755, %v579
    %v795 = vmul.f32 %v755, %v584
    %v796 = vmul.f32 %v755, %v587
    %v797 = vmul.f32 %v755, %v592
    %v798 = vmul.f32 %v755, %v595
    %v799 = vmul.f32 %v755, %v600
    %v800 = vmul.f32 %v755, %v603
    %v801 = vmul.f32 %v755, %v608
    %v802 = vmul.f32 %v755, %v611
    %v803 = vmul.f32 %v755, %v616
    %v804 = vmul.f32 %v755, %v619
    %v805 = vmul.f32 %v755, %v624
    %v806 = vmul.f32 %v755, %v627
    %v807 = vmul.f32 %v755, %v632
    %v808 = vmul.f32 %v755, %v635
    %v809 = vmul.f32 %v755, %v640
    %v810 = vmul.f32 %v755, %v643
    %v811 = vmul.f32 %v755, %v648
    %v812 = vmul.f32 %v755, %v651
    %v813 = vmul.f32 %v755, %v656
    %v814 = vmul.f32 %v755, %v659
    %v815 = vmul.f32 %v755, %v664
    %v816 = vmul.f32 %v755, %v667
    %v817 = vmul.f32 %v755, %v672
    %v818 = vmul.f32 %v755, %v675
    %v819 = vmul.f32 %v755, %v680
    %v820 = vmul.f32 %v755, %v683
    %v821 = vsel %vm687, %v432, %v757
    %v822 = vsel %vm688, %v435, %v758
    %v823 = vsel %vm689, %v440, %v759
    %v824 = vsel %vm690, %v443, %v760
    %v825 = vsel %vm691, %v448, %v761
    %v826 = vsel %vm692, %v451, %v762
    %v827 = vsel %vm693, %v456, %v763
    %v828 = vsel %vm694, %v459, %v764
    %v829 = vsel %vm695, %v464, %v765
    %v830 = vsel %vm696, %v467, %v766
    %v831 = vsel %vm697, %v472, %v767
    %v832 = vsel %vm698, %v475, %v768
    %v833 = vsel %vm699, %v480, %v769
    %v834 = vsel %vm700, %v483, %v770
    %v835 = vsel %vm701, %v488, %v771
    %v836 = vsel %vm702, %v491, %v772
    %v837 = vsel %vm703, %v496, %v773
    %v838 = vsel %vm704, %v499, %v774
    %v839 = vsel %vm705, %v504, %v775
    %v840 = vsel %vm706, %v507, %v776
    %v841 = vsel %vm707, %v512, %v777
    %v842 = vsel %vm708, %v515, %v778
    %v843 = vsel %vm709, %v520, %v779
    %v844 = vsel %vm710, %v523, %v780
    %v845 = vsel %vm711, %v528, %v781
    %v846 = vsel %vm712, %v531, %v782
    %v847 = vsel %vm713, %v536, %v783
    %v848 = vsel %vm714, %v539, %v784
    %v849 = vsel %vm715, %v544, %v785
    %v850 = vsel %vm716, %v547, %v786
    %v851 = vsel %vm717, %v552, %v787
    %v852 = vsel %vm718, %v555, %v788
    %v853 = vsel %vm719, %v560, %v789
    %v854 = vsel %vm720, %v563, %v790
    %v855 = vsel %vm721, %v568, %v791
    %v856 = vsel %vm722, %v571, %v792
    %v857 = vsel %vm723, %v576, %v793
    %v858 = vsel %vm724, %v579, %v794
    %v859 = vsel %vm725, %v584, %v795
    %v860 = vsel %vm726, %v587, %v796
    %v861 = vsel %vm727, %v592, %v797
    %v862 = vsel %vm728, %v595, %v798
    %v863 = vsel %vm729, %v600, %v799
    %v864 = vsel %vm730, %v603, %v800
    %v865 = vsel %vm731, %v608, %v801
    %v866 = vsel %vm732, %v611, %v802
    %v867 = vsel %vm733, %v616, %v803
    %v868 = vsel %vm734, %v619, %v804
    %v869 = vsel %vm735, %v624, %v805
    %v870 = vsel %vm736, %v627, %v806
    %v871 = vsel %vm737, %v632, %v807
    %v872 = vsel %vm738, %v635, %v808
    %v873 = vsel %vm739, %v640, %v809
    %v874 = vsel %vm740, %v643, %v810
    %v875 = vsel %vm741, %v648, %v811
    %v876 = vsel %vm742, %v651, %v812
    %v877 = vsel %vm743, %v656, %v813
    %v878 = vsel %vm744, %v659, %v814
    %v879 = vsel %vm745, %v664, %v815
    %v880 = vsel %vm746, %v667, %v816
    %v881 = vsel %vm747, %v672, %v817
    %v882 = vsel %vm748, %v675, %v818
    %v883 = vsel %vm749, %v680, %v819
    %v884 = vsel %vm750, %v683, %v820
    %v885 = vpack.c.bf16 %v822, %v821
    %v886 = vpack.c.bf16 %v824, %v823
    %v887 = vpack.c.bf16 %v826, %v825
    %v888 = vpack.c.bf16 %v828, %v827
    %v889 = vpack.c.bf16 %v830, %v829
    %v890 = vpack.c.bf16 %v832, %v831
    %v891 = vpack.c.bf16 %v834, %v833
    %v892 = vpack.c.bf16 %v836, %v835
    %v893 = vpack.c.bf16 %v838, %v837
    %v894 = vpack.c.bf16 %v840, %v839
    %v895 = vpack.c.bf16 %v842, %v841
    %v896 = vpack.c.bf16 %v844, %v843
    %v897 = vpack.c.bf16 %v846, %v845
    %v898 = vpack.c.bf16 %v848, %v847
    %v899 = vpack.c.bf16 %v850, %v849
    %v900 = vpack.c.bf16 %v852, %v851
    %v901 = vpack.c.bf16 %v854, %v853
    %v902 = vpack.c.bf16 %v856, %v855
    %v903 = vpack.c.bf16 %v858, %v857
    %v904 = vpack.c.bf16 %v860, %v859
    %v905 = vpack.c.bf16 %v862, %v861
    %v906 = vpack.c.bf16 %v864, %v863
    %v907 = vpack.c.bf16 %v866, %v865
    %v908 = vpack.c.bf16 %v868, %v867
    %v909 = vpack.c.bf16 %v870, %v869
    %v910 = vpack.c.bf16 %v872, %v871
    %v911 = vpack.c.bf16 %v874, %v873
    %v912 = vpack.c.bf16 %v876, %v875
    %v913 = vpack.c.bf16 %v878, %v877
    %v914 = vpack.c.bf16 %v880, %v879
    %v915 = vpack.c.bf16 %v882, %v881
    %v916 = vpack.c.bf16 %v884, %v883
    %v949 = vunpack.c.l.b16 %v885
    %v950 = vunpack.c.h.b16 %v885
    %v951 = vunpack.c.l.b16 %v886
    %v952 = vunpack.c.h.b16 %v886
    %v953 = vunpack.c.l.b16 %v887
    %v954 = vunpack.c.h.b16 %v887
    %v955 = vunpack.c.l.b16 %v888
    %v956 = vunpack.c.h.b16 %v888
    %v957 = vunpack.c.l.b16 %v889
    %v958 = vunpack.c.h.b16 %v889
    %v959 = vunpack.c.l.b16 %v890
    %v960 = vunpack.c.h.b16 %v890
    %v961 = vunpack.c.l.b16 %v891
    %v962 = vunpack.c.h.b16 %v891
    %v963 = vunpack.c.l.b16 %v892
    %v964 = vunpack.c.h.b16 %v892
    %v965 = vunpack.c.l.b16 %v893
    %v966 = vunpack.c.h.b16 %v893
    %v967 = vunpack.c.l.b16 %v894
    %v968 = vunpack.c.h.b16 %v894
    %v969 = vunpack.c.l.b16 %v895
    %v970 = vunpack.c.h.b16 %v895
    %v971 = vunpack.c.l.b16 %v896
    %v972 = vunpack.c.h.b16 %v896
    %v973 = vunpack.c.l.b16 %v897
    %v974 = vunpack.c.h.b16 %v897
    %v975 = vunpack.c.l.b16 %v898
    %v976 = vunpack.c.h.b16 %v898
    %v977 = vunpack.c.l.b16 %v899
    %v978 = vunpack.c.h.b16 %v899
    %v979 = vunpack.c.l.b16 %v900
    %v980 = vunpack.c.h.b16 %v900
    %v981 = vunpack.c.l.b16 %v901
    %v982 = vunpack.c.h.b16 %v901
    %v983 = vunpack.c.l.b16 %v902
    %v984 = vunpack.c.h.b16 %v902
    %v985 = vunpack.c.l.b16 %v903
    %v986 = vunpack.c.h.b16 %v903
    %v987 = vunpack.c.l.b16 %v904
    %v988 = vunpack.c.h.b16 %v904
    %v989 = vunpack.c.l.b16 %v905
    %v990 = vunpack.c.h.b16 %v905
    %v991 = vunpack.c.l.b16 %v906
    %v992 = vunpack.c.h.b16 %v906
    %v993 = vunpack.c.l.b16 %v907
    %v994 = vunpack.c.h.b16 %v907
    %v995 = vunpack.c.l.b16 %v908
    %v996 = vunpack.c.h.b16 %v908
    %v997 = vunpack.c.l.b16 %v909
    %v998 = vunpack.c.h.b16 %v909
    %v999 = vunpack.c.l.b16 %v910
    %v1000 = vunpack.c.h.b16 %v910
    %v1001 = vunpack.c.l.b16 %v911
    %v1002 = vunpack.c.h.b16 %v911
    %v1003 = vunpack.c.l.b16 %v912
    %v1004 = vunpack.c.h.b16 %v912
    %v1005 = vunpack.c.l.b16 %v913
    %v1006 = vunpack.c.h.b16 %v913
    %v1007 = vunpack.c.l.b16 %v914
    %v1008 = vunpack.c.h.b16 %v914
    %v1009 = vunpack.c.l.b16 %v915
    %v1010 = vunpack.c.h.b16 %v915
    %v1011 = vunpack.c.l.b16 %v916
    %v1012 = vunpack.c.h.b16 %v916
    %v1013 = vpack.c.b16 %v949, %v949
    %v1014 = vpack.c.b16 %v950, %v950
    %v1015 = vpack.c.b16 %v951, %v951
    %v1016 = vpack.c.b16 %v952, %v952
    %v1017 = vpack.c.b16 %v953, %v953
    %v1018 = vpack.c.b16 %v954, %v954
    %v1019 = vpack.c.b16 %v955, %v955
    %v1020 = vpack.c.b16 %v956, %v956
    %v1021 = vpack.c.b16 %v957, %v957
    %v1022 = vpack.c.b16 %v958, %v958
    %v1023 = vpack.c.b16 %v959, %v959
    %v1024 = vpack.c.b16 %v960, %v960
    %v1025 = vpack.c.b16 %v961, %v961
    %v1026 = vpack.c.b16 %v962, %v962
    %v1027 = vpack.c.b16 %v963, %v963
    %v1028 = vpack.c.b16 %v964, %v964
    %v1029 = vpack.c.b16 %v965, %v965
    %v1030 = vpack.c.b16 %v966, %v966
    %v1031 = vpack.c.b16 %v967, %v967
    %v1032 = vpack.c.b16 %v968, %v968
    %v1033 = vpack.c.b16 %v969, %v969
    %v1034 = vpack.c.b16 %v970, %v970
    %v1035 = vpack.c.b16 %v971, %v971
    %v1036 = vpack.c.b16 %v972, %v972
    %v1037 = vpack.c.b16 %v973, %v973
    %v1038 = vpack.c.b16 %v974, %v974
    %v1039 = vpack.c.b16 %v975, %v975
    %v1040 = vpack.c.b16 %v976, %v976
    %v1041 = vpack.c.b16 %v977, %v977
    %v1042 = vpack.c.b16 %v978, %v978
    %v1043 = vpack.c.b16 %v979, %v979
    %v1044 = vpack.c.b16 %v980, %v980
    %v1045 = vpack.c.b16 %v981, %v981
    %v1046 = vpack.c.b16 %v982, %v982
    %v1047 = vpack.c.b16 %v983, %v983
    %v1048 = vpack.c.b16 %v984, %v984
    %v1049 = vpack.c.b16 %v985, %v985
    %v1050 = vpack.c.b16 %v986, %v986
    %v1051 = vpack.c.b16 %v987, %v987
    %v1052 = vpack.c.b16 %v988, %v988
    %v1053 = vpack.c.b16 %v989, %v989
    %v1054 = vpack.c.b16 %v990, %v990
    %v1055 = vpack.c.b16 %v991, %v991
    %v1056 = vpack.c.b16 %v992, %v992
    %v1057 = vpack.c.b16 %v993, %v993
    %v1058 = vpack.c.b16 %v994, %v994
    %v1059 = vpack.c.b16 %v995, %v995
    %v1060 = vpack.c.b16 %v996, %v996
    %v1061 = vpack.c.b16 %v997, %v997
    %v1062 = vpack.c.b16 %v998, %v998
    %v1063 = vpack.c.b16 %v999, %v999
    %v1064 = vpack.c.b16 %v1000, %v1000
    %v1065 = vpack.c.b16 %v1001, %v1001
    %v1066 = vpack.c.b16 %v1002, %v1002
    %v1067 = vpack.c.b16 %v1003, %v1003
    %v1068 = vpack.c.b16 %v1004, %v1004
    %v1069 = vpack.c.b16 %v1005, %v1005
    %v1070 = vpack.c.b16 %v1006, %v1006
    %v1071 = vpack.c.b16 %v1007, %v1007
    %v1072 = vpack.c.b16 %v1008, %v1008
    %v1073 = vpack.c.b16 %v1009, %v1009
    %v1074 = vpack.c.b16 %v1010, %v1010
    %v1075 = vpack.c.b16 %v1011, %v1011
    %v1076 = vpack.c.b16 %v1012, %v1012
    %vm1141 = vcmask 519168
    %1142 = vst.msk [vmem:[%s4] sm:$0xf] %vm1141, %v1013
    %1143 = vst.msk [vmem:[%s4 + $0x4] sm:$0xf] %vm1141, %v1014
    %1144 = vst.msk [vmem:[%s4 + $0x8] sm:$0xf] %vm1141, %v1015
    %1145 = vst.msk [vmem:[%s4 + $0xc] sm:$0xf] %vm1141, %v1016
    %1146 = vst.msk [vmem:[%s4 + $0x10] sm:$0xf] %vm1141, %v1017
    %1147 = vst.msk [vmem:[%s4 + $0x14] sm:$0xf] %vm1141, %v1018
    %1148 = vst.msk [vmem:[%s4 + $0x18] sm:$0xf] %vm1141, %v1019
    %1149 = vst.msk [vmem:[%s4 + $0x1c] sm:$0xf] %vm1141, %v1020
    %1150 = vst.msk [vmem:[%s4 + $0x20] sm:$0xf] %vm1141, %v1021
    %1151 = vst.msk [vmem:[%s4 + $0x24] sm:$0xf] %vm1141, %v1022
    %1152 = vst.msk [vmem:[%s4 + $0x28] sm:$0xf] %vm1141, %v1023
    %1153 = vst.msk [vmem:[%s4 + $0x2c] sm:$0xf] %vm1141, %v1024
    %1154 = vst.msk [vmem:[%s4 + $0x30] sm:$0xf] %vm1141, %v1025
    %1155 = vst.msk [vmem:[%s4 + $0x34] sm:$0xf] %vm1141, %v1026
    %1156 = vst.msk [vmem:[%s4 + $0x38] sm:$0xf] %vm1141, %v1027
    %1157 = vst.msk [vmem:[%s4 + $0x3c] sm:$0xf] %vm1141, %v1028
    %1158 = vst.msk [vmem:[%s4 + $0x40] sm:$0xf] %vm1141, %v1029
    %1159 = vst.msk [vmem:[%s4 + $0x44] sm:$0xf] %vm1141, %v1030
    %1160 = vst.msk [vmem:[%s4 + $0x48] sm:$0xf] %vm1141, %v1031
    %1161 = vst.msk [vmem:[%s4 + $0x4c] sm:$0xf] %vm1141, %v1032
    %1162 = vst.msk [vmem:[%s4 + $0x50] sm:$0xf] %vm1141, %v1033
    %1163 = vst.msk [vmem:[%s4 + $0x54] sm:$0xf] %vm1141, %v1034
    %1164 = vst.msk [vmem:[%s4 + $0x58] sm:$0xf] %vm1141, %v1035
    %1165 = vst.msk [vmem:[%s4 + $0x5c] sm:$0xf] %vm1141, %v1036
    %1166 = vst.msk [vmem:[%s4 + $0x60] sm:$0xf] %vm1141, %v1037
    %1167 = vst.msk [vmem:[%s4 + $0x64] sm:$0xf] %vm1141, %v1038
    %1168 = vst.msk [vmem:[%s4 + $0x68] sm:$0xf] %vm1141, %v1039
    %1169 = vst.msk [vmem:[%s4 + $0x6c] sm:$0xf] %vm1141, %v1040
    %1170 = vst.msk [vmem:[%s4 + $0x70] sm:$0xf] %vm1141, %v1041
    %1171 = vst.msk [vmem:[%s4 + $0x74] sm:$0xf] %vm1141, %v1042
    %1172 = vst.msk [vmem:[%s4 + $0x78] sm:$0xf] %vm1141, %v1043
    %1173 = vst.msk [vmem:[%s4 + $0x7c] sm:$0xf] %vm1141, %v1044
    %1174 = vst.msk [vmem:[%s4 + $0x80] sm:$0xf] %vm1141, %v1045
    %1175 = vst.msk [vmem:[%s4 + $0x84] sm:$0xf] %vm1141, %v1046
    %1176 = vst.msk [vmem:[%s4 + $0x88] sm:$0xf] %vm1141, %v1047
    %1177 = vst.msk [vmem:[%s4 + $0x8c] sm:$0xf] %vm1141, %v1048
    %1178 = vst.msk [vmem:[%s4 + $0x90] sm:$0xf] %vm1141, %v1049
    %1179 = vst.msk [vmem:[%s4 + $0x94] sm:$0xf] %vm1141, %v1050
    %1180 = vst.msk [vmem:[%s4 + $0x98] sm:$0xf] %vm1141, %v1051
    %1181 = vst.msk [vmem:[%s4 + $0x9c] sm:$0xf] %vm1141, %v1052
    %1182 = vst.msk [vmem:[%s4 + $0xa0] sm:$0xf] %vm1141, %v1053
    %1183 = vst.msk [vmem:[%s4 + $0xa4] sm:$0xf] %vm1141, %v1054
    %1184 = vst.msk [vmem:[%s4 + $0xa8] sm:$0xf] %vm1141, %v1055
    %1185 = vst.msk [vmem:[%s4 + $0xac] sm:$0xf] %vm1141, %v1056
    %1186 = vst.msk [vmem:[%s4 + $0xb0] sm:$0xf] %vm1141, %v1057
    %1187 = vst.msk [vmem:[%s4 + $0xb4] sm:$0xf] %vm1141, %v1058
    %1188 = vst.msk [vmem:[%s4 + $0xb8] sm:$0xf] %vm1141, %v1059
    %1189 = vst.msk [vmem:[%s4 + $0xbc] sm:$0xf] %vm1141, %v1060
    %1190 = vst.msk [vmem:[%s4 + $0xc0] sm:$0xf] %vm1141, %v1061
    %1191 = vst.msk [vmem:[%s4 + $0xc4] sm:$0xf] %vm1141, %v1062
    %1192 = vst.msk [vmem:[%s4 + $0xc8] sm:$0xf] %vm1141, %v1063
    %1193 = vst.msk [vmem:[%s4 + $0xcc] sm:$0xf] %vm1141, %v1064
    %1194 = vst.msk [vmem:[%s4 + $0xd0] sm:$0xf] %vm1141, %v1065
    %1195 = vst.msk [vmem:[%s4 + $0xd4] sm:$0xf] %vm1141, %v1066
    %1196 = vst.msk [vmem:[%s4 + $0xd8] sm:$0xf] %vm1141, %v1067
    %1197 = vst.msk [vmem:[%s4 + $0xdc] sm:$0xf] %vm1141, %v1068
    %1198 = vst.msk [vmem:[%s4 + $0xe0] sm:$0xf] %vm1141, %v1069
    %1199 = vst.msk [vmem:[%s4 + $0xe4] sm:$0xf] %vm1141, %v1070
    %1200 = vst.msk [vmem:[%s4 + $0xe8] sm:$0xf] %vm1141, %v1071
    %1201 = vst.msk [vmem:[%s4 + $0xec] sm:$0xf] %vm1141, %v1072
    %1202 = vst.msk [vmem:[%s4 + $0xf0] sm:$0xf] %vm1141, %v1073
    %1203 = vst.msk [vmem:[%s4 + $0xf4] sm:$0xf] %vm1141, %v1074
    %1204 = vst.msk [vmem:[%s4 + $0xf8] sm:$0xf] %vm1141, %v1075
    %1205 = vst.msk [vmem:[%s4 + $0xfc] sm:$0xf] %vm1141, %v1076
    // Predicated region
    $region30: #{sphereface_forward.5} parent=1 // pred_check
      _
    $region31: #{sphereface_forward.5} parent=1 // pred_check_branch
      %1207 = sbr.rel (0) target = $region33
    $region32: #{sphereface_forward.5} parent=1 // pred_region
      _
    $region33: #{sphereface_forward.5} parent=1 // pred_fallthru
      _
    // Predicated region
    $region34: #{sphereface_forward.5} parent=1 // pred_check
      _
    $region35: #{sphereface_forward.5} parent=1 // pred_check_branch
      %1209 = sbr.rel (0) target = $region37
    $region36: #{sphereface_forward.5} parent=1 // pred_region
      _
    $region37: #{sphereface_forward.5} parent=1 // pred_fallthru
      _
    %1210 = vsyncpa [#allocation3], 1
    %1211 = vsyncpa [#allocation5], 1

// kernel: sphereface_forward.6
$region0: #{sphereface_forward.6}
  #allocation0 [shape = 'u32[]', space=smem, size = 0x4, offset = 0x4, fixed_abs, tag = 'smem constant byte address 0x4 - core index']
  #allocation1 [shape = 'u32[144,128]{1,0:T(1,128)}', space=vmem, size = 0x12000, scoped, tag = 'internal scratch']
  %s0 = inlined_call_operand.vmem [shape: bf16[128,576], index: 0, kind: input, shape index: {}]
  %s1 = inlined_call_operand.hbm [shape: bf16[576,128], index: 1, kind: input, shape index: {}]
  %s2 = inlined_call_operand.hbm [shape: f32[1,128], index: 2, kind: input, shape index: {}]
  %s3 = inlined_call_operand.hbm [shape: f32[1,128], index: 3, kind: input, shape index: {}]
  %s4 = inlined_call_operand.vmem [shape: bf16[128,128], index: 4, kind: output, shape index: {}]
  %s5 = sld [smem:[#allocation0]]
  $region38: #{sphereface_forward.6} parent=0
    _
  %s7 = ssub.s32 1, %s5
  %s8 = scalar_select 0, %s7, %s5
  $region1: #{sphereface_forward.6} parent=0
    #allocation2 [shape = 'u8[147456]{0}', space=vmem, size = 0x24000, scoped, tag = 'input window, operand 1, single buffered']
    #allocation3 [shape = 's32[1]{0}', space=sflag, size = 0x4, scoped, tag = 'scoped memory for sphereface_forward.6']
    #allocation4 [shape = 'u8[512]{0}', space=vmem, size = 0x400, scoped, tag = 'input window, operand 2, single buffered']
    #allocation5 [shape = 's32[1]{0}', space=sflag, size = 0x4, scoped, tag = 'scoped memory for sphereface_forward.6']
    #allocation6 [shape = 'u8[512]{0}', space=vmem, size = 0x400, scoped, tag = 'input window, operand 3, single buffered']
    %9 = vsyncpa [#allocation3], 0
    %10 = vsyncpa [#allocation5], 0
    // Predicated region
    $region2: #{sphereface_forward.6} parent=1 // pred_check
      _
    $region3: #{sphereface_forward.6} parent=1 // pred_check_branch
      %12 = sbr.rel (0) target = $region5
    $region4: #{sphereface_forward.6} parent=1 // pred_region
      _
    $region5: #{sphereface_forward.6} parent=1 // pred_fallthru
      _
    // Predicated region
    $region6: #{sphereface_forward.6} parent=1 // pred_check
      _
    $region7: #{sphereface_forward.6} parent=1 // pred_check_branch
      %14 = sbr.rel (0) target = $region9
    $region8: #{sphereface_forward.6} parent=1 // pred_region
      %s16 = ssub.s32 4608, 4608
      %17 = vsyncadd [#allocation3], %s16
      %s18 = sshll.u32 [#allocation2], 4
      %s19 = int_to_ptr.vmem [resolvable:$true] %s18
      %24 = dma.hbm_to_vmem [thread:$0]  %s1, 4608, %s19, [#allocation3], 64, 64, 4
    $region9: #{sphereface_forward.6} parent=1 // pred_fallthru
      _
    // Predicated region
    $region10: #{sphereface_forward.6} parent=1 // pred_check
      _
    $region11: #{sphereface_forward.6} parent=1 // pred_check_branch
      %26 = sbr.rel (0) target = $region13
    $region12: #{sphereface_forward.6} parent=1 // pred_region
      %s28 = ssub.s32 16, 16
      %29 = vsyncadd [#allocation5], %s28
      %s31 = sshll.u32 [#allocation4], 4
      %s32 = int_to_ptr.vmem [resolvable:$true] %s31
      %34 = dma.hbm_to_vmem [thread:$0]  %s2, 16, %s32, [#allocation5]
    $region13: #{sphereface_forward.6} parent=1 // pred_fallthru
      _
    // Predicated region
    $region14: #{sphereface_forward.6} parent=1 // pred_check
      _
    $region15: #{sphereface_forward.6} parent=1 // pred_check_branch
      %36 = sbr.rel (0) target = $region17
    $region16: #{sphereface_forward.6} parent=1 // pred_region
      %s38 = ssub.s32 16, 16
      %39 = vsyncadd [#allocation5], %s38
      %s41 = sshll.u32 [#allocation6], 4
      %s42 = int_to_ptr.vmem [resolvable:$true] %s41
      %44 = dma.hbm_to_vmem [thread:$0]  %s3, 16, %s42, [#allocation5]
    $region17: #{sphereface_forward.6} parent=1 // pred_fallthru
      _
    // Predicated region
    $region18: #{sphereface_forward.6} parent=1 // pred_check
      _
    $region19: #{sphereface_forward.6} parent=1 // pred_check_branch
      %46 = sbr.rel (0) target = $region21
    $region20: #{sphereface_forward.6} parent=1 // pred_region
      %47 = dma.done [#allocation3], 4608
    $region21: #{sphereface_forward.6} parent=1 // pred_fallthru
      _
    // Predicated region
    $region22: #{sphereface_forward.6} parent=1 // pred_check
      _
    $region23: #{sphereface_forward.6} parent=1 // pred_check_branch
      %49 = sbr.rel (0) target = $region25
    $region24: #{sphereface_forward.6} parent=1 // pred_region
      %50 = dma.done [#allocation5], 16
    $region25: #{sphereface_forward.6} parent=1 // pred_fallthru
      _
    // Predicated region
    $region26: #{sphereface_forward.6} parent=1 // pred_check
      _
    $region27: #{sphereface_forward.6} parent=1 // pred_check_branch
      %52 = sbr.rel (0) target = $region29
    $region28: #{sphereface_forward.6} parent=1 // pred_region
      %53 = dma.done [#allocation5], 16
    $region29: #{sphereface_forward.6} parent=1 // pred_fallthru
      _
    %v55 = vld [vmem:[%s0] sm:$0xff]
    %v56 = vld [vmem:[%s0 + $0x8] sm:$0xff]
    %v57 = vld [vmem:[%s0 + $0x10] sm:$0xf]
    %v58 = vld [vmem:[%s0 + $0x14] sm:$0xff]
    %v59 = vld [vmem:[%s0 + $0x1c] sm:$0xff]
    %v60 = vld [vmem:[%s0 + $0x24] sm:$0xf]
    %v61 = vld [vmem:[%s0 + $0x28] sm:$0xff]
    %v62 = vld [vmem:[%s0 + $0x30] sm:$0xff]
    %v63 = vld [vmem:[%s0 + $0x38] sm:$0xf]
    %v64 = vld [vmem:[%s0 + $0x3c] sm:$0xff]
    %v65 = vld [vmem:[%s0 + $0x44] sm:$0xff]
    %v66 = vld [vmem:[%s0 + $0x4c] sm:$0xf]
    %v67 = vld [vmem:[%s0 + $0x50] sm:$0xff]
    %v68 = vld [vmem:[%s0 + $0x58] sm:$0xff]
    %v69 = vld [vmem:[%s0 + $0x60] sm:$0xf]
    %v70 = vld [vmem:[%s0 + $0x64] sm:$0xff]
    %v71 = vld [vmem:[%s0 + $0x6c] sm:$0xff]
    %v72 = vld [vmem:[%s0 + $0x74] sm:$0xf]
    %v73 = vld [vmem:[%s0 + $0x78] sm:$0xff]
    %v74 = vld [vmem:[%s0 + $0x80] sm:$0xff]
    %v75 = vld [vmem:[%s0 + $0x88] sm:$0xf]
    %v76 = vld [vmem:[%s0 + $0x8c] sm:$0xff]
    %v77 = vld [vmem:[%s0 + $0x94] sm:$0xff]
    %v78 = vld [vmem:[%s0 + $0x9c] sm:$0xf]
    %v79 = vld [vmem:[%s0 + $0xa0] sm:$0xff]
    %v80 = vld [vmem:[%s0 + $0xa8] sm:$0xff]
    %v81 = vld [vmem:[%s0 + $0xb0] sm:$0xf]
    %v82 = vld [vmem:[%s0 + $0xb4] sm:$0xff]
    %v83 = vld [vmem:[%s0 + $0xbc] sm:$0xff]
    %v84 = vld [vmem:[%s0 + $0xc4] sm:$0xf]
    %v85 = vld [vmem:[%s0 + $0xc8] sm:$0xff]
    %v86 = vld [vmem:[%s0 + $0xd0] sm:$0xff]
    %v87 = vld [vmem:[%s0 + $0xd8] sm:$0xf]
    %v88 = vld [vmem:[%s0 + $0xdc] sm:$0xff]
    %v89 = vld [vmem:[%s0 + $0xe4] sm:$0xff]
    %v90 = vld [vmem:[%s0 + $0xec] sm:$0xf]
    %v91 = vld [vmem:[%s0 + $0xf0] sm:$0xff]
    %v92 = vld [vmem:[%s0 + $0xf8] sm:$0xff]
    %v93 = vld [vmem:[%s0 + $0x100] sm:$0xf]
    %v94 = vld [vmem:[%s0 + $0x104] sm:$0xff]
    %v95 = vld [vmem:[%s0 + $0x10c] sm:$0xff]
    %v96 = vld [vmem:[%s0 + $0x114] sm:$0xf]
    %v97 = vld [vmem:[%s0 + $0x118] sm:$0xff]
    %v98 = vld [vmem:[%s0 + $0x120] sm:$0xff]
    %v99 = vld [vmem:[%s0 + $0x128] sm:$0xf]
    %v100 = vld [vmem:[%s0 + $0x12c] sm:$0xff]
    %v101 = vld [vmem:[%s0 + $0x134] sm:$0xff]
    %v102 = vld [vmem:[%s0 + $0x13c] sm:$0xf]
    %v103 = vld [vmem:[#allocation2] sm:$0xf]
    %v104 = vld [vmem:[#allocation2 + $0x4] sm:$0xf]
    %v105 = vld [vmem:[#allocation2 + $0x8] sm:$0xf]
    %v106 = vld [vmem:[#allocation2 + $0xc] sm:$0xf]
    %v107 = vld [vmem:[#allocation2 + $0x10] sm:$0xf]
    %v108 = vld [vmem:[#allocation2 + $0x14] sm:$0xf]
    %v109 = vld [vmem:[#allocation2 + $0x18] sm:$0xf]
    %v110 = vld [vmem:[#allocation2 + $0x1c] sm:$0xf]
    %v111 = vld [vmem:[#allocation2 + $0x20] sm:$0xf]
    %v112 = vld [vmem:[#allocation2 + $0x24] sm:$0xf]
    %v113 = vld [vmem:[#allocation2 + $0x28] sm:$0xf]
    %v114 = vld [vmem:[#allocation2 + $0x2c] sm:$0xf]
    %v115 = vld [vmem:[#allocation2 + $0x30] sm:$0xf]
    %v116 = vld [vmem:[#allocation2 + $0x34] sm:$0xf]
    %v117 = vld [vmem:[#allocation2 + $0x38] sm:$0xf]
    %v118 = vld [vmem:[#allocation2 + $0x3c] sm:$0xf]
    %v119 = vld [vmem:[#allocation2 + $0x40] sm:$0xf]
    %v120 = vld [vmem:[#allocation2 + $0x44] sm:$0xf]
    %v121 = vld [vmem:[#allocation2 + $0x48] sm:$0xf]
    %v122 = vld [vmem:[#allocation2 + $0x4c] sm:$0xf]
    %v123 = vld [vmem:[#allocation2 + $0x50] sm:$0xf]
    %v124 = vld [vmem:[#allocation2 + $0x54] sm:$0xf]
    %v125 = vld [vmem:[#allocation2 + $0x58] sm:$0xf]
    %v126 = vld [vmem:[#allocation2 + $0x5c] sm:$0xf]
    %v127 = vld [vmem:[#allocation2 + $0x60] sm:$0xf]
    %v128 = vld [vmem:[#allocation2 + $0x64] sm:$0xf]
    %v129 = vld [vmem:[#allocation2 + $0x68] sm:$0xf]
    %v130 = vld [vmem:[#allocation2 + $0x6c] sm:$0xf]
    %v131 = vld [vmem:[#allocation2 + $0x70] sm:$0xf]
    %v132 = vld [vmem:[#allocation2 + $0x74] sm:$0xf]
    %v133 = vld [vmem:[#allocation2 + $0x78] sm:$0xf]
    %v134 = vld [vmem:[#allocation2 + $0x7c] sm:$0xf]
    %v135 = vld [vmem:[#allocation2 + $0x80] sm:$0xf]
    %v136 = vld [vmem:[#allocation2 + $0x84] sm:$0xf]
    %v137 = vld [vmem:[#allocation2 + $0x88] sm:$0xf]
    %v138 = vld [vmem:[#allocation2 + $0x8c] sm:$0xf]
    %v139 = vld [vmem:[#allocation2 + $0x90] sm:$0xf]
    %v140 = vld [vmem:[#allocation2 + $0x94] sm:$0xf]
    %v141 = vld [vmem:[#allocation2 + $0x98] sm:$0xf]
    %v142 = vld [vmem:[#allocation2 + $0x9c] sm:$0xf]
    %v143 = vld [vmem:[#allocation2 + $0xa0] sm:$0xf]
    %v144 = vld [vmem:[#allocation2 + $0xa4] sm:$0xf]
    %v145 = vld [vmem:[#allocation2 + $0xa8] sm:$0xf]
    %v146 = vld [vmem:[#allocation2 + $0xac] sm:$0xf]
    %v147 = vld [vmem:[#allocation2 + $0xb0] sm:$0xf]
    %v148 = vld [vmem:[#allocation2 + $0xb4] sm:$0xf]
    %v149 = vld [vmem:[#allocation2 + $0xb8] sm:$0xf]
    %v150 = vld [vmem:[#allocation2 + $0xbc] sm:$0xf]
    %v151 = vld [vmem:[#allocation2 + $0xc0] sm:$0xf]
    %v152 = vld [vmem:[#allocation2 + $0xc4] sm:$0xf]
    %v153 = vld [vmem:[#allocation2 + $0xc8] sm:$0xf]
    %v154 = vld [vmem:[#allocation2 + $0xcc] sm:$0xf]
    %v155 = vld [vmem:[#allocation2 + $0xd0] sm:$0xf]
    %v156 = vld [vmem:[#allocation2 + $0xd4] sm:$0xf]
    %v157 = vld [vmem:[#allocation2 + $0xd8] sm:$0xf]
    %v158 = vld [vmem:[#allocation2 + $0xdc] sm:$0xf]
    %v159 = vld [vmem:[#allocation2 + $0xe0] sm:$0xf]
    %v160 = vld [vmem:[#allocation2 + $0xe4] sm:$0xf]
    %v161 = vld [vmem:[#allocation2 + $0xe8] sm:$0xf]
    %v162 = vld [vmem:[#allocation2 + $0xec] sm:$0xf]
    %v163 = vld [vmem:[#allocation2 + $0xf0] sm:$0xf]
    %v164 = vld [vmem:[#allocation2 + $0xf4] sm:$0xf]
    %v165 = vld [vmem:[#allocation2 + $0xf8] sm:$0xf]
    %v166 = vld [vmem:[#allocation2 + $0xfc] sm:$0xf]
    %v167 = vld [vmem:[#allocation2 + $0x100] sm:$0xf]
    %v168 = vld [vmem:[#allocation2 + $0x104] sm:$0xf]
    %v169 = vld [vmem:[#allocation2 + $0x108] sm:$0xf]
    %v170 = vld [vmem:[#allocation2 + $0x10c] sm:$0xf]
    %v171 = vld [vmem:[#allocation2 + $0x110] sm:$0xf]
    %v172 = vld [vmem:[#allocation2 + $0x114] sm:$0xf]
    %v173 = vld [vmem:[#allocation2 + $0x118] sm:$0xf]
    %v174 = vld [vmem:[#allocation2 + $0x11c] sm:$0xf]
    %v175 = vld [vmem:[#allocation4] sm:$0x1]
    %v177 = vlaneseq
    %v178 = vshrl.u32 %v177, 7
    %v179 = vsub.s32 0, %v178
    %v180 = vrot.slane %v175, %v179
    %v230 = vunpack.c.l.b16 %v55
    %v231 = vunpack.c.h.b16 %v55
    %v232 = vunpack.c.l.b16 %v56
    %v233 = vunpack.c.h.b16 %v56
    %v234 = vunpack.c.l.b16 %v57
    %v235 = vunpack.c.l.b16 %v58
    %v236 = vunpack.c.h.b16 %v58
    %v237 = vunpack.c.l.b16 %v59
    %v238 = vunpack.c.h.b16 %v59
    %v239 = vunpack.c.l.b16 %v60
    %v240 = vunpack.c.l.b16 %v61
    %v241 = vunpack.c.h.b16 %v61
    %v242 = vunpack.c.l.b16 %v62
    %v243 = vunpack.c.h.b16 %v62
    %v244 = vunpack.c.l.b16 %v63
    %v245 = vunpack.c.l.b16 %v64
    %v246 = vunpack.c.h.b16 %v64
    %v247 = vunpack.c.l.b16 %v65
    %v248 = vunpack.c.h.b16 %v65
    %v249 = vunpack.c.l.b16 %v66
    %v250 = vunpack.c.l.b16 %v67
    %v251 = vunpack.c.h.b16 %v67
    %v252 = vunpack.c.l.b16 %v68
    %v253 = vunpack.c.h.b16 %v68
    %v254 = vunpack.c.l.b16 %v69
    %v255 = vunpack.c.l.b16 %v70
    %v256 = vunpack.c.h.b16 %v70
    %v257 = vunpack.c.l.b16 %v71
    %v258 = vunpack.c.h.b16 %v71
    %v259 = vunpack.c.l.b16 %v72
    %v260 = vunpack.c.l.b16 %v73
    %v261 = vunpack.c.h.b16 %v73
    %v262 = vunpack.c.l.b16 %v74
    %v263 = vunpack.c.h.b16 %v74
    %v264 = vunpack.c.l.b16 %v75
    %v265 = vunpack.c.l.b16 %v76
    %v266 = vunpack.c.h.b16 %v76
    %v267 = vunpack.c.l.b16 %v77
    %v268 = vunpack.c.h.b16 %v77
    %v269 = vunpack.c.l.b16 %v78
    %v270 = vunpack.c.l.b16 %v79
    %v271 = vunpack.c.h.b16 %v79
    %v272 = vunpack.c.l.b16 %v80
    %v273 = vunpack.c.h.b16 %v80
    %v274 = vunpack.c.l.b16 %v81
    %v275 = vunpack.c.l.b16 %v82
    %v276 = vunpack.c.h.b16 %v82
    %v277 = vunpack.c.l.b16 %v83
    %v278 = vunpack.c.h.b16 %v83
    %v279 = vunpack.c.l.b16 %v84
    %v280 = vunpack.c.l.b16 %v85
    %v281 = vunpack.c.h.b16 %v85
    %v282 = vunpack.c.l.b16 %v86
    %v283 = vunpack.c.h.b16 %v86
    %v284 = vunpack.c.l.b16 %v87
    %v285 = vunpack.c.l.b16 %v88
    %v286 = vunpack.c.h.b16 %v88
    %v287 = vunpack.c.l.b16 %v89
    %v288 = vunpack.c.h.b16 %v89
    %v289 = vunpack.c.l.b16 %v90
    %v290 = vunpack.c.l.b16 %v91
    %v291 = vunpack.c.h.b16 %v91
    %v292 = vunpack.c.l.b16 %v92
    %v293 = vunpack.c.h.b16 %v92
    %v294 = vunpack.c.l.b16 %v93
    %v295 = vunpack.c.l.b16 %v94
    %v296 = vunpack.c.h.b16 %v94
    %v297 = vunpack.c.l.b16 %v95
    %v298 = vunpack.c.h.b16 %v95
    %v299 = vunpack.c.l.b16 %v96
    %v300 = vunpack.c.l.b16 %v97
    %v301 = vunpack.c.h.b16 %v97
    %v302 = vunpack.c.l.b16 %v98
    %v303 = vunpack.c.h.b16 %v98
    %v304 = vunpack.c.l.b16 %v99
    %v305 = vunpack.c.l.b16 %v100
    %v306 = vunpack.c.h.b16 %v100
    %v307 = vunpack.c.l.b16 %v101
    %v308 = vunpack.c.h.b16 %v101
    %v309 = vunpack.c.l.b16 %v102
    %v310 = vpack.c.b16 %v235, %v230
    %v311 = vpack.c.b16 %v236, %v231
    %v312 = vpack.c.b16 %v237, %v232
    %v313 = vpack.c.b16 %v238, %v233
    %v314 = vpack.c.b16 %v239, %v234
    %v315 = vpack.c.b16 %v245, %v240
    %v316 = vpack.c.b16 %v246, %v241
    %v317 = vpack.c.b16 %v247, %v242
    %v318 = vpack.c.b16 %v248, %v243
    %v319 = vpack.c.b16 %v249, %v244
    %v320 = vpack.c.b16 %v255, %v250
    %v321 = vpack.c.b16 %v256, %v251
    %v322 = vpack.c.b16 %v257, %v252
    %v323 = vpack.c.b16 %v258, %v253
    %v324 = vpack.c.b16 %v259, %v254
    %v325 = vpack.c.b16 %v265, %v260
    %v326 = vpack.c.b16 %v266, %v261
    %v327 = vpack.c.b16 %v267, %v262
    %v328 = vpack.c.b16 %v268, %v263
    %v329 = vpack.c.b16 %v269, %v264
    %v330 = vpack.c.b16 %v275, %v270
    %v331 = vpack.c.b16 %v276, %v271
    %v332 = vpack.c.b16 %v277, %v272
    %v333 = vpack.c.b16 %v278, %v273
    %v334 = vpack.c.b16 %v279, %v274
    %v335 = vpack.c.b16 %v285, %v280
    %v336 = vpack.c.b16 %v286, %v281
    %v337 = vpack.c.b16 %v287, %v282
    %v338 = vpack.c.b16 %v288, %v283
    %v339 = vpack.c.b16 %v289, %v284
    %v340 = vpack.c.b16 %v295, %v290
    %v341 = vpack.c.b16 %v296, %v291
    %v342 = vpack.c.b16 %v297, %v292
    %v343 = vpack.c.b16 %v298, %v293
    %v344 = vpack.c.b16 %v299, %v294
    %v345 = vpack.c.b16 %v305, %v300
    %v346 = vpack.c.b16 %v306, %v301
    %v347 = vpack.c.b16 %v307, %v302
    %v348 = vpack.c.b16 %v308, %v303
    %v349 = vpack.c.b16 %v309, %v304
    %v454 = vunpack.c.l.b16 %v103
    %v455 = vunpack.c.l.b16 %v104
    %v456 = vunpack.c.l.b16 %v105
    %v457 = vunpack.c.l.b16 %v106
    %v458 = vunpack.c.l.b16 %v107
    %v459 = vunpack.c.l.b16 %v108
    %v460 = vunpack.c.l.b16 %v109
    %v461 = vunpack.c.l.b16 %v110
    %v462 = vunpack.c.l.b16 %v111
    %v463 = vunpack.c.l.b16 %v112
    %v464 = vunpack.c.l.b16 %v113
    %v465 = vunpack.c.l.b16 %v114
    %v466 = vunpack.c.l.b16 %v115
    %v467 = vunpack.c.l.b16 %v116
    %v468 = vunpack.c.l.b16 %v117
    %v469 = vunpack.c.l.b16 %v118
    %v470 = vunpack.c.l.b16 %v119
    %v471 = vunpack.c.l.b16 %v120
    %v472 = vunpack.c.l.b16 %v121
    %v473 = vunpack.c.l.b16 %v122
    %v474 = vunpack.c.l.b16 %v123
    %v475 = vunpack.c.l.b16 %v124
    %v476 = vunpack.c.l.b16 %v125
    %v477 = vunpack.c.l.b16 %v126
    %v478 = vunpack.c.l.b16 %v127
    %v479 = vunpack.c.l.b16 %v128
    %v480 = vunpack.c.l.b16 %v129
    %v481 = vunpack.c.l.b16 %v130
    %v482 = vunpack.c.l.b16 %v131
    %v483 = vunpack.c.l.b16 %v132
    %v484 = vunpack.c.l.b16 %v133
    %v485 = vunpack.c.l.b16 %v134
    %v486 = vunpack.c.l.b16 %v135
    %v487 = vunpack.c.l.b16 %v136
    %v488 = vunpack.c.l.b16 %v137
    %v489 = vunpack.c.l.b16 %v138
    %v490 = vunpack.c.l.b16 %v139
    %v491 = vunpack.c.l.b16 %v140
    %v492 = vunpack.c.l.b16 %v141
    %v493 = vunpack.c.l.b16 %v142
    %v494 = vunpack.c.l.b16 %v143
    %v495 = vunpack.c.l.b16 %v144
    %v496 = vunpack.c.l.b16 %v145
    %v497 = vunpack.c.l.b16 %v146
    %v498 = vunpack.c.l.b16 %v147
    %v499 = vunpack.c.l.b16 %v148
    %v500 = vunpack.c.l.b16 %v149
    %v501 = vunpack.c.l.b16 %v150
    %v502 = vunpack.c.l.b16 %v151
    %v503 = vunpack.c.l.b16 %v152
    %v504 = vunpack.c.l.b16 %v153
    %v505 = vunpack.c.l.b16 %v154
    %v506 = vunpack.c.l.b16 %v155
    %v507 = vunpack.c.l.b16 %v156
    %v508 = vunpack.c.l.b16 %v157
    %v509 = vunpack.c.l.b16 %v158
    %v510 = vunpack.c.l.b16 %v159
    %v511 = vunpack.c.l.b16 %v160
    %v512 = vunpack.c.l.b16 %v161
    %v513 = vunpack.c.l.b16 %v162
    %v514 = vunpack.c.l.b16 %v163
    %v515 = vunpack.c.l.b16 %v164
    %v516 = vunpack.c.l.b16 %v165
    %v517 = vunpack.c.l.b16 %v166
    %v518 = vunpack.c.l.b16 %v167
    %v519 = vunpack.c.l.b16 %v168
    %v520 = vunpack.c.l.b16 %v169
    %v521 = vunpack.c.l.b16 %v170
    %v522 = vunpack.c.l.b16 %v171
    %v523 = vunpack.c.l.b16 %v172
    %v524 = vunpack.c.l.b16 %v173
    %v525 = vunpack.c.l.b16 %v174
    %v526 = vpack.c.b16 %v455, %v454
    %v527 = vpack.c.b16 %v457, %v456
    %v528 = vpack.c.b16 %v459, %v458
    %v529 = vpack.c.b16 %v461, %v460
    %v530 = vpack.c.b16 %v463, %v462
    %v531 = vpack.c.b16 %v465, %v464
    %v532 = vpack.c.b16 %v467, %v466
    %v533 = vpack.c.b16 %v469, %v468
    %v534 = vpack.c.b16 %v471, %v470
    %v535 = vpack.c.b16 %v473, %v472
    %v536 = vpack.c.b16 %v475, %v474
    %v537 = vpack.c.b16 %v477, %v476
    %v538 = vpack.c.b16 %v479, %v478
    %v539 = vpack.c.b16 %v481, %v480
    %v540 = vpack.c.b16 %v483, %v482
    %v541 = vpack.c.b16 %v485, %v484
    %v542 = vpack.c.b16 %v487, %v486
    %v543 = vpack.c.b16 %v489, %v488
    %v544 = vpack.c.b16 %v491, %v490
    %v545 = vpack.c.b16 %v493, %v492
    %v546 = vpack.c.b16 %v495, %v494
    %v547 = vpack.c.b16 %v497, %v496
    %v548 = vpack.c.b16 %v499, %v498
    %v549 = vpack.c.b16 %v501, %v500
    %v550 = vpack.c.b16 %v503, %v502
    %v551 = vpack.c.b16 %v505, %v504
    %v552 = vpack.c.b16 %v507, %v506
    %v553 = vpack.c.b16 %v509, %v508
    %v554 = vpack.c.b16 %v511, %v510
    %v555 = vpack.c.b16 %v513, %v512
    %v556 = vpack.c.b16 %v515, %v514
    %v557 = vpack.c.b16 %v517, %v516
    %v558 = vpack.c.b16 %v519, %v518
    %v559 = vpack.c.b16 %v521, %v520
    %v560 = vpack.c.b16 %v523, %v522
    %v561 = vpack.c.b16 %v525, %v524
    %vm598 = vcmask 523264
    %v600 = vsel %vm598, %v314, 0
    %v603 = vsel %vm598, %v319, 0
    %v606 = vsel %vm598, %v324, 0
    %v609 = vsel %vm598, %v329, 0
    %v612 = vsel %vm598, %v334, 0
    %v615 = vsel %vm598, %v339, 0
    %v618 = vsel %vm598, %v344, 0
    %v621 = vsel %vm598, %v349, 0
    %623 = vmatprep.subr.bf16.mxu0 0
    %624 = vmatpush1.bf16.msra.mxu0 %v526
    %625 = vmatprep.subr.bf16.mxu0 0
    %626 = vmatpush1.bf16.msra.mxu0 %v527
    %627 = vmatprep.subr.bf16.mxu0 0
    %628 = vmatpush1.bf16.msra.mxu0 %v528
    %629 = vmatprep.subr.bf16.mxu0 0
    %630 = vmatpush1.bf16.msra.mxu0 %v529
    %631 = vmatprep.subr.bf16.mxu0 0
    %632 = vmatpush1.bf16.msra.mxu0 %v530
    %633 = vmatprep.subr.bf16.mxu0 0
    %634 = vmatpush1.bf16.msra.mxu0 %v531
    %635 = vmatprep.subr.bf16.mxu0 0
    %636 = vmatpush1.bf16.msra.mxu0 %v532
    %637 = vmatprep.subr.bf16.mxu0 0
    %638 = vmatpush1.bf16.msra.mxu0 %v533
    %639 = vmatprep.subr.bf16.mxu0 0
    %640 = vmatpush1.bf16.msra.mxu0 %v534
    %641 = vmatprep.subr.bf16.mxu0 0
    %642 = vmatpush1.bf16.msra.mxu0 %v535
    %643 = vmatprep.subr.bf16.mxu0 0
    %644 = vmatpush1.bf16.msra.mxu0 %v536
    %645 = vmatprep.subr.bf16.mxu0 0
    %646 = vmatpush1.bf16.msra.mxu0 %v537
    %647 = vmatprep.subr.bf16.mxu0 0
    %648 = vmatpush1.bf16.msra.mxu0 %v538
    %649 = vmatprep.subr.bf16.mxu0 0
    %650 = vmatpush1.bf16.msra.mxu0 %v539
    %651 = vmatprep.subr.bf16.mxu0 0
    %652 = vmatpush1.bf16.msra.mxu0 %v540
    %653 = vmatprep.subr.bf16.mxu0 0
    %654 = vmatpush1.bf16.msra.mxu0 %v541
    %655 = vmatprep.mubr.bf16.mxu0 %v311
    %656 = vmatmul.mubr.bf16.gmra.mrb[0].mxu0 %v310
    %v657 = vpop.f32.mrb[0].mxu0
    %v658 = vadd.f32 %v180, %v657
    %v659 = vpop.f32.mrb[0].mxu0
    %v660 = vpop.f32.mrb[0].mxu0
    %v661 = vadd.f32 %v180, %v660
    %v662 = vpop.f32.mrb[0].mxu0
    %663 = vmatprep.mubr.bf16.mxu0 %v316
    %664 = vmatmul.mubr.bf16.gmra.mrb[0].mxu0 %v315
    %v665 = vpop.f32.mrb[0].mxu0
    %v666 = vadd.f32 %v180, %v665
    %v667 = vpop.f32.mrb[0].mxu0
    %v668 = vpop.f32.mrb[0].mxu0
    %v669 = vadd.f32 %v180, %v668
    %v670 = vpop.f32.mrb[0].mxu0
    %671 = vmatprep.mubr.bf16.mxu0 %v321
    %672 = vmatmul.mubr.bf16.gmra.mrb[0].mxu0 %v320
    %v673 = vpop.f32.mrb[0].mxu0
    %v674 = vadd.f32 %v180, %v673
    %v675 = vpop.f32.mrb[0].mxu0
    %v676 = vpop.f32.mrb[0].mxu0
    %v677 = vadd.f32 %v180, %v676
    %v678 = vpop.f32.mrb[0].mxu0
    %679 = vmatprep.mubr.bf16.mxu0 %v326
    %680 = vmatmul.mubr.bf16.gmra.mrb[0].mxu0 %v325
    %v681 = vpop.f32.mrb[0].mxu0
    %v682 = vadd.f32 %v180, %v681
    %v683 = vpop.f32.mrb[0].mxu0
    %v684 = vpop.f32.mrb[0].mxu0
    %v685 = vadd.f32 %v180, %v684
    %v686 = vpop.f32.mrb[0].mxu0
    %687 = vmatprep.mubr.bf16.mxu0 %v331
    %688 = vmatmul.mubr.bf16.gmra.mrb[0].mxu0 %v330
    %v689 = vpop.f32.mrb[0].mxu0
    %v690 = vadd.f32 %v180, %v689
    %v691 = vpop.f32.mrb[0].mxu0
    %v692 = vpop.f32.mrb[0].mxu0
    %v693 = vadd.f32 %v180, %v692
    %v694 = vpop.f32.mrb[0].mxu0
    %695 = vmatprep.mubr.bf16.mxu0 %v336
    %696 = vmatmul.mubr.bf16.gmra.mrb[0].mxu0 %v335
    %v697 = vpop.f32.mrb[0].mxu0
    %v698 = vadd.f32 %v180, %v697
    %v699 = vpop.f32.mrb[0].mxu0
    %v700 = vpop.f32.mrb[0].mxu0
    %v701 = vadd.f32 %v180, %v700
    %v702 = vpop.f32.mrb[0].mxu0
    %703 = vmatprep.mubr.bf16.mxu0 %v341
    %704 = vmatmul.mubr.bf16.gmra.mrb[0].mxu0 %v340
    %v705 = vpop.f32.mrb[0].mxu0
    %v706 = vadd.f32 %v180, %v705
    %v707 = vpop.f32.mrb[0].mxu0
    %v708 = vpop.f32.mrb[0].mxu0
    %v709 = vadd.f32 %v180, %v708
    %v710 = vpop.f32.mrb[0].mxu0
    %711 = vmatprep.mubr.bf16.mxu0 %v346
    %712 = vmatmul.mubr.bf16.gmra.mrb[0].mxu0 %v345
    %v713 = vpop.f32.mrb[0].mxu0
    %v714 = vadd.f32 %v180, %v713
    %v715 = vpop.f32.mrb[0].mxu0
    %v716 = vpop.f32.mrb[0].mxu0
    %v717 = vadd.f32 %v180, %v716
    %v718 = vpop.f32.mrb[0].mxu0
    %719 = vdwg.mxu0
    %720 = vmatprep.subr.bf16.mxu0 0
    %721 = vmatpush1.bf16.msra.mxu0 %v542
    %722 = vmatprep.subr.bf16.mxu0 0
    %723 = vmatpush1.bf16.msra.mxu0 %v543
    %724 = vmatprep.subr.bf16.mxu0 0
    %725 = vmatpush1.bf16.msra.mxu0 %v544
    %726 = vmatprep.subr.bf16.mxu0 0
    %727 = vmatpush1.bf16.msra.mxu0 %v545
    %728 = vmatprep.subr.bf16.mxu0 0
    %729 = vmatpush1.bf16.msra.mxu0 %v546
    %730 = vmatprep.subr.bf16.mxu0 0
    %731 = vmatpush1.bf16.msra.mxu0 %v547
    %732 = vmatprep.subr.bf16.mxu0 0
    %733 = vmatpush1.bf16.msra.mxu0 %v548
    %734 = vmatprep.subr.bf16.mxu0 0
    %735 = vmatpush1.bf16.msra.mxu0 %v549
    %736 = vmatprep.subr.bf16.mxu0 0
    %737 = vmatpush1.bf16.msra.mxu0 %v550
    %738 = vmatprep.subr.bf16.mxu0 0
    %739 = vmatpush1.bf16.msra.mxu0 %v551
    %740 = vmatprep.subr.bf16.mxu0 0
    %741 = vmatpush1.bf16.msra.mxu0 %v552
    %742 = vmatprep.subr.bf16.mxu0 0
    %743 = vmatpush1.bf16.msra.mxu0 %v553
    %744 = vmatprep.subr.bf16.mxu0 0
    %745 = vmatpush1.bf16.msra.mxu0 %v554
    %746 = vmatprep.subr.bf16.mxu0 0
    %747 = vmatpush1.bf16.msra.mxu0 %v555
    %748 = vmatprep.subr.bf16.mxu0 0
    %749 = vmatpush1.bf16.msra.mxu0 %v556
    %750 = vmatprep.subr.bf16.mxu0 0
    %751 = vmatpush1.bf16.msra.mxu0 %v557
    %752 = vmatprep.mubr.bf16.mxu0 %v313
    %753 = vmatmul.mubr.bf16.gmra.mrb[0].mxu0 %v312
    %v754 = vpop.f32.mrb[0].mxu0
    %v755 = vadd.f32 %v658, %v754
    %v756 = vpop.f32.mrb[0].mxu0
    %v757 = vpop.f32.mrb[0].mxu0
    %v758 = vadd.f32 %v661, %v757
    %v759 = vpop.f32.mrb[0].mxu0
    %760 = vmatprep.mubr.bf16.mxu0 %v318
    %761 = vmatmul.mubr.bf16.gmra.mrb[0].mxu0 %v317
    %v762 = vpop.f32.mrb[0].mxu0
    %v763 = vadd.f32 %v666, %v762
    %v764 = vpop.f32.mrb[0].mxu0
    %v765 = vpop.f32.mrb[0].mxu0
    %v766 = vadd.f32 %v669, %v765
    %v767 = vpop.f32.mrb[0].mxu0
    %768 = vmatprep.mubr.bf16.mxu0 %v323
    %769 = vmatmul.mubr.bf16.gmra.mrb[0].mxu0 %v322
    %v770 = vpop.f32.mrb[0].mxu0
    %v771 = vadd.f32 %v674, %v770
    %v772 = vpop.f32.mrb[0].mxu0
    %v773 = vpop.f32.mrb[0].mxu0
    %v774 = vadd.f32 %v677, %v773
    %v775 = vpop.f32.mrb[0].mxu0
    %776 = vmatprep.mubr.bf16.mxu0 %v328
    %777 = vmatmul.mubr.bf16.gmra.mrb[0].mxu0 %v327
    %v778 = vpop.f32.mrb[0].mxu0
    %v779 = vadd.f32 %v682, %v778
    %v780 = vpop.f32.mrb[0].mxu0
    %v781 = vpop.f32.mrb[0].mxu0
    %v782 = vadd.f32 %v685, %v781
    %v783 = vpop.f32.mrb[0].mxu0
    %784 = vmatprep.mubr.bf16.mxu0 %v333
    %785 = vmatmul.mubr.bf16.gmra.mrb[0].mxu0 %v332
    %v786 = vpop.f32.mrb[0].mxu0
    %v787 = vadd.f32 %v690, %v786
    %v788 = vpop.f32.mrb[0].mxu0
    %v789 = vpop.f32.mrb[0].mxu0
    %v790 = vadd.f32 %v693, %v789
    %v791 = vpop.f32.mrb[0].mxu0
    %792 = vmatprep.mubr.bf16.mxu0 %v338
    %793 = vmatmul.mubr.bf16.gmra.mrb[0].mxu0 %v337
    %v794 = vpop.f32.mrb[0].mxu0
    %v795 = vadd.f32 %v698, %v794
    %v796 = vpop.f32.mrb[0].mxu0
    %v797 = vpop.f32.mrb[0].mxu0
    %v798 = vadd.f32 %v701, %v797
    %v799 = vpop.f32.mrb[0].mxu0
    %800 = vmatprep.mubr.bf16.mxu0 %v343
    %801 = vmatmul.mubr.bf16.gmra.mrb[0].mxu0 %v342
    %v802 = vpop.f32.mrb[0].mxu0
    %v803 = vadd.f32 %v706, %v802
    %v804 = vpop.f32.mrb[0].mxu0
    %v805 = vpop.f32.mrb[0].mxu0
    %v806 = vadd.f32 %v709, %v805
    %v807 = vpop.f32.mrb[0].mxu0
    %808 = vmatprep.mubr.bf16.mxu0 %v348
    %809 = vmatmul.mubr.bf16.gmra.mrb[0].mxu0 %v347
    %v810 = vpop.f32.mrb[0].mxu0
    %v811 = vadd.f32 %v714, %v810
    %v812 = vpop.f32.mrb[0].mxu0
    %v813 = vpop.f32.mrb[0].mxu0
    %v814 = vadd.f32 %v717, %v813
    %v815 = vpop.f32.mrb[0].mxu0
    %816 = vdwg.mxu0
    %817 = vmatprep.subr.bf16.mxu0 0
    %818 = vmatpush1.bf16.msra.mxu0 %v558
    %819 = vmatprep.subr.bf16.mxu0 0
    %820 = vmatpush1.bf16.msra.mxu0 %v559
    %821 = vmatprep.subr.bf16.mxu0 0
    %822 = vmatpush1.bf16.msra.mxu0 %v560
    %823 = vmatprep.subr.bf16.mxu0 0
    %824 = vmatpush1.bf16.msra.mxu0 %v561
    %825 = vmatprep.subr.bf16.mxu0 0
    %826 = vmatpush1.bf16.msra.mxu0 0
    %827 = vmatprep.subr.bf16.mxu0 0
    %828 = vmatpush1.bf16.msra.mxu0 0
    %829 = vmatprep.subr.bf16.mxu0 0
    %830 = vmatpush1.bf16.msra.mxu0 0
    %831 = vmatprep.subr.bf16.mxu0 0
    %832 = vmatpush1.bf16.msra.mxu0 0
    %833 = vmatprep.subr.bf16.mxu0 0
    %834 = vmatpush1.bf16.msra.mxu0 0
    %835 = vmatprep.subr.bf16.mxu0 0
    %836 = vmatpush1.bf16.msra.mxu0 0
    %837 = vmatprep.subr.bf16.mxu0 0
    %838 = vmatpush1.bf16.msra.mxu0 0
    %839 = vmatprep.subr.bf16.mxu0 0
    %840 = vmatpush1.bf16.msra.mxu0 0
    %841 = vmatprep.subr.bf16.mxu0 0
    %842 = vmatpush1.bf16.msra.mxu0 0
    %843 = vmatprep.subr.bf16.mxu0 0
    %844 = vmatpush1.bf16.msra.mxu0 0
    %845 = vmatprep.subr.bf16.mxu0 0
    %846 = vmatpush1.bf16.msra.mxu0 0
    %847 = vmatprep.subr.bf16.mxu0 0
    %848 = vmatpush1.bf16.msra.mxu0 0
    %849 = vmatprep.mubr.bf16.mxu0 0
    %850 = vmatmul.mubr.bf16.gmra.mrb[0].mxu0 %v600
    %v851 = vpop.f32.mrb[0].mxu0
    %v852 = vadd.f32 %v755, %v851
    %v853 = vpop.f32.mrb[0].mxu0
    %v854 = vpop.f32.mrb[0].mxu0
    %v855 = vadd.f32 %v758, %v854
    %v856 = vpop.f32.mrb[0].mxu0
    %857 = vmatprep.mubr.bf16.mxu0 0
    %858 = vmatmul.mubr.bf16.gmra.mrb[0].mxu0 %v603
    %v859 = vpop.f32.mrb[0].mxu0
    %v860 = vadd.f32 %v763, %v859
    %v861 = vpop.f32.mrb[0].mxu0
    %v862 = vpop.f32.mrb[0].mxu0
    %v863 = vadd.f32 %v766, %v862
    %v864 = vpop.f32.mrb[0].mxu0
    %865 = vmatprep.mubr.bf16.mxu0 0
    %866 = vmatmul.mubr.bf16.gmra.mrb[0].mxu0 %v606
    %v867 = vpop.f32.mrb[0].mxu0
    %v868 = vadd.f32 %v771, %v867
    %v869 = vpop.f32.mrb[0].mxu0
    %v870 = vpop.f32.mrb[0].mxu0
    %v871 = vadd.f32 %v774, %v870
    %v872 = vpop.f32.mrb[0].mxu0
    %873 = vmatprep.mubr.bf16.mxu0 0
    %874 = vmatmul.mubr.bf16.gmra.mrb[0].mxu0 %v609
    %v875 = vpop.f32.mrb[0].mxu0
    %v876 = vadd.f32 %v779, %v875
    %v877 = vpop.f32.mrb[0].mxu0
    %v878 = vpop.f32.mrb[0].mxu0
    %v879 = vadd.f32 %v782, %v878
    %v880 = vpop.f32.mrb[0].mxu0
    %881 = vmatprep.mubr.bf16.mxu0 0
    %882 = vmatmul.mubr.bf16.gmra.mrb[0].mxu0 %v612
    %v883 = vpop.f32.mrb[0].mxu0
    %v884 = vadd.f32 %v787, %v883
    %v885 = vpop.f32.mrb[0].mxu0
    %v886 = vpop.f32.mrb[0].mxu0
    %v887 = vadd.f32 %v790, %v886
    %v888 = vpop.f32.mrb[0].mxu0
    %889 = vmatprep.mubr.bf16.mxu0 0
    %890 = vmatmul.mubr.bf16.gmra.mrb[0].mxu0 %v615
    %v891 = vpop.f32.mrb[0].mxu0
    %v892 = vadd.f32 %v795, %v891
    %v893 = vpop.f32.mrb[0].mxu0
    %v894 = vpop.f32.mrb[0].mxu0
    %v895 = vadd.f32 %v798, %v894
    %v896 = vpop.f32.mrb[0].mxu0
    %897 = vmatprep.mubr.bf16.mxu0 0
    %898 = vmatmul.mubr.bf16.gmra.mrb[0].mxu0 %v618
    %v899 = vpop.f32.mrb[0].mxu0
    %v900 = vadd.f32 %v803, %v899
    %v901 = vpop.f32.mrb[0].mxu0
    %v902 = vpop.f32.mrb[0].mxu0
    %v903 = vadd.f32 %v806, %v902
    %v904 = vpop.f32.mrb[0].mxu0
    %905 = vmatprep.mubr.bf16.mxu0 0
    %906 = vmatmul.mubr.bf16.gmra.mrb[0].mxu0 %v621
    %v907 = vpop.f32.mrb[0].mxu0
    %v908 = vadd.f32 %v811, %v907
    %v909 = vpop.f32.mrb[0].mxu0
    %v910 = vpop.f32.mrb[0].mxu0
    %v911 = vadd.f32 %v814, %v910
    %v912 = vpop.f32.mrb[0].mxu0
    %913 = vdwg.mxu0
    %v914 = vld [vmem:[#allocation6] sm:$0x1]
    %vm915 = vcmp.ge.f32.partialorder %v852, 0.0
    %vm916 = vcmp.ge.f32.partialorder %v855, 0.0
    %vm917 = vcmp.ge.f32.partialorder %v860, 0.0
    %vm918 = vcmp.ge.f32.partialorder %v863, 0.0
    %vm919 = vcmp.ge.f32.partialorder %v868, 0.0
    %vm920 = vcmp.ge.f32.partialorder %v871, 0.0
    %vm921 = vcmp.ge.f32.partialorder %v876, 0.0
    %vm922 = vcmp.ge.f32.partialorder %v879, 0.0
    %vm923 = vcmp.ge.f32.partialorder %v884, 0.0
    %vm924 = vcmp.ge.f32.partialorder %v887, 0.0
    %vm925 = vcmp.ge.f32.partialorder %v892, 0.0
    %vm926 = vcmp.ge.f32.partialorder %v895, 0.0
    %vm927 = vcmp.ge.f32.partialorder %v900, 0.0
    %vm928 = vcmp.ge.f32.partialorder %v903, 0.0
    %vm929 = vcmp.ge.f32.partialorder %v908, 0.0
    %vm930 = vcmp.ge.f32.partialorder %v911, 0.0
    %v932 = vlaneseq
    %v933 = vshrl.u32 %v932, 7
    %v934 = vsub.s32 0, %v933
    %v935 = vrot.slane %v914, %v934
    %v937 = vmul.f32 %v935, %v852
    %v938 = vmul.f32 %v935, %v855
    %v939 = vmul.f32 %v935, %v860
    %v940 = vmul.f32 %v935, %v863
    %v941 = vmul.f32 %v935, %v868
    %v942 = vmul.f32 %v935, %v871
    %v943 = vmul.f32 %v935, %v876
    %v944 = vmul.f32 %v935, %v879
    %v945 = vmul.f32 %v935, %v884
    %v946 = vmul.f32 %v935, %v887
    %v947 = vmul.f32 %v935, %v892
    %v948 = vmul.f32 %v935, %v895
    %v949 = vmul.f32 %v935, %v900
    %v950 = vmul.f32 %v935, %v903
    %v951 = vmul.f32 %v935, %v908
    %v952 = vmul.f32 %v935, %v911
    %v953 = vsel %vm915, %v852, %v937
    %v954 = vsel %vm916, %v855, %v938
    %v955 = vsel %vm917, %v860, %v939
    %v956 = vsel %vm918, %v863, %v940
    %v957 = vsel %vm919, %v868, %v941
    %v958 = vsel %vm920, %v871, %v942
    %v959 = vsel %vm921, %v876, %v943
    %v960 = vsel %vm922, %v879, %v944
    %v961 = vsel %vm923, %v884, %v945
    %v962 = vsel %vm924, %v887, %v946
    %v963 = vsel %vm925, %v892, %v947
    %v964 = vsel %vm926, %v895, %v948
    %v965 = vsel %vm927, %v900, %v949
    %v966 = vsel %vm928, %v903, %v950
    %v967 = vsel %vm929, %v908, %v951
    %v968 = vsel %vm930, %v911, %v952
    %v969 = vpack.c.bf16 %v954, %v953
    %v970 = vpack.c.bf16 %v956, %v955
    %v971 = vpack.c.bf16 %v958, %v957
    %v972 = vpack.c.bf16 %v960, %v959
    %v973 = vpack.c.bf16 %v962, %v961
    %v974 = vpack.c.bf16 %v964, %v963
    %v975 = vpack.c.bf16 %v966, %v965
    %v976 = vpack.c.bf16 %v968, %v967
    %v985 = vunpack.c.l.b16 %v969
    %v986 = vunpack.c.h.b16 %v969
    %v987 = vunpack.c.l.b16 %v970
    %v988 = vunpack.c.h.b16 %v970
    %v989 = vunpack.c.l.b16 %v971
    %v990 = vunpack.c.h.b16 %v971
    %v991 = vunpack.c.l.b16 %v972
    %v992 = vunpack.c.h.b16 %v972
    %v993 = vunpack.c.l.b16 %v973
    %v994 = vunpack.c.h.b16 %v973
    %v995 = vunpack.c.l.b16 %v974
    %v996 = vunpack.c.h.b16 %v974
    %v997 = vunpack.c.l.b16 %v975
    %v998 = vunpack.c.h.b16 %v975
    %v999 = vunpack.c.l.b16 %v976
    %v1000 = vunpack.c.h.b16 %v976
    %v1001 = vpack.c.b16 %v985, %v985
    %v1002 = vpack.c.b16 %v986, %v986
    %v1003 = vpack.c.b16 %v987, %v987
    %v1004 = vpack.c.b16 %v988, %v988
    %v1005 = vpack.c.b16 %v989, %v989
    %v1006 = vpack.c.b16 %v990, %v990
    %v1007 = vpack.c.b16 %v991, %v991
    %v1008 = vpack.c.b16 %v992, %v992
    %v1009 = vpack.c.b16 %v993, %v993
    %v1010 = vpack.c.b16 %v994, %v994
    %v1011 = vpack.c.b16 %v995, %v995
    %v1012 = vpack.c.b16 %v996, %v996
    %v1013 = vpack.c.b16 %v997, %v997
    %v1014 = vpack.c.b16 %v998, %v998
    %v1015 = vpack.c.b16 %v999, %v999
    %v1016 = vpack.c.b16 %v1000, %v1000
    %1033 = vst [vmem:[%s4] sm:$0xf] %v1001
    %1034 = vst [vmem:[%s4 + $0x4] sm:$0xf] %v1002
    %1035 = vst [vmem:[%s4 + $0x8] sm:$0xf] %v1003
    %1036 = vst [vmem:[%s4 + $0xc] sm:$0xf] %v1004
    %1037 = vst [vmem:[%s4 + $0x10] sm:$0xf] %v1005
    %1038 = vst [vmem:[%s4 + $0x14] sm:$0xf] %v1006
    %1039 = vst [vmem:[%s4 + $0x18] sm:$0xf] %v1007
    %1040 = vst [vmem:[%s4 + $0x1c] sm:$0xf] %v1008
    %1041 = vst [vmem:[%s4 + $0x20] sm:$0xf] %v1009
    %1042 = vst [vmem:[%s4 + $0x24] sm:$0xf] %v1010
    %1043 = vst [vmem:[%s4 + $0x28] sm:$0xf] %v1011
    %1044 = vst [vmem:[%s4 + $0x2c] sm:$0xf] %v1012
    %1045 = vst [vmem:[%s4 + $0x30] sm:$0xf] %v1013
    %1046 = vst [vmem:[%s4 + $0x34] sm:$0xf] %v1014
    %1047 = vst [vmem:[%s4 + $0x38] sm:$0xf] %v1015
    %1048 = vst [vmem:[%s4 + $0x3c] sm:$0xf] %v1016
    // Predicated region
    $region30: #{sphereface_forward.6} parent=1 // pred_check
      _
    $region31: #{sphereface_forward.6} parent=1 // pred_check_branch
      %1050 = sbr.rel (0) target = $region33
    $region32: #{sphereface_forward.6} parent=1 // pred_region
      _
    $region33: #{sphereface_forward.6} parent=1 // pred_fallthru
      _
    // Predicated region
    $region34: #{sphereface_forward.6} parent=1 // pred_check
      _
    $region35: #{sphereface_forward.6} parent=1 // pred_check_branch
      %1052 = sbr.rel (0) target = $region37
    $region36: #{sphereface_forward.6} parent=1 // pred_region
      _
    $region37: #{sphereface_forward.6} parent=1 // pred_fallthru
      _
    %1053 = vsyncpa [#allocation3], 1
    %1054 = vsyncpa [#allocation5], 1

// kernel: sphereface_forward.7
$region0: #{sphereface_forward.7}
  #allocation0 [shape = 'u32[]', space=smem, size = 0x4, offset = 0x4, fixed_abs, tag = 'smem constant byte address 0x4 - core index']
  #allocation1 [shape = 'u32[144,128]{1,0:T(1,128)}', space=vmem, size = 0x12000, scoped, tag = 'internal scratch']
  %s0 = inlined_call_operand.vmem [shape: bf16[32,1152], index: 0, kind: input, shape index: {}]
  %s1 = inlined_call_operand.vmem [shape: bf16[1152,256], index: 1, kind: input, shape index: {}]
  %s2 = inlined_call_operand.vmem [shape: f32[1,256], index: 2, kind: input, shape index: {}]
  %s3 = inlined_call_operand.vmem [shape: f32[1,256], index: 3, kind: input, shape index: {}]
  %s4 = inlined_call_operand.vmem [shape: bf16[32,256], index: 4, kind: output, shape index: {}]
  %s5 = sld [smem:[#allocation0]]
  $region127: #{sphereface_forward.7} parent=0
    _
  %s7 = ssub.s32 1, %s5
  %s8 = scalar_select 0, %s7, %s5
  $region1: #{sphereface_forward.7} parent=0
    #allocation2 [shape = 'u8[589824]{0}', space=vmem, size = 0x90000, scoped, tag = 'input window, operand 1']
    #allocation3 [shape = 'u8[16384]{0}', space=vmem, size = 0x4000, scoped, tag = 'output window, operand 0']
    loop: start=0, step=1, limit=4
    $region2: #{sphereface_forward.7} parent=1 // loop_pre_header
      _
    $region3: #{sphereface_forward.7} parent=1 // loop_header
      %s10 = sphi 0, %s14
      %p11 = scmp.ge.s32.totalorder %s10, 4
      %s17 = sphi 0, %s29
      %s18 = sphi 0, %s25
      %s19 = sphi 0, %s17
      %s20 = sphi 0, %s18
      %s21 = sphi 0, %s19
      %s22 = sphi 0, %s20
      %s32 = sphi 0, %s34
      %s35 = sphi 0, %s32
      %s36 = sphi 0, %s35
      %s52 = sphi 0, %s36
      %s58 = sphi 0, %s60
      %s61 = sphi 0, %s58
      %s62 = sphi 0, %s61
      %s78 = sphi 0, %s62
      %s84 = sphi 0, %s86
      %s87 = sphi 0, %s84
      %s88 = sphi 0, %s87
      %s104 = sphi 0, %s88
      %s110 = sphi 0, %s112
      %s113 = sphi 0, %s110
      %s114 = sphi 0, %s113
      %s130 = sphi 0, %s114
      %s138 = sphi 0, %s140
      %s141 = sphi 0, %s138
      %s142 = sphi 0, %s141
      %s158 = sphi 0, %s142
    $region4: #{sphereface_forward.7} parent=1 // loop_header_branch
      %13 = sbr.rel (%p11) target = $region8
    $region5: #{sphereface_forward.7} parent=1 // loop_body
      %s15 = ssub.s32 %s10, 1
      %s16 = ssub.s32 %s10, 2
      %s23 = sadd.s32 1, %s18
      %p24 = scmp.ge.s32.totalorder %s23, 2
      %s25 = scalar_select %p24, 0, %s23
      %s26 = sadd.s32 1, %s17
      %s27 = scalar_select %p24, %s26, %s17
      %p28 = scmp.ge.s32.totalorder %s27, 1
      %s29 = scalar_select %p28, 0, %s27
      %s30 = ssub.s32 %s17, %s29
      %p31 = scmp.eq.s32.totalorder %s30, 0
      %s33 = sadd.s32 %s32, 1
      %s34 = scalar_select %p31, %s32, %s33
      %p37 = pneg %p31
      %p38 = scmp.eq.s32.totalorder %s10, 1
      %p39 = por %p37, %p38
      %p40 = scmp.ne.s32.totalorder %s32, %s35
      %p41 = scmp.eq.s32.totalorder %s10, 0
      %p42 = por %p40, %p41
      %p43 = scmp.ne.s32.totalorder %s32, %s35
      %p44 = scmp.eq.s32.totalorder %s15, 1
      %p45 = por %p43, %p44
      %p46 = scmp.ne.s32.totalorder %s35, %s36
      %p47 = scmp.eq.s32.totalorder %s15, 0
      %p48 = por %p46, %p47
      %p49 = scmp.ne.s32.totalorder %s35, %s36
      %p50 = scmp.eq.s32.totalorder %s16, 1
      %p51 = por %p49, %p50
      %p53 = scmp.ne.s32.totalorder %s36, %s52
      %p54 = scmp.eq.s32.totalorder %s16, 0
      %p55 = por %p53, %p54
      %s56 = ssub.s32 %s18, %s25
      %p57 = scmp.eq.s32.totalorder %s56, 0
      %s59 = sadd.s32 %s58, 1
      %s60 = scalar_select %p57, %s58, %s59
      %p63 = pneg %p57
      %p64 = scmp.eq.s32.totalorder %s10, 1
      %p65 = por %p63, %p64
      %p66 = scmp.ne.s32.totalorder %s58, %s61
      %p67 = scmp.eq.s32.totalorder %s10, 0
      %p68 = por %p66, %p67
      %p69 = scmp.ne.s32.totalorder %s58, %s61
      %p70 = scmp.eq.s32.totalorder %s15, 1
      %p71 = por %p69, %p70
      %p72 = scmp.ne.s32.totalorder %s61, %s62
      %p73 = scmp.eq.s32.totalorder %s15, 0
      %p74 = por %p72, %p73
      %p75 = scmp.ne.s32.totalorder %s61, %s62
      %p76 = scmp.eq.s32.totalorder %s16, 1
      %p77 = por %p75, %p76
      %p79 = scmp.ne.s32.totalorder %s62, %s78
      %p80 = scmp.eq.s32.totalorder %s16, 0
      %p81 = por %p79, %p80
      %s82 = ssub.s32 %s18, %s25
      %p83 = scmp.eq.s32.totalorder %s82, 0
      %s85 = sadd.s32 %s84, 1
      %s86 = scalar_select %p83, %s84, %s85
      %p89 = pneg %p83
      %p90 = scmp.eq.s32.totalorder %s10, 1
      %p91 = por %p89, %p90
      %p92 = scmp.ne.s32.totalorder %s84, %s87
      %p93 = scmp.eq.s32.totalorder %s10, 0
      %p94 = por %p92, %p93
      %p95 = scmp.ne.s32.totalorder %s84, %s87
      %p96 = scmp.eq.s32.totalorder %s15, 1
      %p97 = por %p95, %p96
      %p98 = scmp.ne.s32.totalorder %s87, %s88
      %p99 = scmp.eq.s32.totalorder %s15, 0
      %p100 = por %p98, %p99
      %p101 = scmp.ne.s32.totalorder %s87, %s88
      %p102 = scmp.eq.s32.totalorder %s16, 1
      %p103 = por %p101, %p102
      %p105 = scmp.ne.s32.totalorder %s88, %s104
      %p106 = scmp.eq.s32.totalorder %s16, 0
      %p107 = por %p105, %p106
      %s108 = ssub.s32 %s18, %s25
      %p109 = scmp.eq.s32.totalorder %s108, 0
      %s111 = sadd.s32 %s110, 1
      %s112 = scalar_select %p109, %s110, %s111
      %p115 = pneg %p109
      %p116 = scmp.eq.s32.totalorder %s10, 1
      %p117 = por %p115, %p116
      %p118 = scmp.ne.s32.totalorder %s110, %s113
      %p119 = scmp.eq.s32.totalorder %s10, 0
      %p120 = por %p118, %p119
      %p121 = scmp.ne.s32.totalorder %s110, %s113
      %p122 = scmp.eq.s32.totalorder %s15, 1
      %p123 = por %p121, %p122
      %p124 = scmp.ne.s32.totalorder %s113, %s114
      %p125 = scmp.eq.s32.totalorder %s15, 0
      %p126 = por %p124, %p125
      %p127 = scmp.ne.s32.totalorder %s113, %s114
      %p128 = scmp.eq.s32.totalorder %s16, 1
      %p129 = por %p127, %p128
      %p131 = scmp.ne.s32.totalorder %s114, %s130
      %p132 = scmp.eq.s32.totalorder %s16, 0
      %p133 = por %p131, %p132
      %s134 = ssub.s32 %s17, %s29
      %s135 = ssub.s32 %s18, %s25
      %s136 = sor.u32 %s134, %s135
      %p137 = scmp.eq.s32.totalorder %s136, 0
      %s139 = sadd.s32 %s138, 1
      %s140 = scalar_select %p137, %s138, %s139
      %p143 = pneg %p137
      %p144 = scmp.eq.s32.totalorder %s10, 1
      %p145 = por %p143, %p144
      %p146 = scmp.ne.s32.totalorder %s138, %s141
      %p147 = scmp.eq.s32.totalorder %s10, 0
      %p148 = por %p146, %p147
      %p149 = scmp.ne.s32.totalorder %s138, %s141
      %p150 = scmp.eq.s32.totalorder %s15, 1
      %p151 = por %p149, %p150
      %p152 = scmp.ne.s32.totalorder %s141, %s142
      %p153 = scmp.eq.s32.totalorder %s15, 0
      %p154 = por %p152, %p153
      %p155 = scmp.ne.s32.totalorder %s141, %s142
      %p156 = scmp.eq.s32.totalorder %s16, 1
      %p157 = por %p155, %p156
      %p159 = scmp.ne.s32.totalorder %s142, %s158
      %p160 = scmp.eq.s32.totalorder %s16, 0
      %p161 = por %p159, %p160
      %p162 = scmp.le.s32.totalorder 1, %s10
      %p163 = scmp.lt.s32.totalorder %s10, 3
      %p164 = pnand %p162, %p163
      %p165 = pneg %p164
      // Predicated region
      $region9: #{sphereface_forward.7} parent=5 // pred_check
        _
      $region10: #{sphereface_forward.7} parent=5 // pred_check_branch
        %167 = sbr.rel (%p164) target = $region12
      $region11: #{sphereface_forward.7} parent=5 // pred_region
        %s168 = ssub.s32 %s10, 1
        // Predicated region
        $region13: #{sphereface_forward.7} parent=11 // pred_check
          %p169 = pneg %p48
        $region14: #{sphereface_forward.7} parent=11 // pred_check_branch
          %171 = sbr.rel (%p169) target = $region16
        $region15: #{sphereface_forward.7} parent=11 // pred_region
          %s172 = smul.u32 4, %s19
          %p173 = scmp.lt.s32.totalorder %s172, 3
          %s174 = scalar_select %p173, %s172, 3
          %s175 = smul.addr %s174, 9
          %s176 = smul.addr %s175, 4
          %s177 = scalar_lea.vmem %s0, %s176
          %s178 = smul.u32 4, %s19
        $region16: #{sphereface_forward.7} parent=11 // pred_fallthru
          _
      $region12: #{sphereface_forward.7} parent=5 // pred_fallthru
        _
      %p179 = scmp.lt.s32.totalorder %s10, 2
      // Predicated region
      $region17: #{sphereface_forward.7} parent=5 // pred_check
        %p180 = pneg %p179
      $region18: #{sphereface_forward.7} parent=5 // pred_check_branch
        %182 = sbr.rel (%p180) target = $region20
      $region19: #{sphereface_forward.7} parent=5 // pred_region
        // Predicated region
        $region21: #{sphereface_forward.7} parent=19 // pred_check
          %p183 = pneg %p68
        $region22: #{sphereface_forward.7} parent=19 // pred_check_branch
          %185 = sbr.rel (%p183) target = $region24
        $region23: #{sphereface_forward.7} parent=19 // pred_region
          %s186 = sand.u32 %s58, 1
          %s187 = sand.u32 %s58, 1
          %s188 = smul.addr %s187, 576
          %s189 = scalar_lea.vmem [#allocation2], %s188
          %s190 = smul.addr %s18, 4
          %s191 = scalar_lea.vmem %s1, %s190
          // Predicated region
          $region25: #{sphereface_forward.7} parent=23 // pred_check
            _
          $region26: #{sphereface_forward.7} parent=23 // pred_check_branch
            %193 = sbr.rel (0) target = $region28
          $region27: #{sphereface_forward.7} parent=23 // pred_region
            // Predicated region
            $region29: #{sphereface_forward.7} parent=27 // pred_check
              _
            $region30: #{sphereface_forward.7} parent=27 // pred_check_branch
              %195 = sbr.rel target = $region32
            $region31: #{sphereface_forward.7} parent=27 // pred_region
              // Predicated region
              $region44: #{sphereface_forward.7} parent=31 // pred_check
                _
              $region45: #{sphereface_forward.7} parent=31 // pred_check_branch
                %496 = sbr.rel (0) target = $region47
              $region46: #{sphereface_forward.7} parent=31 // pred_region
                loop: start=0, step=1, limit=1
                $region48: #{sphereface_forward.7} parent=46 // loop_pre_header
                  _
                $region49: #{sphereface_forward.7} parent=46 // loop_header
                  %s498 = sphi 0, %s502
                  %p499 = scmp.ge.s32.totalorder %s498, 1
                  %s503 = sphi %s191, %s191
                  %s504 = sphi %s189, %s189
                $region50: #{sphereface_forward.7} parent=46 // loop_header_branch
                  %501 = sbr.rel (%p499) target = $region54
                $region51: #{sphereface_forward.7} parent=46 // loop_body
                  _
                $region52: #{sphereface_forward.7} parent=46 // loop_footer
                  %s502 = sadd.s32 1, %s498
                $region53: #{sphereface_forward.7} parent=46 // loop_footer_branch
                  %497 = sbr.rel target = $region49
                $region54: #{sphereface_forward.7} parent=46 // loop_exit
                  _
                loop: start=0, step=1, limit=1
                $region55: #{sphereface_forward.7} parent=46 // loop_pre_header
                  _
                $region56: #{sphereface_forward.7} parent=46 // loop_header
                  %s507 = sphi 0, %s511
                  %p508 = scmp.ge.s32.totalorder %s507, 1
                  %s512 = sphi %s191, %s191
                  %s513 = sphi %s189, %s189
                $region57: #{sphereface_forward.7} parent=46 // loop_header_branch
                  %510 = sbr.rel (%p508) target = $region61
                $region58: #{sphereface_forward.7} parent=46 // loop_body
                  %v514 = vld [vmem:[%s512] sm:$0xf]
                  %515 = vst [vmem:[%s513] sm:$0xf] %v514
                  %v516 = vld [vmem:[%s512 + $0x8] sm:$0xf]
                  %517 = vst [vmem:[%s513 + $0x4] sm:$0xf] %v516
                  %v518 = vld [vmem:[%s512 + $0x10] sm:$0xf]
                  %519 = vst [vmem:[%s513 + $0x8] sm:$0xf] %v518
                  %v520 = vld [vmem:[%s512 + $0x18] sm:$0xf]
                  %521 = vst [vmem:[%s513 + $0xc] sm:$0xf] %v520
                  %v522 = vld [vmem:[%s512 + $0x20] sm:$0xf]
                  %523 = vst [vmem:[%s513 + $0x10] sm:$0xf] %v522
                  %v524 = vld [vmem:[%s512 + $0x28] sm:$0xf]
                  %525 = vst [vmem:[%s513 + $0x14] sm:$0xf] %v524
                  %v526 = vld [vmem:[%s512 + $0x30] sm:$0xf]
                  %527 = vst [vmem:[%s513 + $0x18] sm:$0xf] %v526
                  %v528 = vld [vmem:[%s512 + $0x38] sm:$0xf]
                  %529 = vst [vmem:[%s513 + $0x1c] sm:$0xf] %v528
                  %v530 = vld [vmem:[%s512 + $0x40] sm:$0xf]
                  %531 = vst [vmem:[%s513 + $0x20] sm:$0xf] %v530
                  %v532 = vld [vmem:[%s512 + $0x48] sm:$0xf]
                  %533 = vst [vmem:[%s513 + $0x24] sm:$0xf] %v532
                  %v534 = vld [vmem:[%s512 + $0x50] sm:$0xf]
                  %535 = vst [vmem:[%s513 + $0x28] sm:$0xf] %v534
                  %v536 = vld [vmem:[%s512 + $0x58] sm:$0xf]
                  %537 = vst [vmem:[%s513 + $0x2c] sm:$0xf] %v536
                  %v538 = vld [vmem:[%s512 + $0x60] sm:$0xf]
                  %539 = vst [vmem:[%s513 + $0x30] sm:$0xf] %v538
                  %v540 = vld [vmem:[%s512 + $0x68] sm:$0xf]
                  %541 = vst [vmem:[%s513 + $0x34] sm:$0xf] %v540
                  %v542 = vld [vmem:[%s512 + $0x70] sm:$0xf]
                  %543 = vst [vmem:[%s513 + $0x38] sm:$0xf] %v542
                  %v544 = vld [vmem:[%s512 + $0x78] sm:$0xf]
                  %545 = vst [vmem:[%s513 + $0x3c] sm:$0xf] %v544
                  %v546 = vld [vmem:[%s512 + $0x80] sm:$0xf]
                  %547 = vst [vmem:[%s513 + $0x40] sm:$0xf] %v546
                  %v548 = vld [vmem:[%s512 + $0x88] sm:$0xf]
                  %549 = vst [vmem:[%s513 + $0x44] sm:$0xf] %v548
                  %v550 = vld [vmem:[%s512 + $0x90] sm:$0xf]
                  %551 = vst [vmem:[%s513 + $0x48] sm:$0xf] %v550
                  %v552 = vld [vmem:[%s512 + $0x98] sm:$0xf]
                  %553 = vst [vmem:[%s513 + $0x4c] sm:$0xf] %v552
                  %v554 = vld [vmem:[%s512 + $0xa0] sm:$0xf]
                  %555 = vst [vmem:[%s513 + $0x50] sm:$0xf] %v554
                  %v556 = vld [vmem:[%s512 + $0xa8] sm:$0xf]
                  %557 = vst [vmem:[%s513 + $0x54] sm:$0xf] %v556
                  %v558 = vld [vmem:[%s512 + $0xb0] sm:$0xf]
                  %559 = vst [vmem:[%s513 + $0x58] sm:$0xf] %v558
                  %v560 = vld [vmem:[%s512 + $0xb8] sm:$0xf]
                  %561 = vst [vmem:[%s513 + $0x5c] sm:$0xf] %v560
                  %v562 = vld [vmem:[%s512 + $0xc0] sm:$0xf]
                  %563 = vst [vmem:[%s513 + $0x60] sm:$0xf] %v562
                  %v564 = vld [vmem:[%s512 + $0xc8] sm:$0xf]
                  %565 = vst [vmem:[%s513 + $0x64] sm:$0xf] %v564
                  %v566 = vld [vmem:[%s512 + $0xd0] sm:$0xf]
                  %567 = vst [vmem:[%s513 + $0x68] sm:$0xf] %v566
                  %v568 = vld [vmem:[%s512 + $0xd8] sm:$0xf]
                  %569 = vst [vmem:[%s513 + $0x6c] sm:$0xf] %v568
                  %v570 = vld [vmem:[%s512 + $0xe0] sm:$0xf]
                  %571 = vst [vmem:[%s513 + $0x70] sm:$0xf] %v570
                  %v572 = vld [vmem:[%s512 + $0xe8] sm:$0xf]
                  %573 = vst [vmem:[%s513 + $0x74] sm:$0xf] %v572
                  %v574 = vld [vmem:[%s512 + $0xf0] sm:$0xf]
                  %575 = vst [vmem:[%s513 + $0x78] sm:$0xf] %v574
                  %v576 = vld [vmem:[%s512 + $0xf8] sm:$0xf]
                  %577 = vst [vmem:[%s513 + $0x7c] sm:$0xf] %v576
                  %v578 = vld [vmem:[%s512 + $0x100] sm:$0xf]
                  %579 = vst [vmem:[%s513 + $0x80] sm:$0xf] %v578
                  %v580 = vld [vmem:[%s512 + $0x108] sm:$0xf]
                  %581 = vst [vmem:[%s513 + $0x84] sm:$0xf] %v580
                  %v582 = vld [vmem:[%s512 + $0x110] sm:$0xf]
                  %583 = vst [vmem:[%s513 + $0x88] sm:$0xf] %v582
                  %v584 = vld [vmem:[%s512 + $0x118] sm:$0xf]
                  %585 = vst [vmem:[%s513 + $0x8c] sm:$0xf] %v584
                  %v586 = vld [vmem:[%s512 + $0x120] sm:$0xf]
                  %587 = vst [vmem:[%s513 + $0x90] sm:$0xf] %v586
                  %v588 = vld [vmem:[%s512 + $0x128] sm:$0xf]
                  %589 = vst [vmem:[%s513 + $0x94] sm:$0xf] %v588
                  %v590 = vld [vmem:[%s512 + $0x130] sm:$0xf]
                  %591 = vst [vmem:[%s513 + $0x98] sm:$0xf] %v590
                  %v592 = vld [vmem:[%s512 + $0x138] sm:$0xf]
                  %593 = vst [vmem:[%s513 + $0x9c] sm:$0xf] %v592
                  %v594 = vld [vmem:[%s512 + $0x140] sm:$0xf]
                  %595 = vst [vmem:[%s513 + $0xa0] sm:$0xf] %v594
                  %v596 = vld [vmem:[%s512 + $0x148] sm:$0xf]
                  %597 = vst [vmem:[%s513 + $0xa4] sm:$0xf] %v596
                  %v598 = vld [vmem:[%s512 + $0x150] sm:$0xf]
                  %599 = vst [vmem:[%s513 + $0xa8] sm:$0xf] %v598
                  %v600 = vld [vmem:[%s512 + $0x158] sm:$0xf]
                  %601 = vst [vmem:[%s513 + $0xac] sm:$0xf] %v600
                  %v602 = vld [vmem:[%s512 + $0x160] sm:$0xf]
                  %603 = vst [vmem:[%s513 + $0xb0] sm:$0xf] %v602
                  %v604 = vld [vmem:[%s512 + $0x168] sm:$0xf]
                  %605 = vst [vmem:[%s513 + $0xb4] sm:$0xf] %v604
                  %v606 = vld [vmem:[%s512 + $0x170] sm:$0xf]
                  %607 = vst [vmem:[%s513 + $0xb8] sm:$0xf] %v606
                  %v608 = vld [vmem:[%s512 + $0x178] sm:$0xf]
                  %609 = vst [vmem:[%s513 + $0xbc] sm:$0xf] %v608
                  %v610 = vld [vmem:[%s512 + $0x180] sm:$0xf]
                  %611 = vst [vmem:[%s513 + $0xc0] sm:$0xf] %v610
                  %v612 = vld [vmem:[%s512 + $0x188] sm:$0xf]
                  %613 = vst [vmem:[%s513 + $0xc4] sm:$0xf] %v612
                  %v614 = vld [vmem:[%s512 + $0x190] sm:$0xf]
                  %615 = vst [vmem:[%s513 + $0xc8] sm:$0xf] %v614
                  %v616 = vld [vmem:[%s512 + $0x198] sm:$0xf]
                  %617 = vst [vmem:[%s513 + $0xcc] sm:$0xf] %v616
                  %v618 = vld [vmem:[%s512 + $0x1a0] sm:$0xf]
                  %619 = vst [vmem:[%s513 + $0xd0] sm:$0xf] %v618
                  %v620 = vld [vmem:[%s512 + $0x1a8] sm:$0xf]
                  %621 = vst [vmem:[%s513 + $0xd4] sm:$0xf] %v620
                  %v622 = vld [vmem:[%s512 + $0x1b0] sm:$0xf]
                  %623 = vst [vmem:[%s513 + $0xd8] sm:$0xf] %v622
                  %v624 = vld [vmem:[%s512 + $0x1b8] sm:$0xf]
                  %625 = vst [vmem:[%s513 + $0xdc] sm:$0xf] %v624
                  %v626 = vld [vmem:[%s512 + $0x1c0] sm:$0xf]
                  %627 = vst [vmem:[%s513 + $0xe0] sm:$0xf] %v626
                  %v628 = vld [vmem:[%s512 + $0x1c8] sm:$0xf]
                  %629 = vst [vmem:[%s513 + $0xe4] sm:$0xf] %v628
                  %v630 = vld [vmem:[%s512 + $0x1d0] sm:$0xf]
                  %631 = vst [vmem:[%s513 + $0xe8] sm:$0xf] %v630
                  %v632 = vld [vmem:[%s512 + $0x1d8] sm:$0xf]
                  %633 = vst [vmem:[%s513 + $0xec] sm:$0xf] %v632
                  %v634 = vld [vmem:[%s512 + $0x1e0] sm:$0xf]
                  %635 = vst [vmem:[%s513 + $0xf0] sm:$0xf] %v634
                  %v636 = vld [vmem:[%s512 + $0x1e8] sm:$0xf]
                  %637 = vst [vmem:[%s513 + $0xf4] sm:$0xf] %v636
                  %v638 = vld [vmem:[%s512 + $0x1f0] sm:$0xf]
                  %639 = vst [vmem:[%s513 + $0xf8] sm:$0xf] %v638
                  %v640 = vld [vmem:[%s512 + $0x1f8] sm:$0xf]
                  %641 = vst [vmem:[%s513 + $0xfc] sm:$0xf] %v640
                  %v642 = vld [vmem:[%s512 + $0x200] sm:$0xf]
                  %643 = vst [vmem:[%s513 + $0x100] sm:$0xf] %v642
                  %v644 = vld [vmem:[%s512 + $0x208] sm:$0xf]
                  %645 = vst [vmem:[%s513 + $0x104] sm:$0xf] %v644
                  %v646 = vld [vmem:[%s512 + $0x210] sm:$0xf]
                  %647 = vst [vmem:[%s513 + $0x108] sm:$0xf] %v646
                  %v648 = vld [vmem:[%s512 + $0x218] sm:$0xf]
                  %649 = vst [vmem:[%s513 + $0x10c] sm:$0xf] %v648
                  %v650 = vld [vmem:[%s512 + $0x220] sm:$0xf]
                  %651 = vst [vmem:[%s513 + $0x110] sm:$0xf] %v650
                  %v652 = vld [vmem:[%s512 + $0x228] sm:$0xf]
                  %653 = vst [vmem:[%s513 + $0x114] sm:$0xf] %v652
                  %v654 = vld [vmem:[%s512 + $0x230] sm:$0xf]
                  %655 = vst [vmem:[%s513 + $0x118] sm:$0xf] %v654
                  %v656 = vld [vmem:[%s512 + $0x238] sm:$0xf]
                  %657 = vst [vmem:[%s513 + $0x11c] sm:$0xf] %v656
                  %v658 = vld [vmem:[%s512 + $0x240] sm:$0xf]
                  %659 = vst [vmem:[%s513 + $0x120] sm:$0xf] %v658
                  %v660 = vld [vmem:[%s512 + $0x248] sm:$0xf]
                  %661 = vst [vmem:[%s513 + $0x124] sm:$0xf] %v660
                  %v662 = vld [vmem:[%s512 + $0x250] sm:$0xf]
                  %663 = vst [vmem:[%s513 + $0x128] sm:$0xf] %v662
                  %v664 = vld [vmem:[%s512 + $0x258] sm:$0xf]
                  %665 = vst [vmem:[%s513 + $0x12c] sm:$0xf] %v664
                  %v666 = vld [vmem:[%s512 + $0x260] sm:$0xf]
                  %667 = vst [vmem:[%s513 + $0x130] sm:$0xf] %v666
                  %v668 = vld [vmem:[%s512 + $0x268] sm:$0xf]
                  %669 = vst [vmem:[%s513 + $0x134] sm:$0xf] %v668
                  %v670 = vld [vmem:[%s512 + $0x270] sm:$0xf]
                  %671 = vst [vmem:[%s513 + $0x138] sm:$0xf] %v670
                  %v672 = vld [vmem:[%s512 + $0x278] sm:$0xf]
                  %673 = vst [vmem:[%s513 + $0x13c] sm:$0xf] %v672
                  %v674 = vld [vmem:[%s512 + $0x280] sm:$0xf]
                  %675 = vst [vmem:[%s513 + $0x140] sm:$0xf] %v674
                  %v676 = vld [vmem:[%s512 + $0x288] sm:$0xf]
                  %677 = vst [vmem:[%s513 + $0x144] sm:$0xf] %v676
                  %v678 = vld [vmem:[%s512 + $0x290] sm:$0xf]
                  %679 = vst [vmem:[%s513 + $0x148] sm:$0xf] %v678
                  %v680 = vld [vmem:[%s512 + $0x298] sm:$0xf]
                  %681 = vst [vmem:[%s513 + $0x14c] sm:$0xf] %v680
                  %v682 = vld [vmem:[%s512 + $0x2a0] sm:$0xf]
                  %683 = vst [vmem:[%s513 + $0x150] sm:$0xf] %v682
                  %v684 = vld [vmem:[%s512 + $0x2a8] sm:$0xf]
                  %685 = vst [vmem:[%s513 + $0x154] sm:$0xf] %v684
                  %v686 = vld [vmem:[%s512 + $0x2b0] sm:$0xf]
                  %687 = vst [vmem:[%s513 + $0x158] sm:$0xf] %v686
                  %v688 = vld [vmem:[%s512 + $0x2b8] sm:$0xf]
                  %689 = vst [vmem:[%s513 + $0x15c] sm:$0xf] %v688
                  %v690 = vld [vmem:[%s512 + $0x2c0] sm:$0xf]
                  %691 = vst [vmem:[%s513 + $0x160] sm:$0xf] %v690
                  %v692 = vld [vmem:[%s512 + $0x2c8] sm:$0xf]
                  %693 = vst [vmem:[%s513 + $0x164] sm:$0xf] %v692
                  %v694 = vld [vmem:[%s512 + $0x2d0] sm:$0xf]
                  %695 = vst [vmem:[%s513 + $0x168] sm:$0xf] %v694
                  %v696 = vld [vmem:[%s512 + $0x2d8] sm:$0xf]
                  %697 = vst [vmem:[%s513 + $0x16c] sm:$0xf] %v696
                  %v698 = vld [vmem:[%s512 + $0x2e0] sm:$0xf]
                  %699 = vst [vmem:[%s513 + $0x170] sm:$0xf] %v698
                  %v700 = vld [vmem:[%s512 + $0x2e8] sm:$0xf]
                  %701 = vst [vmem:[%s513 + $0x174] sm:$0xf] %v700
                  %v702 = vld [vmem:[%s512 + $0x2f0] sm:$0xf]
                  %703 = vst [vmem:[%s513 + $0x178] sm:$0xf] %v702
                  %v704 = vld [vmem:[%s512 + $0x2f8] sm:$0xf]
                  %705 = vst [vmem:[%s513 + $0x17c] sm:$0xf] %v704
                  %v706 = vld [vmem:[%s512 + $0x300] sm:$0xf]
                  %707 = vst [vmem:[%s513 + $0x180] sm:$0xf] %v706
                  %v708 = vld [vmem:[%s512 + $0x308] sm:$0xf]
                  %709 = vst [vmem:[%s513 + $0x184] sm:$0xf] %v708
                  %v710 = vld [vmem:[%s512 + $0x310] sm:$0xf]
                  %711 = vst [vmem:[%s513 + $0x188] sm:$0xf] %v710
                  %v712 = vld [vmem:[%s512 + $0x318] sm:$0xf]
                  %713 = vst [vmem:[%s513 + $0x18c] sm:$0xf] %v712
                  %v714 = vld [vmem:[%s512 + $0x320] sm:$0xf]
                  %715 = vst [vmem:[%s513 + $0x190] sm:$0xf] %v714
                  %v716 = vld [vmem:[%s512 + $0x328] sm:$0xf]
                  %717 = vst [vmem:[%s513 + $0x194] sm:$0xf] %v716
                  %v718 = vld [vmem:[%s512 + $0x330] sm:$0xf]
                  %719 = vst [vmem:[%s513 + $0x198] sm:$0xf] %v718
                  %v720 = vld [vmem:[%s512 + $0x338] sm:$0xf]
                  %721 = vst [vmem:[%s513 + $0x19c] sm:$0xf] %v720
                  %v722 = vld [vmem:[%s512 + $0x340] sm:$0xf]
                  %723 = vst [vmem:[%s513 + $0x1a0] sm:$0xf] %v722
                  %v724 = vld [vmem:[%s512 + $0x348] sm:$0xf]
                  %725 = vst [vmem:[%s513 + $0x1a4] sm:$0xf] %v724
                  %v726 = vld [vmem:[%s512 + $0x350] sm:$0xf]
                  %727 = vst [vmem:[%s513 + $0x1a8] sm:$0xf] %v726
                  %v728 = vld [vmem:[%s512 + $0x358] sm:$0xf]
                  %729 = vst [vmem:[%s513 + $0x1ac] sm:$0xf] %v728
                  %v730 = vld [vmem:[%s512 + $0x360] sm:$0xf]
                  %731 = vst [vmem:[%s513 + $0x1b0] sm:$0xf] %v730
                  %v732 = vld [vmem:[%s512 + $0x368] sm:$0xf]
                  %733 = vst [vmem:[%s513 + $0x1b4] sm:$0xf] %v732
                  %v734 = vld [vmem:[%s512 + $0x370] sm:$0xf]
                  %735 = vst [vmem:[%s513 + $0x1b8] sm:$0xf] %v734
                  %v736 = vld [vmem:[%s512 + $0x378] sm:$0xf]
                  %737 = vst [vmem:[%s513 + $0x1bc] sm:$0xf] %v736
                  %v738 = vld [vmem:[%s512 + $0x380] sm:$0xf]
                  %739 = vst [vmem:[%s513 + $0x1c0] sm:$0xf] %v738
                  %v740 = vld [vmem:[%s512 + $0x388] sm:$0xf]
                  %741 = vst [vmem:[%s513 + $0x1c4] sm:$0xf] %v740
                  %v742 = vld [vmem:[%s512 + $0x390] sm:$0xf]
                  %743 = vst [vmem:[%s513 + $0x1c8] sm:$0xf] %v742
                  %v744 = vld [vmem:[%s512 + $0x398] sm:$0xf]
                  %745 = vst [vmem:[%s513 + $0x1cc] sm:$0xf] %v744
                  %v746 = vld [vmem:[%s512 + $0x3a0] sm:$0xf]
                  %747 = vst [vmem:[%s513 + $0x1d0] sm:$0xf] %v746
                  %v748 = vld [vmem:[%s512 + $0x3a8] sm:$0xf]
                  %749 = vst [vmem:[%s513 + $0x1d4] sm:$0xf] %v748
                  %v750 = vld [vmem:[%s512 + $0x3b0] sm:$0xf]
                  %751 = vst [vmem:[%s513 + $0x1d8] sm:$0xf] %v750
                  %v752 = vld [vmem:[%s512 + $0x3b8] sm:$0xf]
                  %753 = vst [vmem:[%s513 + $0x1dc] sm:$0xf] %v752
                  %v754 = vld [vmem:[%s512 + $0x3c0] sm:$0xf]
                  %755 = vst [vmem:[%s513 + $0x1e0] sm:$0xf] %v754
                  %v756 = vld [vmem:[%s512 + $0x3c8] sm:$0xf]
                  %757 = vst [vmem:[%s513 + $0x1e4] sm:$0xf] %v756
                  %v758 = vld [vmem:[%s512 + $0x3d0] sm:$0xf]
                  %759 = vst [vmem:[%s513 + $0x1e8] sm:$0xf] %v758
                  %v760 = vld [vmem:[%s512 + $0x3d8] sm:$0xf]
                  %761 = vst [vmem:[%s513 + $0x1ec] sm:$0xf] %v760
                  %v762 = vld [vmem:[%s512 + $0x3e0] sm:$0xf]
                  %763 = vst [vmem:[%s513 + $0x1f0] sm:$0xf] %v762
                  %v764 = vld [vmem:[%s512 + $0x3e8] sm:$0xf]
                  %765 = vst [vmem:[%s513 + $0x1f4] sm:$0xf] %v764
                  %v766 = vld [vmem:[%s512 + $0x3f0] sm:$0xf]
                  %767 = vst [vmem:[%s513 + $0x1f8] sm:$0xf] %v766
                  %v768 = vld [vmem:[%s512 + $0x3f8] sm:$0xf]
                  %769 = vst [vmem:[%s513 + $0x1fc] sm:$0xf] %v768
                  %v770 = vld [vmem:[%s512 + $0x400] sm:$0xf]
                  %771 = vst [vmem:[%s513 + $0x200] sm:$0xf] %v770
                  %v772 = vld [vmem:[%s512 + $0x408] sm:$0xf]
                  %773 = vst [vmem:[%s513 + $0x204] sm:$0xf] %v772
                  %v774 = vld [vmem:[%s512 + $0x410] sm:$0xf]
                  %775 = vst [vmem:[%s513 + $0x208] sm:$0xf] %v774
                  %v776 = vld [vmem:[%s512 + $0x418] sm:$0xf]
                  %777 = vst [vmem:[%s513 + $0x20c] sm:$0xf] %v776
                  %v778 = vld [vmem:[%s512 + $0x420] sm:$0xf]
                  %779 = vst [vmem:[%s513 + $0x210] sm:$0xf] %v778
                  %v780 = vld [vmem:[%s512 + $0x428] sm:$0xf]
                  %781 = vst [vmem:[%s513 + $0x214] sm:$0xf] %v780
                  %v782 = vld [vmem:[%s512 + $0x430] sm:$0xf]
                  %783 = vst [vmem:[%s513 + $0x218] sm:$0xf] %v782
                  %v784 = vld [vmem:[%s512 + $0x438] sm:$0xf]
                  %785 = vst [vmem:[%s513 + $0x21c] sm:$0xf] %v784
                  %v786 = vld [vmem:[%s512 + $0x440] sm:$0xf]
                  %787 = vst [vmem:[%s513 + $0x220] sm:$0xf] %v786
                  %v788 = vld [vmem:[%s512 + $0x448] sm:$0xf]
                  %789 = vst [vmem:[%s513 + $0x224] sm:$0xf] %v788
                  %v790 = vld [vmem:[%s512 + $0x450] sm:$0xf]
                  %791 = vst [vmem:[%s513 + $0x228] sm:$0xf] %v790
                  %v792 = vld [vmem:[%s512 + $0x458] sm:$0xf]
                  %793 = vst [vmem:[%s513 + $0x22c] sm:$0xf] %v792
                  %v794 = vld [vmem:[%s512 + $0x460] sm:$0xf]
                  %795 = vst [vmem:[%s513 + $0x230] sm:$0xf] %v794
                  %v796 = vld [vmem:[%s512 + $0x468] sm:$0xf]
                  %797 = vst [vmem:[%s513 + $0x234] sm:$0xf] %v796
                  %v798 = vld [vmem:[%s512 + $0x470] sm:$0xf]
                  %799 = vst [vmem:[%s513 + $0x238] sm:$0xf] %v798
                  %v800 = vld [vmem:[%s512 + $0x478] sm:$0xf]
                  %801 = vst [vmem:[%s513 + $0x23c] sm:$0xf] %v800
                $region59: #{sphereface_forward.7} parent=46 // loop_footer
                  %s511 = sadd.s32 1, %s507
                $region60: #{sphereface_forward.7} parent=46 // loop_footer_branch
                  %506 = sbr.rel target = $region56
                $region61: #{sphereface_forward.7} parent=46 // loop_exit
                  _
              $region47: #{sphereface_forward.7} parent=31 // pred_fallthru
                _
            $region32: #{sphereface_forward.7} parent=27 // pred_fallthru
              _
            // Predicated region
            $region33: #{sphereface_forward.7} parent=27 // pred_check
              _
            $region34: #{sphereface_forward.7} parent=27 // pred_check_branch
              %197 = sbr.rel (0) target = $region36
            $region35: #{sphereface_forward.7} parent=27 // pred_region
              loop: start=0, step=1, limit=1
              $region37: #{sphereface_forward.7} parent=35 // loop_pre_header
                _
              $region38: #{sphereface_forward.7} parent=35 // loop_header
                %s200 = sphi 0, %s204
                %p201 = scmp.ge.s32.totalorder %s200, 1
                %s205 = sphi %s191, %s191
                %s206 = sphi %s189, %s189
              $region39: #{sphereface_forward.7} parent=35 // loop_header_branch
                %203 = sbr.rel (%p201) target = $region43
              $region40: #{sphereface_forward.7} parent=35 // loop_body
                %v207 = vld [vmem:[%s205] sm:$0xf]
                %208 = vst [vmem:[%s206] sm:$0xf] %v207
                %v209 = vld [vmem:[%s205 + $0x8] sm:$0xf]
                %210 = vst [vmem:[%s206 + $0x4] sm:$0xf] %v209
                %v211 = vld [vmem:[%s205 + $0x10] sm:$0xf]
                %212 = vst [vmem:[%s206 + $0x8] sm:$0xf] %v211
                %v213 = vld [vmem:[%s205 + $0x18] sm:$0xf]
                %214 = vst [vmem:[%s206 + $0xc] sm:$0xf] %v213
                %v215 = vld [vmem:[%s205 + $0x20] sm:$0xf]
                %216 = vst [vmem:[%s206 + $0x10] sm:$0xf] %v215
                %v217 = vld [vmem:[%s205 + $0x28] sm:$0xf]
                %218 = vst [vmem:[%s206 + $0x14] sm:$0xf] %v217
                %v219 = vld [vmem:[%s205 + $0x30] sm:$0xf]
                %220 = vst [vmem:[%s206 + $0x18] sm:$0xf] %v219
                %v221 = vld [vmem:[%s205 + $0x38] sm:$0xf]
                %222 = vst [vmem:[%s206 + $0x1c] sm:$0xf] %v221
                %v223 = vld [vmem:[%s205 + $0x40] sm:$0xf]
                %224 = vst [vmem:[%s206 + $0x20] sm:$0xf] %v223
                %v225 = vld [vmem:[%s205 + $0x48] sm:$0xf]
                %226 = vst [vmem:[%s206 + $0x24] sm:$0xf] %v225
                %v227 = vld [vmem:[%s205 + $0x50] sm:$0xf]
                %228 = vst [vmem:[%s206 + $0x28] sm:$0xf] %v227
                %v229 = vld [vmem:[%s205 + $0x58] sm:$0xf]
                %230 = vst [vmem:[%s206 + $0x2c] sm:$0xf] %v229
                %v231 = vld [vmem:[%s205 + $0x60] sm:$0xf]
                %232 = vst [vmem:[%s206 + $0x30] sm:$0xf] %v231
                %v233 = vld [vmem:[%s205 + $0x68] sm:$0xf]
                %234 = vst [vmem:[%s206 + $0x34] sm:$0xf] %v233
                %v235 = vld [vmem:[%s205 + $0x70] sm:$0xf]
                %236 = vst [vmem:[%s206 + $0x38] sm:$0xf] %v235
                %v237 = vld [vmem:[%s205 + $0x78] sm:$0xf]
                %238 = vst [vmem:[%s206 + $0x3c] sm:$0xf] %v237
                %v239 = vld [vmem:[%s205 + $0x80] sm:$0xf]
                %240 = vst [vmem:[%s206 + $0x40] sm:$0xf] %v239
                %v241 = vld [vmem:[%s205 + $0x88] sm:$0xf]
                %242 = vst [vmem:[%s206 + $0x44] sm:$0xf] %v241
                %v243 = vld [vmem:[%s205 + $0x90] sm:$0xf]
                %244 = vst [vmem:[%s206 + $0x48] sm:$0xf] %v243
                %v245 = vld [vmem:[%s205 + $0x98] sm:$0xf]
                %246 = vst [vmem:[%s206 + $0x4c] sm:$0xf] %v245
                %v247 = vld [vmem:[%s205 + $0xa0] sm:$0xf]
                %248 = vst [vmem:[%s206 + $0x50] sm:$0xf] %v247
                %v249 = vld [vmem:[%s205 + $0xa8] sm:$0xf]
                %250 = vst [vmem:[%s206 + $0x54] sm:$0xf] %v249
                %v251 = vld [vmem:[%s205 + $0xb0] sm:$0xf]
                %252 = vst [vmem:[%s206 + $0x58] sm:$0xf] %v251
                %v253 = vld [vmem:[%s205 + $0xb8] sm:$0xf]
                %254 = vst [vmem:[%s206 + $0x5c] sm:$0xf] %v253
                %v255 = vld [vmem:[%s205 + $0xc0] sm:$0xf]
                %256 = vst [vmem:[%s206 + $0x60] sm:$0xf] %v255
                %v257 = vld [vmem:[%s205 + $0xc8] sm:$0xf]
                %258 = vst [vmem:[%s206 + $0x64] sm:$0xf] %v257
                %v259 = vld [vmem:[%s205 + $0xd0] sm:$0xf]
                %260 = vst [vmem:[%s206 + $0x68] sm:$0xf] %v259
                %v261 = vld [vmem:[%s205 + $0xd8] sm:$0xf]
                %262 = vst [vmem:[%s206 + $0x6c] sm:$0xf] %v261
                %v263 = vld [vmem:[%s205 + $0xe0] sm:$0xf]
                %264 = vst [vmem:[%s206 + $0x70] sm:$0xf] %v263
                %v265 = vld [vmem:[%s205 + $0xe8] sm:$0xf]
                %266 = vst [vmem:[%s206 + $0x74] sm:$0xf] %v265
                %v267 = vld [vmem:[%s205 + $0xf0] sm:$0xf]
                %268 = vst [vmem:[%s206 + $0x78] sm:$0xf] %v267
                %v269 = vld [vmem:[%s205 + $0xf8] sm:$0xf]
                %270 = vst [vmem:[%s206 + $0x7c] sm:$0xf] %v269
                %v271 = vld [vmem:[%s205 + $0x100] sm:$0xf]
                %272 = vst [vmem:[%s206 + $0x80] sm:$0xf] %v271
                %v273 = vld [vmem:[%s205 + $0x108] sm:$0xf]
                %274 = vst [vmem:[%s206 + $0x84] sm:$0xf] %v273
                %v275 = vld [vmem:[%s205 + $0x110] sm:$0xf]
                %276 = vst [vmem:[%s206 + $0x88] sm:$0xf] %v275
                %v277 = vld [vmem:[%s205 + $0x118] sm:$0xf]
                %278 = vst [vmem:[%s206 + $0x8c] sm:$0xf] %v277
                %v279 = vld [vmem:[%s205 + $0x120] sm:$0xf]
                %280 = vst [vmem:[%s206 + $0x90] sm:$0xf] %v279
                %v281 = vld [vmem:[%s205 + $0x128] sm:$0xf]
                %282 = vst [vmem:[%s206 + $0x94] sm:$0xf] %v281
                %v283 = vld [vmem:[%s205 + $0x130] sm:$0xf]
                %284 = vst [vmem:[%s206 + $0x98] sm:$0xf] %v283
                %v285 = vld [vmem:[%s205 + $0x138] sm:$0xf]
                %286 = vst [vmem:[%s206 + $0x9c] sm:$0xf] %v285
                %v287 = vld [vmem:[%s205 + $0x140] sm:$0xf]
                %288 = vst [vmem:[%s206 + $0xa0] sm:$0xf] %v287
                %v289 = vld [vmem:[%s205 + $0x148] sm:$0xf]
                %290 = vst [vmem:[%s206 + $0xa4] sm:$0xf] %v289
                %v291 = vld [vmem:[%s205 + $0x150] sm:$0xf]
                %292 = vst [vmem:[%s206 + $0xa8] sm:$0xf] %v291
                %v293 = vld [vmem:[%s205 + $0x158] sm:$0xf]
                %294 = vst [vmem:[%s206 + $0xac] sm:$0xf] %v293
                %v295 = vld [vmem:[%s205 + $0x160] sm:$0xf]
                %296 = vst [vmem:[%s206 + $0xb0] sm:$0xf] %v295
                %v297 = vld [vmem:[%s205 + $0x168] sm:$0xf]
                %298 = vst [vmem:[%s206 + $0xb4] sm:$0xf] %v297
                %v299 = vld [vmem:[%s205 + $0x170] sm:$0xf]
                %300 = vst [vmem:[%s206 + $0xb8] sm:$0xf] %v299
                %v301 = vld [vmem:[%s205 + $0x178] sm:$0xf]
                %302 = vst [vmem:[%s206 + $0xbc] sm:$0xf] %v301
                %v303 = vld [vmem:[%s205 + $0x180] sm:$0xf]
                %304 = vst [vmem:[%s206 + $0xc0] sm:$0xf] %v303
                %v305 = vld [vmem:[%s205 + $0x188] sm:$0xf]
                %306 = vst [vmem:[%s206 + $0xc4] sm:$0xf] %v305
                %v307 = vld [vmem:[%s205 + $0x190] sm:$0xf]
                %308 = vst [vmem:[%s206 + $0xc8] sm:$0xf] %v307
                %v309 = vld [vmem:[%s205 + $0x198] sm:$0xf]
                %310 = vst [vmem:[%s206 + $0xcc] sm:$0xf] %v309
                %v311 = vld [vmem:[%s205 + $0x1a0] sm:$0xf]
                %312 = vst [vmem:[%s206 + $0xd0] sm:$0xf] %v311
                %v313 = vld [vmem:[%s205 + $0x1a8] sm:$0xf]
                %314 = vst [vmem:[%s206 + $0xd4] sm:$0xf] %v313
                %v315 = vld [vmem:[%s205 + $0x1b0] sm:$0xf]
                %316 = vst [vmem:[%s206 + $0xd8] sm:$0xf] %v315
                %v317 = vld [vmem:[%s205 + $0x1b8] sm:$0xf]
                %318 = vst [vmem:[%s206 + $0xdc] sm:$0xf] %v317
                %v319 = vld [vmem:[%s205 + $0x1c0] sm:$0xf]
                %320 = vst [vmem:[%s206 + $0xe0] sm:$0xf] %v319
                %v321 = vld [vmem:[%s205 + $0x1c8] sm:$0xf]
                %322 = vst [vmem:[%s206 + $0xe4] sm:$0xf] %v321
                %v323 = vld [vmem:[%s205 + $0x1d0] sm:$0xf]
                %324 = vst [vmem:[%s206 + $0xe8] sm:$0xf] %v323
                %v325 = vld [vmem:[%s205 + $0x1d8] sm:$0xf]
                %326 = vst [vmem:[%s206 + $0xec] sm:$0xf] %v325
                %v327 = vld [vmem:[%s205 + $0x1e0] sm:$0xf]
                %328 = vst [vmem:[%s206 + $0xf0] sm:$0xf] %v327
                %v329 = vld [vmem:[%s205 + $0x1e8] sm:$0xf]
                %330 = vst [vmem:[%s206 + $0xf4] sm:$0xf] %v329
                %v331 = vld [vmem:[%s205 + $0x1f0] sm:$0xf]
                %332 = vst [vmem:[%s206 + $0xf8] sm:$0xf] %v331
                %v333 = vld [vmem:[%s205 + $0x1f8] sm:$0xf]
                %334 = vst [vmem:[%s206 + $0xfc] sm:$0xf] %v333
                %v335 = vld [vmem:[%s205 + $0x200] sm:$0xf]
                %336 = vst [vmem:[%s206 + $0x100] sm:$0xf] %v335
                %v337 = vld [vmem:[%s205 + $0x208] sm:$0xf]
                %338 = vst [vmem:[%s206 + $0x104] sm:$0xf] %v337
                %v339 = vld [vmem:[%s205 + $0x210] sm:$0xf]
                %340 = vst [vmem:[%s206 + $0x108] sm:$0xf] %v339
                %v341 = vld [vmem:[%s205 + $0x218] sm:$0xf]
                %342 = vst [vmem:[%s206 + $0x10c] sm:$0xf] %v341
                %v343 = vld [vmem:[%s205 + $0x220] sm:$0xf]
                %344 = vst [vmem:[%s206 + $0x110] sm:$0xf] %v343
                %v345 = vld [vmem:[%s205 + $0x228] sm:$0xf]
                %346 = vst [vmem:[%s206 + $0x114] sm:$0xf] %v345
                %v347 = vld [vmem:[%s205 + $0x230] sm:$0xf]
                %348 = vst [vmem:[%s206 + $0x118] sm:$0xf] %v347
                %v349 = vld [vmem:[%s205 + $0x238] sm:$0xf]
                %350 = vst [vmem:[%s206 + $0x11c] sm:$0xf] %v349
                %v351 = vld [vmem:[%s205 + $0x240] sm:$0xf]
                %352 = vst [vmem:[%s206 + $0x120] sm:$0xf] %v351
                %v353 = vld [vmem:[%s205 + $0x248] sm:$0xf]
                %354 = vst [vmem:[%s206 + $0x124] sm:$0xf] %v353
                %v355 = vld [vmem:[%s205 + $0x250] sm:$0xf]
                %356 = vst [vmem:[%s206 + $0x128] sm:$0xf] %v355
                %v357 = vld [vmem:[%s205 + $0x258] sm:$0xf]
                %358 = vst [vmem:[%s206 + $0x12c] sm:$0xf] %v357
                %v359 = vld [vmem:[%s205 + $0x260] sm:$0xf]
                %360 = vst [vmem:[%s206 + $0x130] sm:$0xf] %v359
                %v361 = vld [vmem:[%s205 + $0x268] sm:$0xf]
                %362 = vst [vmem:[%s206 + $0x134] sm:$0xf] %v361
                %v363 = vld [vmem:[%s205 + $0x270] sm:$0xf]
                %364 = vst [vmem:[%s206 + $0x138] sm:$0xf] %v363
                %v365 = vld [vmem:[%s205 + $0x278] sm:$0xf]
                %366 = vst [vmem:[%s206 + $0x13c] sm:$0xf] %v365
                %v367 = vld [vmem:[%s205 + $0x280] sm:$0xf]
                %368 = vst [vmem:[%s206 + $0x140] sm:$0xf] %v367
                %v369 = vld [vmem:[%s205 + $0x288] sm:$0xf]
                %370 = vst [vmem:[%s206 + $0x144] sm:$0xf] %v369
                %v371 = vld [vmem:[%s205 + $0x290] sm:$0xf]
                %372 = vst [vmem:[%s206 + $0x148] sm:$0xf] %v371
                %v373 = vld [vmem:[%s205 + $0x298] sm:$0xf]
                %374 = vst [vmem:[%s206 + $0x14c] sm:$0xf] %v373
                %v375 = vld [vmem:[%s205 + $0x2a0] sm:$0xf]
                %376 = vst [vmem:[%s206 + $0x150] sm:$0xf] %v375
                %v377 = vld [vmem:[%s205 + $0x2a8] sm:$0xf]
                %378 = vst [vmem:[%s206 + $0x154] sm:$0xf] %v377
                %v379 = vld [vmem:[%s205 + $0x2b0] sm:$0xf]
                %380 = vst [vmem:[%s206 + $0x158] sm:$0xf] %v379
                %v381 = vld [vmem:[%s205 + $0x2b8] sm:$0xf]
                %382 = vst [vmem:[%s206 + $0x15c] sm:$0xf] %v381
                %v383 = vld [vmem:[%s205 + $0x2c0] sm:$0xf]
                %384 = vst [vmem:[%s206 + $0x160] sm:$0xf] %v383
                %v385 = vld [vmem:[%s205 + $0x2c8] sm:$0xf]
                %386 = vst [vmem:[%s206 + $0x164] sm:$0xf] %v385
                %v387 = vld [vmem:[%s205 + $0x2d0] sm:$0xf]
                %388 = vst [vmem:[%s206 + $0x168] sm:$0xf] %v387
                %v389 = vld [vmem:[%s205 + $0x2d8] sm:$0xf]
                %390 = vst [vmem:[%s206 + $0x16c] sm:$0xf] %v389
                %v391 = vld [vmem:[%s205 + $0x2e0] sm:$0xf]
                %392 = vst [vmem:[%s206 + $0x170] sm:$0xf] %v391
                %v393 = vld [vmem:[%s205 + $0x2e8] sm:$0xf]
                %394 = vst [vmem:[%s206 + $0x174] sm:$0xf] %v393
                %v395 = vld [vmem:[%s205 + $0x2f0] sm:$0xf]
                %396 = vst [vmem:[%s206 + $0x178] sm:$0xf] %v395
                %v397 = vld [vmem:[%s205 + $0x2f8] sm:$0xf]
                %398 = vst [vmem:[%s206 + $0x17c] sm:$0xf] %v397
                %v399 = vld [vmem:[%s205 + $0x300] sm:$0xf]
                %400 = vst [vmem:[%s206 + $0x180] sm:$0xf] %v399
                %v401 = vld [vmem:[%s205 + $0x308] sm:$0xf]
                %402 = vst [vmem:[%s206 + $0x184] sm:$0xf] %v401
                %v403 = vld [vmem:[%s205 + $0x310] sm:$0xf]
                %404 = vst [vmem:[%s206 + $0x188] sm:$0xf] %v403
                %v405 = vld [vmem:[%s205 + $0x318] sm:$0xf]
                %406 = vst [vmem:[%s206 + $0x18c] sm:$0xf] %v405
                %v407 = vld [vmem:[%s205 + $0x320] sm:$0xf]
                %408 = vst [vmem:[%s206 + $0x190] sm:$0xf] %v407
                %v409 = vld [vmem:[%s205 + $0x328] sm:$0xf]
                %410 = vst [vmem:[%s206 + $0x194] sm:$0xf] %v409
                %v411 = vld [vmem:[%s205 + $0x330] sm:$0xf]
                %412 = vst [vmem:[%s206 + $0x198] sm:$0xf] %v411
                %v413 = vld [vmem:[%s205 + $0x338] sm:$0xf]
                %414 = vst [vmem:[%s206 + $0x19c] sm:$0xf] %v413
                %v415 = vld [vmem:[%s205 + $0x340] sm:$0xf]
                %416 = vst [vmem:[%s206 + $0x1a0] sm:$0xf] %v415
                %v417 = vld [vmem:[%s205 + $0x348] sm:$0xf]
                %418 = vst [vmem:[%s206 + $0x1a4] sm:$0xf] %v417
                %v419 = vld [vmem:[%s205 + $0x350] sm:$0xf]
                %420 = vst [vmem:[%s206 + $0x1a8] sm:$0xf] %v419
                %v421 = vld [vmem:[%s205 + $0x358] sm:$0xf]
                %422 = vst [vmem:[%s206 + $0x1ac] sm:$0xf] %v421
                %v423 = vld [vmem:[%s205 + $0x360] sm:$0xf]
                %424 = vst [vmem:[%s206 + $0x1b0] sm:$0xf] %v423
                %v425 = vld [vmem:[%s205 + $0x368] sm:$0xf]
                %426 = vst [vmem:[%s206 + $0x1b4] sm:$0xf] %v425
                %v427 = vld [vmem:[%s205 + $0x370] sm:$0xf]
                %428 = vst [vmem:[%s206 + $0x1b8] sm:$0xf] %v427
                %v429 = vld [vmem:[%s205 + $0x378] sm:$0xf]
                %430 = vst [vmem:[%s206 + $0x1bc] sm:$0xf] %v429
                %v431 = vld [vmem:[%s205 + $0x380] sm:$0xf]
                %432 = vst [vmem:[%s206 + $0x1c0] sm:$0xf] %v431
                %v433 = vld [vmem:[%s205 + $0x388] sm:$0xf]
                %434 = vst [vmem:[%s206 + $0x1c4] sm:$0xf] %v433
                %v435 = vld [vmem:[%s205 + $0x390] sm:$0xf]
                %436 = vst [vmem:[%s206 + $0x1c8] sm:$0xf] %v435
                %v437 = vld [vmem:[%s205 + $0x398] sm:$0xf]
                %438 = vst [vmem:[%s206 + $0x1cc] sm:$0xf] %v437
                %v439 = vld [vmem:[%s205 + $0x3a0] sm:$0xf]
                %440 = vst [vmem:[%s206 + $0x1d0] sm:$0xf] %v439
                %v441 = vld [vmem:[%s205 + $0x3a8] sm:$0xf]
                %442 = vst [vmem:[%s206 + $0x1d4] sm:$0xf] %v441
                %v443 = vld [vmem:[%s205 + $0x3b0] sm:$0xf]
                %444 = vst [vmem:[%s206 + $0x1d8] sm:$0xf] %v443
                %v445 = vld [vmem:[%s205 + $0x3b8] sm:$0xf]
                %446 = vst [vmem:[%s206 + $0x1dc] sm:$0xf] %v445
                %v447 = vld [vmem:[%s205 + $0x3c0] sm:$0xf]
                %448 = vst [vmem:[%s206 + $0x1e0] sm:$0xf] %v447
                %v449 = vld [vmem:[%s205 + $0x3c8] sm:$0xf]
                %450 = vst [vmem:[%s206 + $0x1e4] sm:$0xf] %v449
                %v451 = vld [vmem:[%s205 + $0x3d0] sm:$0xf]
                %452 = vst [vmem:[%s206 + $0x1e8] sm:$0xf] %v451
                %v453 = vld [vmem:[%s205 + $0x3d8] sm:$0xf]
                %454 = vst [vmem:[%s206 + $0x1ec] sm:$0xf] %v453
                %v455 = vld [vmem:[%s205 + $0x3e0] sm:$0xf]
                %456 = vst [vmem:[%s206 + $0x1f0] sm:$0xf] %v455
                %v457 = vld [vmem:[%s205 + $0x3e8] sm:$0xf]
                %458 = vst [vmem:[%s206 + $0x1f4] sm:$0xf] %v457
                %v459 = vld [vmem:[%s205 + $0x3f0] sm:$0xf]
                %460 = vst [vmem:[%s206 + $0x1f8] sm:$0xf] %v459
                %v461 = vld [vmem:[%s205 + $0x3f8] sm:$0xf]
                %462 = vst [vmem:[%s206 + $0x1fc] sm:$0xf] %v461
                %v463 = vld [vmem:[%s205 + $0x400] sm:$0xf]
                %464 = vst [vmem:[%s206 + $0x200] sm:$0xf] %v463
                %v465 = vld [vmem:[%s205 + $0x408] sm:$0xf]
                %466 = vst [vmem:[%s206 + $0x204] sm:$0xf] %v465
                %v467 = vld [vmem:[%s205 + $0x410] sm:$0xf]
                %468 = vst [vmem:[%s206 + $0x208] sm:$0xf] %v467
                %v469 = vld [vmem:[%s205 + $0x418] sm:$0xf]
                %470 = vst [vmem:[%s206 + $0x20c] sm:$0xf] %v469
                %v471 = vld [vmem:[%s205 + $0x420] sm:$0xf]
                %472 = vst [vmem:[%s206 + $0x210] sm:$0xf] %v471
                %v473 = vld [vmem:[%s205 + $0x428] sm:$0xf]
                %474 = vst [vmem:[%s206 + $0x214] sm:$0xf] %v473
                %v475 = vld [vmem:[%s205 + $0x430] sm:$0xf]
                %476 = vst [vmem:[%s206 + $0x218] sm:$0xf] %v475
                %v477 = vld [vmem:[%s205 + $0x438] sm:$0xf]
                %478 = vst [vmem:[%s206 + $0x21c] sm:$0xf] %v477
                %v479 = vld [vmem:[%s205 + $0x440] sm:$0xf]
                %480 = vst [vmem:[%s206 + $0x220] sm:$0xf] %v479
                %v481 = vld [vmem:[%s205 + $0x448] sm:$0xf]
                %482 = vst [vmem:[%s206 + $0x224] sm:$0xf] %v481
                %v483 = vld [vmem:[%s205 + $0x450] sm:$0xf]
                %484 = vst [vmem:[%s206 + $0x228] sm:$0xf] %v483
                %v485 = vld [vmem:[%s205 + $0x458] sm:$0xf]
                %486 = vst [vmem:[%s206 + $0x22c] sm:$0xf] %v485
                %v487 = vld [vmem:[%s205 + $0x460] sm:$0xf]
                %488 = vst [vmem:[%s206 + $0x230] sm:$0xf] %v487
                %v489 = vld [vmem:[%s205 + $0x468] sm:$0xf]
                %490 = vst [vmem:[%s206 + $0x234] sm:$0xf] %v489
                %v491 = vld [vmem:[%s205 + $0x470] sm:$0xf]
                %492 = vst [vmem:[%s206 + $0x238] sm:$0xf] %v491
                %v493 = vld [vmem:[%s205 + $0x478] sm:$0xf]
                %494 = vst [vmem:[%s206 + $0x23c] sm:$0xf] %v493
              $region41: #{sphereface_forward.7} parent=35 // loop_footer
                %s204 = sadd.s32 1, %s200
              $region42: #{sphereface_forward.7} parent=35 // loop_footer_branch
                %199 = sbr.rel target = $region38
              $region43: #{sphereface_forward.7} parent=35 // loop_exit
                _
            $region36: #{sphereface_forward.7} parent=27 // pred_fallthru
              _
          $region28: #{sphereface_forward.7} parent=23 // pred_fallthru
            _
          %802 = vnop
        $region24: #{sphereface_forward.7} parent=19 // pred_fallthru
          _
        // Predicated region
        $region62: #{sphereface_forward.7} parent=19 // pred_check
          %p803 = pneg %p94
        $region63: #{sphereface_forward.7} parent=19 // pred_check_branch
          %805 = sbr.rel (%p803) target = $region65
        $region64: #{sphereface_forward.7} parent=19 // pred_region
          %p806 = scmp.lt.s32.totalorder %s18, 1
          %s807 = scalar_select %p806, %s18, 1
          %s808 = scalar_lea.vmem %s2, %s807
        $region65: #{sphereface_forward.7} parent=19 // pred_fallthru
          _
        // Predicated region
        $region66: #{sphereface_forward.7} parent=19 // pred_check
          %p809 = pneg %p120
        $region67: #{sphereface_forward.7} parent=19 // pred_check_branch
          %811 = sbr.rel (%p809) target = $region69
        $region68: #{sphereface_forward.7} parent=19 // pred_region
          %p812 = scmp.lt.s32.totalorder %s18, 1
          %s813 = scalar_select %p812, %s18, 1
          %s814 = scalar_lea.vmem %s3, %s813
        $region69: #{sphereface_forward.7} parent=19 // pred_fallthru
          _
      $region20: #{sphereface_forward.7} parent=5 // pred_fallthru
        _
      %p815 = scmp.le.s32.totalorder 1, %s10
      %p816 = scmp.lt.s32.totalorder %s10, 3
      %p817 = pnand %p815, %p816
      %p818 = pneg %p817
      // Predicated region
      $region70: #{sphereface_forward.7} parent=5 // pred_check
        _
      $region71: #{sphereface_forward.7} parent=5 // pred_check_branch
        %820 = sbr.rel (%p817) target = $region73
      $region72: #{sphereface_forward.7} parent=5 // pred_region
        %s821 = ssub.s32 %s10, 1
        %s822 = sand.u32 %s61, 1
        %s823 = sand.u32 %s61, 1
        %s824 = smul.addr %s823, 576
        %s825 = scalar_lea.vmem [#allocation2], %s824
        // Predicated region
        $region74: #{sphereface_forward.7} parent=72 // pred_check
          %p826 = pneg %p74
        $region75: #{sphereface_forward.7} parent=72 // pred_check_branch
          %828 = sbr.rel (%p826) target = $region77
        $region76: #{sphereface_forward.7} parent=72 // pred_region
          _
        $region77: #{sphereface_forward.7} parent=72 // pred_fallthru
          _
        %s829 = smul.u32 4, %s19
        %p830 = scmp.lt.s32.totalorder %s829, 3
        %s831 = scalar_select %p830, %s829, 3
        %s832 = smul.addr %s831, 9
        %s833 = smul.addr %s832, 4
        %s834 = scalar_lea.vmem %s0, %s833
        %p835 = pneg %p48
        %p836 = pneg %p45
        %s837 = sand.u32 %s61, 1
        %s838 = sand.u32 %s61, 1
        %s839 = smul.addr %s838, 576
        %s840 = scalar_lea.vmem [#allocation2], %s839
        %p841 = pneg %p74
        %p842 = pneg %p71
        %p843 = scmp.lt.s32.totalorder %s20, 1
        %s844 = scalar_select %p843, %s20, 1
        %s845 = scalar_lea.vmem %s2, %s844
        %p846 = pneg %p100
        %p847 = pneg %p97
        %p848 = scmp.lt.s32.totalorder %s20, 1
        %s849 = scalar_select %p848, %s20, 1
        %s850 = scalar_lea.vmem %s3, %s849
        %p851 = pneg %p126
        %p852 = pneg %p123
        %p853 = pneg %p154
        %p854 = pneg %p151
        %s855 = sand.u32 %s141, 1
        %s856 = sand.u32 %s141, 1
        %s857 = smul.addr %s856, 16
        %s858 = scalar_lea.vmem [#allocation3], %s857
        %s859 = smul.u32 4, %s19
        %p860 = scmp.lt.s32.totalorder %s859, 3
        %s861 = scalar_select %p860, %s859, 3
        %s862 = smul.addr %s861, 9
        %s863 = smul.addr %s862, 4
        %s864 = scalar_lea.vmem %s0, %s863
        %s865 = smul.u32 4, %s19
        %p866 = scmp.lt.s32.totalorder %s20, 1
        %s867 = scalar_select %p866, %s20, 1
        %s868 = scalar_lea.vmem %s2, %s867
        %p869 = scmp.lt.s32.totalorder %s20, 1
        %s870 = scalar_select %p869, %s20, 1
        %s871 = scalar_lea.vmem %s3, %s870
        %s872 = smul.u32 4, %s19
        %v874 = vld [vmem:[%s864] sm:$0xff]
        %v875 = vld [vmem:[%s864 + $0x8] sm:$0xff]
        %v876 = vld [vmem:[%s864 + $0x10] sm:$0xff]
        %v877 = vld [vmem:[%s864 + $0x18] sm:$0xff]
        %v878 = vld [vmem:[%s864 + $0x20] sm:$0xf]
        %v879 = vld [vmem:[%s864 + $0x24] sm:$0xff]
        %v880 = vld [vmem:[%s864 + $0x2c] sm:$0xff]
        %v881 = vld [vmem:[%s864 + $0x34] sm:$0xff]
        %v882 = vld [vmem:[%s864 + $0x3c] sm:$0xff]
        %v883 = vld [vmem:[%s864 + $0x44] sm:$0xf]
        %v884 = vld [vmem:[%s864 + $0x48] sm:$0xff]
        %v885 = vld [vmem:[%s864 + $0x50] sm:$0xff]
        %v886 = vld [vmem:[%s864 + $0x58] sm:$0xff]
        %v887 = vld [vmem:[%s864 + $0x60] sm:$0xff]
        %v888 = vld [vmem:[%s864 + $0x68] sm:$0xf]
        %v889 = vld [vmem:[%s864 + $0x6c] sm:$0xff]
        %v890 = vld [vmem:[%s864 + $0x74] sm:$0xff]
        %v891 = vld [vmem:[%s864 + $0x7c] sm:$0xff]
        %v892 = vld [vmem:[%s864 + $0x84] sm:$0xff]
        %v893 = vld [vmem:[%s864 + $0x8c] sm:$0xf]
        %v894 = vld [vmem:[%s825] sm:$0xf]
        %v895 = vld [vmem:[%s825 + $0x4] sm:$0xf]
        %v896 = vld [vmem:[%s825 + $0x8] sm:$0xf]
        %v897 = vld [vmem:[%s825 + $0xc] sm:$0xf]
        %v898 = vld [vmem:[%s825 + $0x10] sm:$0xf]
        %v899 = vld [vmem:[%s825 + $0x14] sm:$0xf]
        %v900 = vld [vmem:[%s825 + $0x18] sm:$0xf]
        %v901 = vld [vmem:[%s825 + $0x1c] sm:$0xf]
        %v902 = vld [vmem:[%s825 + $0x20] sm:$0xf]
        %v903 = vld [vmem:[%s825 + $0x24] sm:$0xf]
        %v904 = vld [vmem:[%s825 + $0x28] sm:$0xf]
        %v905 = vld [vmem:[%s825 + $0x2c] sm:$0xf]
        %v906 = vld [vmem:[%s825 + $0x30] sm:$0xf]
        %v907 = vld [vmem:[%s825 + $0x34] sm:$0xf]
        %v908 = vld [vmem:[%s825 + $0x38] sm:$0xf]
        %v909 = vld [vmem:[%s825 + $0x3c] sm:$0xf]
        %v910 = vld [vmem:[%s825 + $0x40] sm:$0xf]
        %v911 = vld [vmem:[%s825 + $0x44] sm:$0xf]
        %v912 = vld [vmem:[%s825 + $0x48] sm:$0xf]
        %v913 = vld [vmem:[%s825 + $0x4c] sm:$0xf]
        %v914 = vld [vmem:[%s825 + $0x50] sm:$0xf]
        %v915 = vld [vmem:[%s825 + $0x54] sm:$0xf]
        %v916 = vld [vmem:[%s825 + $0x58] sm:$0xf]
        %v917 = vld [vmem:[%s825 + $0x5c] sm:$0xf]
        %v918 = vld [vmem:[%s825 + $0x60] sm:$0xf]
        %v919 = vld [vmem:[%s825 + $0x64] sm:$0xf]
        %v920 = vld [vmem:[%s825 + $0x68] sm:$0xf]
        %v921 = vld [vmem:[%s825 + $0x6c] sm:$0xf]
        %v922 = vld [vmem:[%s825 + $0x70] sm:$0xf]
        %v923 = vld [vmem:[%s825 + $0x74] sm:$0xf]
        %v924 = vld [vmem:[%s825 + $0x78] sm:$0xf]
        %v925 = vld [vmem:[%s825 + $0x7c] sm:$0xf]
        %v926 = vld [vmem:[%s825 + $0x80] sm:$0xf]
        %v927 = vld [vmem:[%s825 + $0x84] sm:$0xf]
        %v928 = vld [vmem:[%s825 + $0x88] sm:$0xf]
        %v929 = vld [vmem:[%s825 + $0x8c] sm:$0xf]
        %v930 = vld [vmem:[%s825 + $0x90] sm:$0xf]
        %v931 = vld [vmem:[%s825 + $0x94] sm:$0xf]
        %v932 = vld [vmem:[%s825 + $0x98] sm:$0xf]
        %v933 = vld [vmem:[%s825 + $0x9c] sm:$0xf]
        %v934 = vld [vmem:[%s825 + $0xa0] sm:$0xf]
        %v935 = vld [vmem:[%s825 + $0xa4] sm:$0xf]
        %v936 = vld [vmem:[%s825 + $0xa8] sm:$0xf]
        %v937 = vld [vmem:[%s825 + $0xac] sm:$0xf]
        %v938 = vld [vmem:[%s825 + $0xb0] sm:$0xf]
        %v939 = vld [vmem:[%s825 + $0xb4] sm:$0xf]
        %v940 = vld [vmem:[%s825 + $0xb8] sm:$0xf]
        %v941 = vld [vmem:[%s825 + $0xbc] sm:$0xf]
        %v942 = vld [vmem:[%s825 + $0xc0] sm:$0xf]
        %v943 = vld [vmem:[%s825 + $0xc4] sm:$0xf]
        %v944 = vld [vmem:[%s825 + $0xc8] sm:$0xf]
        %v945 = vld [vmem:[%s825 + $0xcc] sm:$0xf]
        %v946 = vld [vmem:[%s825 + $0xd0] sm:$0xf]
        %v947 = vld [vmem:[%s825 + $0xd4] sm:$0xf]
        %v948 = vld [vmem:[%s825 + $0xd8] sm:$0xf]
        %v949 = vld [vmem:[%s825 + $0xdc] sm:$0xf]
        %v950 = vld [vmem:[%s825 + $0xe0] sm:$0xf]
        %v951 = vld [vmem:[%s825 + $0xe4] sm:$0xf]
        %v952 = vld [vmem:[%s825 + $0xe8] sm:$0xf]
        %v953 = vld [vmem:[%s825 + $0xec] sm:$0xf]
        %v954 = vld [vmem:[%s825 + $0xf0] sm:$0xf]
        %v955 = vld [vmem:[%s825 + $0xf4] sm:$0xf]
        %v956 = vld [vmem:[%s825 + $0xf8] sm:$0xf]
        %v957 = vld [vmem:[%s825 + $0xfc] sm:$0xf]
        %v958 = vld [vmem:[%s825 + $0x100] sm:$0xf]
        %v959 = vld [vmem:[%s825 + $0x104] sm:$0xf]
        %v960 = vld [vmem:[%s825 + $0x108] sm:$0xf]
        %v961 = vld [vmem:[%s825 + $0x10c] sm:$0xf]
        %v962 = vld [vmem:[%s825 + $0x110] sm:$0xf]
        %v963 = vld [vmem:[%s825 + $0x114] sm:$0xf]
        %v964 = vld [vmem:[%s825 + $0x118] sm:$0xf]
        %v965 = vld [vmem:[%s825 + $0x11c] sm:$0xf]
        %v966 = vld [vmem:[%s825 + $0x120] sm:$0xf]
        %v967 = vld [vmem:[%s825 + $0x124] sm:$0xf]
        %v968 = vld [vmem:[%s825 + $0x128] sm:$0xf]
        %v969 = vld [vmem:[%s825 + $0x12c] sm:$0xf]
        %v970 = vld [vmem:[%s825 + $0x130] sm:$0xf]
        %v971 = vld [vmem:[%s825 + $0x134] sm:$0xf]
        %v972 = vld [vmem:[%s825 + $0x138] sm:$0xf]
        %v973 = vld [vmem:[%s825 + $0x13c] sm:$0xf]
        %v974 = vld [vmem:[%s825 + $0x140] sm:$0xf]
        %v975 = vld [vmem:[%s825 + $0x144] sm:$0xf]
        %v976 = vld [vmem:[%s825 + $0x148] sm:$0xf]
        %v977 = vld [vmem:[%s825 + $0x14c] sm:$0xf]
        %v978 = vld [vmem:[%s825 + $0x150] sm:$0xf]
        %v979 = vld [vmem:[%s825 + $0x154] sm:$0xf]
        %v980 = vld [vmem:[%s825 + $0x158] sm:$0xf]
        %v981 = vld [vmem:[%s825 + $0x15c] sm:$0xf]
        %v982 = vld [vmem:[%s825 + $0x160] sm:$0xf]
        %v983 = vld [vmem:[%s825 + $0x164] sm:$0xf]
        %v984 = vld [vmem:[%s825 + $0x168] sm:$0xf]
        %v985 = vld [vmem:[%s825 + $0x16c] sm:$0xf]
        %v986 = vld [vmem:[%s825 + $0x170] sm:$0xf]
        %v987 = vld [vmem:[%s825 + $0x174] sm:$0xf]
        %v988 = vld [vmem:[%s825 + $0x178] sm:$0xf]
        %v989 = vld [vmem:[%s825 + $0x17c] sm:$0xf]
        %v990 = vld [vmem:[%s825 + $0x180] sm:$0xf]
        %v991 = vld [vmem:[%s825 + $0x184] sm:$0xf]
        %v992 = vld [vmem:[%s825 + $0x188] sm:$0xf]
        %v993 = vld [vmem:[%s825 + $0x18c] sm:$0xf]
        %v994 = vld [vmem:[%s825 + $0x190] sm:$0xf]
        %v995 = vld [vmem:[%s825 + $0x194] sm:$0xf]
        %v996 = vld [vmem:[%s825 + $0x198] sm:$0xf]
        %v997 = vld [vmem:[%s825 + $0x19c] sm:$0xf]
        %v998 = vld [vmem:[%s825 + $0x1a0] sm:$0xf]
        %v999 = vld [vmem:[%s825 + $0x1a4] sm:$0xf]
        %v1000 = vld [vmem:[%s825 + $0x1a8] sm:$0xf]
        %v1001 = vld [vmem:[%s825 + $0x1ac] sm:$0xf]
        %v1002 = vld [vmem:[%s825 + $0x1b0] sm:$0xf]
        %v1003 = vld [vmem:[%s825 + $0x1b4] sm:$0xf]
        %v1004 = vld [vmem:[%s825 + $0x1b8] sm:$0xf]
        %v1005 = vld [vmem:[%s825 + $0x1bc] sm:$0xf]
        %v1006 = vld [vmem:[%s825 + $0x1c0] sm:$0xf]
        %v1007 = vld [vmem:[%s825 + $0x1c4] sm:$0xf]
        %v1008 = vld [vmem:[%s825 + $0x1c8] sm:$0xf]
        %v1009 = vld [vmem:[%s825 + $0x1cc] sm:$0xf]
        %v1010 = vld [vmem:[%s825 + $0x1d0] sm:$0xf]
        %v1011 = vld [vmem:[%s825 + $0x1d4] sm:$0xf]
        %v1012 = vld [vmem:[%s825 + $0x1d8] sm:$0xf]
        %v1013 = vld [vmem:[%s825 + $0x1dc] sm:$0xf]
        %v1014 = vld [vmem:[%s825 + $0x1e0] sm:$0xf]
        %v1015 = vld [vmem:[%s825 + $0x1e4] sm:$0xf]
        %v1016 = vld [vmem:[%s825 + $0x1e8] sm:$0xf]
        %v1017 = vld [vmem:[%s825 + $0x1ec] sm:$0xf]
        %v1018 = vld [vmem:[%s825 + $0x1f0] sm:$0xf]
        %v1019 = vld [vmem:[%s825 + $0x1f4] sm:$0xf]
        %v1020 = vld [vmem:[%s825 + $0x1f8] sm:$0xf]
        %v1021 = vld [vmem:[%s825 + $0x1fc] sm:$0xf]
        %v1022 = vld [vmem:[%s825 + $0x200] sm:$0xf]
        %v1023 = vld [vmem:[%s825 + $0x204] sm:$0xf]
        %v1024 = vld [vmem:[%s825 + $0x208] sm:$0xf]
        %v1025 = vld [vmem:[%s825 + $0x20c] sm:$0xf]
        %v1026 = vld [vmem:[%s825 + $0x210] sm:$0xf]
        %v1027 = vld [vmem:[%s825 + $0x214] sm:$0xf]
        %v1028 = vld [vmem:[%s825 + $0x218] sm:$0xf]
        %v1029 = vld [vmem:[%s825 + $0x21c] sm:$0xf]
        %v1030 = vld [vmem:[%s825 + $0x220] sm:$0xf]
        %v1031 = vld [vmem:[%s825 + $0x224] sm:$0xf]
        %v1032 = vld [vmem:[%s825 + $0x228] sm:$0xf]
        %v1033 = vld [vmem:[%s825 + $0x22c] sm:$0xf]
        %v1034 = vld [vmem:[%s825 + $0x230] sm:$0xf]
        %v1035 = vld [vmem:[%s825 + $0x234] sm:$0xf]
        %v1036 = vld [vmem:[%s825 + $0x238] sm:$0xf]
        %v1037 = vld [vmem:[%s825 + $0x23c] sm:$0xf]
        %v1038 = vld [vmem:[%s868] sm:$0x1]
        %v1040 = vlaneseq
        %v1041 = vshrl.u32 %v1040, 7
        %v1042 = vsub.s32 0, %v1041
        %v1043 = vrot.slane %v1038, %v1042
        %v1065 = vunpack.c.l.b16 %v874
        %v1066 = vunpack.c.h.b16 %v874
        %v1067 = vunpack.c.l.b16 %v875
        %v1068 = vunpack.c.h.b16 %v875
        %v1069 = vunpack.c.l.b16 %v876
        %v1070 = vunpack.c.h.b16 %v876
        %v1071 = vunpack.c.l.b16 %v877
        %v1072 = vunpack.c.h.b16 %v877
        %v1073 = vunpack.c.l.b16 %v878
        %v1074 = vunpack.c.l.b16 %v879
        %v1075 = vunpack.c.h.b16 %v879
        %v1076 = vunpack.c.l.b16 %v880
        %v1077 = vunpack.c.h.b16 %v880
        %v1078 = vunpack.c.l.b16 %v881
        %v1079 = vunpack.c.h.b16 %v881
        %v1080 = vunpack.c.l.b16 %v882
        %v1081 = vunpack.c.h.b16 %v882
        %v1082 = vunpack.c.l.b16 %v883
        %v1083 = vunpack.c.l.b16 %v884
        %v1084 = vunpack.c.h.b16 %v884
        %v1085 = vunpack.c.l.b16 %v885
        %v1086 = vunpack.c.h.b16 %v885
        %v1087 = vunpack.c.l.b16 %v886
        %v1088 = vunpack.c.h.b16 %v886
        %v1089 = vunpack.c.l.b16 %v887
        %v1090 = vunpack.c.h.b16 %v887
        %v1091 = vunpack.c.l.b16 %v888
        %v1092 = vunpack.c.l.b16 %v889
        %v1093 = vunpack.c.h.b16 %v889
        %v1094 = vunpack.c.l.b16 %v890
        %v1095 = vunpack.c.h.b16 %v890
        %v1096 = vunpack.c.l.b16 %v891
        %v1097 = vunpack.c.h.b16 %v891
        %v1098 = vunpack.c.l.b16 %v892
        %v1099 = vunpack.c.h.b16 %v892
        %v1100 = vunpack.c.l.b16 %v893
        %v1101 = vpack.c.b16 %v1074, %v1065
        %v1102 = vpack.c.b16 %v1075, %v1066
        %v1103 = vpack.c.b16 %v1076, %v1067
        %v1104 = vpack.c.b16 %v1077, %v1068
        %v1105 = vpack.c.b16 %v1078, %v1069
        %v1106 = vpack.c.b16 %v1079, %v1070
        %v1107 = vpack.c.b16 %v1080, %v1071
        %v1108 = vpack.c.b16 %v1081, %v1072
        %v1109 = vpack.c.b16 %v1082, %v1073
        %v1110 = vpack.c.b16 %v1092, %v1083
        %v1111 = vpack.c.b16 %v1093, %v1084
        %v1112 = vpack.c.b16 %v1094, %v1085
        %v1113 = vpack.c.b16 %v1095, %v1086
        %v1114 = vpack.c.b16 %v1096, %v1087
        %v1115 = vpack.c.b16 %v1097, %v1088
        %v1116 = vpack.c.b16 %v1098, %v1089
        %v1117 = vpack.c.b16 %v1099, %v1090
        %v1118 = vpack.c.b16 %v1100, %v1091
        %v1281 = vunpack.c.l.b16 %v894
        %v1282 = vunpack.c.l.b16 %v895
        %v1283 = vunpack.c.l.b16 %v896
        %v1284 = vunpack.c.l.b16 %v897
        %v1285 = vunpack.c.l.b16 %v898
        %v1286 = vunpack.c.l.b16 %v899
        %v1287 = vunpack.c.l.b16 %v900
        %v1288 = vunpack.c.l.b16 %v901
        %v1289 = vunpack.c.l.b16 %v902
        %v1290 = vunpack.c.l.b16 %v903
        %v1291 = vunpack.c.l.b16 %v904
        %v1292 = vunpack.c.l.b16 %v905
        %v1293 = vunpack.c.l.b16 %v906
        %v1294 = vunpack.c.l.b16 %v907
        %v1295 = vunpack.c.l.b16 %v908
        %v1296 = vunpack.c.l.b16 %v909
        %v1297 = vunpack.c.l.b16 %v910
        %v1298 = vunpack.c.l.b16 %v911
        %v1299 = vunpack.c.l.b16 %v912
        %v1300 = vunpack.c.l.b16 %v913
        %v1301 = vunpack.c.l.b16 %v914
        %v1302 = vunpack.c.l.b16 %v915
        %v1303 = vunpack.c.l.b16 %v916
        %v1304 = vunpack.c.l.b16 %v917
        %v1305 = vunpack.c.l.b16 %v918
        %v1306 = vunpack.c.l.b16 %v919
        %v1307 = vunpack.c.l.b16 %v920
        %v1308 = vunpack.c.l.b16 %v921
        %v1309 = vunpack.c.l.b16 %v922
        %v1310 = vunpack.c.l.b16 %v923
        %v1311 = vunpack.c.l.b16 %v924
        %v1312 = vunpack.c.l.b16 %v925
        %v1313 = vunpack.c.l.b16 %v926
        %v1314 = vunpack.c.l.b16 %v927
        %v1315 = vunpack.c.l.b16 %v928
        %v1316 = vunpack.c.l.b16 %v929
        %v1317 = vunpack.c.l.b16 %v930
        %v1318 = vunpack.c.l.b16 %v931
        %v1319 = vunpack.c.l.b16 %v932
        %v1320 = vunpack.c.l.b16 %v933
        %v1321 = vunpack.c.l.b16 %v934
        %v1322 = vunpack.c.l.b16 %v935
        %v1323 = vunpack.c.l.b16 %v936
        %v1324 = vunpack.c.l.b16 %v937
        %v1325 = vunpack.c.l.b16 %v938
        %v1326 = vunpack.c.l.b16 %v939
        %v1327 = vunpack.c.l.b16 %v940
        %v1328 = vunpack.c.l.b16 %v941
        %v1329 = vunpack.c.l.b16 %v942
        %v1330 = vunpack.c.l.b16 %v943
        %v1331 = vunpack.c.l.b16 %v944
        %v1332 = vunpack.c.l.b16 %v945
        %v1333 = vunpack.c.l.b16 %v946
        %v1334 = vunpack.c.l.b16 %v947
        %v1335 = vunpack.c.l.b16 %v948
        %v1336 = vunpack.c.l.b16 %v949
        %v1337 = vunpack.c.l.b16 %v950
        %v1338 = vunpack.c.l.b16 %v951
        %v1339 = vunpack.c.l.b16 %v952
        %v1340 = vunpack.c.l.b16 %v953
        %v1341 = vunpack.c.l.b16 %v954
        %v1342 = vunpack.c.l.b16 %v955
        %v1343 = vunpack.c.l.b16 %v956
        %v1344 = vunpack.c.l.b16 %v957
        %v1345 = vunpack.c.l.b16 %v958
        %v1346 = vunpack.c.l.b16 %v959
        %v1347 = vunpack.c.l.b16 %v960
        %v1348 = vunpack.c.l.b16 %v961
        %v1349 = vunpack.c.l.b16 %v962
        %v1350 = vunpack.c.l.b16 %v963
        %v1351 = vunpack.c.l.b16 %v964
        %v1352 = vunpack.c.l.b16 %v965
        %v1353 = vunpack.c.l.b16 %v966
        %v1354 = vunpack.c.l.b16 %v967
        %v1355 = vunpack.c.l.b16 %v968
        %v1356 = vunpack.c.l.b16 %v969
        %v1357 = vunpack.c.l.b16 %v970
        %v1358 = vunpack.c.l.b16 %v971
        %v1359 = vunpack.c.l.b16 %v972
        %v1360 = vunpack.c.l.b16 %v973
        %v1361 = vunpack.c.l.b16 %v974
        %v1362 = vunpack.c.l.b16 %v975
        %v1363 = vunpack.c.l.b16 %v976
        %v1364 = vunpack.c.l.b16 %v977
        %v1365 = vunpack.c.l.b16 %v978
        %v1366 = vunpack.c.l.b16 %v979
        %v1367 = vunpack.c.l.b16 %v980
        %v1368 = vunpack.c.l.b16 %v981
        %v1369 = vunpack.c.l.b16 %v982
        %v1370 = vunpack.c.l.b16 %v983
        %v1371 = vunpack.c.l.b16 %v984
        %v1372 = vunpack.c.l.b16 %v985
        %v1373 = vunpack.c.l.b16 %v986
        %v1374 = vunpack.c.l.b16 %v987
        %v1375 = vunpack.c.l.b16 %v988
        %v1376 = vunpack.c.l.b16 %v989
        %v1377 = vunpack.c.l.b16 %v990
        %v1378 = vunpack.c.l.b16 %v991
        %v1379 = vunpack.c.l.b16 %v992
        %v1380 = vunpack.c.l.b16 %v993
        %v1381 = vunpack.c.l.b16 %v994
        %v1382 = vunpack.c.l.b16 %v995
        %v1383 = vunpack.c.l.b16 %v996
        %v1384 = vunpack.c.l.b16 %v997
        %v1385 = vunpack.c.l.b16 %v998
        %v1386 = vunpack.c.l.b16 %v999
        %v1387 = vunpack.c.l.b16 %v1000
        %v1388 = vunpack.c.l.b16 %v1001
        %v1389 = vunpack.c.l.b16 %v1002
        %v1390 = vunpack.c.l.b16 %v1003
        %v1391 = vunpack.c.l.b16 %v1004
        %v1392 = vunpack.c.l.b16 %v1005
        %v1393 = vunpack.c.l.b16 %v1006
        %v1394 = vunpack.c.l.b16 %v1007
        %v1395 = vunpack.c.l.b16 %v1008
        %v1396 = vunpack.c.l.b16 %v1009
        %v1397 = vunpack.c.l.b16 %v1010
        %v1398 = vunpack.c.l.b16 %v1011
        %v1399 = vunpack.c.l.b16 %v1012
        %v1400 = vunpack.c.l.b16 %v1013
        %v1401 = vunpack.c.l.b16 %v1014
        %v1402 = vunpack.c.l.b16 %v1015
        %v1403 = vunpack.c.l.b16 %v1016
        %v1404 = vunpack.c.l.b16 %v1017
        %v1405 = vunpack.c.l.b16 %v1018
        %v1406 = vunpack.c.l.b16 %v1019
        %v1407 = vunpack.c.l.b16 %v1020
        %v1408 = vunpack.c.l.b16 %v1021
        %v1409 = vunpack.c.l.b16 %v1022
        %v1410 = vunpack.c.l.b16 %v1023
        %v1411 = vunpack.c.l.b16 %v1024
        %v1412 = vunpack.c.l.b16 %v1025
        %v1413 = vunpack.c.l.b16 %v1026
        %v1414 = vunpack.c.l.b16 %v1027
        %v1415 = vunpack.c.l.b16 %v1028
        %v1416 = vunpack.c.l.b16 %v1029
        %v1417 = vunpack.c.l.b16 %v1030
        %v1418 = vunpack.c.l.b16 %v1031
        %v1419 = vunpack.c.l.b16 %v1032
        %v1420 = vunpack.c.l.b16 %v1033
        %v1421 = vunpack.c.l.b16 %v1034
        %v1422 = vunpack.c.l.b16 %v1035
        %v1423 = vunpack.c.l.b16 %v1036
        %v1424 = vunpack.c.l.b16 %v1037
        %v1425 = vpack.c.b16 %v1282, %v1281
        %v1426 = vpack.c.b16 %v1284, %v1283
        %v1427 = vpack.c.b16 %v1286, %v1285
        %v1428 = vpack.c.b16 %v1288, %v1287
        %v1429 = vpack.c.b16 %v1290, %v1289
        %v1430 = vpack.c.b16 %v1292, %v1291
        %v1431 = vpack.c.b16 %v1294, %v1293
        %v1432 = vpack.c.b16 %v1296, %v1295
        %v1433 = vpack.c.b16 %v1298, %v1297
        %v1434 = vpack.c.b16 %v1300, %v1299
        %v1435 = vpack.c.b16 %v1302, %v1301
        %v1436 = vpack.c.b16 %v1304, %v1303
        %v1437 = vpack.c.b16 %v1306, %v1305
        %v1438 = vpack.c.b16 %v1308, %v1307
        %v1439 = vpack.c.b16 %v1310, %v1309
        %v1440 = vpack.c.b16 %v1312, %v1311
        %v1441 = vpack.c.b16 %v1314, %v1313
        %v1442 = vpack.c.b16 %v1316, %v1315
        %v1443 = vpack.c.b16 %v1318, %v1317
        %v1444 = vpack.c.b16 %v1320, %v1319
        %v1445 = vpack.c.b16 %v1322, %v1321
        %v1446 = vpack.c.b16 %v1324, %v1323
        %v1447 = vpack.c.b16 %v1326, %v1325
        %v1448 = vpack.c.b16 %v1328, %v1327
        %v1449 = vpack.c.b16 %v1330, %v1329
        %v1450 = vpack.c.b16 %v1332, %v1331
        %v1451 = vpack.c.b16 %v1334, %v1333
        %v1452 = vpack.c.b16 %v1336, %v1335
        %v1453 = vpack.c.b16 %v1338, %v1337
        %v1454 = vpack.c.b16 %v1340, %v1339
        %v1455 = vpack.c.b16 %v1342, %v1341
        %v1456 = vpack.c.b16 %v1344, %v1343
        %v1457 = vpack.c.b16 %v1346, %v1345
        %v1458 = vpack.c.b16 %v1348, %v1347
        %v1459 = vpack.c.b16 %v1350, %v1349
        %v1460 = vpack.c.b16 %v1352, %v1351
        %v1461 = vpack.c.b16 %v1354, %v1353
        %v1462 = vpack.c.b16 %v1356, %v1355
        %v1463 = vpack.c.b16 %v1358, %v1357
        %v1464 = vpack.c.b16 %v1360, %v1359
        %v1465 = vpack.c.b16 %v1362, %v1361
        %v1466 = vpack.c.b16 %v1364, %v1363
        %v1467 = vpack.c.b16 %v1366, %v1365
        %v1468 = vpack.c.b16 %v1368, %v1367
        %v1469 = vpack.c.b16 %v1370, %v1369
        %v1470 = vpack.c.b16 %v1372, %v1371
        %v1471 = vpack.c.b16 %v1374, %v1373
        %v1472 = vpack.c.b16 %v1376, %v1375
        %v1473 = vpack.c.b16 %v1378, %v1377
        %v1474 = vpack.c.b16 %v1380, %v1379
        %v1475 = vpack.c.b16 %v1382, %v1381
        %v1476 = vpack.c.b16 %v1384, %v1383
        %v1477 = vpack.c.b16 %v1386, %v1385
        %v1478 = vpack.c.b16 %v1388, %v1387
        %v1479 = vpack.c.b16 %v1390, %v1389
        %v1480 = vpack.c.b16 %v1392, %v1391
        %v1481 = vpack.c.b16 %v1394, %v1393
        %v1482 = vpack.c.b16 %v1396, %v1395
        %v1483 = vpack.c.b16 %v1398, %v1397
        %v1484 = vpack.c.b16 %v1400, %v1399
        %v1485 = vpack.c.b16 %v1402, %v1401
        %v1486 = vpack.c.b16 %v1404, %v1403
        %v1487 = vpack.c.b16 %v1406, %v1405
        %v1488 = vpack.c.b16 %v1408, %v1407
        %v1489 = vpack.c.b16 %v1410, %v1409
        %v1490 = vpack.c.b16 %v1412, %v1411
        %v1491 = vpack.c.b16 %v1414, %v1413
        %v1492 = vpack.c.b16 %v1416, %v1415
        %v1493 = vpack.c.b16 %v1418, %v1417
        %v1494 = vpack.c.b16 %v1420, %v1419
        %v1495 = vpack.c.b16 %v1422, %v1421
        %v1496 = vpack.c.b16 %v1424, %v1423
        %1569 = vmatprep.subr.bf16.mxu0 0
        %1570 = vmatpush1.bf16.msra.mxu0 %v1425
        %1571 = vmatprep.subr.bf16.mxu0 0
        %1572 = vmatpush1.bf16.msra.mxu0 %v1426
        %1573 = vmatprep.subr.bf16.mxu0 0
        %1574 = vmatpush1.bf16.msra.mxu0 %v1427
        %1575 = vmatprep.subr.bf16.mxu0 0
        %1576 = vmatpush1.bf16.msra.mxu0 %v1428
        %1577 = vmatprep.subr.bf16.mxu0 0
        %1578 = vmatpush1.bf16.msra.mxu0 %v1429
        %1579 = vmatprep.subr.bf16.mxu0 0
        %1580 = vmatpush1.bf16.msra.mxu0 %v1430
        %1581 = vmatprep.subr.bf16.mxu0 0
        %1582 = vmatpush1.bf16.msra.mxu0 %v1431
        %1583 = vmatprep.subr.bf16.mxu0 0
        %1584 = vmatpush1.bf16.msra.mxu0 %v1432
        %1585 = vmatprep.subr.bf16.mxu0 0
        %1586 = vmatpush1.bf16.msra.mxu0 %v1433
        %1587 = vmatprep.subr.bf16.mxu0 0
        %1588 = vmatpush1.bf16.msra.mxu0 %v1434
        %1589 = vmatprep.subr.bf16.mxu0 0
        %1590 = vmatpush1.bf16.msra.mxu0 %v1435
        %1591 = vmatprep.subr.bf16.mxu0 0
        %1592 = vmatpush1.bf16.msra.mxu0 %v1436
        %1593 = vmatprep.subr.bf16.mxu0 0
        %1594 = vmatpush1.bf16.msra.mxu0 %v1437
        %1595 = vmatprep.subr.bf16.mxu0 0
        %1596 = vmatpush1.bf16.msra.mxu0 %v1438
        %1597 = vmatprep.subr.bf16.mxu0 0
        %1598 = vmatpush1.bf16.msra.mxu0 %v1439
        %1599 = vmatprep.subr.bf16.mxu0 0
        %1600 = vmatpush1.bf16.msra.mxu0 %v1440
        %1601 = vmatprep.mubr.bf16.mxu0 %v1102
        %1602 = vmatmul.mubr.bf16.gmra.mrb[0].mxu0 %v1101
        %v1603 = vpop.f32.mrb[0].mxu0
        %v1604 = vadd.f32 %v1043, %v1603
        %v1605 = vpop.f32.mrb[0].mxu0
        %v1606 = vpop.f32.mrb[0].mxu0
        %v1607 = vadd.f32 %v1043, %v1606
        %v1608 = vpop.f32.mrb[0].mxu0
        %1609 = vmatprep.mubr.bf16.mxu0 %v1111
        %1610 = vmatmul.mubr.bf16.gmra.mrb[0].mxu0 %v1110
        %v1611 = vpop.f32.mrb[0].mxu0
        %v1612 = vadd.f32 %v1043, %v1611
        %v1613 = vpop.f32.mrb[0].mxu0
        %v1614 = vpop.f32.mrb[0].mxu0
        %v1615 = vadd.f32 %v1043, %v1614
        %v1616 = vpop.f32.mrb[0].mxu0
        %1617 = vdwg.mxu0
        %1618 = vmatprep.subr.bf16.mxu0 0
        %1619 = vmatpush1.bf16.msra.mxu0 %v1441
        %1620 = vmatprep.subr.bf16.mxu0 0
        %1621 = vmatpush1.bf16.msra.mxu0 %v1442
        %1622 = vmatprep.subr.bf16.mxu0 0
        %1623 = vmatpush1.bf16.msra.mxu0 %v1443
        %1624 = vmatprep.subr.bf16.mxu0 0
        %1625 = vmatpush1.bf16.msra.mxu0 %v1444
        %1626 = vmatprep.subr.bf16.mxu0 0
        %1627 = vmatpush1.bf16.msra.mxu0 %v1445
        %1628 = vmatprep.subr.bf16.mxu0 0
        %1629 = vmatpush1.bf16.msra.mxu0 %v1446
        %1630 = vmatprep.subr.bf16.mxu0 0
        %1631 = vmatpush1.bf16.msra.mxu0 %v1447
        %1632 = vmatprep.subr.bf16.mxu0 0
        %1633 = vmatpush1.bf16.msra.mxu0 %v1448
        %1634 = vmatprep.subr.bf16.mxu0 0
        %1635 = vmatpush1.bf16.msra.mxu0 %v1449
        %1636 = vmatprep.subr.bf16.mxu0 0
        %1637 = vmatpush1.bf16.msra.mxu0 %v1450
        %1638 = vmatprep.subr.bf16.mxu0 0
        %1639 = vmatpush1.bf16.msra.mxu0 %v1451
        %1640 = vmatprep.subr.bf16.mxu0 0
        %1641 = vmatpush1.bf16.msra.mxu0 %v1452
        %1642 = vmatprep.subr.bf16.mxu0 0
        %1643 = vmatpush1.bf16.msra.mxu0 %v1453
        %1644 = vmatprep.subr.bf16.mxu0 0
        %1645 = vmatpush1.bf16.msra.mxu0 %v1454
        %1646 = vmatprep.subr.bf16.mxu0 0
        %1647 = vmatpush1.bf16.msra.mxu0 %v1455
        %1648 = vmatprep.subr.bf16.mxu0 0
        %1649 = vmatpush1.bf16.msra.mxu0 %v1456
        %1650 = vmatprep.mubr.bf16.mxu0 %v1104
        %1651 = vmatmul.mubr.bf16.gmra.mrb[0].mxu0 %v1103
        %v1652 = vpop.f32.mrb[0].mxu0
        %v1653 = vadd.f32 %v1604, %v1652
        %v1654 = vpop.f32.mrb[0].mxu0
        %v1655 = vpop.f32.mrb[0].mxu0
        %v1656 = vadd.f32 %v1607, %v1655
        %v1657 = vpop.f32.mrb[0].mxu0
        %1658 = vmatprep.mubr.bf16.mxu0 %v1113
        %1659 = vmatmul.mubr.bf16.gmra.mrb[0].mxu0 %v1112
        %v1660 = vpop.f32.mrb[0].mxu0
        %v1661 = vadd.f32 %v1612, %v1660
        %v1662 = vpop.f32.mrb[0].mxu0
        %v1663 = vpop.f32.mrb[0].mxu0
        %v1664 = vadd.f32 %v1615, %v1663
        %v1665 = vpop.f32.mrb[0].mxu0
        %1666 = vdwg.mxu0
        %1667 = vmatprep.subr.bf16.mxu0 0
        %1668 = vmatpush1.bf16.msra.mxu0 %v1457
        %1669 = vmatprep.subr.bf16.mxu0 0
        %1670 = vmatpush1.bf16.msra.mxu0 %v1458
        %1671 = vmatprep.subr.bf16.mxu0 0
        %1672 = vmatpush1.bf16.msra.mxu0 %v1459
        %1673 = vmatprep.subr.bf16.mxu0 0
        %1674 = vmatpush1.bf16.msra.mxu0 %v1460
        %1675 = vmatprep.subr.bf16.mxu0 0
        %1676 = vmatpush1.bf16.msra.mxu0 %v1461
        %1677 = vmatprep.subr.bf16.mxu0 0
        %1678 = vmatpush1.bf16.msra.mxu0 %v1462
        %1679 = vmatprep.subr.bf16.mxu0 0
        %1680 = vmatpush1.bf16.msra.mxu0 %v1463
        %1681 = vmatprep.subr.bf16.mxu0 0
        %1682 = vmatpush1.bf16.msra.mxu0 %v1464
        %1683 = vmatprep.subr.bf16.mxu0 0
        %1684 = vmatpush1.bf16.msra.mxu0 %v1465
        %1685 = vmatprep.subr.bf16.mxu0 0
        %1686 = vmatpush1.bf16.msra.mxu0 %v1466
        %1687 = vmatprep.subr.bf16.mxu0 0
        %1688 = vmatpush1.bf16.msra.mxu0 %v1467
        %1689 = vmatprep.subr.bf16.mxu0 0
        %1690 = vmatpush1.bf16.msra.mxu0 %v1468
        %1691 = vmatprep.subr.bf16.mxu0 0
        %1692 = vmatpush1.bf16.msra.mxu0 %v1469
        %1693 = vmatprep.subr.bf16.mxu0 0
        %1694 = vmatpush1.bf16.msra.mxu0 %v1470
        %1695 = vmatprep.subr.bf16.mxu0 0
        %1696 = vmatpush1.bf16.msra.mxu0 %v1471
        %1697 = vmatprep.subr.bf16.mxu0 0
        %1698 = vmatpush1.bf16.msra.mxu0 %v1472
        %1699 = vmatprep.mubr.bf16.mxu0 %v1106
        %1700 = vmatmul.mubr.bf16.gmra.mrb[0].mxu0 %v1105
        %v1701 = vpop.f32.mrb[0].mxu0
        %v1702 = vadd.f32 %v1653, %v1701
        %v1703 = vpop.f32.mrb[0].mxu0
        %v1704 = vpop.f32.mrb[0].mxu0
        %v1705 = vadd.f32 %v1656, %v1704
        %v1706 = vpop.f32.mrb[0].mxu0
        %1707 = vmatprep.mubr.bf16.mxu0 %v1115
        %1708 = vmatmul.mubr.bf16.gmra.mrb[0].mxu0 %v1114
        %v1709 = vpop.f32.mrb[0].mxu0
        %v1710 = vadd.f32 %v1661, %v1709
        %v1711 = vpop.f32.mrb[0].mxu0
        %v1712 = vpop.f32.mrb[0].mxu0
        %v1713 = vadd.f32 %v1664, %v1712
        %v1714 = vpop.f32.mrb[0].mxu0
        %1715 = vdwg.mxu0
        %1716 = vmatprep.subr.bf16.mxu0 0
        %1717 = vmatpush1.bf16.msra.mxu0 %v1473
        %1718 = vmatprep.subr.bf16.mxu0 0
        %1719 = vmatpush1.bf16.msra.mxu0 %v1474
        %1720 = vmatprep.subr.bf16.mxu0 0
        %1721 = vmatpush1.bf16.msra.mxu0 %v1475
        %1722 = vmatprep.subr.bf16.mxu0 0
        %1723 = vmatpush1.bf16.msra.mxu0 %v1476
        %1724 = vmatprep.subr.bf16.mxu0 0
        %1725 = vmatpush1.bf16.msra.mxu0 %v1477
        %1726 = vmatprep.subr.bf16.mxu0 0
        %1727 = vmatpush1.bf16.msra.mxu0 %v1478
        %1728 = vmatprep.subr.bf16.mxu0 0
        %1729 = vmatpush1.bf16.msra.mxu0 %v1479
        %1730 = vmatprep.subr.bf16.mxu0 0
        %1731 = vmatpush1.bf16.msra.mxu0 %v1480
        %1732 = vmatprep.subr.bf16.mxu0 0
        %1733 = vmatpush1.bf16.msra.mxu0 %v1481
        %1734 = vmatprep.subr.bf16.mxu0 0
        %1735 = vmatpush1.bf16.msra.mxu0 %v1482
        %1736 = vmatprep.subr.bf16.mxu0 0
        %1737 = vmatpush1.bf16.msra.mxu0 %v1483
        %1738 = vmatprep.subr.bf16.mxu0 0
        %1739 = vmatpush1.bf16.msra.mxu0 %v1484
        %1740 = vmatprep.subr.bf16.mxu0 0
        %1741 = vmatpush1.bf16.msra.mxu0 %v1485
        %1742 = vmatprep.subr.bf16.mxu0 0
        %1743 = vmatpush1.bf16.msra.mxu0 %v1486
        %1744 = vmatprep.subr.bf16.mxu0 0
        %1745 = vmatpush1.bf16.msra.mxu0 %v1487
        %1746 = vmatprep.subr.bf16.mxu0 0
        %1747 = vmatpush1.bf16.msra.mxu0 %v1488
        %1748 = vmatprep.mubr.bf16.mxu0 %v1108
        %1749 = vmatmul.mubr.bf16.gmra.mrb[0].mxu0 %v1107
        %v1750 = vpop.f32.mrb[0].mxu0
        %v1751 = vadd.f32 %v1702, %v1750
        %v1752 = vpop.f32.mrb[0].mxu0
        %v1753 = vpop.f32.mrb[0].mxu0
        %v1754 = vadd.f32 %v1705, %v1753
        %v1755 = vpop.f32.mrb[0].mxu0
        %1756 = vmatprep.mubr.bf16.mxu0 %v1117
        %1757 = vmatmul.mubr.bf16.gmra.mrb[0].mxu0 %v1116
        %v1758 = vpop.f32.mrb[0].mxu0
        %v1759 = vadd.f32 %v1710, %v1758
        %v1760 = vpop.f32.mrb[0].mxu0
        %v1761 = vpop.f32.mrb[0].mxu0
        %v1762 = vadd.f32 %v1713, %v1761
        %v1763 = vpop.f32.mrb[0].mxu0
        %1764 = vdwg.mxu0
        %1765 = vmatprep.subr.bf16.mxu0 0
        %1766 = vmatpush1.bf16.msra.mxu0 %v1489
        %1767 = vmatprep.subr.bf16.mxu0 0
        %1768 = vmatpush1.bf16.msra.mxu0 %v1490
        %1769 = vmatprep.subr.bf16.mxu0 0
        %1770 = vmatpush1.bf16.msra.mxu0 %v1491
        %1771 = vmatprep.subr.bf16.mxu0 0
        %1772 = vmatpush1.bf16.msra.mxu0 %v1492
        %1773 = vmatprep.subr.bf16.mxu0 0
        %1774 = vmatpush1.bf16.msra.mxu0 %v1493
        %1775 = vmatprep.subr.bf16.mxu0 0
        %1776 = vmatpush1.bf16.msra.mxu0 %v1494
        %1777 = vmatprep.subr.bf16.mxu0 0
        %1778 = vmatpush1.bf16.msra.mxu0 %v1495
        %1779 = vmatprep.subr.bf16.mxu0 0
        %1780 = vmatpush1.bf16.msra.mxu0 %v1496
        %1781 = vmatprep.subr.bf16.mxu0 0
        %1782 = vmatpush1.bf16.msra.mxu0 0
        %1783 = vmatprep.subr.bf16.mxu0 0
        %1784 = vmatpush1.bf16.msra.mxu0 0
        %1785 = vmatprep.subr.bf16.mxu0 0
        %1786 = vmatpush1.bf16.msra.mxu0 0
        %1787 = vmatprep.subr.bf16.mxu0 0
        %1788 = vmatpush1.bf16.msra.mxu0 0
        %1789 = vmatprep.subr.bf16.mxu0 0
        %1790 = vmatpush1.bf16.msra.mxu0 0
        %1791 = vmatprep.subr.bf16.mxu0 0
        %1792 = vmatpush1.bf16.msra.mxu0 0
        %1793 = vmatprep.subr.bf16.mxu0 0
        %1794 = vmatpush1.bf16.msra.mxu0 0
        %1795 = vmatprep.subr.bf16.mxu0 0
        %1796 = vmatpush1.bf16.msra.mxu0 0
        %1797 = vmatprep.mubr.bf16.mxu0 0
        %1798 = vmatmul.mubr.bf16.gmra.mrb[0].mxu0 %v1109
        %v1799 = vpop.f32.mrb[0].mxu0
        %v1800 = vadd.f32 %v1751, %v1799
        %v1801 = vpop.f32.mrb[0].mxu0
        %v1802 = vpop.f32.mrb[0].mxu0
        %v1803 = vadd.f32 %v1754, %v1802
        %v1804 = vpop.f32.mrb[0].mxu0
        %1805 = vmatprep.mubr.bf16.mxu0 0
        %1806 = vmatmul.mubr.bf16.gmra.mrb[0].mxu0 %v1118
        %v1807 = vpop.f32.mrb[0].mxu0
        %v1808 = vadd.f32 %v1759, %v1807
        %v1809 = vpop.f32.mrb[0].mxu0
        %v1810 = vpop.f32.mrb[0].mxu0
        %v1811 = vadd.f32 %v1762, %v1810
        %v1812 = vpop.f32.mrb[0].mxu0
        %1813 = vdwg.mxu0
        %v1814 = vld [vmem:[%s871] sm:$0x1]
        %vm1815 = vcmp.ge.f32.partialorder %v1800, 0.0
        %vm1816 = vcmp.ge.f32.partialorder %v1803, 0.0
        %vm1817 = vcmp.ge.f32.partialorder %v1808, 0.0
        %vm1818 = vcmp.ge.f32.partialorder %v1811, 0.0
        %v1820 = vlaneseq
        %v1821 = vshrl.u32 %v1820, 7
        %v1822 = vsub.s32 0, %v1821
        %v1823 = vrot.slane %v1814, %v1822
        %v1825 = vmul.f32 %v1823, %v1800
        %v1826 = vmul.f32 %v1823, %v1803
        %v1827 = vmul.f32 %v1823, %v1808
        %v1828 = vmul.f32 %v1823, %v1811
        %v1829 = vsel %vm1815, %v1800, %v1825
        %v1830 = vsel %vm1816, %v1803, %v1826
        %v1831 = vsel %vm1817, %v1808, %v1827
        %v1832 = vsel %vm1818, %v1811, %v1828
        %v1833 = vpack.c.bf16 %v1830, %v1829
        %v1834 = vpack.c.bf16 %v1832, %v1831
        %v1837 = vunpack.c.l.b16 %v1833
        %v1838 = vunpack.c.h.b16 %v1833
        %v1839 = vunpack.c.l.b16 %v1834
        %v1840 = vunpack.c.h.b16 %v1834
        %v1841 = vpack.c.b16 %v1837, %v1837
        %v1842 = vpack.c.b16 %v1838, %v1838
        %v1843 = vpack.c.b16 %v1839, %v1839
        %v1844 = vpack.c.b16 %v1840, %v1840
        %1849 = vst [vmem:[%s858] sm:$0xf] %v1841
        %1850 = vst [vmem:[%s858 + $0x4] sm:$0xf] %v1842
        %1851 = vst [vmem:[%s858 + $0x8] sm:$0xf] %v1843
        %1852 = vst [vmem:[%s858 + $0xc] sm:$0xf] %v1844
        %s1853 = sand.u32 %s141, 1
        %s1854 = sand.u32 %s141, 1
        %s1855 = smul.addr %s1854, 16
        %s1856 = scalar_lea.vmem [#allocation3], %s1855
        // Predicated region
        $region78: #{sphereface_forward.7} parent=72 // pred_check
          %p1857 = pneg %p151
        $region79: #{sphereface_forward.7} parent=72 // pred_check_branch
          %1859 = sbr.rel (%p1857) target = $region81
        $region80: #{sphereface_forward.7} parent=72 // pred_region
          %s1860 = smul.u32 4, %s19
          %s1861 = smul.addr %s1860, 2
          %s1862 = sadd.s32 %s20, %s1861
          %s1863 = smul.addr %s1862, 4
          %s1864 = scalar_lea.vmem %s4, %s1863
          // Predicated region
          $region82: #{sphereface_forward.7} parent=80 // pred_check
            _
          $region83: #{sphereface_forward.7} parent=80 // pred_check_branch
            %1866 = sbr.rel (0) target = $region85
          $region84: #{sphereface_forward.7} parent=80 // pred_region
            // Predicated region
            $region86: #{sphereface_forward.7} parent=84 // pred_check
              _
            $region87: #{sphereface_forward.7} parent=84 // pred_check_branch
              %1868 = sbr.rel target = $region89
            $region88: #{sphereface_forward.7} parent=84 // pred_region
              // Predicated region
              $region101: #{sphereface_forward.7} parent=88 // pred_check
                _
              $region102: #{sphereface_forward.7} parent=88 // pred_check_branch
                %1889 = sbr.rel (0) target = $region104
              $region103: #{sphereface_forward.7} parent=88 // pred_region
                loop: start=0, step=1, limit=1
                $region105: #{sphereface_forward.7} parent=103 // loop_pre_header
                  _
                $region106: #{sphereface_forward.7} parent=103 // loop_header
                  %s1891 = sphi 0, %s1895
                  %p1892 = scmp.ge.s32.totalorder %s1891, 1
                  %s1896 = sphi %s1856, %s1856
                  %s1897 = sphi %s1864, %s1864
                $region107: #{sphereface_forward.7} parent=103 // loop_header_branch
                  %1894 = sbr.rel (%p1892) target = $region111
                $region108: #{sphereface_forward.7} parent=103 // loop_body
                  _
                $region109: #{sphereface_forward.7} parent=103 // loop_footer
                  %s1895 = sadd.s32 1, %s1891
                $region110: #{sphereface_forward.7} parent=103 // loop_footer_branch
                  %1890 = sbr.rel target = $region106
                $region111: #{sphereface_forward.7} parent=103 // loop_exit
                  _
                loop: start=0, step=1, limit=1
                $region112: #{sphereface_forward.7} parent=103 // loop_pre_header
                  _
                $region113: #{sphereface_forward.7} parent=103 // loop_header
                  %s1900 = sphi 0, %s1904
                  %p1901 = scmp.ge.s32.totalorder %s1900, 1
                  %s1905 = sphi %s1856, %s1856
                  %s1906 = sphi %s1864, %s1864
                $region114: #{sphereface_forward.7} parent=103 // loop_header_branch
                  %1903 = sbr.rel (%p1901) target = $region118
                $region115: #{sphereface_forward.7} parent=103 // loop_body
                  %v1907 = vld [vmem:[%s1905] sm:$0xf]
                  %1908 = vst [vmem:[%s1906] sm:$0xf] %v1907
                  %v1909 = vld [vmem:[%s1905 + $0x4] sm:$0xf]
                  %1910 = vst [vmem:[%s1906 + $0x8] sm:$0xf] %v1909
                  %v1911 = vld [vmem:[%s1905 + $0x8] sm:$0xf]
                  %1912 = vst [vmem:[%s1906 + $0x10] sm:$0xf] %v1911
                  %v1913 = vld [vmem:[%s1905 + $0xc] sm:$0xf]
                  %1914 = vst [vmem:[%s1906 + $0x18] sm:$0xf] %v1913
                $region116: #{sphereface_forward.7} parent=103 // loop_footer
                  %s1904 = sadd.s32 1, %s1900
                $region117: #{sphereface_forward.7} parent=103 // loop_footer_branch
                  %1899 = sbr.rel target = $region113
                $region118: #{sphereface_forward.7} parent=103 // loop_exit
                  _
              $region104: #{sphereface_forward.7} parent=88 // pred_fallthru
                _
            $region89: #{sphereface_forward.7} parent=84 // pred_fallthru
              _
            // Predicated region
            $region90: #{sphereface_forward.7} parent=84 // pred_check
              _
            $region91: #{sphereface_forward.7} parent=84 // pred_check_branch
              %1870 = sbr.rel (0) target = $region93
            $region92: #{sphereface_forward.7} parent=84 // pred_region
              loop: start=0, step=1, limit=1
              $region94: #{sphereface_forward.7} parent=92 // loop_pre_header
                _
              $region95: #{sphereface_forward.7} parent=92 // loop_header
                %s1873 = sphi 0, %s1877
                %p1874 = scmp.ge.s32.totalorder %s1873, 1
                %s1878 = sphi %s1856, %s1856
                %s1879 = sphi %s1864, %s1864
              $region96: #{sphereface_forward.7} parent=92 // loop_header_branch
                %1876 = sbr.rel (%p1874) target = $region100
              $region97: #{sphereface_forward.7} parent=92 // loop_body
                %v1880 = vld [vmem:[%s1878] sm:$0xf]
                %1881 = vst [vmem:[%s1879] sm:$0xf] %v1880
                %v1882 = vld [vmem:[%s1878 + $0x4] sm:$0xf]
                %1883 = vst [vmem:[%s1879 + $0x8] sm:$0xf] %v1882
                %v1884 = vld [vmem:[%s1878 + $0x8] sm:$0xf]
                %1885 = vst [vmem:[%s1879 + $0x10] sm:$0xf] %v1884
                %v1886 = vld [vmem:[%s1878 + $0xc] sm:$0xf]
                %1887 = vst [vmem:[%s1879 + $0x18] sm:$0xf] %v1886
              $region98: #{sphereface_forward.7} parent=92 // loop_footer
                %s1877 = sadd.s32 1, %s1873
              $region99: #{sphereface_forward.7} parent=92 // loop_footer_branch
                %1872 = sbr.rel target = $region95
              $region100: #{sphereface_forward.7} parent=92 // loop_exit
                _
            $region93: #{sphereface_forward.7} parent=84 // pred_fallthru
              _
          $region85: #{sphereface_forward.7} parent=80 // pred_fallthru
            _
          %1915 = vnop
        $region81: #{sphereface_forward.7} parent=72 // pred_fallthru
          _
      $region73: #{sphereface_forward.7} parent=5 // pred_fallthru
        _
      %p1916 = scmp.le.s32.totalorder 2, %s10
      // Predicated region
      $region119: #{sphereface_forward.7} parent=5 // pred_check
        %p1917 = pneg %p1916
      $region120: #{sphereface_forward.7} parent=5 // pred_check_branch
        %1919 = sbr.rel (%p1917) target = $region122
      $region121: #{sphereface_forward.7} parent=5 // pred_region
        %s1920 = ssub.s32 %s10, 2
        // Predicated region
        $region123: #{sphereface_forward.7} parent=121 // pred_check
          %p1921 = pneg %p157
        $region124: #{sphereface_forward.7} parent=121 // pred_check_branch
          %1923 = sbr.rel (%p1921) target = $region126
        $region125: #{sphereface_forward.7} parent=121 // pred_region
          %s1924 = sand.u32 %s142, 1
          %s1925 = sand.u32 %s142, 1
          %s1926 = smul.addr %s1925, 16
          %s1927 = scalar_lea.vmem [#allocation3], %s1926
        $region126: #{sphereface_forward.7} parent=121 // pred_fallthru
          _
      $region122: #{sphereface_forward.7} parent=5 // pred_fallthru
        _
    $region6: #{sphereface_forward.7} parent=1 // loop_footer
      %s14 = sadd.s32 1, %s10
    $region7: #{sphereface_forward.7} parent=1 // loop_footer_branch
      %9 = sbr.rel target = $region3
    $region8: #{sphereface_forward.7} parent=1 // loop_exit
      _

// kernel: sphereface_forward.8
$region0: #{sphereface_forward.8}
  #allocation0 [shape = 'u32[]', space=smem, size = 0x4, offset = 0x4, fixed_abs, tag = 'smem constant byte address 0x4 - core index']
  #allocation1 [shape = 'u32[144,128]{1,0:T(1,128)}', space=vmem, size = 0x12000, scoped, tag = 'internal scratch']
  %s0 = inlined_call_operand.vmem [shape: bf16[8,2304], index: 0, kind: input, shape index: {}]
  %s1 = inlined_call_operand.vmem [shape: bf16[2304,512], index: 1, kind: input, shape index: {}]
  %s2 = inlined_call_operand.vmem [shape: f32[1,512], index: 2, kind: input, shape index: {}]
  %s3 = inlined_call_operand.vmem [shape: f32[1,512], index: 3, kind: input, shape index: {}]
  %s4 = inlined_call_operand.vmem [shape: bf16[8,512], index: 4, kind: output, shape index: {}]
  %s5 = sld [smem:[#allocation0]]
  $region87: #{sphereface_forward.8} parent=0
    _
  %s7 = ssub.s32 1, %s5
  %s8 = scalar_select 0, %s7, %s5
  $region1: #{sphereface_forward.8} parent=0
    #allocation2 [shape = 'u8[2359296]{0}', space=vmem, size = 0x240000, scoped, tag = 'input window, operand 1']
    loop: start=0, step=1, limit=4
    $region2: #{sphereface_forward.8} parent=1 // loop_pre_header
      _
    $region3: #{sphereface_forward.8} parent=1 // loop_header
      %s10 = sphi 0, %s14
      %p11 = scmp.ge.s32.totalorder %s10, 4
      %s17 = sphi 0, %s29
      %s18 = sphi 0, %s25
      %s19 = sphi 0, %s17
      %s20 = sphi 0, %s18
      %s21 = sphi 0, %s19
      %s22 = sphi 0, %s20
      %s32 = sphi 0, %s34
      %s35 = sphi 0, %s32
      %s36 = sphi 0, %s35
      %s52 = sphi 0, %s36
      %s58 = sphi 0, %s60
      %s61 = sphi 0, %s58
      %s62 = sphi 0, %s61
      %s78 = sphi 0, %s62
      %s84 = sphi 0, %s86
      %s87 = sphi 0, %s84
      %s88 = sphi 0, %s87
      %s104 = sphi 0, %s88
      %s110 = sphi 0, %s112
      %s113 = sphi 0, %s110
      %s114 = sphi 0, %s113
      %s130 = sphi 0, %s114
      %s138 = sphi 0, %s140
      %s141 = sphi 0, %s138
      %s142 = sphi 0, %s141
      %s158 = sphi 0, %s142
    $region4: #{sphereface_forward.8} parent=1 // loop_header_branch
      %13 = sbr.rel (%p11) target = $region8
    $region5: #{sphereface_forward.8} parent=1 // loop_body
      %s15 = ssub.s32 %s10, 1
      %s16 = ssub.s32 %s10, 2
      %s23 = sadd.s32 1, %s18
      %p24 = scmp.ge.s32.totalorder %s23, 2
      %s25 = scalar_select %p24, 0, %s23
      %s26 = sadd.s32 1, %s17
      %s27 = scalar_select %p24, %s26, %s17
      %p28 = scmp.ge.s32.totalorder %s27, 1
      %s29 = scalar_select %p28, 0, %s27
      %s30 = ssub.s32 %s17, %s29
      %p31 = scmp.eq.s32.totalorder %s30, 0
      %s33 = sadd.s32 %s32, 1
      %s34 = scalar_select %p31, %s32, %s33
      %p37 = pneg %p31
      %p38 = scmp.eq.s32.totalorder %s10, 1
      %p39 = por %p37, %p38
      %p40 = scmp.ne.s32.totalorder %s32, %s35
      %p41 = scmp.eq.s32.totalorder %s10, 0
      %p42 = por %p40, %p41
      %p43 = scmp.ne.s32.totalorder %s32, %s35
      %p44 = scmp.eq.s32.totalorder %s15, 1
      %p45 = por %p43, %p44
      %p46 = scmp.ne.s32.totalorder %s35, %s36
      %p47 = scmp.eq.s32.totalorder %s15, 0
      %p48 = por %p46, %p47
      %p49 = scmp.ne.s32.totalorder %s35, %s36
      %p50 = scmp.eq.s32.totalorder %s16, 1
      %p51 = por %p49, %p50
      %p53 = scmp.ne.s32.totalorder %s36, %s52
      %p54 = scmp.eq.s32.totalorder %s16, 0
      %p55 = por %p53, %p54
      %s56 = ssub.s32 %s18, %s25
      %p57 = scmp.eq.s32.totalorder %s56, 0
      %s59 = sadd.s32 %s58, 1
      %s60 = scalar_select %p57, %s58, %s59
      %p63 = pneg %p57
      %p64 = scmp.eq.s32.totalorder %s10, 1
      %p65 = por %p63, %p64
      %p66 = scmp.ne.s32.totalorder %s58, %s61
      %p67 = scmp.eq.s32.totalorder %s10, 0
      %p68 = por %p66, %p67
      %p69 = scmp.ne.s32.totalorder %s58, %s61
      %p70 = scmp.eq.s32.totalorder %s15, 1
      %p71 = por %p69, %p70
      %p72 = scmp.ne.s32.totalorder %s61, %s62
      %p73 = scmp.eq.s32.totalorder %s15, 0
      %p74 = por %p72, %p73
      %p75 = scmp.ne.s32.totalorder %s61, %s62
      %p76 = scmp.eq.s32.totalorder %s16, 1
      %p77 = por %p75, %p76
      %p79 = scmp.ne.s32.totalorder %s62, %s78
      %p80 = scmp.eq.s32.totalorder %s16, 0
      %p81 = por %p79, %p80
      %s82 = ssub.s32 %s18, %s25
      %p83 = scmp.eq.s32.totalorder %s82, 0
      %s85 = sadd.s32 %s84, 1
      %s86 = scalar_select %p83, %s84, %s85
      %p89 = pneg %p83
      %p90 = scmp.eq.s32.totalorder %s10, 1
      %p91 = por %p89, %p90
      %p92 = scmp.ne.s32.totalorder %s84, %s87
      %p93 = scmp.eq.s32.totalorder %s10, 0
      %p94 = por %p92, %p93
      %p95 = scmp.ne.s32.totalorder %s84, %s87
      %p96 = scmp.eq.s32.totalorder %s15, 1
      %p97 = por %p95, %p96
      %p98 = scmp.ne.s32.totalorder %s87, %s88
      %p99 = scmp.eq.s32.totalorder %s15, 0
      %p100 = por %p98, %p99
      %p101 = scmp.ne.s32.totalorder %s87, %s88
      %p102 = scmp.eq.s32.totalorder %s16, 1
      %p103 = por %p101, %p102
      %p105 = scmp.ne.s32.totalorder %s88, %s104
      %p106 = scmp.eq.s32.totalorder %s16, 0
      %p107 = por %p105, %p106
      %s108 = ssub.s32 %s18, %s25
      %p109 = scmp.eq.s32.totalorder %s108, 0
      %s111 = sadd.s32 %s110, 1
      %s112 = scalar_select %p109, %s110, %s111
      %p115 = pneg %p109
      %p116 = scmp.eq.s32.totalorder %s10, 1
      %p117 = por %p115, %p116
      %p118 = scmp.ne.s32.totalorder %s110, %s113
      %p119 = scmp.eq.s32.totalorder %s10, 0
      %p120 = por %p118, %p119
      %p121 = scmp.ne.s32.totalorder %s110, %s113
      %p122 = scmp.eq.s32.totalorder %s15, 1
      %p123 = por %p121, %p122
      %p124 = scmp.ne.s32.totalorder %s113, %s114
      %p125 = scmp.eq.s32.totalorder %s15, 0
      %p126 = por %p124, %p125
      %p127 = scmp.ne.s32.totalorder %s113, %s114
      %p128 = scmp.eq.s32.totalorder %s16, 1
      %p129 = por %p127, %p128
      %p131 = scmp.ne.s32.totalorder %s114, %s130
      %p132 = scmp.eq.s32.totalorder %s16, 0
      %p133 = por %p131, %p132
      %s134 = ssub.s32 %s17, %s29
      %s135 = ssub.s32 %s18, %s25
      %s136 = sor.u32 %s134, %s135
      %p137 = scmp.eq.s32.totalorder %s136, 0
      %s139 = sadd.s32 %s138, 1
      %s140 = scalar_select %p137, %s138, %s139
      %p143 = pneg %p137
      %p144 = scmp.eq.s32.totalorder %s10, 1
      %p145 = por %p143, %p144
      %p146 = scmp.ne.s32.totalorder %s138, %s141
      %p147 = scmp.eq.s32.totalorder %s10, 0
      %p148 = por %p146, %p147
      %p149 = scmp.ne.s32.totalorder %s138, %s141
      %p150 = scmp.eq.s32.totalorder %s15, 1
      %p151 = por %p149, %p150
      %p152 = scmp.ne.s32.totalorder %s141, %s142
      %p153 = scmp.eq.s32.totalorder %s15, 0
      %p154 = por %p152, %p153
      %p155 = scmp.ne.s32.totalorder %s141, %s142
      %p156 = scmp.eq.s32.totalorder %s16, 1
      %p157 = por %p155, %p156
      %p159 = scmp.ne.s32.totalorder %s142, %s158
      %p160 = scmp.eq.s32.totalorder %s16, 0
      %p161 = por %p159, %p160
      %p162 = scmp.le.s32.totalorder 1, %s10
      %p163 = scmp.lt.s32.totalorder %s10, 3
      %p164 = pnand %p162, %p163
      %p165 = pneg %p164
      // Predicated region
      $region9: #{sphereface_forward.8} parent=5 // pred_check
        _
      $region10: #{sphereface_forward.8} parent=5 // pred_check_branch
        %167 = sbr.rel (%p164) target = $region12
      $region11: #{sphereface_forward.8} parent=5 // pred_region
        %s168 = ssub.s32 %s10, 1
        // Predicated region
        $region13: #{sphereface_forward.8} parent=11 // pred_check
          %p169 = pneg %p48
        $region14: #{sphereface_forward.8} parent=11 // pred_check_branch
          %171 = sbr.rel (%p169) target = $region16
        $region15: #{sphereface_forward.8} parent=11 // pred_region
          %p172 = scmp.lt.s32.totalorder %s19, 0
          %s173 = scalar_select %p172, %s19, 0
          %s174 = smul.addr %s173, 18
          %s175 = smul.addr %s174, 4
          %s176 = scalar_lea.vmem %s0, %s175
        $region16: #{sphereface_forward.8} parent=11 // pred_fallthru
          _
      $region12: #{sphereface_forward.8} parent=5 // pred_fallthru
        _
      %p177 = scmp.lt.s32.totalorder %s10, 2
      // Predicated region
      $region17: #{sphereface_forward.8} parent=5 // pred_check
        %p178 = pneg %p177
      $region18: #{sphereface_forward.8} parent=5 // pred_check_branch
        %180 = sbr.rel (%p178) target = $region20
      $region19: #{sphereface_forward.8} parent=5 // pred_region
        // Predicated region
        $region21: #{sphereface_forward.8} parent=19 // pred_check
          %p181 = pneg %p68
        $region22: #{sphereface_forward.8} parent=19 // pred_check_branch
          %183 = sbr.rel (%p181) target = $region24
        $region23: #{sphereface_forward.8} parent=19 // pred_region
          %s184 = sand.u32 %s58, 1
          %s185 = sand.u32 %s58, 1
          %s186 = smul.addr %s185, 2304
          %s187 = scalar_lea.vmem [#allocation2], %s186
          %s188 = smul.u32 2, %s18
          %s189 = smul.addr %s188, 4
          %s190 = scalar_lea.vmem %s1, %s189
          // Predicated region
          $region25: #{sphereface_forward.8} parent=23 // pred_check
            _
          $region26: #{sphereface_forward.8} parent=23 // pred_check_branch
            %192 = sbr.rel (0) target = $region28
          $region27: #{sphereface_forward.8} parent=23 // pred_region
            // Predicated region
            $region29: #{sphereface_forward.8} parent=27 // pred_check
              _
            $region30: #{sphereface_forward.8} parent=27 // pred_check_branch
              %194 = sbr.rel (0) target = $region32
            $region31: #{sphereface_forward.8} parent=27 // pred_region
              // Predicated region
              $region44: #{sphereface_forward.8} parent=31 // pred_check
                _
              $region45: #{sphereface_forward.8} parent=31 // pred_check_branch
                %783 = sbr.rel (0) target = $region47
              $region46: #{sphereface_forward.8} parent=31 // pred_region
                loop: start=0, step=1, limit=1
                $region48: #{sphereface_forward.8} parent=46 // loop_pre_header
                  _
                $region49: #{sphereface_forward.8} parent=46 // loop_header
                  %s785 = sphi 0, %s789
                  %p786 = scmp.ge.s32.totalorder %s785, 1
                  %s790 = sphi %s190, %s190
                  %s791 = sphi %s187, %s187
                $region50: #{sphereface_forward.8} parent=46 // loop_header_branch
                  %788 = sbr.rel (%p786) target = $region54
                $region51: #{sphereface_forward.8} parent=46 // loop_body
                  %v792 = vld [vmem:[%s790] sm:$0xff]
                  %793 = vst [vmem:[%s791] sm:$0xff] %v792
                  %v794 = vld [vmem:[%s790 + $0x10] sm:$0xff]
                  %795 = vst [vmem:[%s791 + $0x8] sm:$0xff] %v794
                  %v796 = vld [vmem:[%s790 + $0x20] sm:$0xff]
                  %797 = vst [vmem:[%s791 + $0x10] sm:$0xff] %v796
                  %v798 = vld [vmem:[%s790 + $0x30] sm:$0xff]
                  %799 = vst [vmem:[%s791 + $0x18] sm:$0xff] %v798
                  %v800 = vld [vmem:[%s790 + $0x40] sm:$0xff]
                  %801 = vst [vmem:[%s791 + $0x20] sm:$0xff] %v800
                  %v802 = vld [vmem:[%s790 + $0x50] sm:$0xff]
                  %803 = vst [vmem:[%s791 + $0x28] sm:$0xff] %v802
                  %v804 = vld [vmem:[%s790 + $0x60] sm:$0xff]
                  %805 = vst [vmem:[%s791 + $0x30] sm:$0xff] %v804
                  %v806 = vld [vmem:[%s790 + $0x70] sm:$0xff]
                  %807 = vst [vmem:[%s791 + $0x38] sm:$0xff] %v806
                  %v808 = vld [vmem:[%s790 + $0x80] sm:$0xff]
                  %809 = vst [vmem:[%s791 + $0x40] sm:$0xff] %v808
                  %v810 = vld [vmem:[%s790 + $0x90] sm:$0xff]
                  %811 = vst [vmem:[%s791 + $0x48] sm:$0xff] %v810
                  %v812 = vld [vmem:[%s790 + $0xa0] sm:$0xff]
                  %813 = vst [vmem:[%s791 + $0x50] sm:$0xff] %v812
                  %v814 = vld [vmem:[%s790 + $0xb0] sm:$0xff]
                  %815 = vst [vmem:[%s791 + $0x58] sm:$0xff] %v814
                  %v816 = vld [vmem:[%s790 + $0xc0] sm:$0xff]
                  %817 = vst [vmem:[%s791 + $0x60] sm:$0xff] %v816
                  %v818 = vld [vmem:[%s790 + $0xd0] sm:$0xff]
                  %819 = vst [vmem:[%s791 + $0x68] sm:$0xff] %v818
                  %v820 = vld [vmem:[%s790 + $0xe0] sm:$0xff]
                  %821 = vst [vmem:[%s791 + $0x70] sm:$0xff] %v820
                  %v822 = vld [vmem:[%s790 + $0xf0] sm:$0xff]
                  %823 = vst [vmem:[%s791 + $0x78] sm:$0xff] %v822
                  %v824 = vld [vmem:[%s790 + $0x100] sm:$0xff]
                  %825 = vst [vmem:[%s791 + $0x80] sm:$0xff] %v824
                  %v826 = vld [vmem:[%s790 + $0x110] sm:$0xff]
                  %827 = vst [vmem:[%s791 + $0x88] sm:$0xff] %v826
                  %v828 = vld [vmem:[%s790 + $0x120] sm:$0xff]
                  %829 = vst [vmem:[%s791 + $0x90] sm:$0xff] %v828
                  %v830 = vld [vmem:[%s790 + $0x130] sm:$0xff]
                  %831 = vst [vmem:[%s791 + $0x98] sm:$0xff] %v830
                  %v832 = vld [vmem:[%s790 + $0x140] sm:$0xff]
                  %833 = vst [vmem:[%s791 + $0xa0] sm:$0xff] %v832
                  %v834 = vld [vmem:[%s790 + $0x150] sm:$0xff]
                  %835 = vst [vmem:[%s791 + $0xa8] sm:$0xff] %v834
                  %v836 = vld [vmem:[%s790 + $0x160] sm:$0xff]
                  %837 = vst [vmem:[%s791 + $0xb0] sm:$0xff] %v836
                  %v838 = vld [vmem:[%s790 + $0x170] sm:$0xff]
                  %839 = vst [vmem:[%s791 + $0xb8] sm:$0xff] %v838
                  %v840 = vld [vmem:[%s790 + $0x180] sm:$0xff]
                  %841 = vst [vmem:[%s791 + $0xc0] sm:$0xff] %v840
                  %v842 = vld [vmem:[%s790 + $0x190] sm:$0xff]
                  %843 = vst [vmem:[%s791 + $0xc8] sm:$0xff] %v842
                  %v844 = vld [vmem:[%s790 + $0x1a0] sm:$0xff]
                  %845 = vst [vmem:[%s791 + $0xd0] sm:$0xff] %v844
                  %v846 = vld [vmem:[%s790 + $0x1b0] sm:$0xff]
                  %847 = vst [vmem:[%s791 + $0xd8] sm:$0xff] %v846
                  %v848 = vld [vmem:[%s790 + $0x1c0] sm:$0xff]
                  %849 = vst [vmem:[%s791 + $0xe0] sm:$0xff] %v848
                  %v850 = vld [vmem:[%s790 + $0x1d0] sm:$0xff]
                  %851 = vst [vmem:[%s791 + $0xe8] sm:$0xff] %v850
                  %v852 = vld [vmem:[%s790 + $0x1e0] sm:$0xff]
                  %853 = vst [vmem:[%s791 + $0xf0] sm:$0xff] %v852
                  %v854 = vld [vmem:[%s790 + $0x1f0] sm:$0xff]
                  %855 = vst [vmem:[%s791 + $0xf8] sm:$0xff] %v854
                  %v856 = vld [vmem:[%s790 + $0x200] sm:$0xff]
                  %857 = vst [vmem:[%s791 + $0x100] sm:$0xff] %v856
                  %v858 = vld [vmem:[%s790 + $0x210] sm:$0xff]
                  %859 = vst [vmem:[%s791 + $0x108] sm:$0xff] %v858
                  %v860 = vld [vmem:[%s790 + $0x220] sm:$0xff]
                  %861 = vst [vmem:[%s791 + $0x110] sm:$0xff] %v860
                  %v862 = vld [vmem:[%s790 + $0x230] sm:$0xff]
                  %863 = vst [vmem:[%s791 + $0x118] sm:$0xff] %v862
                  %v864 = vld [vmem:[%s790 + $0x240] sm:$0xff]
                  %865 = vst [vmem:[%s791 + $0x120] sm:$0xff] %v864
                  %v866 = vld [vmem:[%s790 + $0x250] sm:$0xff]
                  %867 = vst [vmem:[%s791 + $0x128] sm:$0xff] %v866
                  %v868 = vld [vmem:[%s790 + $0x260] sm:$0xff]
                  %869 = vst [vmem:[%s791 + $0x130] sm:$0xff] %v868
                  %v870 = vld [vmem:[%s790 + $0x270] sm:$0xff]
                  %871 = vst [vmem:[%s791 + $0x138] sm:$0xff] %v870
                  %v872 = vld [vmem:[%s790 + $0x280] sm:$0xff]
                  %873 = vst [vmem:[%s791 + $0x140] sm:$0xff] %v872
                  %v874 = vld [vmem:[%s790 + $0x290] sm:$0xff]
                  %875 = vst [vmem:[%s791 + $0x148] sm:$0xff] %v874
                  %v876 = vld [vmem:[%s790 + $0x2a0] sm:$0xff]
                  %877 = vst [vmem:[%s791 + $0x150] sm:$0xff] %v876
                  %v878 = vld [vmem:[%s790 + $0x2b0] sm:$0xff]
                  %879 = vst [vmem:[%s791 + $0x158] sm:$0xff] %v878
                  %v880 = vld [vmem:[%s790 + $0x2c0] sm:$0xff]
                  %881 = vst [vmem:[%s791 + $0x160] sm:$0xff] %v880
                  %v882 = vld [vmem:[%s790 + $0x2d0] sm:$0xff]
                  %883 = vst [vmem:[%s791 + $0x168] sm:$0xff] %v882
                  %v884 = vld [vmem:[%s790 + $0x2e0] sm:$0xff]
                  %885 = vst [vmem:[%s791 + $0x170] sm:$0xff] %v884
                  %v886 = vld [vmem:[%s790 + $0x2f0] sm:$0xff]
                  %887 = vst [vmem:[%s791 + $0x178] sm:$0xff] %v886
                  %v888 = vld [vmem:[%s790 + $0x300] sm:$0xff]
                  %889 = vst [vmem:[%s791 + $0x180] sm:$0xff] %v888
                  %v890 = vld [vmem:[%s790 + $0x310] sm:$0xff]
                  %891 = vst [vmem:[%s791 + $0x188] sm:$0xff] %v890
                  %v892 = vld [vmem:[%s790 + $0x320] sm:$0xff]
                  %893 = vst [vmem:[%s791 + $0x190] sm:$0xff] %v892
                  %v894 = vld [vmem:[%s790 + $0x330] sm:$0xff]
                  %895 = vst [vmem:[%s791 + $0x198] sm:$0xff] %v894
                  %v896 = vld [vmem:[%s790 + $0x340] sm:$0xff]
                  %897 = vst [vmem:[%s791 + $0x1a0] sm:$0xff] %v896
                  %v898 = vld [vmem:[%s790 + $0x350] sm:$0xff]
                  %899 = vst [vmem:[%s791 + $0x1a8] sm:$0xff] %v898
                  %v900 = vld [vmem:[%s790 + $0x360] sm:$0xff]
                  %901 = vst [vmem:[%s791 + $0x1b0] sm:$0xff] %v900
                  %v902 = vld [vmem:[%s790 + $0x370] sm:$0xff]
                  %903 = vst [vmem:[%s791 + $0x1b8] sm:$0xff] %v902
                  %v904 = vld [vmem:[%s790 + $0x380] sm:$0xff]
                  %905 = vst [vmem:[%s791 + $0x1c0] sm:$0xff] %v904
                  %v906 = vld [vmem:[%s790 + $0x390] sm:$0xff]
                  %907 = vst [vmem:[%s791 + $0x1c8] sm:$0xff] %v906
                  %v908 = vld [vmem:[%s790 + $0x3a0] sm:$0xff]
                  %909 = vst [vmem:[%s791 + $0x1d0] sm:$0xff] %v908
                  %v910 = vld [vmem:[%s790 + $0x3b0] sm:$0xff]
                  %911 = vst [vmem:[%s791 + $0x1d8] sm:$0xff] %v910
                  %v912 = vld [vmem:[%s790 + $0x3c0] sm:$0xff]
                  %913 = vst [vmem:[%s791 + $0x1e0] sm:$0xff] %v912
                  %v914 = vld [vmem:[%s790 + $0x3d0] sm:$0xff]
                  %915 = vst [vmem:[%s791 + $0x1e8] sm:$0xff] %v914
                  %v916 = vld [vmem:[%s790 + $0x3e0] sm:$0xff]
                  %917 = vst [vmem:[%s791 + $0x1f0] sm:$0xff] %v916
                  %v918 = vld [vmem:[%s790 + $0x3f0] sm:$0xff]
                  %919 = vst [vmem:[%s791 + $0x1f8] sm:$0xff] %v918
                  %v920 = vld [vmem:[%s790 + $0x400] sm:$0xff]
                  %921 = vst [vmem:[%s791 + $0x200] sm:$0xff] %v920
                  %v922 = vld [vmem:[%s790 + $0x410] sm:$0xff]
                  %923 = vst [vmem:[%s791 + $0x208] sm:$0xff] %v922
                  %v924 = vld [vmem:[%s790 + $0x420] sm:$0xff]
                  %925 = vst [vmem:[%s791 + $0x210] sm:$0xff] %v924
                  %v926 = vld [vmem:[%s790 + $0x430] sm:$0xff]
                  %927 = vst [vmem:[%s791 + $0x218] sm:$0xff] %v926
                  %v928 = vld [vmem:[%s790 + $0x440] sm:$0xff]
                  %929 = vst [vmem:[%s791 + $0x220] sm:$0xff] %v928
                  %v930 = vld [vmem:[%s790 + $0x450] sm:$0xff]
                  %931 = vst [vmem:[%s791 + $0x228] sm:$0xff] %v930
                  %v932 = vld [vmem:[%s790 + $0x460] sm:$0xff]
                  %933 = vst [vmem:[%s791 + $0x230] sm:$0xff] %v932
                  %v934 = vld [vmem:[%s790 + $0x470] sm:$0xff]
                  %935 = vst [vmem:[%s791 + $0x238] sm:$0xff] %v934
                  %v936 = vld [vmem:[%s790 + $0x480] sm:$0xff]
                  %937 = vst [vmem:[%s791 + $0x240] sm:$0xff] %v936
                  %v938 = vld [vmem:[%s790 + $0x490] sm:$0xff]
                  %939 = vst [vmem:[%s791 + $0x248] sm:$0xff] %v938
                  %v940 = vld [vmem:[%s790 + $0x4a0] sm:$0xff]
                  %941 = vst [vmem:[%s791 + $0x250] sm:$0xff] %v940
                  %v942 = vld [vmem:[%s790 + $0x4b0] sm:$0xff]
                  %943 = vst [vmem:[%s791 + $0x258] sm:$0xff] %v942
                  %v944 = vld [vmem:[%s790 + $0x4c0] sm:$0xff]
                  %945 = vst [vmem:[%s791 + $0x260] sm:$0xff] %v944
                  %v946 = vld [vmem:[%s790 + $0x4d0] sm:$0xff]
                  %947 = vst [vmem:[%s791 + $0x268] sm:$0xff] %v946
                  %v948 = vld [vmem:[%s790 + $0x4e0] sm:$0xff]
                  %949 = vst [vmem:[%s791 + $0x270] sm:$0xff] %v948
                  %v950 = vld [vmem:[%s790 + $0x4f0] sm:$0xff]
                  %951 = vst [vmem:[%s791 + $0x278] sm:$0xff] %v950
                  %v952 = vld [vmem:[%s790 + $0x500] sm:$0xff]
                  %953 = vst [vmem:[%s791 + $0x280] sm:$0xff] %v952
                  %v954 = vld [vmem:[%s790 + $0x510] sm:$0xff]
                  %955 = vst [vmem:[%s791 + $0x288] sm:$0xff] %v954
                  %v956 = vld [vmem:[%s790 + $0x520] sm:$0xff]
                  %957 = vst [vmem:[%s791 + $0x290] sm:$0xff] %v956
                  %v958 = vld [vmem:[%s790 + $0x530] sm:$0xff]
                  %959 = vst [vmem:[%s791 + $0x298] sm:$0xff] %v958
                  %v960 = vld [vmem:[%s790 + $0x540] sm:$0xff]
                  %961 = vst [vmem:[%s791 + $0x2a0] sm:$0xff] %v960
                  %v962 = vld [vmem:[%s790 + $0x550] sm:$0xff]
                  %963 = vst [vmem:[%s791 + $0x2a8] sm:$0xff] %v962
                  %v964 = vld [vmem:[%s790 + $0x560] sm:$0xff]
                  %965 = vst [vmem:[%s791 + $0x2b0] sm:$0xff] %v964
                  %v966 = vld [vmem:[%s790 + $0x570] sm:$0xff]
                  %967 = vst [vmem:[%s791 + $0x2b8] sm:$0xff] %v966
                  %v968 = vld [vmem:[%s790 + $0x580] sm:$0xff]
                  %969 = vst [vmem:[%s791 + $0x2c0] sm:$0xff] %v968
                  %v970 = vld [vmem:[%s790 + $0x590] sm:$0xff]
                  %971 = vst [vmem:[%s791 + $0x2c8] sm:$0xff] %v970
                  %v972 = vld [vmem:[%s790 + $0x5a0] sm:$0xff]
                  %973 = vst [vmem:[%s791 + $0x2d0] sm:$0xff] %v972
                  %v974 = vld [vmem:[%s790 + $0x5b0] sm:$0xff]
                  %975 = vst [vmem:[%s791 + $0x2d8] sm:$0xff] %v974
                  %v976 = vld [vmem:[%s790 + $0x5c0] sm:$0xff]
                  %977 = vst [vmem:[%s791 + $0x2e0] sm:$0xff] %v976
                  %v978 = vld [vmem:[%s790 + $0x5d0] sm:$0xff]
                  %979 = vst [vmem:[%s791 + $0x2e8] sm:$0xff] %v978
                  %v980 = vld [vmem:[%s790 + $0x5e0] sm:$0xff]
                  %981 = vst [vmem:[%s791 + $0x2f0] sm:$0xff] %v980
                  %v982 = vld [vmem:[%s790 + $0x5f0] sm:$0xff]
                  %983 = vst [vmem:[%s791 + $0x2f8] sm:$0xff] %v982
                  %v984 = vld [vmem:[%s790 + $0x600] sm:$0xff]
                  %985 = vst [vmem:[%s791 + $0x300] sm:$0xff] %v984
                  %v986 = vld [vmem:[%s790 + $0x610] sm:$0xff]
                  %987 = vst [vmem:[%s791 + $0x308] sm:$0xff] %v986
                  %v988 = vld [vmem:[%s790 + $0x620] sm:$0xff]
                  %989 = vst [vmem:[%s791 + $0x310] sm:$0xff] %v988
                  %v990 = vld [vmem:[%s790 + $0x630] sm:$0xff]
                  %991 = vst [vmem:[%s791 + $0x318] sm:$0xff] %v990
                  %v992 = vld [vmem:[%s790 + $0x640] sm:$0xff]
                  %993 = vst [vmem:[%s791 + $0x320] sm:$0xff] %v992
                  %v994 = vld [vmem:[%s790 + $0x650] sm:$0xff]
                  %995 = vst [vmem:[%s791 + $0x328] sm:$0xff] %v994
                  %v996 = vld [vmem:[%s790 + $0x660] sm:$0xff]
                  %997 = vst [vmem:[%s791 + $0x330] sm:$0xff] %v996
                  %v998 = vld [vmem:[%s790 + $0x670] sm:$0xff]
                  %999 = vst [vmem:[%s791 + $0x338] sm:$0xff] %v998
                  %v1000 = vld [vmem:[%s790 + $0x680] sm:$0xff]
                  %1001 = vst [vmem:[%s791 + $0x340] sm:$0xff] %v1000
                  %v1002 = vld [vmem:[%s790 + $0x690] sm:$0xff]
                  %1003 = vst [vmem:[%s791 + $0x348] sm:$0xff] %v1002
                  %v1004 = vld [vmem:[%s790 + $0x6a0] sm:$0xff]
                  %1005 = vst [vmem:[%s791 + $0x350] sm:$0xff] %v1004
                  %v1006 = vld [vmem:[%s790 + $0x6b0] sm:$0xff]
                  %1007 = vst [vmem:[%s791 + $0x358] sm:$0xff] %v1006
                  %v1008 = vld [vmem:[%s790 + $0x6c0] sm:$0xff]
                  %1009 = vst [vmem:[%s791 + $0x360] sm:$0xff] %v1008
                  %v1010 = vld [vmem:[%s790 + $0x6d0] sm:$0xff]
                  %1011 = vst [vmem:[%s791 + $0x368] sm:$0xff] %v1010
                  %v1012 = vld [vmem:[%s790 + $0x6e0] sm:$0xff]
                  %1013 = vst [vmem:[%s791 + $0x370] sm:$0xff] %v1012
                  %v1014 = vld [vmem:[%s790 + $0x6f0] sm:$0xff]
                  %1015 = vst [vmem:[%s791 + $0x378] sm:$0xff] %v1014
                  %v1016 = vld [vmem:[%s790 + $0x700] sm:$0xff]
                  %1017 = vst [vmem:[%s791 + $0x380] sm:$0xff] %v1016
                  %v1018 = vld [vmem:[%s790 + $0x710] sm:$0xff]
                  %1019 = vst [vmem:[%s791 + $0x388] sm:$0xff] %v1018
                  %v1020 = vld [vmem:[%s790 + $0x720] sm:$0xff]
                  %1021 = vst [vmem:[%s791 + $0x390] sm:$0xff] %v1020
                  %v1022 = vld [vmem:[%s790 + $0x730] sm:$0xff]
                  %1023 = vst [vmem:[%s791 + $0x398] sm:$0xff] %v1022
                  %v1024 = vld [vmem:[%s790 + $0x740] sm:$0xff]
                  %1025 = vst [vmem:[%s791 + $0x3a0] sm:$0xff] %v1024
                  %v1026 = vld [vmem:[%s790 + $0x750] sm:$0xff]
                  %1027 = vst [vmem:[%s791 + $0x3a8] sm:$0xff] %v1026
                  %v1028 = vld [vmem:[%s790 + $0x760] sm:$0xff]
                  %1029 = vst [vmem:[%s791 + $0x3b0] sm:$0xff] %v1028
                  %v1030 = vld [vmem:[%s790 + $0x770] sm:$0xff]
                  %1031 = vst [vmem:[%s791 + $0x3b8] sm:$0xff] %v1030
                  %v1032 = vld [vmem:[%s790 + $0x780] sm:$0xff]
                  %1033 = vst [vmem:[%s791 + $0x3c0] sm:$0xff] %v1032
                  %v1034 = vld [vmem:[%s790 + $0x790] sm:$0xff]
                  %1035 = vst [vmem:[%s791 + $0x3c8] sm:$0xff] %v1034
                  %v1036 = vld [vmem:[%s790 + $0x7a0] sm:$0xff]
                  %1037 = vst [vmem:[%s791 + $0x3d0] sm:$0xff] %v1036
                  %v1038 = vld [vmem:[%s790 + $0x7b0] sm:$0xff]
                  %1039 = vst [vmem:[%s791 + $0x3d8] sm:$0xff] %v1038
                  %v1040 = vld [vmem:[%s790 + $0x7c0] sm:$0xff]
                  %1041 = vst [vmem:[%s791 + $0x3e0] sm:$0xff] %v1040
                  %v1042 = vld [vmem:[%s790 + $0x7d0] sm:$0xff]
                  %1043 = vst [vmem:[%s791 + $0x3e8] sm:$0xff] %v1042
                  %v1044 = vld [vmem:[%s790 + $0x7e0] sm:$0xff]
                  %1045 = vst [vmem:[%s791 + $0x3f0] sm:$0xff] %v1044
                  %v1046 = vld [vmem:[%s790 + $0x7f0] sm:$0xff]
                  %1047 = vst [vmem:[%s791 + $0x3f8] sm:$0xff] %v1046
                  %v1048 = vld [vmem:[%s790 + $0x800] sm:$0xff]
                  %1049 = vst [vmem:[%s791 + $0x400] sm:$0xff] %v1048
                  %v1050 = vld [vmem:[%s790 + $0x810] sm:$0xff]
                  %1051 = vst [vmem:[%s791 + $0x408] sm:$0xff] %v1050
                  %v1052 = vld [vmem:[%s790 + $0x820] sm:$0xff]
                  %1053 = vst [vmem:[%s791 + $0x410] sm:$0xff] %v1052
                  %v1054 = vld [vmem:[%s790 + $0x830] sm:$0xff]
                  %1055 = vst [vmem:[%s791 + $0x418] sm:$0xff] %v1054
                  %v1056 = vld [vmem:[%s790 + $0x840] sm:$0xff]
                  %1057 = vst [vmem:[%s791 + $0x420] sm:$0xff] %v1056
                  %v1058 = vld [vmem:[%s790 + $0x850] sm:$0xff]
                  %1059 = vst [vmem:[%s791 + $0x428] sm:$0xff] %v1058
                  %v1060 = vld [vmem:[%s790 + $0x860] sm:$0xff]
                  %1061 = vst [vmem:[%s791 + $0x430] sm:$0xff] %v1060
                  %v1062 = vld [vmem:[%s790 + $0x870] sm:$0xff]
                  %1063 = vst [vmem:[%s791 + $0x438] sm:$0xff] %v1062
                  %v1064 = vld [vmem:[%s790 + $0x880] sm:$0xff]
                  %1065 = vst [vmem:[%s791 + $0x440] sm:$0xff] %v1064
                  %v1066 = vld [vmem:[%s790 + $0x890] sm:$0xff]
                  %1067 = vst [vmem:[%s791 + $0x448] sm:$0xff] %v1066
                  %v1068 = vld [vmem:[%s790 + $0x8a0] sm:$0xff]
                  %1069 = vst [vmem:[%s791 + $0x450] sm:$0xff] %v1068
                  %v1070 = vld [vmem:[%s790 + $0x8b0] sm:$0xff]
                  %1071 = vst [vmem:[%s791 + $0x458] sm:$0xff] %v1070
                  %v1072 = vld [vmem:[%s790 + $0x8c0] sm:$0xff]
                  %1073 = vst [vmem:[%s791 + $0x460] sm:$0xff] %v1072
                  %v1074 = vld [vmem:[%s790 + $0x8d0] sm:$0xff]
                  %1075 = vst [vmem:[%s791 + $0x468] sm:$0xff] %v1074
                  %v1076 = vld [vmem:[%s790 + $0x8e0] sm:$0xff]
                  %1077 = vst [vmem:[%s791 + $0x470] sm:$0xff] %v1076
                  %v1078 = vld [vmem:[%s790 + $0x8f0] sm:$0xff]
                  %1079 = vst [vmem:[%s791 + $0x478] sm:$0xff] %v1078
                  %v1080 = vld [vmem:[%s790 + $0x900] sm:$0xff]
                  %1081 = vst [vmem:[%s791 + $0x480] sm:$0xff] %v1080
                  %v1082 = vld [vmem:[%s790 + $0x910] sm:$0xff]
                  %1083 = vst [vmem:[%s791 + $0x488] sm:$0xff] %v1082
                  %v1084 = vld [vmem:[%s790 + $0x920] sm:$0xff]
                  %1085 = vst [vmem:[%s791 + $0x490] sm:$0xff] %v1084
                  %v1086 = vld [vmem:[%s790 + $0x930] sm:$0xff]
                  %1087 = vst [vmem:[%s791 + $0x498] sm:$0xff] %v1086
                  %v1088 = vld [vmem:[%s790 + $0x940] sm:$0xff]
                  %1089 = vst [vmem:[%s791 + $0x4a0] sm:$0xff] %v1088
                  %v1090 = vld [vmem:[%s790 + $0x950] sm:$0xff]
                  %1091 = vst [vmem:[%s791 + $0x4a8] sm:$0xff] %v1090
                  %v1092 = vld [vmem:[%s790 + $0x960] sm:$0xff]
                  %1093 = vst [vmem:[%s791 + $0x4b0] sm:$0xff] %v1092
                  %v1094 = vld [vmem:[%s790 + $0x970] sm:$0xff]
                  %1095 = vst [vmem:[%s791 + $0x4b8] sm:$0xff] %v1094
                  %v1096 = vld [vmem:[%s790 + $0x980] sm:$0xff]
                  %1097 = vst [vmem:[%s791 + $0x4c0] sm:$0xff] %v1096
                  %v1098 = vld [vmem:[%s790 + $0x990] sm:$0xff]
                  %1099 = vst [vmem:[%s791 + $0x4c8] sm:$0xff] %v1098
                  %v1100 = vld [vmem:[%s790 + $0x9a0] sm:$0xff]
                  %1101 = vst [vmem:[%s791 + $0x4d0] sm:$0xff] %v1100
                  %v1102 = vld [vmem:[%s790 + $0x9b0] sm:$0xff]
                  %1103 = vst [vmem:[%s791 + $0x4d8] sm:$0xff] %v1102
                  %v1104 = vld [vmem:[%s790 + $0x9c0] sm:$0xff]
                  %1105 = vst [vmem:[%s791 + $0x4e0] sm:$0xff] %v1104
                  %v1106 = vld [vmem:[%s790 + $0x9d0] sm:$0xff]
                  %1107 = vst [vmem:[%s791 + $0x4e8] sm:$0xff] %v1106
                  %v1108 = vld [vmem:[%s790 + $0x9e0] sm:$0xff]
                  %1109 = vst [vmem:[%s791 + $0x4f0] sm:$0xff] %v1108
                  %v1110 = vld [vmem:[%s790 + $0x9f0] sm:$0xff]
                  %1111 = vst [vmem:[%s791 + $0x4f8] sm:$0xff] %v1110
                  %v1112 = vld [vmem:[%s790 + $0xa00] sm:$0xff]
                  %1113 = vst [vmem:[%s791 + $0x500] sm:$0xff] %v1112
                  %v1114 = vld [vmem:[%s790 + $0xa10] sm:$0xff]
                  %1115 = vst [vmem:[%s791 + $0x508] sm:$0xff] %v1114
                  %v1116 = vld [vmem:[%s790 + $0xa20] sm:$0xff]
                  %1117 = vst [vmem:[%s791 + $0x510] sm:$0xff] %v1116
                  %v1118 = vld [vmem:[%s790 + $0xa30] sm:$0xff]
                  %1119 = vst [vmem:[%s791 + $0x518] sm:$0xff] %v1118
                  %v1120 = vld [vmem:[%s790 + $0xa40] sm:$0xff]
                  %1121 = vst [vmem:[%s791 + $0x520] sm:$0xff] %v1120
                  %v1122 = vld [vmem:[%s790 + $0xa50] sm:$0xff]
                  %1123 = vst [vmem:[%s791 + $0x528] sm:$0xff] %v1122
                  %v1124 = vld [vmem:[%s790 + $0xa60] sm:$0xff]
                  %1125 = vst [vmem:[%s791 + $0x530] sm:$0xff] %v1124
                  %v1126 = vld [vmem:[%s790 + $0xa70] sm:$0xff]
                  %1127 = vst [vmem:[%s791 + $0x538] sm:$0xff] %v1126
                  %v1128 = vld [vmem:[%s790 + $0xa80] sm:$0xff]
                  %1129 = vst [vmem:[%s791 + $0x540] sm:$0xff] %v1128
                  %v1130 = vld [vmem:[%s790 + $0xa90] sm:$0xff]
                  %1131 = vst [vmem:[%s791 + $0x548] sm:$0xff] %v1130
                  %v1132 = vld [vmem:[%s790 + $0xaa0] sm:$0xff]
                  %1133 = vst [vmem:[%s791 + $0x550] sm:$0xff] %v1132
                  %v1134 = vld [vmem:[%s790 + $0xab0] sm:$0xff]
                  %1135 = vst [vmem:[%s791 + $0x558] sm:$0xff] %v1134
                  %v1136 = vld [vmem:[%s790 + $0xac0] sm:$0xff]
                  %1137 = vst [vmem:[%s791 + $0x560] sm:$0xff] %v1136
                  %v1138 = vld [vmem:[%s790 + $0xad0] sm:$0xff]
                  %1139 = vst [vmem:[%s791 + $0x568] sm:$0xff] %v1138
                  %v1140 = vld [vmem:[%s790 + $0xae0] sm:$0xff]
                  %1141 = vst [vmem:[%s791 + $0x570] sm:$0xff] %v1140
                  %v1142 = vld [vmem:[%s790 + $0xaf0] sm:$0xff]
                  %1143 = vst [vmem:[%s791 + $0x578] sm:$0xff] %v1142
                  %v1144 = vld [vmem:[%s790 + $0xb00] sm:$0xff]
                  %1145 = vst [vmem:[%s791 + $0x580] sm:$0xff] %v1144
                  %v1146 = vld [vmem:[%s790 + $0xb10] sm:$0xff]
                  %1147 = vst [vmem:[%s791 + $0x588] sm:$0xff] %v1146
                  %v1148 = vld [vmem:[%s790 + $0xb20] sm:$0xff]
                  %1149 = vst [vmem:[%s791 + $0x590] sm:$0xff] %v1148
                  %v1150 = vld [vmem:[%s790 + $0xb30] sm:$0xff]
                  %1151 = vst [vmem:[%s791 + $0x598] sm:$0xff] %v1150
                  %v1152 = vld [vmem:[%s790 + $0xb40] sm:$0xff]
                  %1153 = vst [vmem:[%s791 + $0x5a0] sm:$0xff] %v1152
                  %v1154 = vld [vmem:[%s790 + $0xb50] sm:$0xff]
                  %1155 = vst [vmem:[%s791 + $0x5a8] sm:$0xff] %v1154
                  %v1156 = vld [vmem:[%s790 + $0xb60] sm:$0xff]
                  %1157 = vst [vmem:[%s791 + $0x5b0] sm:$0xff] %v1156
                  %v1158 = vld [vmem:[%s790 + $0xb70] sm:$0xff]
                  %1159 = vst [vmem:[%s791 + $0x5b8] sm:$0xff] %v1158
                  %v1160 = vld [vmem:[%s790 + $0xb80] sm:$0xff]
                  %1161 = vst [vmem:[%s791 + $0x5c0] sm:$0xff] %v1160
                  %v1162 = vld [vmem:[%s790 + $0xb90] sm:$0xff]
                  %1163 = vst [vmem:[%s791 + $0x5c8] sm:$0xff] %v1162
                  %v1164 = vld [vmem:[%s790 + $0xba0] sm:$0xff]
                  %1165 = vst [vmem:[%s791 + $0x5d0] sm:$0xff] %v1164
                  %v1166 = vld [vmem:[%s790 + $0xbb0] sm:$0xff]
                  %1167 = vst [vmem:[%s791 + $0x5d8] sm:$0xff] %v1166
                  %v1168 = vld [vmem:[%s790 + $0xbc0] sm:$0xff]
                  %1169 = vst [vmem:[%s791 + $0x5e0] sm:$0xff] %v1168
                  %v1170 = vld [vmem:[%s790 + $0xbd0] sm:$0xff]
                  %1171 = vst [vmem:[%s791 + $0x5e8] sm:$0xff] %v1170
                  %v1172 = vld [vmem:[%s790 + $0xbe0] sm:$0xff]
                  %1173 = vst [vmem:[%s791 + $0x5f0] sm:$0xff] %v1172
                  %v1174 = vld [vmem:[%s790 + $0xbf0] sm:$0xff]
                  %1175 = vst [vmem:[%s791 + $0x5f8] sm:$0xff] %v1174
                  %v1176 = vld [vmem:[%s790 + $0xc00] sm:$0xff]
                  %1177 = vst [vmem:[%s791 + $0x600] sm:$0xff] %v1176
                  %v1178 = vld [vmem:[%s790 + $0xc10] sm:$0xff]
                  %1179 = vst [vmem:[%s791 + $0x608] sm:$0xff] %v1178
                  %v1180 = vld [vmem:[%s790 + $0xc20] sm:$0xff]
                  %1181 = vst [vmem:[%s791 + $0x610] sm:$0xff] %v1180
                  %v1182 = vld [vmem:[%s790 + $0xc30] sm:$0xff]
                  %1183 = vst [vmem:[%s791 + $0x618] sm:$0xff] %v1182
                  %v1184 = vld [vmem:[%s790 + $0xc40] sm:$0xff]
                  %1185 = vst [vmem:[%s791 + $0x620] sm:$0xff] %v1184
                  %v1186 = vld [vmem:[%s790 + $0xc50] sm:$0xff]
                  %1187 = vst [vmem:[%s791 + $0x628] sm:$0xff] %v1186
                  %v1188 = vld [vmem:[%s790 + $0xc60] sm:$0xff]
                  %1189 = vst [vmem:[%s791 + $0x630] sm:$0xff] %v1188
                  %v1190 = vld [vmem:[%s790 + $0xc70] sm:$0xff]
                  %1191 = vst [vmem:[%s791 + $0x638] sm:$0xff] %v1190
                  %v1192 = vld [vmem:[%s790 + $0xc80] sm:$0xff]
                  %1193 = vst [vmem:[%s791 + $0x640] sm:$0xff] %v1192
                  %v1194 = vld [vmem:[%s790 + $0xc90] sm:$0xff]
                  %1195 = vst [vmem:[%s791 + $0x648] sm:$0xff] %v1194
                  %v1196 = vld [vmem:[%s790 + $0xca0] sm:$0xff]
                  %1197 = vst [vmem:[%s791 + $0x650] sm:$0xff] %v1196
                  %v1198 = vld [vmem:[%s790 + $0xcb0] sm:$0xff]
                  %1199 = vst [vmem:[%s791 + $0x658] sm:$0xff] %v1198
                  %v1200 = vld [vmem:[%s790 + $0xcc0] sm:$0xff]
                  %1201 = vst [vmem:[%s791 + $0x660] sm:$0xff] %v1200
                  %v1202 = vld [vmem:[%s790 + $0xcd0] sm:$0xff]
                  %1203 = vst [vmem:[%s791 + $0x668] sm:$0xff] %v1202
                  %v1204 = vld [vmem:[%s790 + $0xce0] sm:$0xff]
                  %1205 = vst [vmem:[%s791 + $0x670] sm:$0xff] %v1204
                  %v1206 = vld [vmem:[%s790 + $0xcf0] sm:$0xff]
                  %1207 = vst [vmem:[%s791 + $0x678] sm:$0xff] %v1206
                  %v1208 = vld [vmem:[%s790 + $0xd00] sm:$0xff]
                  %1209 = vst [vmem:[%s791 + $0x680] sm:$0xff] %v1208
                  %v1210 = vld [vmem:[%s790 + $0xd10] sm:$0xff]
                  %1211 = vst [vmem:[%s791 + $0x688] sm:$0xff] %v1210
                  %v1212 = vld [vmem:[%s790 + $0xd20] sm:$0xff]
                  %1213 = vst [vmem:[%s791 + $0x690] sm:$0xff] %v1212
                  %v1214 = vld [vmem:[%s790 + $0xd30] sm:$0xff]
                  %1215 = vst [vmem:[%s791 + $0x698] sm:$0xff] %v1214
                  %v1216 = vld [vmem:[%s790 + $0xd40] sm:$0xff]
                  %1217 = vst [vmem:[%s791 + $0x6a0] sm:$0xff] %v1216
                  %v1218 = vld [vmem:[%s790 + $0xd50] sm:$0xff]
                  %1219 = vst [vmem:[%s791 + $0x6a8] sm:$0xff] %v1218
                  %v1220 = vld [vmem:[%s790 + $0xd60] sm:$0xff]
                  %1221 = vst [vmem:[%s791 + $0x6b0] sm:$0xff] %v1220
                  %v1222 = vld [vmem:[%s790 + $0xd70] sm:$0xff]
                  %1223 = vst [vmem:[%s791 + $0x6b8] sm:$0xff] %v1222
                  %v1224 = vld [vmem:[%s790 + $0xd80] sm:$0xff]
                  %1225 = vst [vmem:[%s791 + $0x6c0] sm:$0xff] %v1224
                  %v1226 = vld [vmem:[%s790 + $0xd90] sm:$0xff]
                  %1227 = vst [vmem:[%s791 + $0x6c8] sm:$0xff] %v1226
                  %v1228 = vld [vmem:[%s790 + $0xda0] sm:$0xff]
                  %1229 = vst [vmem:[%s791 + $0x6d0] sm:$0xff] %v1228
                  %v1230 = vld [vmem:[%s790 + $0xdb0] sm:$0xff]
                  %1231 = vst [vmem:[%s791 + $0x6d8] sm:$0xff] %v1230
                  %v1232 = vld [vmem:[%s790 + $0xdc0] sm:$0xff]
                  %1233 = vst [vmem:[%s791 + $0x6e0] sm:$0xff] %v1232
                  %v1234 = vld [vmem:[%s790 + $0xdd0] sm:$0xff]
                  %1235 = vst [vmem:[%s791 + $0x6e8] sm:$0xff] %v1234
                  %v1236 = vld [vmem:[%s790 + $0xde0] sm:$0xff]
                  %1237 = vst [vmem:[%s791 + $0x6f0] sm:$0xff] %v1236
                  %v1238 = vld [vmem:[%s790 + $0xdf0] sm:$0xff]
                  %1239 = vst [vmem:[%s791 + $0x6f8] sm:$0xff] %v1238
                  %v1240 = vld [vmem:[%s790 + $0xe00] sm:$0xff]
                  %1241 = vst [vmem:[%s791 + $0x700] sm:$0xff] %v1240
                  %v1242 = vld [vmem:[%s790 + $0xe10] sm:$0xff]
                  %1243 = vst [vmem:[%s791 + $0x708] sm:$0xff] %v1242
                  %v1244 = vld [vmem:[%s790 + $0xe20] sm:$0xff]
                  %1245 = vst [vmem:[%s791 + $0x710] sm:$0xff] %v1244
                  %v1246 = vld [vmem:[%s790 + $0xe30] sm:$0xff]
                  %1247 = vst [vmem:[%s791 + $0x718] sm:$0xff] %v1246
                  %v1248 = vld [vmem:[%s790 + $0xe40] sm:$0xff]
                  %1249 = vst [vmem:[%s791 + $0x720] sm:$0xff] %v1248
                  %v1250 = vld [vmem:[%s790 + $0xe50] sm:$0xff]
                  %1251 = vst [vmem:[%s791 + $0x728] sm:$0xff] %v1250
                  %v1252 = vld [vmem:[%s790 + $0xe60] sm:$0xff]
                  %1253 = vst [vmem:[%s791 + $0x730] sm:$0xff] %v1252
                  %v1254 = vld [vmem:[%s790 + $0xe70] sm:$0xff]
                  %1255 = vst [vmem:[%s791 + $0x738] sm:$0xff] %v1254
                  %v1256 = vld [vmem:[%s790 + $0xe80] sm:$0xff]
                  %1257 = vst [vmem:[%s791 + $0x740] sm:$0xff] %v1256
                  %v1258 = vld [vmem:[%s790 + $0xe90] sm:$0xff]
                  %1259 = vst [vmem:[%s791 + $0x748] sm:$0xff] %v1258
                  %v1260 = vld [vmem:[%s790 + $0xea0] sm:$0xff]
                  %1261 = vst [vmem:[%s791 + $0x750] sm:$0xff] %v1260
                  %v1262 = vld [vmem:[%s790 + $0xeb0] sm:$0xff]
                  %1263 = vst [vmem:[%s791 + $0x758] sm:$0xff] %v1262
                  %v1264 = vld [vmem:[%s790 + $0xec0] sm:$0xff]
                  %1265 = vst [vmem:[%s791 + $0x760] sm:$0xff] %v1264
                  %v1266 = vld [vmem:[%s790 + $0xed0] sm:$0xff]
                  %1267 = vst [vmem:[%s791 + $0x768] sm:$0xff] %v1266
                  %v1268 = vld [vmem:[%s790 + $0xee0] sm:$0xff]
                  %1269 = vst [vmem:[%s791 + $0x770] sm:$0xff] %v1268
                  %v1270 = vld [vmem:[%s790 + $0xef0] sm:$0xff]
                  %1271 = vst [vmem:[%s791 + $0x778] sm:$0xff] %v1270
                  %v1272 = vld [vmem:[%s790 + $0xf00] sm:$0xff]
                  %1273 = vst [vmem:[%s791 + $0x780] sm:$0xff] %v1272
                  %v1274 = vld [vmem:[%s790 + $0xf10] sm:$0xff]
                  %1275 = vst [vmem:[%s791 + $0x788] sm:$0xff] %v1274
                  %v1276 = vld [vmem:[%s790 + $0xf20] sm:$0xff]
                  %1277 = vst [vmem:[%s791 + $0x790] sm:$0xff] %v1276
                  %v1278 = vld [vmem:[%s790 + $0xf30] sm:$0xff]
                  %1279 = vst [vmem:[%s791 + $0x798] sm:$0xff] %v1278
                  %v1280 = vld [vmem:[%s790 + $0xf40] sm:$0xff]
                  %1281 = vst [vmem:[%s791 + $0x7a0] sm:$0xff] %v1280
                  %v1282 = vld [vmem:[%s790 + $0xf50] sm:$0xff]
                  %1283 = vst [vmem:[%s791 + $0x7a8] sm:$0xff] %v1282
                  %v1284 = vld [vmem:[%s790 + $0xf60] sm:$0xff]
                  %1285 = vst [vmem:[%s791 + $0x7b0] sm:$0xff] %v1284
                  %v1286 = vld [vmem:[%s790 + $0xf70] sm:$0xff]
                  %1287 = vst [vmem:[%s791 + $0x7b8] sm:$0xff] %v1286
                  %v1288 = vld [vmem:[%s790 + $0xf80] sm:$0xff]
                  %1289 = vst [vmem:[%s791 + $0x7c0] sm:$0xff] %v1288
                  %v1290 = vld [vmem:[%s790 + $0xf90] sm:$0xff]
                  %1291 = vst [vmem:[%s791 + $0x7c8] sm:$0xff] %v1290
                  %v1292 = vld [vmem:[%s790 + $0xfa0] sm:$0xff]
                  %1293 = vst [vmem:[%s791 + $0x7d0] sm:$0xff] %v1292
                  %v1294 = vld [vmem:[%s790 + $0xfb0] sm:$0xff]
                  %1295 = vst [vmem:[%s791 + $0x7d8] sm:$0xff] %v1294
                  %v1296 = vld [vmem:[%s790 + $0xfc0] sm:$0xff]
                  %1297 = vst [vmem:[%s791 + $0x7e0] sm:$0xff] %v1296
                  %v1298 = vld [vmem:[%s790 + $0xfd0] sm:$0xff]
                  %1299 = vst [vmem:[%s791 + $0x7e8] sm:$0xff] %v1298
                  %v1300 = vld [vmem:[%s790 + $0xfe0] sm:$0xff]
                  %1301 = vst [vmem:[%s791 + $0x7f0] sm:$0xff] %v1300
                  %v1302 = vld [vmem:[%s790 + $0xff0] sm:$0xff]
                  %1303 = vst [vmem:[%s791 + $0x7f8] sm:$0xff] %v1302
                  %v1304 = vld [vmem:[%s790 + $0x1000] sm:$0xff]
                  %1305 = vst [vmem:[%s791 + $0x800] sm:$0xff] %v1304
                  %v1306 = vld [vmem:[%s790 + $0x1010] sm:$0xff]
                  %1307 = vst [vmem:[%s791 + $0x808] sm:$0xff] %v1306
                  %v1308 = vld [vmem:[%s790 + $0x1020] sm:$0xff]
                  %1309 = vst [vmem:[%s791 + $0x810] sm:$0xff] %v1308
                  %v1310 = vld [vmem:[%s790 + $0x1030] sm:$0xff]
                  %1311 = vst [vmem:[%s791 + $0x818] sm:$0xff] %v1310
                  %v1312 = vld [vmem:[%s790 + $0x1040] sm:$0xff]
                  %1313 = vst [vmem:[%s791 + $0x820] sm:$0xff] %v1312
                  %v1314 = vld [vmem:[%s790 + $0x1050] sm:$0xff]
                  %1315 = vst [vmem:[%s791 + $0x828] sm:$0xff] %v1314
                  %v1316 = vld [vmem:[%s790 + $0x1060] sm:$0xff]
                  %1317 = vst [vmem:[%s791 + $0x830] sm:$0xff] %v1316
                  %v1318 = vld [vmem:[%s790 + $0x1070] sm:$0xff]
                  %1319 = vst [vmem:[%s791 + $0x838] sm:$0xff] %v1318
                  %v1320 = vld [vmem:[%s790 + $0x1080] sm:$0xff]
                  %1321 = vst [vmem:[%s791 + $0x840] sm:$0xff] %v1320
                  %v1322 = vld [vmem:[%s790 + $0x1090] sm:$0xff]
                  %1323 = vst [vmem:[%s791 + $0x848] sm:$0xff] %v1322
                  %v1324 = vld [vmem:[%s790 + $0x10a0] sm:$0xff]
                  %1325 = vst [vmem:[%s791 + $0x850] sm:$0xff] %v1324
                  %v1326 = vld [vmem:[%s790 + $0x10b0] sm:$0xff]
                  %1327 = vst [vmem:[%s791 + $0x858] sm:$0xff] %v1326
                  %v1328 = vld [vmem:[%s790 + $0x10c0] sm:$0xff]
                  %1329 = vst [vmem:[%s791 + $0x860] sm:$0xff] %v1328
                  %v1330 = vld [vmem:[%s790 + $0x10d0] sm:$0xff]
                  %1331 = vst [vmem:[%s791 + $0x868] sm:$0xff] %v1330
                  %v1332 = vld [vmem:[%s790 + $0x10e0] sm:$0xff]
                  %1333 = vst [vmem:[%s791 + $0x870] sm:$0xff] %v1332
                  %v1334 = vld [vmem:[%s790 + $0x10f0] sm:$0xff]
                  %1335 = vst [vmem:[%s791 + $0x878] sm:$0xff] %v1334
                  %v1336 = vld [vmem:[%s790 + $0x1100] sm:$0xff]
                  %1337 = vst [vmem:[%s791 + $0x880] sm:$0xff] %v1336
                  %v1338 = vld [vmem:[%s790 + $0x1110] sm:$0xff]
                  %1339 = vst [vmem:[%s791 + $0x888] sm:$0xff] %v1338
                  %v1340 = vld [vmem:[%s790 + $0x1120] sm:$0xff]
                  %1341 = vst [vmem:[%s791 + $0x890] sm:$0xff] %v1340
                  %v1342 = vld [vmem:[%s790 + $0x1130] sm:$0xff]
                  %1343 = vst [vmem:[%s791 + $0x898] sm:$0xff] %v1342
                  %v1344 = vld [vmem:[%s790 + $0x1140] sm:$0xff]
                  %1345 = vst [vmem:[%s791 + $0x8a0] sm:$0xff] %v1344
                  %v1346 = vld [vmem:[%s790 + $0x1150] sm:$0xff]
                  %1347 = vst [vmem:[%s791 + $0x8a8] sm:$0xff] %v1346
                  %v1348 = vld [vmem:[%s790 + $0x1160] sm:$0xff]
                  %1349 = vst [vmem:[%s791 + $0x8b0] sm:$0xff] %v1348
                  %v1350 = vld [vmem:[%s790 + $0x1170] sm:$0xff]
                  %1351 = vst [vmem:[%s791 + $0x8b8] sm:$0xff] %v1350
                  %v1352 = vld [vmem:[%s790 + $0x1180] sm:$0xff]
                  %1353 = vst [vmem:[%s791 + $0x8c0] sm:$0xff] %v1352
                  %v1354 = vld [vmem:[%s790 + $0x1190] sm:$0xff]
                  %1355 = vst [vmem:[%s791 + $0x8c8] sm:$0xff] %v1354
                  %v1356 = vld [vmem:[%s790 + $0x11a0] sm:$0xff]
                  %1357 = vst [vmem:[%s791 + $0x8d0] sm:$0xff] %v1356
                  %v1358 = vld [vmem:[%s790 + $0x11b0] sm:$0xff]
                  %1359 = vst [vmem:[%s791 + $0x8d8] sm:$0xff] %v1358
                  %v1360 = vld [vmem:[%s790 + $0x11c0] sm:$0xff]
                  %1361 = vst [vmem:[%s791 + $0x8e0] sm:$0xff] %v1360
                  %v1362 = vld [vmem:[%s790 + $0x11d0] sm:$0xff]
                  %1363 = vst [vmem:[%s791 + $0x8e8] sm:$0xff] %v1362
                  %v1364 = vld [vmem:[%s790 + $0x11e0] sm:$0xff]
                  %1365 = vst [vmem:[%s791 + $0x8f0] sm:$0xff] %v1364
                  %v1366 = vld [vmem:[%s790 + $0x11f0] sm:$0xff]
                  %1367 = vst [vmem:[%s791 + $0x8f8] sm:$0xff] %v1366
                $region52: #{sphereface_forward.8} parent=46 // loop_footer
                  %s789 = sadd.s32 1, %s785
                $region53: #{sphereface_forward.8} parent=46 // loop_footer_branch
                  %784 = sbr.rel target = $region49
                $region54: #{sphereface_forward.8} parent=46 // loop_exit
                  _
              $region47: #{sphereface_forward.8} parent=31 // pred_fallthru
                _
              // Predicated region
              $region55: #{sphereface_forward.8} parent=31 // pred_check
                _
              $region56: #{sphereface_forward.8} parent=31 // pred_check_branch
                %1369 = sbr.rel target = $region58
              $region57: #{sphereface_forward.8} parent=31 // pred_region
                _
              $region58: #{sphereface_forward.8} parent=31 // pred_fallthru
                _
            $region32: #{sphereface_forward.8} parent=27 // pred_fallthru
              _
            // Predicated region
            $region33: #{sphereface_forward.8} parent=27 // pred_check
              _
            $region34: #{sphereface_forward.8} parent=27 // pred_check_branch
              %196 = sbr.rel target = $region36
            $region35: #{sphereface_forward.8} parent=27 // pred_region
              loop: start=0, step=1, limit=1
              $region37: #{sphereface_forward.8} parent=35 // loop_pre_header
                _
              $region38: #{sphereface_forward.8} parent=35 // loop_header
                %s199 = sphi 0, %s203
                %p200 = scmp.ge.s32.totalorder %s199, 1
                %s204 = sphi %s190, %s190
                %s205 = sphi %s187, %s187
              $region39: #{sphereface_forward.8} parent=35 // loop_header_branch
                %202 = sbr.rel (%p200) target = $region43
              $region40: #{sphereface_forward.8} parent=35 // loop_body
                %v206 = vld [vmem:[%s204] sm:$0xff]
                %207 = vst [vmem:[%s205] sm:$0xff] %v206
                %v208 = vld [vmem:[%s204 + $0x10] sm:$0xff]
                %209 = vst [vmem:[%s205 + $0x8] sm:$0xff] %v208
                %v210 = vld [vmem:[%s204 + $0x20] sm:$0xff]
                %211 = vst [vmem:[%s205 + $0x10] sm:$0xff] %v210
                %v212 = vld [vmem:[%s204 + $0x30] sm:$0xff]
                %213 = vst [vmem:[%s205 + $0x18] sm:$0xff] %v212
                %v214 = vld [vmem:[%s204 + $0x40] sm:$0xff]
                %215 = vst [vmem:[%s205 + $0x20] sm:$0xff] %v214
                %v216 = vld [vmem:[%s204 + $0x50] sm:$0xff]
                %217 = vst [vmem:[%s205 + $0x28] sm:$0xff] %v216
                %v218 = vld [vmem:[%s204 + $0x60] sm:$0xff]
                %219 = vst [vmem:[%s205 + $0x30] sm:$0xff] %v218
                %v220 = vld [vmem:[%s204 + $0x70] sm:$0xff]
                %221 = vst [vmem:[%s205 + $0x38] sm:$0xff] %v220
                %v222 = vld [vmem:[%s204 + $0x80] sm:$0xff]
                %223 = vst [vmem:[%s205 + $0x40] sm:$0xff] %v222
                %v224 = vld [vmem:[%s204 + $0x90] sm:$0xff]
                %225 = vst [vmem:[%s205 + $0x48] sm:$0xff] %v224
                %v226 = vld [vmem:[%s204 + $0xa0] sm:$0xff]
                %227 = vst [vmem:[%s205 + $0x50] sm:$0xff] %v226
                %v228 = vld [vmem:[%s204 + $0xb0] sm:$0xff]
                %229 = vst [vmem:[%s205 + $0x58] sm:$0xff] %v228
                %v230 = vld [vmem:[%s204 + $0xc0] sm:$0xff]
                %231 = vst [vmem:[%s205 + $0x60] sm:$0xff] %v230
                %v232 = vld [vmem:[%s204 + $0xd0] sm:$0xff]
                %233 = vst [vmem:[%s205 + $0x68] sm:$0xff] %v232
                %v234 = vld [vmem:[%s204 + $0xe0] sm:$0xff]
                %235 = vst [vmem:[%s205 + $0x70] sm:$0xff] %v234
                %v236 = vld [vmem:[%s204 + $0xf0] sm:$0xff]
                %237 = vst [vmem:[%s205 + $0x78] sm:$0xff] %v236
                %v238 = vld [vmem:[%s204 + $0x100] sm:$0xff]
                %239 = vst [vmem:[%s205 + $0x80] sm:$0xff] %v238
                %v240 = vld [vmem:[%s204 + $0x110] sm:$0xff]
                %241 = vst [vmem:[%s205 + $0x88] sm:$0xff] %v240
                %v242 = vld [vmem:[%s204 + $0x120] sm:$0xff]
                %243 = vst [vmem:[%s205 + $0x90] sm:$0xff] %v242
                %v244 = vld [vmem:[%s204 + $0x130] sm:$0xff]
                %245 = vst [vmem:[%s205 + $0x98] sm:$0xff] %v244
                %v246 = vld [vmem:[%s204 + $0x140] sm:$0xff]
                %247 = vst [vmem:[%s205 + $0xa0] sm:$0xff] %v246
                %v248 = vld [vmem:[%s204 + $0x150] sm:$0xff]
                %249 = vst [vmem:[%s205 + $0xa8] sm:$0xff] %v248
                %v250 = vld [vmem:[%s204 + $0x160] sm:$0xff]
                %251 = vst [vmem:[%s205 + $0xb0] sm:$0xff] %v250
                %v252 = vld [vmem:[%s204 + $0x170] sm:$0xff]
                %253 = vst [vmem:[%s205 + $0xb8] sm:$0xff] %v252
                %v254 = vld [vmem:[%s204 + $0x180] sm:$0xff]
                %255 = vst [vmem:[%s205 + $0xc0] sm:$0xff] %v254
                %v256 = vld [vmem:[%s204 + $0x190] sm:$0xff]
                %257 = vst [vmem:[%s205 + $0xc8] sm:$0xff] %v256
                %v258 = vld [vmem:[%s204 + $0x1a0] sm:$0xff]
                %259 = vst [vmem:[%s205 + $0xd0] sm:$0xff] %v258
                %v260 = vld [vmem:[%s204 + $0x1b0] sm:$0xff]
                %261 = vst [vmem:[%s205 + $0xd8] sm:$0xff] %v260
                %v262 = vld [vmem:[%s204 + $0x1c0] sm:$0xff]
                %263 = vst [vmem:[%s205 + $0xe0] sm:$0xff] %v262
                %v264 = vld [vmem:[%s204 + $0x1d0] sm:$0xff]
                %265 = vst [vmem:[%s205 + $0xe8] sm:$0xff] %v264
                %v266 = vld [vmem:[%s204 + $0x1e0] sm:$0xff]
                %267 = vst [vmem:[%s205 + $0xf0] sm:$0xff] %v266
                %v268 = vld [vmem:[%s204 + $0x1f0] sm:$0xff]
                %269 = vst [vmem:[%s205 + $0xf8] sm:$0xff] %v268
                %v270 = vld [vmem:[%s204 + $0x200] sm:$0xff]
                %271 = vst [vmem:[%s205 + $0x100] sm:$0xff] %v270
                %v272 = vld [vmem:[%s204 + $0x210] sm:$0xff]
                %273 = vst [vmem:[%s205 + $0x108] sm:$0xff] %v272
                %v274 = vld [vmem:[%s204 + $0x220] sm:$0xff]
                %275 = vst [vmem:[%s205 + $0x110] sm:$0xff] %v274
                %v276 = vld [vmem:[%s204 + $0x230] sm:$0xff]
                %277 = vst [vmem:[%s205 + $0x118] sm:$0xff] %v276
                %v278 = vld [vmem:[%s204 + $0x240] sm:$0xff]
                %279 = vst [vmem:[%s205 + $0x120] sm:$0xff] %v278
                %v280 = vld [vmem:[%s204 + $0x250] sm:$0xff]
                %281 = vst [vmem:[%s205 + $0x128] sm:$0xff] %v280
                %v282 = vld [vmem:[%s204 + $0x260] sm:$0xff]
                %283 = vst [vmem:[%s205 + $0x130] sm:$0xff] %v282
                %v284 = vld [vmem:[%s204 + $0x270] sm:$0xff]
                %285 = vst [vmem:[%s205 + $0x138] sm:$0xff] %v284
                %v286 = vld [vmem:[%s204 + $0x280] sm:$0xff]
                %287 = vst [vmem:[%s205 + $0x140] sm:$0xff] %v286
                %v288 = vld [vmem:[%s204 + $0x290] sm:$0xff]
                %289 = vst [vmem:[%s205 + $0x148] sm:$0xff] %v288
                %v290 = vld [vmem:[%s204 + $0x2a0] sm:$0xff]
                %291 = vst [vmem:[%s205 + $0x150] sm:$0xff] %v290
                %v292 = vld [vmem:[%s204 + $0x2b0] sm:$0xff]
                %293 = vst [vmem:[%s205 + $0x158] sm:$0xff] %v292
                %v294 = vld [vmem:[%s204 + $0x2c0] sm:$0xff]
                %295 = vst [vmem:[%s205 + $0x160] sm:$0xff] %v294
                %v296 = vld [vmem:[%s204 + $0x2d0] sm:$0xff]
                %297 = vst [vmem:[%s205 + $0x168] sm:$0xff] %v296
                %v298 = vld [vmem:[%s204 + $0x2e0] sm:$0xff]
                %299 = vst [vmem:[%s205 + $0x170] sm:$0xff] %v298
                %v300 = vld [vmem:[%s204 + $0x2f0] sm:$0xff]
                %301 = vst [vmem:[%s205 + $0x178] sm:$0xff] %v300
                %v302 = vld [vmem:[%s204 + $0x300] sm:$0xff]
                %303 = vst [vmem:[%s205 + $0x180] sm:$0xff] %v302
                %v304 = vld [vmem:[%s204 + $0x310] sm:$0xff]
                %305 = vst [vmem:[%s205 + $0x188] sm:$0xff] %v304
                %v306 = vld [vmem:[%s204 + $0x320] sm:$0xff]
                %307 = vst [vmem:[%s205 + $0x190] sm:$0xff] %v306
                %v308 = vld [vmem:[%s204 + $0x330] sm:$0xff]
                %309 = vst [vmem:[%s205 + $0x198] sm:$0xff] %v308
                %v310 = vld [vmem:[%s204 + $0x340] sm:$0xff]
                %311 = vst [vmem:[%s205 + $0x1a0] sm:$0xff] %v310
                %v312 = vld [vmem:[%s204 + $0x350] sm:$0xff]
                %313 = vst [vmem:[%s205 + $0x1a8] sm:$0xff] %v312
                %v314 = vld [vmem:[%s204 + $0x360] sm:$0xff]
                %315 = vst [vmem:[%s205 + $0x1b0] sm:$0xff] %v314
                %v316 = vld [vmem:[%s204 + $0x370] sm:$0xff]
                %317 = vst [vmem:[%s205 + $0x1b8] sm:$0xff] %v316
                %v318 = vld [vmem:[%s204 + $0x380] sm:$0xff]
                %319 = vst [vmem:[%s205 + $0x1c0] sm:$0xff] %v318
                %v320 = vld [vmem:[%s204 + $0x390] sm:$0xff]
                %321 = vst [vmem:[%s205 + $0x1c8] sm:$0xff] %v320
                %v322 = vld [vmem:[%s204 + $0x3a0] sm:$0xff]
                %323 = vst [vmem:[%s205 + $0x1d0] sm:$0xff] %v322
                %v324 = vld [vmem:[%s204 + $0x3b0] sm:$0xff]
                %325 = vst [vmem:[%s205 + $0x1d8] sm:$0xff] %v324
                %v326 = vld [vmem:[%s204 + $0x3c0] sm:$0xff]
                %327 = vst [vmem:[%s205 + $0x1e0] sm:$0xff] %v326
                %v328 = vld [vmem:[%s204 + $0x3d0] sm:$0xff]
                %329 = vst [vmem:[%s205 + $0x1e8] sm:$0xff] %v328
                %v330 = vld [vmem:[%s204 + $0x3e0] sm:$0xff]
                %331 = vst [vmem:[%s205 + $0x1f0] sm:$0xff] %v330
                %v332 = vld [vmem:[%s204 + $0x3f0] sm:$0xff]
                %333 = vst [vmem:[%s205 + $0x1f8] sm:$0xff] %v332
                %v334 = vld [vmem:[%s204 + $0x400] sm:$0xff]
                %335 = vst [vmem:[%s205 + $0x200] sm:$0xff] %v334
                %v336 = vld [vmem:[%s204 + $0x410] sm:$0xff]
                %337 = vst [vmem:[%s205 + $0x208] sm:$0xff] %v336
                %v338 = vld [vmem:[%s204 + $0x420] sm:$0xff]
                %339 = vst [vmem:[%s205 + $0x210] sm:$0xff] %v338
                %v340 = vld [vmem:[%s204 + $0x430] sm:$0xff]
                %341 = vst [vmem:[%s205 + $0x218] sm:$0xff] %v340
                %v342 = vld [vmem:[%s204 + $0x440] sm:$0xff]
                %343 = vst [vmem:[%s205 + $0x220] sm:$0xff] %v342
                %v344 = vld [vmem:[%s204 + $0x450] sm:$0xff]
                %345 = vst [vmem:[%s205 + $0x228] sm:$0xff] %v344
                %v346 = vld [vmem:[%s204 + $0x460] sm:$0xff]
                %347 = vst [vmem:[%s205 + $0x230] sm:$0xff] %v346
                %v348 = vld [vmem:[%s204 + $0x470] sm:$0xff]
                %349 = vst [vmem:[%s205 + $0x238] sm:$0xff] %v348
                %v350 = vld [vmem:[%s204 + $0x480] sm:$0xff]
                %351 = vst [vmem:[%s205 + $0x240] sm:$0xff] %v350
                %v352 = vld [vmem:[%s204 + $0x490] sm:$0xff]
                %353 = vst [vmem:[%s205 + $0x248] sm:$0xff] %v352
                %v354 = vld [vmem:[%s204 + $0x4a0] sm:$0xff]
                %355 = vst [vmem:[%s205 + $0x250] sm:$0xff] %v354
                %v356 = vld [vmem:[%s204 + $0x4b0] sm:$0xff]
                %357 = vst [vmem:[%s205 + $0x258] sm:$0xff] %v356
                %v358 = vld [vmem:[%s204 + $0x4c0] sm:$0xff]
                %359 = vst [vmem:[%s205 + $0x260] sm:$0xff] %v358
                %v360 = vld [vmem:[%s204 + $0x4d0] sm:$0xff]
                %361 = vst [vmem:[%s205 + $0x268] sm:$0xff] %v360
                %v362 = vld [vmem:[%s204 + $0x4e0] sm:$0xff]
                %363 = vst [vmem:[%s205 + $0x270] sm:$0xff] %v362
                %v364 = vld [vmem:[%s204 + $0x4f0] sm:$0xff]
                %365 = vst [vmem:[%s205 + $0x278] sm:$0xff] %v364
                %v366 = vld [vmem:[%s204 + $0x500] sm:$0xff]
                %367 = vst [vmem:[%s205 + $0x280] sm:$0xff] %v366
                %v368 = vld [vmem:[%s204 + $0x510] sm:$0xff]
                %369 = vst [vmem:[%s205 + $0x288] sm:$0xff] %v368
                %v370 = vld [vmem:[%s204 + $0x520] sm:$0xff]
                %371 = vst [vmem:[%s205 + $0x290] sm:$0xff] %v370
                %v372 = vld [vmem:[%s204 + $0x530] sm:$0xff]
                %373 = vst [vmem:[%s205 + $0x298] sm:$0xff] %v372
                %v374 = vld [vmem:[%s204 + $0x540] sm:$0xff]
                %375 = vst [vmem:[%s205 + $0x2a0] sm:$0xff] %v374
                %v376 = vld [vmem:[%s204 + $0x550] sm:$0xff]
                %377 = vst [vmem:[%s205 + $0x2a8] sm:$0xff] %v376
                %v378 = vld [vmem:[%s204 + $0x560] sm:$0xff]
                %379 = vst [vmem:[%s205 + $0x2b0] sm:$0xff] %v378
                %v380 = vld [vmem:[%s204 + $0x570] sm:$0xff]
                %381 = vst [vmem:[%s205 + $0x2b8] sm:$0xff] %v380
                %v382 = vld [vmem:[%s204 + $0x580] sm:$0xff]
                %383 = vst [vmem:[%s205 + $0x2c0] sm:$0xff] %v382
                %v384 = vld [vmem:[%s204 + $0x590] sm:$0xff]
                %385 = vst [vmem:[%s205 + $0x2c8] sm:$0xff] %v384
                %v386 = vld [vmem:[%s204 + $0x5a0] sm:$0xff]
                %387 = vst [vmem:[%s205 + $0x2d0] sm:$0xff] %v386
                %v388 = vld [vmem:[%s204 + $0x5b0] sm:$0xff]
                %389 = vst [vmem:[%s205 + $0x2d8] sm:$0xff] %v388
                %v390 = vld [vmem:[%s204 + $0x5c0] sm:$0xff]
                %391 = vst [vmem:[%s205 + $0x2e0] sm:$0xff] %v390
                %v392 = vld [vmem:[%s204 + $0x5d0] sm:$0xff]
                %393 = vst [vmem:[%s205 + $0x2e8] sm:$0xff] %v392
                %v394 = vld [vmem:[%s204 + $0x5e0] sm:$0xff]
                %395 = vst [vmem:[%s205 + $0x2f0] sm:$0xff] %v394
                %v396 = vld [vmem:[%s204 + $0x5f0] sm:$0xff]
                %397 = vst [vmem:[%s205 + $0x2f8] sm:$0xff] %v396
                %v398 = vld [vmem:[%s204 + $0x600] sm:$0xff]
                %399 = vst [vmem:[%s205 + $0x300] sm:$0xff] %v398
                %v400 = vld [vmem:[%s204 + $0x610] sm:$0xff]
                %401 = vst [vmem:[%s205 + $0x308] sm:$0xff] %v400
                %v402 = vld [vmem:[%s204 + $0x620] sm:$0xff]
                %403 = vst [vmem:[%s205 + $0x310] sm:$0xff] %v402
                %v404 = vld [vmem:[%s204 + $0x630] sm:$0xff]
                %405 = vst [vmem:[%s205 + $0x318] sm:$0xff] %v404
                %v406 = vld [vmem:[%s204 + $0x640] sm:$0xff]
                %407 = vst [vmem:[%s205 + $0x320] sm:$0xff] %v406
                %v408 = vld [vmem:[%s204 + $0x650] sm:$0xff]
                %409 = vst [vmem:[%s205 + $0x328] sm:$0xff] %v408
                %v410 = vld [vmem:[%s204 + $0x660] sm:$0xff]
                %411 = vst [vmem:[%s205 + $0x330] sm:$0xff] %v410
                %v412 = vld [vmem:[%s204 + $0x670] sm:$0xff]
                %413 = vst [vmem:[%s205 + $0x338] sm:$0xff] %v412
                %v414 = vld [vmem:[%s204 + $0x680] sm:$0xff]
                %415 = vst [vmem:[%s205 + $0x340] sm:$0xff] %v414
                %v416 = vld [vmem:[%s204 + $0x690] sm:$0xff]
                %417 = vst [vmem:[%s205 + $0x348] sm:$0xff] %v416
                %v418 = vld [vmem:[%s204 + $0x6a0] sm:$0xff]
                %419 = vst [vmem:[%s205 + $0x350] sm:$0xff] %v418
                %v420 = vld [vmem:[%s204 + $0x6b0] sm:$0xff]
                %421 = vst [vmem:[%s205 + $0x358] sm:$0xff] %v420
                %v422 = vld [vmem:[%s204 + $0x6c0] sm:$0xff]
                %423 = vst [vmem:[%s205 + $0x360] sm:$0xff] %v422
                %v424 = vld [vmem:[%s204 + $0x6d0] sm:$0xff]
                %425 = vst [vmem:[%s205 + $0x368] sm:$0xff] %v424
                %v426 = vld [vmem:[%s204 + $0x6e0] sm:$0xff]
                %427 = vst [vmem:[%s205 + $0x370] sm:$0xff] %v426
                %v428 = vld [vmem:[%s204 + $0x6f0] sm:$0xff]
                %429 = vst [vmem:[%s205 + $0x378] sm:$0xff] %v428
                %v430 = vld [vmem:[%s204 + $0x700] sm:$0xff]
                %431 = vst [vmem:[%s205 + $0x380] sm:$0xff] %v430
                %v432 = vld [vmem:[%s204 + $0x710] sm:$0xff]
                %433 = vst [vmem:[%s205 + $0x388] sm:$0xff] %v432
                %v434 = vld [vmem:[%s204 + $0x720] sm:$0xff]
                %435 = vst [vmem:[%s205 + $0x390] sm:$0xff] %v434
                %v436 = vld [vmem:[%s204 + $0x730] sm:$0xff]
                %437 = vst [vmem:[%s205 + $0x398] sm:$0xff] %v436
                %v438 = vld [vmem:[%s204 + $0x740] sm:$0xff]
                %439 = vst [vmem:[%s205 + $0x3a0] sm:$0xff] %v438
                %v440 = vld [vmem:[%s204 + $0x750] sm:$0xff]
                %441 = vst [vmem:[%s205 + $0x3a8] sm:$0xff] %v440
                %v442 = vld [vmem:[%s204 + $0x760] sm:$0xff]
                %443 = vst [vmem:[%s205 + $0x3b0] sm:$0xff] %v442
                %v444 = vld [vmem:[%s204 + $0x770] sm:$0xff]
                %445 = vst [vmem:[%s205 + $0x3b8] sm:$0xff] %v444
                %v446 = vld [vmem:[%s204 + $0x780] sm:$0xff]
                %447 = vst [vmem:[%s205 + $0x3c0] sm:$0xff] %v446
                %v448 = vld [vmem:[%s204 + $0x790] sm:$0xff]
                %449 = vst [vmem:[%s205 + $0x3c8] sm:$0xff] %v448
                %v450 = vld [vmem:[%s204 + $0x7a0] sm:$0xff]
                %451 = vst [vmem:[%s205 + $0x3d0] sm:$0xff] %v450
                %v452 = vld [vmem:[%s204 + $0x7b0] sm:$0xff]
                %453 = vst [vmem:[%s205 + $0x3d8] sm:$0xff] %v452
                %v454 = vld [vmem:[%s204 + $0x7c0] sm:$0xff]
                %455 = vst [vmem:[%s205 + $0x3e0] sm:$0xff] %v454
                %v456 = vld [vmem:[%s204 + $0x7d0] sm:$0xff]
                %457 = vst [vmem:[%s205 + $0x3e8] sm:$0xff] %v456
                %v458 = vld [vmem:[%s204 + $0x7e0] sm:$0xff]
                %459 = vst [vmem:[%s205 + $0x3f0] sm:$0xff] %v458
                %v460 = vld [vmem:[%s204 + $0x7f0] sm:$0xff]
                %461 = vst [vmem:[%s205 + $0x3f8] sm:$0xff] %v460
                %v462 = vld [vmem:[%s204 + $0x800] sm:$0xff]
                %463 = vst [vmem:[%s205 + $0x400] sm:$0xff] %v462
                %v464 = vld [vmem:[%s204 + $0x810] sm:$0xff]
                %465 = vst [vmem:[%s205 + $0x408] sm:$0xff] %v464
                %v466 = vld [vmem:[%s204 + $0x820] sm:$0xff]
                %467 = vst [vmem:[%s205 + $0x410] sm:$0xff] %v466
                %v468 = vld [vmem:[%s204 + $0x830] sm:$0xff]
                %469 = vst [vmem:[%s205 + $0x418] sm:$0xff] %v468
                %v470 = vld [vmem:[%s204 + $0x840] sm:$0xff]
                %471 = vst [vmem:[%s205 + $0x420] sm:$0xff] %v470
                %v472 = vld [vmem:[%s204 + $0x850] sm:$0xff]
                %473 = vst [vmem:[%s205 + $0x428] sm:$0xff] %v472
                %v474 = vld [vmem:[%s204 + $0x860] sm:$0xff]
                %475 = vst [vmem:[%s205 + $0x430] sm:$0xff] %v474
                %v476 = vld [vmem:[%s204 + $0x870] sm:$0xff]
                %477 = vst [vmem:[%s205 + $0x438] sm:$0xff] %v476
                %v478 = vld [vmem:[%s204 + $0x880] sm:$0xff]
                %479 = vst [vmem:[%s205 + $0x440] sm:$0xff] %v478
                %v480 = vld [vmem:[%s204 + $0x890] sm:$0xff]
                %481 = vst [vmem:[%s205 + $0x448] sm:$0xff] %v480
                %v482 = vld [vmem:[%s204 + $0x8a0] sm:$0xff]
                %483 = vst [vmem:[%s205 + $0x450] sm:$0xff] %v482
                %v484 = vld [vmem:[%s204 + $0x8b0] sm:$0xff]
                %485 = vst [vmem:[%s205 + $0x458] sm:$0xff] %v484
                %v486 = vld [vmem:[%s204 + $0x8c0] sm:$0xff]
                %487 = vst [vmem:[%s205 + $0x460] sm:$0xff] %v486
                %v488 = vld [vmem:[%s204 + $0x8d0] sm:$0xff]
                %489 = vst [vmem:[%s205 + $0x468] sm:$0xff] %v488
                %v490 = vld [vmem:[%s204 + $0x8e0] sm:$0xff]
                %491 = vst [vmem:[%s205 + $0x470] sm:$0xff] %v490
                %v492 = vld [vmem:[%s204 + $0x8f0] sm:$0xff]
                %493 = vst [vmem:[%s205 + $0x478] sm:$0xff] %v492
                %v494 = vld [vmem:[%s204 + $0x900] sm:$0xff]
                %495 = vst [vmem:[%s205 + $0x480] sm:$0xff] %v494
                %v496 = vld [vmem:[%s204 + $0x910] sm:$0xff]
                %497 = vst [vmem:[%s205 + $0x488] sm:$0xff] %v496
                %v498 = vld [vmem:[%s204 + $0x920] sm:$0xff]
                %499 = vst [vmem:[%s205 + $0x490] sm:$0xff] %v498
                %v500 = vld [vmem:[%s204 + $0x930] sm:$0xff]
                %501 = vst [vmem:[%s205 + $0x498] sm:$0xff] %v500
                %v502 = vld [vmem:[%s204 + $0x940] sm:$0xff]
                %503 = vst [vmem:[%s205 + $0x4a0] sm:$0xff] %v502
                %v504 = vld [vmem:[%s204 + $0x950] sm:$0xff]
                %505 = vst [vmem:[%s205 + $0x4a8] sm:$0xff] %v504
                %v506 = vld [vmem:[%s204 + $0x960] sm:$0xff]
                %507 = vst [vmem:[%s205 + $0x4b0] sm:$0xff] %v506
                %v508 = vld [vmem:[%s204 + $0x970] sm:$0xff]
                %509 = vst [vmem:[%s205 + $0x4b8] sm:$0xff] %v508
                %v510 = vld [vmem:[%s204 + $0x980] sm:$0xff]
                %511 = vst [vmem:[%s205 + $0x4c0] sm:$0xff] %v510
                %v512 = vld [vmem:[%s204 + $0x990] sm:$0xff]
                %513 = vst [vmem:[%s205 + $0x4c8] sm:$0xff] %v512
                %v514 = vld [vmem:[%s204 + $0x9a0] sm:$0xff]
                %515 = vst [vmem:[%s205 + $0x4d0] sm:$0xff] %v514
                %v516 = vld [vmem:[%s204 + $0x9b0] sm:$0xff]
                %517 = vst [vmem:[%s205 + $0x4d8] sm:$0xff] %v516
                %v518 = vld [vmem:[%s204 + $0x9c0] sm:$0xff]
                %519 = vst [vmem:[%s205 + $0x4e0] sm:$0xff] %v518
                %v520 = vld [vmem:[%s204 + $0x9d0] sm:$0xff]
                %521 = vst [vmem:[%s205 + $0x4e8] sm:$0xff] %v520
                %v522 = vld [vmem:[%s204 + $0x9e0] sm:$0xff]
                %523 = vst [vmem:[%s205 + $0x4f0] sm:$0xff] %v522
                %v524 = vld [vmem:[%s204 + $0x9f0] sm:$0xff]
                %525 = vst [vmem:[%s205 + $0x4f8] sm:$0xff] %v524
                %v526 = vld [vmem:[%s204 + $0xa00] sm:$0xff]
                %527 = vst [vmem:[%s205 + $0x500] sm:$0xff] %v526
                %v528 = vld [vmem:[%s204 + $0xa10] sm:$0xff]
                %529 = vst [vmem:[%s205 + $0x508] sm:$0xff] %v528
                %v530 = vld [vmem:[%s204 + $0xa20] sm:$0xff]
                %531 = vst [vmem:[%s205 + $0x510] sm:$0xff] %v530
                %v532 = vld [vmem:[%s204 + $0xa30] sm:$0xff]
                %533 = vst [vmem:[%s205 + $0x518] sm:$0xff] %v532
                %v534 = vld [vmem:[%s204 + $0xa40] sm:$0xff]
                %535 = vst [vmem:[%s205 + $0x520] sm:$0xff] %v534
                %v536 = vld [vmem:[%s204 + $0xa50] sm:$0xff]
                %537 = vst [vmem:[%s205 + $0x528] sm:$0xff] %v536
                %v538 = vld [vmem:[%s204 + $0xa60] sm:$0xff]
                %539 = vst [vmem:[%s205 + $0x530] sm:$0xff] %v538
                %v540 = vld [vmem:[%s204 + $0xa70] sm:$0xff]
                %541 = vst [vmem:[%s205 + $0x538] sm:$0xff] %v540
                %v542 = vld [vmem:[%s204 + $0xa80] sm:$0xff]
                %543 = vst [vmem:[%s205 + $0x540] sm:$0xff] %v542
                %v544 = vld [vmem:[%s204 + $0xa90] sm:$0xff]
                %545 = vst [vmem:[%s205 + $0x548] sm:$0xff] %v544
                %v546 = vld [vmem:[%s204 + $0xaa0] sm:$0xff]
                %547 = vst [vmem:[%s205 + $0x550] sm:$0xff] %v546
                %v548 = vld [vmem:[%s204 + $0xab0] sm:$0xff]
                %549 = vst [vmem:[%s205 + $0x558] sm:$0xff] %v548
                %v550 = vld [vmem:[%s204 + $0xac0] sm:$0xff]
                %551 = vst [vmem:[%s205 + $0x560] sm:$0xff] %v550
                %v552 = vld [vmem:[%s204 + $0xad0] sm:$0xff]
                %553 = vst [vmem:[%s205 + $0x568] sm:$0xff] %v552
                %v554 = vld [vmem:[%s204 + $0xae0] sm:$0xff]
                %555 = vst [vmem:[%s205 + $0x570] sm:$0xff] %v554
                %v556 = vld [vmem:[%s204 + $0xaf0] sm:$0xff]
                %557 = vst [vmem:[%s205 + $0x578] sm:$0xff] %v556
                %v558 = vld [vmem:[%s204 + $0xb00] sm:$0xff]
                %559 = vst [vmem:[%s205 + $0x580] sm:$0xff] %v558
                %v560 = vld [vmem:[%s204 + $0xb10] sm:$0xff]
                %561 = vst [vmem:[%s205 + $0x588] sm:$0xff] %v560
                %v562 = vld [vmem:[%s204 + $0xb20] sm:$0xff]
                %563 = vst [vmem:[%s205 + $0x590] sm:$0xff] %v562
                %v564 = vld [vmem:[%s204 + $0xb30] sm:$0xff]
                %565 = vst [vmem:[%s205 + $0x598] sm:$0xff] %v564
                %v566 = vld [vmem:[%s204 + $0xb40] sm:$0xff]
                %567 = vst [vmem:[%s205 + $0x5a0] sm:$0xff] %v566
                %v568 = vld [vmem:[%s204 + $0xb50] sm:$0xff]
                %569 = vst [vmem:[%s205 + $0x5a8] sm:$0xff] %v568
                %v570 = vld [vmem:[%s204 + $0xb60] sm:$0xff]
                %571 = vst [vmem:[%s205 + $0x5b0] sm:$0xff] %v570
                %v572 = vld [vmem:[%s204 + $0xb70] sm:$0xff]
                %573 = vst [vmem:[%s205 + $0x5b8] sm:$0xff] %v572
                %v574 = vld [vmem:[%s204 + $0xb80] sm:$0xff]
                %575 = vst [vmem:[%s205 + $0x5c0] sm:$0xff] %v574
                %v576 = vld [vmem:[%s204 + $0xb90] sm:$0xff]
                %577 = vst [vmem:[%s205 + $0x5c8] sm:$0xff] %v576
                %v578 = vld [vmem:[%s204 + $0xba0] sm:$0xff]
                %579 = vst [vmem:[%s205 + $0x5d0] sm:$0xff] %v578
                %v580 = vld [vmem:[%s204 + $0xbb0] sm:$0xff]
                %581 = vst [vmem:[%s205 + $0x5d8] sm:$0xff] %v580
                %v582 = vld [vmem:[%s204 + $0xbc0] sm:$0xff]
                %583 = vst [vmem:[%s205 + $0x5e0] sm:$0xff] %v582
                %v584 = vld [vmem:[%s204 + $0xbd0] sm:$0xff]
                %585 = vst [vmem:[%s205 + $0x5e8] sm:$0xff] %v584
                %v586 = vld [vmem:[%s204 + $0xbe0] sm:$0xff]
                %587 = vst [vmem:[%s205 + $0x5f0] sm:$0xff] %v586
                %v588 = vld [vmem:[%s204 + $0xbf0] sm:$0xff]
                %589 = vst [vmem:[%s205 + $0x5f8] sm:$0xff] %v588
                %v590 = vld [vmem:[%s204 + $0xc00] sm:$0xff]
                %591 = vst [vmem:[%s205 + $0x600] sm:$0xff] %v590
                %v592 = vld [vmem:[%s204 + $0xc10] sm:$0xff]
                %593 = vst [vmem:[%s205 + $0x608] sm:$0xff] %v592
                %v594 = vld [vmem:[%s204 + $0xc20] sm:$0xff]
                %595 = vst [vmem:[%s205 + $0x610] sm:$0xff] %v594
                %v596 = vld [vmem:[%s204 + $0xc30] sm:$0xff]
                %597 = vst [vmem:[%s205 + $0x618] sm:$0xff] %v596
                %v598 = vld [vmem:[%s204 + $0xc40] sm:$0xff]
                %599 = vst [vmem:[%s205 + $0x620] sm:$0xff] %v598
                %v600 = vld [vmem:[%s204 + $0xc50] sm:$0xff]
                %601 = vst [vmem:[%s205 + $0x628] sm:$0xff] %v600
                %v602 = vld [vmem:[%s204 + $0xc60] sm:$0xff]
                %603 = vst [vmem:[%s205 + $0x630] sm:$0xff] %v602
                %v604 = vld [vmem:[%s204 + $0xc70] sm:$0xff]
                %605 = vst [vmem:[%s205 + $0x638] sm:$0xff] %v604
                %v606 = vld [vmem:[%s204 + $0xc80] sm:$0xff]
                %607 = vst [vmem:[%s205 + $0x640] sm:$0xff] %v606
                %v608 = vld [vmem:[%s204 + $0xc90] sm:$0xff]
                %609 = vst [vmem:[%s205 + $0x648] sm:$0xff] %v608
                %v610 = vld [vmem:[%s204 + $0xca0] sm:$0xff]
                %611 = vst [vmem:[%s205 + $0x650] sm:$0xff] %v610
                %v612 = vld [vmem:[%s204 + $0xcb0] sm:$0xff]
                %613 = vst [vmem:[%s205 + $0x658] sm:$0xff] %v612
                %v614 = vld [vmem:[%s204 + $0xcc0] sm:$0xff]
                %615 = vst [vmem:[%s205 + $0x660] sm:$0xff] %v614
                %v616 = vld [vmem:[%s204 + $0xcd0] sm:$0xff]
                %617 = vst [vmem:[%s205 + $0x668] sm:$0xff] %v616
                %v618 = vld [vmem:[%s204 + $0xce0] sm:$0xff]
                %619 = vst [vmem:[%s205 + $0x670] sm:$0xff] %v618
                %v620 = vld [vmem:[%s204 + $0xcf0] sm:$0xff]
                %621 = vst [vmem:[%s205 + $0x678] sm:$0xff] %v620
                %v622 = vld [vmem:[%s204 + $0xd00] sm:$0xff]
                %623 = vst [vmem:[%s205 + $0x680] sm:$0xff] %v622
                %v624 = vld [vmem:[%s204 + $0xd10] sm:$0xff]
                %625 = vst [vmem:[%s205 + $0x688] sm:$0xff] %v624
                %v626 = vld [vmem:[%s204 + $0xd20] sm:$0xff]
                %627 = vst [vmem:[%s205 + $0x690] sm:$0xff] %v626
                %v628 = vld [vmem:[%s204 + $0xd30] sm:$0xff]
                %629 = vst [vmem:[%s205 + $0x698] sm:$0xff] %v628
                %v630 = vld [vmem:[%s204 + $0xd40] sm:$0xff]
                %631 = vst [vmem:[%s205 + $0x6a0] sm:$0xff] %v630
                %v632 = vld [vmem:[%s204 + $0xd50] sm:$0xff]
                %633 = vst [vmem:[%s205 + $0x6a8] sm:$0xff] %v632
                %v634 = vld [vmem:[%s204 + $0xd60] sm:$0xff]
                %635 = vst [vmem:[%s205 + $0x6b0] sm:$0xff] %v634
                %v636 = vld [vmem:[%s204 + $0xd70] sm:$0xff]
                %637 = vst [vmem:[%s205 + $0x6b8] sm:$0xff] %v636
                %v638 = vld [vmem:[%s204 + $0xd80] sm:$0xff]
                %639 = vst [vmem:[%s205 + $0x6c0] sm:$0xff] %v638
                %v640 = vld [vmem:[%s204 + $0xd90] sm:$0xff]
                %641 = vst [vmem:[%s205 + $0x6c8] sm:$0xff] %v640
                %v642 = vld [vmem:[%s204 + $0xda0] sm:$0xff]
                %643 = vst [vmem:[%s205 + $0x6d0] sm:$0xff] %v642
                %v644 = vld [vmem:[%s204 + $0xdb0] sm:$0xff]
                %645 = vst [vmem:[%s205 + $0x6d8] sm:$0xff] %v644
                %v646 = vld [vmem:[%s204 + $0xdc0] sm:$0xff]
                %647 = vst [vmem:[%s205 + $0x6e0] sm:$0xff] %v646
                %v648 = vld [vmem:[%s204 + $0xdd0] sm:$0xff]
                %649 = vst [vmem:[%s205 + $0x6e8] sm:$0xff] %v648
                %v650 = vld [vmem:[%s204 + $0xde0] sm:$0xff]
                %651 = vst [vmem:[%s205 + $0x6f0] sm:$0xff] %v650
                %v652 = vld [vmem:[%s204 + $0xdf0] sm:$0xff]
                %653 = vst [vmem:[%s205 + $0x6f8] sm:$0xff] %v652
                %v654 = vld [vmem:[%s204 + $0xe00] sm:$0xff]
                %655 = vst [vmem:[%s205 + $0x700] sm:$0xff] %v654
                %v656 = vld [vmem:[%s204 + $0xe10] sm:$0xff]
                %657 = vst [vmem:[%s205 + $0x708] sm:$0xff] %v656
                %v658 = vld [vmem:[%s204 + $0xe20] sm:$0xff]
                %659 = vst [vmem:[%s205 + $0x710] sm:$0xff] %v658
                %v660 = vld [vmem:[%s204 + $0xe30] sm:$0xff]
                %661 = vst [vmem:[%s205 + $0x718] sm:$0xff] %v660
                %v662 = vld [vmem:[%s204 + $0xe40] sm:$0xff]
                %663 = vst [vmem:[%s205 + $0x720] sm:$0xff] %v662
                %v664 = vld [vmem:[%s204 + $0xe50] sm:$0xff]
                %665 = vst [vmem:[%s205 + $0x728] sm:$0xff] %v664
                %v666 = vld [vmem:[%s204 + $0xe60] sm:$0xff]
                %667 = vst [vmem:[%s205 + $0x730] sm:$0xff] %v666
                %v668 = vld [vmem:[%s204 + $0xe70] sm:$0xff]
                %669 = vst [vmem:[%s205 + $0x738] sm:$0xff] %v668
                %v670 = vld [vmem:[%s204 + $0xe80] sm:$0xff]
                %671 = vst [vmem:[%s205 + $0x740] sm:$0xff] %v670
                %v672 = vld [vmem:[%s204 + $0xe90] sm:$0xff]
                %673 = vst [vmem:[%s205 + $0x748] sm:$0xff] %v672
                %v674 = vld [vmem:[%s204 + $0xea0] sm:$0xff]
                %675 = vst [vmem:[%s205 + $0x750] sm:$0xff] %v674
                %v676 = vld [vmem:[%s204 + $0xeb0] sm:$0xff]
                %677 = vst [vmem:[%s205 + $0x758] sm:$0xff] %v676
                %v678 = vld [vmem:[%s204 + $0xec0] sm:$0xff]
                %679 = vst [vmem:[%s205 + $0x760] sm:$0xff] %v678
                %v680 = vld [vmem:[%s204 + $0xed0] sm:$0xff]
                %681 = vst [vmem:[%s205 + $0x768] sm:$0xff] %v680
                %v682 = vld [vmem:[%s204 + $0xee0] sm:$0xff]
                %683 = vst [vmem:[%s205 + $0x770] sm:$0xff] %v682
                %v684 = vld [vmem:[%s204 + $0xef0] sm:$0xff]
                %685 = vst [vmem:[%s205 + $0x778] sm:$0xff] %v684
                %v686 = vld [vmem:[%s204 + $0xf00] sm:$0xff]
                %687 = vst [vmem:[%s205 + $0x780] sm:$0xff] %v686
                %v688 = vld [vmem:[%s204 + $0xf10] sm:$0xff]
                %689 = vst [vmem:[%s205 + $0x788] sm:$0xff] %v688
                %v690 = vld [vmem:[%s204 + $0xf20] sm:$0xff]
                %691 = vst [vmem:[%s205 + $0x790] sm:$0xff] %v690
                %v692 = vld [vmem:[%s204 + $0xf30] sm:$0xff]
                %693 = vst [vmem:[%s205 + $0x798] sm:$0xff] %v692
                %v694 = vld [vmem:[%s204 + $0xf40] sm:$0xff]
                %695 = vst [vmem:[%s205 + $0x7a0] sm:$0xff] %v694
                %v696 = vld [vmem:[%s204 + $0xf50] sm:$0xff]
                %697 = vst [vmem:[%s205 + $0x7a8] sm:$0xff] %v696
                %v698 = vld [vmem:[%s204 + $0xf60] sm:$0xff]
                %699 = vst [vmem:[%s205 + $0x7b0] sm:$0xff] %v698
                %v700 = vld [vmem:[%s204 + $0xf70] sm:$0xff]
                %701 = vst [vmem:[%s205 + $0x7b8] sm:$0xff] %v700
                %v702 = vld [vmem:[%s204 + $0xf80] sm:$0xff]
                %703 = vst [vmem:[%s205 + $0x7c0] sm:$0xff] %v702
                %v704 = vld [vmem:[%s204 + $0xf90] sm:$0xff]
                %705 = vst [vmem:[%s205 + $0x7c8] sm:$0xff] %v704
                %v706 = vld [vmem:[%s204 + $0xfa0] sm:$0xff]
                %707 = vst [vmem:[%s205 + $0x7d0] sm:$0xff] %v706
                %v708 = vld [vmem:[%s204 + $0xfb0] sm:$0xff]
                %709 = vst [vmem:[%s205 + $0x7d8] sm:$0xff] %v708
                %v710 = vld [vmem:[%s204 + $0xfc0] sm:$0xff]
                %711 = vst [vmem:[%s205 + $0x7e0] sm:$0xff] %v710
                %v712 = vld [vmem:[%s204 + $0xfd0] sm:$0xff]
                %713 = vst [vmem:[%s205 + $0x7e8] sm:$0xff] %v712
                %v714 = vld [vmem:[%s204 + $0xfe0] sm:$0xff]
                %715 = vst [vmem:[%s205 + $0x7f0] sm:$0xff] %v714
                %v716 = vld [vmem:[%s204 + $0xff0] sm:$0xff]
                %717 = vst [vmem:[%s205 + $0x7f8] sm:$0xff] %v716
                %v718 = vld [vmem:[%s204 + $0x1000] sm:$0xff]
                %719 = vst [vmem:[%s205 + $0x800] sm:$0xff] %v718
                %v720 = vld [vmem:[%s204 + $0x1010] sm:$0xff]
                %721 = vst [vmem:[%s205 + $0x808] sm:$0xff] %v720
                %v722 = vld [vmem:[%s204 + $0x1020] sm:$0xff]
                %723 = vst [vmem:[%s205 + $0x810] sm:$0xff] %v722
                %v724 = vld [vmem:[%s204 + $0x1030] sm:$0xff]
                %725 = vst [vmem:[%s205 + $0x818] sm:$0xff] %v724
                %v726 = vld [vmem:[%s204 + $0x1040] sm:$0xff]
                %727 = vst [vmem:[%s205 + $0x820] sm:$0xff] %v726
                %v728 = vld [vmem:[%s204 + $0x1050] sm:$0xff]
                %729 = vst [vmem:[%s205 + $0x828] sm:$0xff] %v728
                %v730 = vld [vmem:[%s204 + $0x1060] sm:$0xff]
                %731 = vst [vmem:[%s205 + $0x830] sm:$0xff] %v730
                %v732 = vld [vmem:[%s204 + $0x1070] sm:$0xff]
                %733 = vst [vmem:[%s205 + $0x838] sm:$0xff] %v732
                %v734 = vld [vmem:[%s204 + $0x1080] sm:$0xff]
                %735 = vst [vmem:[%s205 + $0x840] sm:$0xff] %v734
                %v736 = vld [vmem:[%s204 + $0x1090] sm:$0xff]
                %737 = vst [vmem:[%s205 + $0x848] sm:$0xff] %v736
                %v738 = vld [vmem:[%s204 + $0x10a0] sm:$0xff]
                %739 = vst [vmem:[%s205 + $0x850] sm:$0xff] %v738
                %v740 = vld [vmem:[%s204 + $0x10b0] sm:$0xff]
                %741 = vst [vmem:[%s205 + $0x858] sm:$0xff] %v740
                %v742 = vld [vmem:[%s204 + $0x10c0] sm:$0xff]
                %743 = vst [vmem:[%s205 + $0x860] sm:$0xff] %v742
                %v744 = vld [vmem:[%s204 + $0x10d0] sm:$0xff]
                %745 = vst [vmem:[%s205 + $0x868] sm:$0xff] %v744
                %v746 = vld [vmem:[%s204 + $0x10e0] sm:$0xff]
                %747 = vst [vmem:[%s205 + $0x870] sm:$0xff] %v746
                %v748 = vld [vmem:[%s204 + $0x10f0] sm:$0xff]
                %749 = vst [vmem:[%s205 + $0x878] sm:$0xff] %v748
                %v750 = vld [vmem:[%s204 + $0x1100] sm:$0xff]
                %751 = vst [vmem:[%s205 + $0x880] sm:$0xff] %v750
                %v752 = vld [vmem:[%s204 + $0x1110] sm:$0xff]
                %753 = vst [vmem:[%s205 + $0x888] sm:$0xff] %v752
                %v754 = vld [vmem:[%s204 + $0x1120] sm:$0xff]
                %755 = vst [vmem:[%s205 + $0x890] sm:$0xff] %v754
                %v756 = vld [vmem:[%s204 + $0x1130] sm:$0xff]
                %757 = vst [vmem:[%s205 + $0x898] sm:$0xff] %v756
                %v758 = vld [vmem:[%s204 + $0x1140] sm:$0xff]
                %759 = vst [vmem:[%s205 + $0x8a0] sm:$0xff] %v758
                %v760 = vld [vmem:[%s204 + $0x1150] sm:$0xff]
                %761 = vst [vmem:[%s205 + $0x8a8] sm:$0xff] %v760
                %v762 = vld [vmem:[%s204 + $0x1160] sm:$0xff]
                %763 = vst [vmem:[%s205 + $0x8b0] sm:$0xff] %v762
                %v764 = vld [vmem:[%s204 + $0x1170] sm:$0xff]
                %765 = vst [vmem:[%s205 + $0x8b8] sm:$0xff] %v764
                %v766 = vld [vmem:[%s204 + $0x1180] sm:$0xff]
                %767 = vst [vmem:[%s205 + $0x8c0] sm:$0xff] %v766
                %v768 = vld [vmem:[%s204 + $0x1190] sm:$0xff]
                %769 = vst [vmem:[%s205 + $0x8c8] sm:$0xff] %v768
                %v770 = vld [vmem:[%s204 + $0x11a0] sm:$0xff]
                %771 = vst [vmem:[%s205 + $0x8d0] sm:$0xff] %v770
                %v772 = vld [vmem:[%s204 + $0x11b0] sm:$0xff]
                %773 = vst [vmem:[%s205 + $0x8d8] sm:$0xff] %v772
                %v774 = vld [vmem:[%s204 + $0x11c0] sm:$0xff]
                %775 = vst [vmem:[%s205 + $0x8e0] sm:$0xff] %v774
                %v776 = vld [vmem:[%s204 + $0x11d0] sm:$0xff]
                %777 = vst [vmem:[%s205 + $0x8e8] sm:$0xff] %v776
                %v778 = vld [vmem:[%s204 + $0x11e0] sm:$0xff]
                %779 = vst [vmem:[%s205 + $0x8f0] sm:$0xff] %v778
                %v780 = vld [vmem:[%s204 + $0x11f0] sm:$0xff]
                %781 = vst [vmem:[%s205 + $0x8f8] sm:$0xff] %v780
              $region41: #{sphereface_forward.8} parent=35 // loop_footer
                %s203 = sadd.s32 1, %s199
              $region42: #{sphereface_forward.8} parent=35 // loop_footer_branch
                %198 = sbr.rel target = $region38
              $region43: #{sphereface_forward.8} parent=35 // loop_exit
                _
            $region36: #{sphereface_forward.8} parent=27 // pred_fallthru
              _
          $region28: #{sphereface_forward.8} parent=23 // pred_fallthru
            _
          %1370 = vnop
        $region24: #{sphereface_forward.8} parent=19 // pred_fallthru
          _
        // Predicated region
        $region59: #{sphereface_forward.8} parent=19 // pred_check
          %p1371 = pneg %p94
        $region60: #{sphereface_forward.8} parent=19 // pred_check_branch
          %1373 = sbr.rel (%p1371) target = $region62
        $region61: #{sphereface_forward.8} parent=19 // pred_region
          %s1374 = smul.u32 2, %s18
          %p1375 = scmp.lt.s32.totalorder %s1374, 3
          %s1376 = scalar_select %p1375, %s1374, 3
          %s1377 = scalar_lea.vmem %s2, %s1376
          %s1378 = smul.u32 2, %s18
        $region62: #{sphereface_forward.8} parent=19 // pred_fallthru
          _
        // Predicated region
        $region63: #{sphereface_forward.8} parent=19 // pred_check
          %p1379 = pneg %p120
        $region64: #{sphereface_forward.8} parent=19 // pred_check_branch
          %1381 = sbr.rel (%p1379) target = $region66
        $region65: #{sphereface_forward.8} parent=19 // pred_region
          %s1382 = smul.u32 2, %s18
          %p1383 = scmp.lt.s32.totalorder %s1382, 3
          %s1384 = scalar_select %p1383, %s1382, 3
          %s1385 = scalar_lea.vmem %s3, %s1384
          %s1386 = smul.u32 2, %s18
        $region66: #{sphereface_forward.8} parent=19 // pred_fallthru
          _
      $region20: #{sphereface_forward.8} parent=5 // pred_fallthru
        _
      %p1387 = scmp.le.s32.totalorder 1, %s10
      %p1388 = scmp.lt.s32.totalorder %s10, 3
      %p1389 = pnand %p1387, %p1388
      %p1390 = pneg %p1389
      // Predicated region
      $region67: #{sphereface_forward.8} parent=5 // pred_check
        _
      $region68: #{sphereface_forward.8} parent=5 // pred_check_branch
        %1392 = sbr.rel (%p1389) target = $region70
      $region69: #{sphereface_forward.8} parent=5 // pred_region
        %s1393 = ssub.s32 %s10, 1
        %s1394 = sand.u32 %s61, 1
        %s1395 = sand.u32 %s61, 1
        %s1396 = smul.addr %s1395, 2304
        %s1397 = scalar_lea.vmem [#allocation2], %s1396
        // Predicated region
        $region71: #{sphereface_forward.8} parent=69 // pred_check
          %p1398 = pneg %p74
        $region72: #{sphereface_forward.8} parent=69 // pred_check_branch
          %1400 = sbr.rel (%p1398) target = $region74
        $region73: #{sphereface_forward.8} parent=69 // pred_region
          _
        $region74: #{sphereface_forward.8} parent=69 // pred_fallthru
          _
        %p1401 = scmp.lt.s32.totalorder %s19, 0
        %s1402 = scalar_select %p1401, %s19, 0
        %s1403 = smul.addr %s1402, 18
        %s1404 = smul.addr %s1403, 4
        %s1405 = scalar_lea.vmem %s0, %s1404
        %p1406 = pneg %p48
        %p1407 = pneg %p45
        %s1408 = sand.u32 %s61, 1
        %s1409 = sand.u32 %s61, 1
        %s1410 = smul.addr %s1409, 2304
        %s1411 = scalar_lea.vmem [#allocation2], %s1410
        %p1412 = pneg %p74
        %p1413 = pneg %p71
        %s1414 = smul.u32 2, %s20
        %p1415 = scmp.lt.s32.totalorder %s1414, 3
        %s1416 = scalar_select %p1415, %s1414, 3
        %s1417 = scalar_lea.vmem %s2, %s1416
        %p1418 = pneg %p100
        %p1419 = pneg %p97
        %s1420 = smul.u32 2, %s20
        %p1421 = scmp.lt.s32.totalorder %s1420, 3
        %s1422 = scalar_select %p1421, %s1420, 3
        %s1423 = scalar_lea.vmem %s3, %s1422
        %p1424 = pneg %p126
        %p1425 = pneg %p123
        %p1426 = pneg %p154
        %p1427 = pneg %p151
        %s1428 = smul.u32 2, %s20
        %p1429 = scmp.lt.s32.totalorder %s19, 0
        %s1430 = scalar_select %p1429, %s19, 0
        %p1431 = scmp.lt.s32.totalorder %s1428, 3
        %s1432 = scalar_select %p1431, %s1428, 3
        %s1433 = smul.addr %s1430, 4
        %s1434 = sadd.s32 %s1432, %s1433
        %s1435 = smul.addr %s1434, 4
        %s1436 = scalar_lea.vmem %s4, %s1435
        %p1437 = scmp.lt.s32.totalorder %s19, 0
        %s1438 = scalar_select %p1437, %s19, 0
        %s1439 = smul.addr %s1438, 18
        %s1440 = smul.addr %s1439, 4
        %s1441 = scalar_lea.vmem %s0, %s1440
        %s1442 = smul.u32 2, %s20
        %s1443 = smul.u32 2, %s20
        %p1444 = scmp.lt.s32.totalorder %s1443, 3
        %s1445 = scalar_select %p1444, %s1443, 3
        %s1446 = scalar_lea.vmem %s2, %s1445
        %s1447 = smul.u32 2, %s20
        %s1448 = smul.u32 2, %s20
        %p1449 = scmp.lt.s32.totalorder %s1448, 3
        %s1450 = scalar_select %p1449, %s1448, 3
        %s1451 = scalar_lea.vmem %s3, %s1450
        %s1452 = smul.u32 2, %s20
        %s1453 = smul.u32 2, %s20
        %p1454 = scmp.lt.s32.totalorder %s19, 0
        %s1455 = scalar_select %p1454, %s19, 0
        %p1456 = scmp.lt.s32.totalorder %s1453, 3
        %s1457 = scalar_select %p1456, %s1453, 3
        %s1458 = smul.addr %s1455, 4
        %s1459 = sadd.s32 %s1457, %s1458
        %s1460 = smul.addr %s1459, 4
        %s1461 = scalar_lea.vmem %s4, %s1460
        %s1462 = smul.u32 2, %s20
        %v1463 = vld [vmem:[%s1441] sm:$0xff]
        %v1464 = vld [vmem:[%s1441 + $0x8] sm:$0xff]
        %v1465 = vld [vmem:[%s1441 + $0x10] sm:$0xff]
        %v1466 = vld [vmem:[%s1441 + $0x18] sm:$0xff]
        %v1467 = vld [vmem:[%s1441 + $0x20] sm:$0xff]
        %v1468 = vld [vmem:[%s1441 + $0x28] sm:$0xff]
        %v1469 = vld [vmem:[%s1441 + $0x30] sm:$0xff]
        %v1470 = vld [vmem:[%s1441 + $0x38] sm:$0xff]
        %v1471 = vld [vmem:[%s1441 + $0x40] sm:$0xff]
        %v1472 = vld [vmem:[%s1397] sm:$0xff]
        %v1473 = vld [vmem:[%s1397 + $0x8] sm:$0xff]
        %v1474 = vld [vmem:[%s1397 + $0x10] sm:$0xff]
        %v1475 = vld [vmem:[%s1397 + $0x18] sm:$0xff]
        %v1476 = vld [vmem:[%s1397 + $0x20] sm:$0xff]
        %v1477 = vld [vmem:[%s1397 + $0x28] sm:$0xff]
        %v1478 = vld [vmem:[%s1397 + $0x30] sm:$0xff]
        %v1479 = vld [vmem:[%s1397 + $0x38] sm:$0xff]
        %v1480 = vld [vmem:[%s1397 + $0x40] sm:$0xff]
        %v1481 = vld [vmem:[%s1397 + $0x48] sm:$0xff]
        %v1482 = vld [vmem:[%s1397 + $0x50] sm:$0xff]
        %v1483 = vld [vmem:[%s1397 + $0x58] sm:$0xff]
        %v1484 = vld [vmem:[%s1397 + $0x60] sm:$0xff]
        %v1485 = vld [vmem:[%s1397 + $0x68] sm:$0xff]
        %v1486 = vld [vmem:[%s1397 + $0x70] sm:$0xff]
        %v1487 = vld [vmem:[%s1397 + $0x78] sm:$0xff]
        %v1488 = vld [vmem:[%s1397 + $0x80] sm:$0xff]
        %v1489 = vld [vmem:[%s1397 + $0x88] sm:$0xff]
        %v1490 = vld [vmem:[%s1397 + $0x90] sm:$0xff]
        %v1491 = vld [vmem:[%s1397 + $0x98] sm:$0xff]
        %v1492 = vld [vmem:[%s1397 + $0xa0] sm:$0xff]
        %v1493 = vld [vmem:[%s1397 + $0xa8] sm:$0xff]
        %v1494 = vld [vmem:[%s1397 + $0xb0] sm:$0xff]
        %v1495 = vld [vmem:[%s1397 + $0xb8] sm:$0xff]
        %v1496 = vld [vmem:[%s1397 + $0xc0] sm:$0xff]
        %v1497 = vld [vmem:[%s1397 + $0xc8] sm:$0xff]
        %v1498 = vld [vmem:[%s1397 + $0xd0] sm:$0xff]
        %v1499 = vld [vmem:[%s1397 + $0xd8] sm:$0xff]
        %v1500 = vld [vmem:[%s1397 + $0xe0] sm:$0xff]
        %v1501 = vld [vmem:[%s1397 + $0xe8] sm:$0xff]
        %v1502 = vld [vmem:[%s1397 + $0xf0] sm:$0xff]
        %v1503 = vld [vmem:[%s1397 + $0xf8] sm:$0xff]
        %v1504 = vld [vmem:[%s1397 + $0x100] sm:$0xff]
        %v1505 = vld [vmem:[%s1397 + $0x108] sm:$0xff]
        %v1506 = vld [vmem:[%s1397 + $0x110] sm:$0xff]
        %v1507 = vld [vmem:[%s1397 + $0x118] sm:$0xff]
        %v1508 = vld [vmem:[%s1397 + $0x120] sm:$0xff]
        %v1509 = vld [vmem:[%s1397 + $0x128] sm:$0xff]
        %v1510 = vld [vmem:[%s1397 + $0x130] sm:$0xff]
        %v1511 = vld [vmem:[%s1397 + $0x138] sm:$0xff]
        %v1512 = vld [vmem:[%s1397 + $0x140] sm:$0xff]
        %v1513 = vld [vmem:[%s1397 + $0x148] sm:$0xff]
        %v1514 = vld [vmem:[%s1397 + $0x150] sm:$0xff]
        %v1515 = vld [vmem:[%s1397 + $0x158] sm:$0xff]
        %v1516 = vld [vmem:[%s1397 + $0x160] sm:$0xff]
        %v1517 = vld [vmem:[%s1397 + $0x168] sm:$0xff]
        %v1518 = vld [vmem:[%s1397 + $0x170] sm:$0xff]
        %v1519 = vld [vmem:[%s1397 + $0x178] sm:$0xff]
        %v1520 = vld [vmem:[%s1397 + $0x180] sm:$0xff]
        %v1521 = vld [vmem:[%s1397 + $0x188] sm:$0xff]
        %v1522 = vld [vmem:[%s1397 + $0x190] sm:$0xff]
        %v1523 = vld [vmem:[%s1397 + $0x198] sm:$0xff]
        %v1524 = vld [vmem:[%s1397 + $0x1a0] sm:$0xff]
        %v1525 = vld [vmem:[%s1397 + $0x1a8] sm:$0xff]
        %v1526 = vld [vmem:[%s1397 + $0x1b0] sm:$0xff]
        %v1527 = vld [vmem:[%s1397 + $0x1b8] sm:$0xff]
        %v1528 = vld [vmem:[%s1397 + $0x1c0] sm:$0xff]
        %v1529 = vld [vmem:[%s1397 + $0x1c8] sm:$0xff]
        %v1530 = vld [vmem:[%s1397 + $0x1d0] sm:$0xff]
        %v1531 = vld [vmem:[%s1397 + $0x1d8] sm:$0xff]
        %v1532 = vld [vmem:[%s1397 + $0x1e0] sm:$0xff]
        %v1533 = vld [vmem:[%s1397 + $0x1e8] sm:$0xff]
        %v1534 = vld [vmem:[%s1397 + $0x1f0] sm:$0xff]
        %v1535 = vld [vmem:[%s1397 + $0x1f8] sm:$0xff]
        %v1536 = vld [vmem:[%s1397 + $0x200] sm:$0xff]
        %v1537 = vld [vmem:[%s1397 + $0x208] sm:$0xff]
        %v1538 = vld [vmem:[%s1397 + $0x210] sm:$0xff]
        %v1539 = vld [vmem:[%s1397 + $0x218] sm:$0xff]
        %v1540 = vld [vmem:[%s1397 + $0x220] sm:$0xff]
        %v1541 = vld [vmem:[%s1397 + $0x228] sm:$0xff]
        %v1542 = vld [vmem:[%s1397 + $0x230] sm:$0xff]
        %v1543 = vld [vmem:[%s1397 + $0x238] sm:$0xff]
        %v1544 = vld [vmem:[%s1397 + $0x240] sm:$0xff]
        %v1545 = vld [vmem:[%s1397 + $0x248] sm:$0xff]
        %v1546 = vld [vmem:[%s1397 + $0x250] sm:$0xff]
        %v1547 = vld [vmem:[%s1397 + $0x258] sm:$0xff]
        %v1548 = vld [vmem:[%s1397 + $0x260] sm:$0xff]
        %v1549 = vld [vmem:[%s1397 + $0x268] sm:$0xff]
        %v1550 = vld [vmem:[%s1397 + $0x270] sm:$0xff]
        %v1551 = vld [vmem:[%s1397 + $0x278] sm:$0xff]
        %v1552 = vld [vmem:[%s1397 + $0x280] sm:$0xff]
        %v1553 = vld [vmem:[%s1397 + $0x288] sm:$0xff]
        %v1554 = vld [vmem:[%s1397 + $0x290] sm:$0xff]
        %v1555 = vld [vmem:[%s1397 + $0x298] sm:$0xff]
        %v1556 = vld [vmem:[%s1397 + $0x2a0] sm:$0xff]
        %v1557 = vld [vmem:[%s1397 + $0x2a8] sm:$0xff]
        %v1558 = vld [vmem:[%s1397 + $0x2b0] sm:$0xff]
        %v1559 = vld [vmem:[%s1397 + $0x2b8] sm:$0xff]
        %v1560 = vld [vmem:[%s1397 + $0x2c0] sm:$0xff]
        %v1561 = vld [vmem:[%s1397 + $0x2c8] sm:$0xff]
        %v1562 = vld [vmem:[%s1397 + $0x2d0] sm:$0xff]
        %v1563 = vld [vmem:[%s1397 + $0x2d8] sm:$0xff]
        %v1564 = vld [vmem:[%s1397 + $0x2e0] sm:$0xff]
        %v1565 = vld [vmem:[%s1397 + $0x2e8] sm:$0xff]
        %v1566 = vld [vmem:[%s1397 + $0x2f0] sm:$0xff]
        %v1567 = vld [vmem:[%s1397 + $0x2f8] sm:$0xff]
        %v1568 = vld [vmem:[%s1397 + $0x300] sm:$0xff]
        %v1569 = vld [vmem:[%s1397 + $0x308] sm:$0xff]
        %v1570 = vld [vmem:[%s1397 + $0x310] sm:$0xff]
        %v1571 = vld [vmem:[%s1397 + $0x318] sm:$0xff]
        %v1572 = vld [vmem:[%s1397 + $0x320] sm:$0xff]
        %v1573 = vld [vmem:[%s1397 + $0x328] sm:$0xff]
        %v1574 = vld [vmem:[%s1397 + $0x330] sm:$0xff]
        %v1575 = vld [vmem:[%s1397 + $0x338] sm:$0xff]
        %v1576 = vld [vmem:[%s1397 + $0x340] sm:$0xff]
        %v1577 = vld [vmem:[%s1397 + $0x348] sm:$0xff]
        %v1578 = vld [vmem:[%s1397 + $0x350] sm:$0xff]
        %v1579 = vld [vmem:[%s1397 + $0x358] sm:$0xff]
        %v1580 = vld [vmem:[%s1397 + $0x360] sm:$0xff]
        %v1581 = vld [vmem:[%s1397 + $0x368] sm:$0xff]
        %v1582 = vld [vmem:[%s1397 + $0x370] sm:$0xff]
        %v1583 = vld [vmem:[%s1397 + $0x378] sm:$0xff]
        %v1584 = vld [vmem:[%s1397 + $0x380] sm:$0xff]
        %v1585 = vld [vmem:[%s1397 + $0x388] sm:$0xff]
        %v1586 = vld [vmem:[%s1397 + $0x390] sm:$0xff]
        %v1587 = vld [vmem:[%s1397 + $0x398] sm:$0xff]
        %v1588 = vld [vmem:[%s1397 + $0x3a0] sm:$0xff]
        %v1589 = vld [vmem:[%s1397 + $0x3a8] sm:$0xff]
        %v1590 = vld [vmem:[%s1397 + $0x3b0] sm:$0xff]
        %v1591 = vld [vmem:[%s1397 + $0x3b8] sm:$0xff]
        %v1592 = vld [vmem:[%s1397 + $0x3c0] sm:$0xff]
        %v1593 = vld [vmem:[%s1397 + $0x3c8] sm:$0xff]
        %v1594 = vld [vmem:[%s1397 + $0x3d0] sm:$0xff]
        %v1595 = vld [vmem:[%s1397 + $0x3d8] sm:$0xff]
        %v1596 = vld [vmem:[%s1397 + $0x3e0] sm:$0xff]
        %v1597 = vld [vmem:[%s1397 + $0x3e8] sm:$0xff]
        %v1598 = vld [vmem:[%s1397 + $0x3f0] sm:$0xff]
        %v1599 = vld [vmem:[%s1397 + $0x3f8] sm:$0xff]
        %v1600 = vld [vmem:[%s1397 + $0x400] sm:$0xff]
        %v1601 = vld [vmem:[%s1397 + $0x408] sm:$0xff]
        %v1602 = vld [vmem:[%s1397 + $0x410] sm:$0xff]
        %v1603 = vld [vmem:[%s1397 + $0x418] sm:$0xff]
        %v1604 = vld [vmem:[%s1397 + $0x420] sm:$0xff]
        %v1605 = vld [vmem:[%s1397 + $0x428] sm:$0xff]
        %v1606 = vld [vmem:[%s1397 + $0x430] sm:$0xff]
        %v1607 = vld [vmem:[%s1397 + $0x438] sm:$0xff]
        %v1608 = vld [vmem:[%s1397 + $0x440] sm:$0xff]
        %v1609 = vld [vmem:[%s1397 + $0x448] sm:$0xff]
        %v1610 = vld [vmem:[%s1397 + $0x450] sm:$0xff]
        %v1611 = vld [vmem:[%s1397 + $0x458] sm:$0xff]
        %v1612 = vld [vmem:[%s1397 + $0x460] sm:$0xff]
        %v1613 = vld [vmem:[%s1397 + $0x468] sm:$0xff]
        %v1614 = vld [vmem:[%s1397 + $0x470] sm:$0xff]
        %v1615 = vld [vmem:[%s1397 + $0x478] sm:$0xff]
        %v1616 = vld [vmem:[%s1397 + $0x480] sm:$0xff]
        %v1617 = vld [vmem:[%s1397 + $0x488] sm:$0xff]
        %v1618 = vld [vmem:[%s1397 + $0x490] sm:$0xff]
        %v1619 = vld [vmem:[%s1397 + $0x498] sm:$0xff]
        %v1620 = vld [vmem:[%s1397 + $0x4a0] sm:$0xff]
        %v1621 = vld [vmem:[%s1397 + $0x4a8] sm:$0xff]
        %v1622 = vld [vmem:[%s1397 + $0x4b0] sm:$0xff]
        %v1623 = vld [vmem:[%s1397 + $0x4b8] sm:$0xff]
        %v1624 = vld [vmem:[%s1397 + $0x4c0] sm:$0xff]
        %v1625 = vld [vmem:[%s1397 + $0x4c8] sm:$0xff]
        %v1626 = vld [vmem:[%s1397 + $0x4d0] sm:$0xff]
        %v1627 = vld [vmem:[%s1397 + $0x4d8] sm:$0xff]
        %v1628 = vld [vmem:[%s1397 + $0x4e0] sm:$0xff]
        %v1629 = vld [vmem:[%s1397 + $0x4e8] sm:$0xff]
        %v1630 = vld [vmem:[%s1397 + $0x4f0] sm:$0xff]
        %v1631 = vld [vmem:[%s1397 + $0x4f8] sm:$0xff]
        %v1632 = vld [vmem:[%s1397 + $0x500] sm:$0xff]
        %v1633 = vld [vmem:[%s1397 + $0x508] sm:$0xff]
        %v1634 = vld [vmem:[%s1397 + $0x510] sm:$0xff]
        %v1635 = vld [vmem:[%s1397 + $0x518] sm:$0xff]
        %v1636 = vld [vmem:[%s1397 + $0x520] sm:$0xff]
        %v1637 = vld [vmem:[%s1397 + $0x528] sm:$0xff]
        %v1638 = vld [vmem:[%s1397 + $0x530] sm:$0xff]
        %v1639 = vld [vmem:[%s1397 + $0x538] sm:$0xff]
        %v1640 = vld [vmem:[%s1397 + $0x540] sm:$0xff]
        %v1641 = vld [vmem:[%s1397 + $0x548] sm:$0xff]
        %v1642 = vld [vmem:[%s1397 + $0x550] sm:$0xff]
        %v1643 = vld [vmem:[%s1397 + $0x558] sm:$0xff]
        %v1644 = vld [vmem:[%s1397 + $0x560] sm:$0xff]
        %v1645 = vld [vmem:[%s1397 + $0x568] sm:$0xff]
        %v1646 = vld [vmem:[%s1397 + $0x570] sm:$0xff]
        %v1647 = vld [vmem:[%s1397 + $0x578] sm:$0xff]
        %v1648 = vld [vmem:[%s1397 + $0x580] sm:$0xff]
        %v1649 = vld [vmem:[%s1397 + $0x588] sm:$0xff]
        %v1650 = vld [vmem:[%s1397 + $0x590] sm:$0xff]
        %v1651 = vld [vmem:[%s1397 + $0x598] sm:$0xff]
        %v1652 = vld [vmem:[%s1397 + $0x5a0] sm:$0xff]
        %v1653 = vld [vmem:[%s1397 + $0x5a8] sm:$0xff]
        %v1654 = vld [vmem:[%s1397 + $0x5b0] sm:$0xff]
        %v1655 = vld [vmem:[%s1397 + $0x5b8] sm:$0xff]
        %v1656 = vld [vmem:[%s1397 + $0x5c0] sm:$0xff]
        %v1657 = vld [vmem:[%s1397 + $0x5c8] sm:$0xff]
        %v1658 = vld [vmem:[%s1397 + $0x5d0] sm:$0xff]
        %v1659 = vld [vmem:[%s1397 + $0x5d8] sm:$0xff]
        %v1660 = vld [vmem:[%s1397 + $0x5e0] sm:$0xff]
        %v1661 = vld [vmem:[%s1397 + $0x5e8] sm:$0xff]
        %v1662 = vld [vmem:[%s1397 + $0x5f0] sm:$0xff]
        %v1663 = vld [vmem:[%s1397 + $0x5f8] sm:$0xff]
        %v1664 = vld [vmem:[%s1397 + $0x600] sm:$0xff]
        %v1665 = vld [vmem:[%s1397 + $0x608] sm:$0xff]
        %v1666 = vld [vmem:[%s1397 + $0x610] sm:$0xff]
        %v1667 = vld [vmem:[%s1397 + $0x618] sm:$0xff]
        %v1668 = vld [vmem:[%s1397 + $0x620] sm:$0xff]
        %v1669 = vld [vmem:[%s1397 + $0x628] sm:$0xff]
        %v1670 = vld [vmem:[%s1397 + $0x630] sm:$0xff]
        %v1671 = vld [vmem:[%s1397 + $0x638] sm:$0xff]
        %v1672 = vld [vmem:[%s1397 + $0x640] sm:$0xff]
        %v1673 = vld [vmem:[%s1397 + $0x648] sm:$0xff]
        %v1674 = vld [vmem:[%s1397 + $0x650] sm:$0xff]
        %v1675 = vld [vmem:[%s1397 + $0x658] sm:$0xff]
        %v1676 = vld [vmem:[%s1397 + $0x660] sm:$0xff]
        %v1677 = vld [vmem:[%s1397 + $0x668] sm:$0xff]
        %v1678 = vld [vmem:[%s1397 + $0x670] sm:$0xff]
        %v1679 = vld [vmem:[%s1397 + $0x678] sm:$0xff]
        %v1680 = vld [vmem:[%s1397 + $0x680] sm:$0xff]
        %v1681 = vld [vmem:[%s1397 + $0x688] sm:$0xff]
        %v1682 = vld [vmem:[%s1397 + $0x690] sm:$0xff]
        %v1683 = vld [vmem:[%s1397 + $0x698] sm:$0xff]
        %v1684 = vld [vmem:[%s1397 + $0x6a0] sm:$0xff]
        %v1685 = vld [vmem:[%s1397 + $0x6a8] sm:$0xff]
        %v1686 = vld [vmem:[%s1397 + $0x6b0] sm:$0xff]
        %v1687 = vld [vmem:[%s1397 + $0x6b8] sm:$0xff]
        %v1688 = vld [vmem:[%s1397 + $0x6c0] sm:$0xff]
        %v1689 = vld [vmem:[%s1397 + $0x6c8] sm:$0xff]
        %v1690 = vld [vmem:[%s1397 + $0x6d0] sm:$0xff]
        %v1691 = vld [vmem:[%s1397 + $0x6d8] sm:$0xff]
        %v1692 = vld [vmem:[%s1397 + $0x6e0] sm:$0xff]
        %v1693 = vld [vmem:[%s1397 + $0x6e8] sm:$0xff]
        %v1694 = vld [vmem:[%s1397 + $0x6f0] sm:$0xff]
        %v1695 = vld [vmem:[%s1397 + $0x6f8] sm:$0xff]
        %v1696 = vld [vmem:[%s1397 + $0x700] sm:$0xff]
        %v1697 = vld [vmem:[%s1397 + $0x708] sm:$0xff]
        %v1698 = vld [vmem:[%s1397 + $0x710] sm:$0xff]
        %v1699 = vld [vmem:[%s1397 + $0x718] sm:$0xff]
        %v1700 = vld [vmem:[%s1397 + $0x720] sm:$0xff]
        %v1701 = vld [vmem:[%s1397 + $0x728] sm:$0xff]
        %v1702 = vld [vmem:[%s1397 + $0x730] sm:$0xff]
        %v1703 = vld [vmem:[%s1397 + $0x738] sm:$0xff]
        %v1704 = vld [vmem:[%s1397 + $0x740] sm:$0xff]
        %v1705 = vld [vmem:[%s1397 + $0x748] sm:$0xff]
        %v1706 = vld [vmem:[%s1397 + $0x750] sm:$0xff]
        %v1707 = vld [vmem:[%s1397 + $0x758] sm:$0xff]
        %v1708 = vld [vmem:[%s1397 + $0x760] sm:$0xff]
        %v1709 = vld [vmem:[%s1397 + $0x768] sm:$0xff]
        %v1710 = vld [vmem:[%s1397 + $0x770] sm:$0xff]
        %v1711 = vld [vmem:[%s1397 + $0x778] sm:$0xff]
        %v1712 = vld [vmem:[%s1397 + $0x780] sm:$0xff]
        %v1713 = vld [vmem:[%s1397 + $0x788] sm:$0xff]
        %v1714 = vld [vmem:[%s1397 + $0x790] sm:$0xff]
        %v1715 = vld [vmem:[%s1397 + $0x798] sm:$0xff]
        %v1716 = vld [vmem:[%s1397 + $0x7a0] sm:$0xff]
        %v1717 = vld [vmem:[%s1397 + $0x7a8] sm:$0xff]
        %v1718 = vld [vmem:[%s1397 + $0x7b0] sm:$0xff]
        %v1719 = vld [vmem:[%s1397 + $0x7b8] sm:$0xff]
        %v1720 = vld [vmem:[%s1397 + $0x7c0] sm:$0xff]
        %v1721 = vld [vmem:[%s1397 + $0x7c8] sm:$0xff]
        %v1722 = vld [vmem:[%s1397 + $0x7d0] sm:$0xff]
        %v1723 = vld [vmem:[%s1397 + $0x7d8] sm:$0xff]
        %v1724 = vld [vmem:[%s1397 + $0x7e0] sm:$0xff]
        %v1725 = vld [vmem:[%s1397 + $0x7e8] sm:$0xff]
        %v1726 = vld [vmem:[%s1397 + $0x7f0] sm:$0xff]
        %v1727 = vld [vmem:[%s1397 + $0x7f8] sm:$0xff]
        %v1728 = vld [vmem:[%s1397 + $0x800] sm:$0xff]
        %v1729 = vld [vmem:[%s1397 + $0x808] sm:$0xff]
        %v1730 = vld [vmem:[%s1397 + $0x810] sm:$0xff]
        %v1731 = vld [vmem:[%s1397 + $0x818] sm:$0xff]
        %v1732 = vld [vmem:[%s1397 + $0x820] sm:$0xff]
        %v1733 = vld [vmem:[%s1397 + $0x828] sm:$0xff]
        %v1734 = vld [vmem:[%s1397 + $0x830] sm:$0xff]
        %v1735 = vld [vmem:[%s1397 + $0x838] sm:$0xff]
        %v1736 = vld [vmem:[%s1397 + $0x840] sm:$0xff]
        %v1737 = vld [vmem:[%s1397 + $0x848] sm:$0xff]
        %v1738 = vld [vmem:[%s1397 + $0x850] sm:$0xff]
        %v1739 = vld [vmem:[%s1397 + $0x858] sm:$0xff]
        %v1740 = vld [vmem:[%s1397 + $0x860] sm:$0xff]
        %v1741 = vld [vmem:[%s1397 + $0x868] sm:$0xff]
        %v1742 = vld [vmem:[%s1397 + $0x870] sm:$0xff]
        %v1743 = vld [vmem:[%s1397 + $0x878] sm:$0xff]
        %v1744 = vld [vmem:[%s1397 + $0x880] sm:$0xff]
        %v1745 = vld [vmem:[%s1397 + $0x888] sm:$0xff]
        %v1746 = vld [vmem:[%s1397 + $0x890] sm:$0xff]
        %v1747 = vld [vmem:[%s1397 + $0x898] sm:$0xff]
        %v1748 = vld [vmem:[%s1397 + $0x8a0] sm:$0xff]
        %v1749 = vld [vmem:[%s1397 + $0x8a8] sm:$0xff]
        %v1750 = vld [vmem:[%s1397 + $0x8b0] sm:$0xff]
        %v1751 = vld [vmem:[%s1397 + $0x8b8] sm:$0xff]
        %v1752 = vld [vmem:[%s1397 + $0x8c0] sm:$0xff]
        %v1753 = vld [vmem:[%s1397 + $0x8c8] sm:$0xff]
        %v1754 = vld [vmem:[%s1397 + $0x8d0] sm:$0xff]
        %v1755 = vld [vmem:[%s1397 + $0x8d8] sm:$0xff]
        %v1756 = vld [vmem:[%s1397 + $0x8e0] sm:$0xff]
        %v1757 = vld [vmem:[%s1397 + $0x8e8] sm:$0xff]
        %v1758 = vld [vmem:[%s1397 + $0x8f0] sm:$0xff]
        %v1759 = vld [vmem:[%s1397 + $0x8f8] sm:$0xff]
        %v1760 = vld [vmem:[%s1446] sm:$0x3]
        %v1762 = vlaneseq
        %v1763 = vshrl.u32 %v1762, 7
        %v1764 = vsub.s32 0, %v1763
        %v1765 = vrot.slane %v1760, %v1764
        %v1766 = vlaneseq
        %v1767 = vshrl.u32 %v1766, 7
        %v1768 = vsub.s32 1, %v1767
        %v1769 = vrot.slane %v1760, %v1768
        %v1781 = vunpack.c.l.b16 %v1463
        %v1782 = vunpack.c.h.b16 %v1463
        %v1783 = vunpack.c.l.b16 %v1464
        %v1784 = vunpack.c.h.b16 %v1464
        %v1785 = vunpack.c.l.b16 %v1465
        %v1786 = vunpack.c.h.b16 %v1465
        %v1787 = vunpack.c.l.b16 %v1466
        %v1788 = vunpack.c.h.b16 %v1466
        %v1789 = vunpack.c.l.b16 %v1467
        %v1790 = vunpack.c.h.b16 %v1467
        %v1791 = vunpack.c.l.b16 %v1468
        %v1792 = vunpack.c.h.b16 %v1468
        %v1793 = vunpack.c.l.b16 %v1469
        %v1794 = vunpack.c.h.b16 %v1469
        %v1795 = vunpack.c.l.b16 %v1470
        %v1796 = vunpack.c.h.b16 %v1470
        %v1797 = vunpack.c.l.b16 %v1471
        %v1798 = vunpack.c.h.b16 %v1471
        %v1799 = vpack.c.b16 %v1781, %v1781
        %v1800 = vpack.c.b16 %v1782, %v1782
        %v1801 = vpack.c.b16 %v1783, %v1783
        %v1802 = vpack.c.b16 %v1784, %v1784
        %v1803 = vpack.c.b16 %v1785, %v1785
        %v1804 = vpack.c.b16 %v1786, %v1786
        %v1805 = vpack.c.b16 %v1787, %v1787
        %v1806 = vpack.c.b16 %v1788, %v1788
        %v1807 = vpack.c.b16 %v1789, %v1789
        %v1808 = vpack.c.b16 %v1790, %v1790
        %v1809 = vpack.c.b16 %v1791, %v1791
        %v1810 = vpack.c.b16 %v1792, %v1792
        %v1811 = vpack.c.b16 %v1793, %v1793
        %v1812 = vpack.c.b16 %v1794, %v1794
        %v1813 = vpack.c.b16 %v1795, %v1795
        %v1814 = vpack.c.b16 %v1796, %v1796
        %v1815 = vpack.c.b16 %v1797, %v1797
        %v1816 = vpack.c.b16 %v1798, %v1798
        %v2123 = vunpack.c.l.b16 %v1472
        %v2124 = vunpack.c.h.b16 %v1472
        %v2125 = vunpack.c.l.b16 %v1473
        %v2126 = vunpack.c.h.b16 %v1473
        %v2127 = vunpack.c.l.b16 %v1474
        %v2128 = vunpack.c.h.b16 %v1474
        %v2129 = vunpack.c.l.b16 %v1475
        %v2130 = vunpack.c.h.b16 %v1475
        %v2131 = vunpack.c.l.b16 %v1476
        %v2132 = vunpack.c.h.b16 %v1476
        %v2133 = vunpack.c.l.b16 %v1477
        %v2134 = vunpack.c.h.b16 %v1477
        %v2135 = vunpack.c.l.b16 %v1478
        %v2136 = vunpack.c.h.b16 %v1478
        %v2137 = vunpack.c.l.b16 %v1479
        %v2138 = vunpack.c.h.b16 %v1479
        %v2139 = vunpack.c.l.b16 %v1480
        %v2140 = vunpack.c.h.b16 %v1480
        %v2141 = vunpack.c.l.b16 %v1481
        %v2142 = vunpack.c.h.b16 %v1481
        %v2143 = vunpack.c.l.b16 %v1482
        %v2144 = vunpack.c.h.b16 %v1482
        %v2145 = vunpack.c.l.b16 %v1483
        %v2146 = vunpack.c.h.b16 %v1483
        %v2147 = vunpack.c.l.b16 %v1484
        %v2148 = vunpack.c.h.b16 %v1484
        %v2149 = vunpack.c.l.b16 %v1485
        %v2150 = vunpack.c.h.b16 %v1485
        %v2151 = vunpack.c.l.b16 %v1486
        %v2152 = vunpack.c.h.b16 %v1486
        %v2153 = vunpack.c.l.b16 %v1487
        %v2154 = vunpack.c.h.b16 %v1487
        %v2155 = vunpack.c.l.b16 %v1488
        %v2156 = vunpack.c.h.b16 %v1488
        %v2157 = vunpack.c.l.b16 %v1489
        %v2158 = vunpack.c.h.b16 %v1489
        %v2159 = vunpack.c.l.b16 %v1490
        %v2160 = vunpack.c.h.b16 %v1490
        %v2161 = vunpack.c.l.b16 %v1491
        %v2162 = vunpack.c.h.b16 %v1491
        %v2163 = vunpack.c.l.b16 %v1492
        %v2164 = vunpack.c.h.b16 %v1492
        %v2165 = vunpack.c.l.b16 %v1493
        %v2166 = vunpack.c.h.b16 %v1493
        %v2167 = vunpack.c.l.b16 %v1494
        %v2168 = vunpack.c.h.b16 %v1494
        %v2169 = vunpack.c.l.b16 %v1495
        %v2170 = vunpack.c.h.b16 %v1495
        %v2171 = vunpack.c.l.b16 %v1496
        %v2172 = vunpack.c.h.b16 %v1496
        %v2173 = vunpack.c.l.b16 %v1497
        %v2174 = vunpack.c.h.b16 %v1497
        %v2175 = vunpack.c.l.b16 %v1498
        %v2176 = vunpack.c.h.b16 %v1498
        %v2177 = vunpack.c.l.b16 %v1499
        %v2178 = vunpack.c.h.b16 %v1499
        %v2179 = vunpack.c.l.b16 %v1500
        %v2180 = vunpack.c.h.b16 %v1500
        %v2181 = vunpack.c.l.b16 %v1501
        %v2182 = vunpack.c.h.b16 %v1501
        %v2183 = vunpack.c.l.b16 %v1502
        %v2184 = vunpack.c.h.b16 %v1502
        %v2185 = vunpack.c.l.b16 %v1503
        %v2186 = vunpack.c.h.b16 %v1503
        %v2187 = vunpack.c.l.b16 %v1504
        %v2188 = vunpack.c.h.b16 %v1504
        %v2189 = vunpack.c.l.b16 %v1505
        %v2190 = vunpack.c.h.b16 %v1505
        %v2191 = vunpack.c.l.b16 %v1506
        %v2192 = vunpack.c.h.b16 %v1506
        %v2193 = vunpack.c.l.b16 %v1507
        %v2194 = vunpack.c.h.b16 %v1507
        %v2195 = vunpack.c.l.b16 %v1508
        %v2196 = vunpack.c.h.b16 %v1508
        %v2197 = vunpack.c.l.b16 %v1509
        %v2198 = vunpack.c.h.b16 %v1509
        %v2199 = vunpack.c.l.b16 %v1510
        %v2200 = vunpack.c.h.b16 %v1510
        %v2201 = vunpack.c.l.b16 %v1511
        %v2202 = vunpack.c.h.b16 %v1511
        %v2203 = vunpack.c.l.b16 %v1512
        %v2204 = vunpack.c.h.b16 %v1512
        %v2205 = vunpack.c.l.b16 %v1513
        %v2206 = vunpack.c.h.b16 %v1513
        %v2207 = vunpack.c.l.b16 %v1514
        %v2208 = vunpack.c.h.b16 %v1514
        %v2209 = vunpack.c.l.b16 %v1515
        %v2210 = vunpack.c.h.b16 %v1515
        %v2211 = vunpack.c.l.b16 %v1516
        %v2212 = vunpack.c.h.b16 %v1516
        %v2213 = vunpack.c.l.b16 %v1517
        %v2214 = vunpack.c.h.b16 %v1517
        %v2215 = vunpack.c.l.b16 %v1518
        %v2216 = vunpack.c.h.b16 %v1518
        %v2217 = vunpack.c.l.b16 %v1519
        %v2218 = vunpack.c.h.b16 %v1519
        %v2219 = vunpack.c.l.b16 %v1520
        %v2220 = vunpack.c.h.b16 %v1520
        %v2221 = vunpack.c.l.b16 %v1521
        %v2222 = vunpack.c.h.b16 %v1521
        %v2223 = vunpack.c.l.b16 %v1522
        %v2224 = vunpack.c.h.b16 %v1522
        %v2225 = vunpack.c.l.b16 %v1523
        %v2226 = vunpack.c.h.b16 %v1523
        %v2227 = vunpack.c.l.b16 %v1524
        %v2228 = vunpack.c.h.b16 %v1524
        %v2229 = vunpack.c.l.b16 %v1525
        %v2230 = vunpack.c.h.b16 %v1525
        %v2231 = vunpack.c.l.b16 %v1526
        %v2232 = vunpack.c.h.b16 %v1526
        %v2233 = vunpack.c.l.b16 %v1527
        %v2234 = vunpack.c.h.b16 %v1527
        %v2235 = vunpack.c.l.b16 %v1528
        %v2236 = vunpack.c.h.b16 %v1528
        %v2237 = vunpack.c.l.b16 %v1529
        %v2238 = vunpack.c.h.b16 %v1529
        %v2239 = vunpack.c.l.b16 %v1530
        %v2240 = vunpack.c.h.b16 %v1530
        %v2241 = vunpack.c.l.b16 %v1531
        %v2242 = vunpack.c.h.b16 %v1531
        %v2243 = vunpack.c.l.b16 %v1532
        %v2244 = vunpack.c.h.b16 %v1532
        %v2245 = vunpack.c.l.b16 %v1533
        %v2246 = vunpack.c.h.b16 %v1533
        %v2247 = vunpack.c.l.b16 %v1534
        %v2248 = vunpack.c.h.b16 %v1534
        %v2249 = vunpack.c.l.b16 %v1535
        %v2250 = vunpack.c.h.b16 %v1535
        %v2251 = vunpack.c.l.b16 %v1536
        %v2252 = vunpack.c.h.b16 %v1536
        %v2253 = vunpack.c.l.b16 %v1537
        %v2254 = vunpack.c.h.b16 %v1537
        %v2255 = vunpack.c.l.b16 %v1538
        %v2256 = vunpack.c.h.b16 %v1538
        %v2257 = vunpack.c.l.b16 %v1539
        %v2258 = vunpack.c.h.b16 %v1539
        %v2259 = vunpack.c.l.b16 %v1540
        %v2260 = vunpack.c.h.b16 %v1540
        %v2261 = vunpack.c.l.b16 %v1541
        %v2262 = vunpack.c.h.b16 %v1541
        %v2263 = vunpack.c.l.b16 %v1542
        %v2264 = vunpack.c.h.b16 %v1542
        %v2265 = vunpack.c.l.b16 %v1543
        %v2266 = vunpack.c.h.b16 %v1543
        %v2267 = vunpack.c.l.b16 %v1544
        %v2268 = vunpack.c.h.b16 %v1544
        %v2269 = vunpack.c.l.b16 %v1545
        %v2270 = vunpack.c.h.b16 %v1545
        %v2271 = vunpack.c.l.b16 %v1546
        %v2272 = vunpack.c.h.b16 %v1546
        %v2273 = vunpack.c.l.b16 %v1547
        %v2274 = vunpack.c.h.b16 %v1547
        %v2275 = vunpack.c.l.b16 %v1548
        %v2276 = vunpack.c.h.b16 %v1548
        %v2277 = vunpack.c.l.b16 %v1549
        %v2278 = vunpack.c.h.b16 %v1549
        %v2279 = vunpack.c.l.b16 %v1550
        %v2280 = vunpack.c.h.b16 %v1550
        %v2281 = vunpack.c.l.b16 %v1551
        %v2282 = vunpack.c.h.b16 %v1551
        %v2283 = vunpack.c.l.b16 %v1552
        %v2284 = vunpack.c.h.b16 %v1552
        %v2285 = vunpack.c.l.b16 %v1553
        %v2286 = vunpack.c.h.b16 %v1553
        %v2287 = vunpack.c.l.b16 %v1554
        %v2288 = vunpack.c.h.b16 %v1554
        %v2289 = vunpack.c.l.b16 %v1555
        %v2290 = vunpack.c.h.b16 %v1555
        %v2291 = vunpack.c.l.b16 %v1556
        %v2292 = vunpack.c.h.b16 %v1556
        %v2293 = vunpack.c.l.b16 %v1557
        %v2294 = vunpack.c.h.b16 %v1557
        %v2295 = vunpack.c.l.b16 %v1558
        %v2296 = vunpack.c.h.b16 %v1558
        %v2297 = vunpack.c.l.b16 %v1559
        %v2298 = vunpack.c.h.b16 %v1559
        %v2299 = vunpack.c.l.b16 %v1560
        %v2300 = vunpack.c.h.b16 %v1560
        %v2301 = vunpack.c.l.b16 %v1561
        %v2302 = vunpack.c.h.b16 %v1561
        %v2303 = vunpack.c.l.b16 %v1562
        %v2304 = vunpack.c.h.b16 %v1562
        %v2305 = vunpack.c.l.b16 %v1563
        %v2306 = vunpack.c.h.b16 %v1563
        %v2307 = vunpack.c.l.b16 %v1564
        %v2308 = vunpack.c.h.b16 %v1564
        %v2309 = vunpack.c.l.b16 %v1565
        %v2310 = vunpack.c.h.b16 %v1565
        %v2311 = vunpack.c.l.b16 %v1566
        %v2312 = vunpack.c.h.b16 %v1566
        %v2313 = vunpack.c.l.b16 %v1567
        %v2314 = vunpack.c.h.b16 %v1567
        %v2315 = vunpack.c.l.b16 %v1568
        %v2316 = vunpack.c.h.b16 %v1568
        %v2317 = vunpack.c.l.b16 %v1569
        %v2318 = vunpack.c.h.b16 %v1569
        %v2319 = vunpack.c.l.b16 %v1570
        %v2320 = vunpack.c.h.b16 %v1570
        %v2321 = vunpack.c.l.b16 %v1571
        %v2322 = vunpack.c.h.b16 %v1571
        %v2323 = vunpack.c.l.b16 %v1572
        %v2324 = vunpack.c.h.b16 %v1572
        %v2325 = vunpack.c.l.b16 %v1573
        %v2326 = vunpack.c.h.b16 %v1573
        %v2327 = vunpack.c.l.b16 %v1574
        %v2328 = vunpack.c.h.b16 %v1574
        %v2329 = vunpack.c.l.b16 %v1575
        %v2330 = vunpack.c.h.b16 %v1575
        %v2331 = vunpack.c.l.b16 %v1576
        %v2332 = vunpack.c.h.b16 %v1576
        %v2333 = vunpack.c.l.b16 %v1577
        %v2334 = vunpack.c.h.b16 %v1577
        %v2335 = vunpack.c.l.b16 %v1578
        %v2336 = vunpack.c.h.b16 %v1578
        %v2337 = vunpack.c.l.b16 %v1579
        %v2338 = vunpack.c.h.b16 %v1579
        %v2339 = vunpack.c.l.b16 %v1580
        %v2340 = vunpack.c.h.b16 %v1580
        %v2341 = vunpack.c.l.b16 %v1581
        %v2342 = vunpack.c.h.b16 %v1581
        %v2343 = vunpack.c.l.b16 %v1582
        %v2344 = vunpack.c.h.b16 %v1582
        %v2345 = vunpack.c.l.b16 %v1583
        %v2346 = vunpack.c.h.b16 %v1583
        %v2347 = vunpack.c.l.b16 %v1584
        %v2348 = vunpack.c.h.b16 %v1584
        %v2349 = vunpack.c.l.b16 %v1585
        %v2350 = vunpack.c.h.b16 %v1585
        %v2351 = vunpack.c.l.b16 %v1586
        %v2352 = vunpack.c.h.b16 %v1586
        %v2353 = vunpack.c.l.b16 %v1587
        %v2354 = vunpack.c.h.b16 %v1587
        %v2355 = vunpack.c.l.b16 %v1588
        %v2356 = vunpack.c.h.b16 %v1588
        %v2357 = vunpack.c.l.b16 %v1589
        %v2358 = vunpack.c.h.b16 %v1589
        %v2359 = vunpack.c.l.b16 %v1590
        %v2360 = vunpack.c.h.b16 %v1590
        %v2361 = vunpack.c.l.b16 %v1591
        %v2362 = vunpack.c.h.b16 %v1591
        %v2363 = vunpack.c.l.b16 %v1592
        %v2364 = vunpack.c.h.b16 %v1592
        %v2365 = vunpack.c.l.b16 %v1593
        %v2366 = vunpack.c.h.b16 %v1593
        %v2367 = vunpack.c.l.b16 %v1594
        %v2368 = vunpack.c.h.b16 %v1594
        %v2369 = vunpack.c.l.b16 %v1595
        %v2370 = vunpack.c.h.b16 %v1595
        %v2371 = vunpack.c.l.b16 %v1596
        %v2372 = vunpack.c.h.b16 %v1596
        %v2373 = vunpack.c.l.b16 %v1597
        %v2374 = vunpack.c.h.b16 %v1597
        %v2375 = vunpack.c.l.b16 %v1598
        %v2376 = vunpack.c.h.b16 %v1598
        %v2377 = vunpack.c.l.b16 %v1599
        %v2378 = vunpack.c.h.b16 %v1599
        %v2379 = vunpack.c.l.b16 %v1600
        %v2380 = vunpack.c.h.b16 %v1600
        %v2381 = vunpack.c.l.b16 %v1601
        %v2382 = vunpack.c.h.b16 %v1601
        %v2383 = vunpack.c.l.b16 %v1602
        %v2384 = vunpack.c.h.b16 %v1602
        %v2385 = vunpack.c.l.b16 %v1603
        %v2386 = vunpack.c.h.b16 %v1603
        %v2387 = vunpack.c.l.b16 %v1604
        %v2388 = vunpack.c.h.b16 %v1604
        %v2389 = vunpack.c.l.b16 %v1605
        %v2390 = vunpack.c.h.b16 %v1605
        %v2391 = vunpack.c.l.b16 %v1606
        %v2392 = vunpack.c.h.b16 %v1606
        %v2393 = vunpack.c.l.b16 %v1607
        %v2394 = vunpack.c.h.b16 %v1607
        %v2395 = vunpack.c.l.b16 %v1608
        %v2396 = vunpack.c.h.b16 %v1608
        %v2397 = vunpack.c.l.b16 %v1609
        %v2398 = vunpack.c.h.b16 %v1609
        %v2399 = vunpack.c.l.b16 %v1610
        %v2400 = vunpack.c.h.b16 %v1610
        %v2401 = vunpack.c.l.b16 %v1611
        %v2402 = vunpack.c.h.b16 %v1611
        %v2403 = vunpack.c.l.b16 %v1612
        %v2404 = vunpack.c.h.b16 %v1612
        %v2405 = vunpack.c.l.b16 %v1613
        %v2406 = vunpack.c.h.b16 %v1613
        %v2407 = vunpack.c.l.b16 %v1614
        %v2408 = vunpack.c.h.b16 %v1614
        %v2409 = vunpack.c.l.b16 %v1615
        %v2410 = vunpack.c.h.b16 %v1615
        %v2411 = vunpack.c.l.b16 %v1616
        %v2412 = vunpack.c.h.b16 %v1616
        %v2413 = vunpack.c.l.b16 %v1617
        %v2414 = vunpack.c.h.b16 %v1617
        %v2415 = vunpack.c.l.b16 %v1618
        %v2416 = vunpack.c.h.b16 %v1618
        %v2417 = vunpack.c.l.b16 %v1619
        %v2418 = vunpack.c.h.b16 %v1619
        %v2419 = vunpack.c.l.b16 %v1620
        %v2420 = vunpack.c.h.b16 %v1620
        %v2421 = vunpack.c.l.b16 %v1621
        %v2422 = vunpack.c.h.b16 %v1621
        %v2423 = vunpack.c.l.b16 %v1622
        %v2424 = vunpack.c.h.b16 %v1622
        %v2425 = vunpack.c.l.b16 %v1623
        %v2426 = vunpack.c.h.b16 %v1623
        %v2427 = vunpack.c.l.b16 %v1624
        %v2428 = vunpack.c.h.b16 %v1624
        %v2429 = vunpack.c.l.b16 %v1625
        %v2430 = vunpack.c.h.b16 %v1625
        %v2431 = vunpack.c.l.b16 %v1626
        %v2432 = vunpack.c.h.b16 %v1626
        %v2433 = vunpack.c.l.b16 %v1627
        %v2434 = vunpack.c.h.b16 %v1627
        %v2435 = vunpack.c.l.b16 %v1628
        %v2436 = vunpack.c.h.b16 %v1628
        %v2437 = vunpack.c.l.b16 %v1629
        %v2438 = vunpack.c.h.b16 %v1629
        %v2439 = vunpack.c.l.b16 %v1630
        %v2440 = vunpack.c.h.b16 %v1630
        %v2441 = vunpack.c.l.b16 %v1631
        %v2442 = vunpack.c.h.b16 %v1631
        %v2443 = vunpack.c.l.b16 %v1632
        %v2444 = vunpack.c.h.b16 %v1632
        %v2445 = vunpack.c.l.b16 %v1633
        %v2446 = vunpack.c.h.b16 %v1633
        %v2447 = vunpack.c.l.b16 %v1634
        %v2448 = vunpack.c.h.b16 %v1634
        %v2449 = vunpack.c.l.b16 %v1635
        %v2450 = vunpack.c.h.b16 %v1635
        %v2451 = vunpack.c.l.b16 %v1636
        %v2452 = vunpack.c.h.b16 %v1636
        %v2453 = vunpack.c.l.b16 %v1637
        %v2454 = vunpack.c.h.b16 %v1637
        %v2455 = vunpack.c.l.b16 %v1638
        %v2456 = vunpack.c.h.b16 %v1638
        %v2457 = vunpack.c.l.b16 %v1639
        %v2458 = vunpack.c.h.b16 %v1639
        %v2459 = vunpack.c.l.b16 %v1640
        %v2460 = vunpack.c.h.b16 %v1640
        %v2461 = vunpack.c.l.b16 %v1641
        %v2462 = vunpack.c.h.b16 %v1641
        %v2463 = vunpack.c.l.b16 %v1642
        %v2464 = vunpack.c.h.b16 %v1642
        %v2465 = vunpack.c.l.b16 %v1643
        %v2466 = vunpack.c.h.b16 %v1643
        %v2467 = vunpack.c.l.b16 %v1644
        %v2468 = vunpack.c.h.b16 %v1644
        %v2469 = vunpack.c.l.b16 %v1645
        %v2470 = vunpack.c.h.b16 %v1645
        %v2471 = vunpack.c.l.b16 %v1646
        %v2472 = vunpack.c.h.b16 %v1646
        %v2473 = vunpack.c.l.b16 %v1647
        %v2474 = vunpack.c.h.b16 %v1647
        %v2475 = vunpack.c.l.b16 %v1648
        %v2476 = vunpack.c.h.b16 %v1648
        %v2477 = vunpack.c.l.b16 %v1649
        %v2478 = vunpack.c.h.b16 %v1649
        %v2479 = vunpack.c.l.b16 %v1650
        %v2480 = vunpack.c.h.b16 %v1650
        %v2481 = vunpack.c.l.b16 %v1651
        %v2482 = vunpack.c.h.b16 %v1651
        %v2483 = vunpack.c.l.b16 %v1652
        %v2484 = vunpack.c.h.b16 %v1652
        %v2485 = vunpack.c.l.b16 %v1653
        %v2486 = vunpack.c.h.b16 %v1653
        %v2487 = vunpack.c.l.b16 %v1654
        %v2488 = vunpack.c.h.b16 %v1654
        %v2489 = vunpack.c.l.b16 %v1655
        %v2490 = vunpack.c.h.b16 %v1655
        %v2491 = vunpack.c.l.b16 %v1656
        %v2492 = vunpack.c.h.b16 %v1656
        %v2493 = vunpack.c.l.b16 %v1657
        %v2494 = vunpack.c.h.b16 %v1657
        %v2495 = vunpack.c.l.b16 %v1658
        %v2496 = vunpack.c.h.b16 %v1658
        %v2497 = vunpack.c.l.b16 %v1659
        %v2498 = vunpack.c.h.b16 %v1659
        %v2499 = vunpack.c.l.b16 %v1660
        %v2500 = vunpack.c.h.b16 %v1660
        %v2501 = vunpack.c.l.b16 %v1661
        %v2502 = vunpack.c.h.b16 %v1661
        %v2503 = vunpack.c.l.b16 %v1662
        %v2504 = vunpack.c.h.b16 %v1662
        %v2505 = vunpack.c.l.b16 %v1663
        %v2506 = vunpack.c.h.b16 %v1663
        %v2507 = vunpack.c.l.b16 %v1664
        %v2508 = vunpack.c.h.b16 %v1664
        %v2509 = vunpack.c.l.b16 %v1665
        %v2510 = vunpack.c.h.b16 %v1665
        %v2511 = vunpack.c.l.b16 %v1666
        %v2512 = vunpack.c.h.b16 %v1666
        %v2513 = vunpack.c.l.b16 %v1667
        %v2514 = vunpack.c.h.b16 %v1667
        %v2515 = vunpack.c.l.b16 %v1668
        %v2516 = vunpack.c.h.b16 %v1668
        %v2517 = vunpack.c.l.b16 %v1669
        %v2518 = vunpack.c.h.b16 %v1669
        %v2519 = vunpack.c.l.b16 %v1670
        %v2520 = vunpack.c.h.b16 %v1670
        %v2521 = vunpack.c.l.b16 %v1671
        %v2522 = vunpack.c.h.b16 %v1671
        %v2523 = vunpack.c.l.b16 %v1672
        %v2524 = vunpack.c.h.b16 %v1672
        %v2525 = vunpack.c.l.b16 %v1673
        %v2526 = vunpack.c.h.b16 %v1673
        %v2527 = vunpack.c.l.b16 %v1674
        %v2528 = vunpack.c.h.b16 %v1674
        %v2529 = vunpack.c.l.b16 %v1675
        %v2530 = vunpack.c.h.b16 %v1675
        %v2531 = vunpack.c.l.b16 %v1676
        %v2532 = vunpack.c.h.b16 %v1676
        %v2533 = vunpack.c.l.b16 %v1677
        %v2534 = vunpack.c.h.b16 %v1677
        %v2535 = vunpack.c.l.b16 %v1678
        %v2536 = vunpack.c.h.b16 %v1678
        %v2537 = vunpack.c.l.b16 %v1679
        %v2538 = vunpack.c.h.b16 %v1679
        %v2539 = vunpack.c.l.b16 %v1680
        %v2540 = vunpack.c.h.b16 %v1680
        %v2541 = vunpack.c.l.b16 %v1681
        %v2542 = vunpack.c.h.b16 %v1681
        %v2543 = vunpack.c.l.b16 %v1682
        %v2544 = vunpack.c.h.b16 %v1682
        %v2545 = vunpack.c.l.b16 %v1683
        %v2546 = vunpack.c.h.b16 %v1683
        %v2547 = vunpack.c.l.b16 %v1684
        %v2548 = vunpack.c.h.b16 %v1684
        %v2549 = vunpack.c.l.b16 %v1685
        %v2550 = vunpack.c.h.b16 %v1685
        %v2551 = vunpack.c.l.b16 %v1686
        %v2552 = vunpack.c.h.b16 %v1686
        %v2553 = vunpack.c.l.b16 %v1687
        %v2554 = vunpack.c.h.b16 %v1687
        %v2555 = vunpack.c.l.b16 %v1688
        %v2556 = vunpack.c.h.b16 %v1688
        %v2557 = vunpack.c.l.b16 %v1689
        %v2558 = vunpack.c.h.b16 %v1689
        %v2559 = vunpack.c.l.b16 %v1690
        %v2560 = vunpack.c.h.b16 %v1690
        %v2561 = vunpack.c.l.b16 %v1691
        %v2562 = vunpack.c.h.b16 %v1691
        %v2563 = vunpack.c.l.b16 %v1692
        %v2564 = vunpack.c.h.b16 %v1692
        %v2565 = vunpack.c.l.b16 %v1693
        %v2566 = vunpack.c.h.b16 %v1693
        %v2567 = vunpack.c.l.b16 %v1694
        %v2568 = vunpack.c.h.b16 %v1694
        %v2569 = vunpack.c.l.b16 %v1695
        %v2570 = vunpack.c.h.b16 %v1695
        %v2571 = vunpack.c.l.b16 %v1696
        %v2572 = vunpack.c.h.b16 %v1696
        %v2573 = vunpack.c.l.b16 %v1697
        %v2574 = vunpack.c.h.b16 %v1697
        %v2575 = vunpack.c.l.b16 %v1698
        %v2576 = vunpack.c.h.b16 %v1698
        %v2577 = vunpack.c.l.b16 %v1699
        %v2578 = vunpack.c.h.b16 %v1699
        %v2579 = vunpack.c.l.b16 %v1700
        %v2580 = vunpack.c.h.b16 %v1700
        %v2581 = vunpack.c.l.b16 %v1701
        %v2582 = vunpack.c.h.b16 %v1701
        %v2583 = vunpack.c.l.b16 %v1702
        %v2584 = vunpack.c.h.b16 %v1702
        %v2585 = vunpack.c.l.b16 %v1703
        %v2586 = vunpack.c.h.b16 %v1703
        %v2587 = vunpack.c.l.b16 %v1704
        %v2588 = vunpack.c.h.b16 %v1704
        %v2589 = vunpack.c.l.b16 %v1705
        %v2590 = vunpack.c.h.b16 %v1705
        %v2591 = vunpack.c.l.b16 %v1706
        %v2592 = vunpack.c.h.b16 %v1706
        %v2593 = vunpack.c.l.b16 %v1707
        %v2594 = vunpack.c.h.b16 %v1707
        %v2595 = vunpack.c.l.b16 %v1708
        %v2596 = vunpack.c.h.b16 %v1708
        %v2597 = vunpack.c.l.b16 %v1709
        %v2598 = vunpack.c.h.b16 %v1709
        %v2599 = vunpack.c.l.b16 %v1710
        %v2600 = vunpack.c.h.b16 %v1710
        %v2601 = vunpack.c.l.b16 %v1711
        %v2602 = vunpack.c.h.b16 %v1711
        %v2603 = vunpack.c.l.b16 %v1712
        %v2604 = vunpack.c.h.b16 %v1712
        %v2605 = vunpack.c.l.b16 %v1713
        %v2606 = vunpack.c.h.b16 %v1713
        %v2607 = vunpack.c.l.b16 %v1714
        %v2608 = vunpack.c.h.b16 %v1714
        %v2609 = vunpack.c.l.b16 %v1715
        %v2610 = vunpack.c.h.b16 %v1715
        %v2611 = vunpack.c.l.b16 %v1716
        %v2612 = vunpack.c.h.b16 %v1716
        %v2613 = vunpack.c.l.b16 %v1717
        %v2614 = vunpack.c.h.b16 %v1717
        %v2615 = vunpack.c.l.b16 %v1718
        %v2616 = vunpack.c.h.b16 %v1718
        %v2617 = vunpack.c.l.b16 %v1719
        %v2618 = vunpack.c.h.b16 %v1719
        %v2619 = vunpack.c.l.b16 %v1720
        %v2620 = vunpack.c.h.b16 %v1720
        %v2621 = vunpack.c.l.b16 %v1721
        %v2622 = vunpack.c.h.b16 %v1721
        %v2623 = vunpack.c.l.b16 %v1722
        %v2624 = vunpack.c.h.b16 %v1722
        %v2625 = vunpack.c.l.b16 %v1723
        %v2626 = vunpack.c.h.b16 %v1723
        %v2627 = vunpack.c.l.b16 %v1724
        %v2628 = vunpack.c.h.b16 %v1724
        %v2629 = vunpack.c.l.b16 %v1725
        %v2630 = vunpack.c.h.b16 %v1725
        %v2631 = vunpack.c.l.b16 %v1726
        %v2632 = vunpack.c.h.b16 %v1726
        %v2633 = vunpack.c.l.b16 %v1727
        %v2634 = vunpack.c.h.b16 %v1727
        %v2635 = vunpack.c.l.b16 %v1728
        %v2636 = vunpack.c.h.b16 %v1728
        %v2637 = vunpack.c.l.b16 %v1729
        %v2638 = vunpack.c.h.b16 %v1729
        %v2639 = vunpack.c.l.b16 %v1730
        %v2640 = vunpack.c.h.b16 %v1730
        %v2641 = vunpack.c.l.b16 %v1731
        %v2642 = vunpack.c.h.b16 %v1731
        %v2643 = vunpack.c.l.b16 %v1732
        %v2644 = vunpack.c.h.b16 %v1732
        %v2645 = vunpack.c.l.b16 %v1733
        %v2646 = vunpack.c.h.b16 %v1733
        %v2647 = vunpack.c.l.b16 %v1734
        %v2648 = vunpack.c.h.b16 %v1734
        %v2649 = vunpack.c.l.b16 %v1735
        %v2650 = vunpack.c.h.b16 %v1735
        %v2651 = vunpack.c.l.b16 %v1736
        %v2652 = vunpack.c.h.b16 %v1736
        %v2653 = vunpack.c.l.b16 %v1737
        %v2654 = vunpack.c.h.b16 %v1737
        %v2655 = vunpack.c.l.b16 %v1738
        %v2656 = vunpack.c.h.b16 %v1738
        %v2657 = vunpack.c.l.b16 %v1739
        %v2658 = vunpack.c.h.b16 %v1739
        %v2659 = vunpack.c.l.b16 %v1740
        %v2660 = vunpack.c.h.b16 %v1740
        %v2661 = vunpack.c.l.b16 %v1741
        %v2662 = vunpack.c.h.b16 %v1741
        %v2663 = vunpack.c.l.b16 %v1742
        %v2664 = vunpack.c.h.b16 %v1742
        %v2665 = vunpack.c.l.b16 %v1743
        %v2666 = vunpack.c.h.b16 %v1743
        %v2667 = vunpack.c.l.b16 %v1744
        %v2668 = vunpack.c.h.b16 %v1744
        %v2669 = vunpack.c.l.b16 %v1745
        %v2670 = vunpack.c.h.b16 %v1745
        %v2671 = vunpack.c.l.b16 %v1746
        %v2672 = vunpack.c.h.b16 %v1746
        %v2673 = vunpack.c.l.b16 %v1747
        %v2674 = vunpack.c.h.b16 %v1747
        %v2675 = vunpack.c.l.b16 %v1748
        %v2676 = vunpack.c.h.b16 %v1748
        %v2677 = vunpack.c.l.b16 %v1749
        %v2678 = vunpack.c.h.b16 %v1749
        %v2679 = vunpack.c.l.b16 %v1750
        %v2680 = vunpack.c.h.b16 %v1750
        %v2681 = vunpack.c.l.b16 %v1751
        %v2682 = vunpack.c.h.b16 %v1751
        %v2683 = vunpack.c.l.b16 %v1752
        %v2684 = vunpack.c.h.b16 %v1752
        %v2685 = vunpack.c.l.b16 %v1753
        %v2686 = vunpack.c.h.b16 %v1753
        %v2687 = vunpack.c.l.b16 %v1754
        %v2688 = vunpack.c.h.b16 %v1754
        %v2689 = vunpack.c.l.b16 %v1755
        %v2690 = vunpack.c.h.b16 %v1755
        %v2691 = vunpack.c.l.b16 %v1756
        %v2692 = vunpack.c.h.b16 %v1756
        %v2693 = vunpack.c.l.b16 %v1757
        %v2694 = vunpack.c.h.b16 %v1757
        %v2695 = vunpack.c.l.b16 %v1758
        %v2696 = vunpack.c.h.b16 %v1758
        %v2697 = vunpack.c.l.b16 %v1759
        %v2698 = vunpack.c.h.b16 %v1759
        %v2699 = vpack.c.b16 %v2125, %v2123
        %v2700 = vpack.c.b16 %v2126, %v2124
        %v2701 = vpack.c.b16 %v2129, %v2127
        %v2702 = vpack.c.b16 %v2130, %v2128
        %v2703 = vpack.c.b16 %v2133, %v2131
        %v2704 = vpack.c.b16 %v2134, %v2132
        %v2705 = vpack.c.b16 %v2137, %v2135
        %v2706 = vpack.c.b16 %v2138, %v2136
        %v2707 = vpack.c.b16 %v2141, %v2139
        %v2708 = vpack.c.b16 %v2142, %v2140
        %v2709 = vpack.c.b16 %v2145, %v2143
        %v2710 = vpack.c.b16 %v2146, %v2144
        %v2711 = vpack.c.b16 %v2149, %v2147
        %v2712 = vpack.c.b16 %v2150, %v2148
        %v2713 = vpack.c.b16 %v2153, %v2151
        %v2714 = vpack.c.b16 %v2154, %v2152
        %v2715 = vpack.c.b16 %v2157, %v2155
        %v2716 = vpack.c.b16 %v2158, %v2156
        %v2717 = vpack.c.b16 %v2161, %v2159
        %v2718 = vpack.c.b16 %v2162, %v2160
        %v2719 = vpack.c.b16 %v2165, %v2163
        %v2720 = vpack.c.b16 %v2166, %v2164
        %v2721 = vpack.c.b16 %v2169, %v2167
        %v2722 = vpack.c.b16 %v2170, %v2168
        %v2723 = vpack.c.b16 %v2173, %v2171
        %v2724 = vpack.c.b16 %v2174, %v2172
        %v2725 = vpack.c.b16 %v2177, %v2175
        %v2726 = vpack.c.b16 %v2178, %v2176
        %v2727 = vpack.c.b16 %v2181, %v2179
        %v2728 = vpack.c.b16 %v2182, %v2180
        %v2729 = vpack.c.b16 %v2185, %v2183
        %v2730 = vpack.c.b16 %v2186, %v2184
        %v2731 = vpack.c.b16 %v2189, %v2187
        %v2732 = vpack.c.b16 %v2190, %v2188
        %v2733 = vpack.c.b16 %v2193, %v2191
        %v2734 = vpack.c.b16 %v2194, %v2192
        %v2735 = vpack.c.b16 %v2197, %v2195
        %v2736 = vpack.c.b16 %v2198, %v2196
        %v2737 = vpack.c.b16 %v2201, %v2199
        %v2738 = vpack.c.b16 %v2202, %v2200
        %v2739 = vpack.c.b16 %v2205, %v2203
        %v2740 = vpack.c.b16 %v2206, %v2204
        %v2741 = vpack.c.b16 %v2209, %v2207
        %v2742 = vpack.c.b16 %v2210, %v2208
        %v2743 = vpack.c.b16 %v2213, %v2211
        %v2744 = vpack.c.b16 %v2214, %v2212
        %v2745 = vpack.c.b16 %v2217, %v2215
        %v2746 = vpack.c.b16 %v2218, %v2216
        %v2747 = vpack.c.b16 %v2221, %v2219
        %v2748 = vpack.c.b16 %v2222, %v2220
        %v2749 = vpack.c.b16 %v2225, %v2223
        %v2750 = vpack.c.b16 %v2226, %v2224
        %v2751 = vpack.c.b16 %v2229, %v2227
        %v2752 = vpack.c.b16 %v2230, %v2228
        %v2753 = vpack.c.b16 %v2233, %v2231
        %v2754 = vpack.c.b16 %v2234, %v2232
        %v2755 = vpack.c.b16 %v2237, %v2235
        %v2756 = vpack.c.b16 %v2238, %v2236
        %v2757 = vpack.c.b16 %v2241, %v2239
        %v2758 = vpack.c.b16 %v2242, %v2240
        %v2759 = vpack.c.b16 %v2245, %v2243
        %v2760 = vpack.c.b16 %v2246, %v2244
        %v2761 = vpack.c.b16 %v2249, %v2247
        %v2762 = vpack.c.b16 %v2250, %v2248
        %v2763 = vpack.c.b16 %v2253, %v2251
        %v2764 = vpack.c.b16 %v2254, %v2252
        %v2765 = vpack.c.b16 %v2257, %v2255
        %v2766 = vpack.c.b16 %v2258, %v2256
        %v2767 = vpack.c.b16 %v2261, %v2259
        %v2768 = vpack.c.b16 %v2262, %v2260
        %v2769 = vpack.c.b16 %v2265, %v2263
        %v2770 = vpack.c.b16 %v2266, %v2264
        %v2771 = vpack.c.b16 %v2269, %v2267
        %v2772 = vpack.c.b16 %v2270, %v2268
        %v2773 = vpack.c.b16 %v2273, %v2271
        %v2774 = vpack.c.b16 %v2274, %v2272
        %v2775 = vpack.c.b16 %v2277, %v2275
        %v2776 = vpack.c.b16 %v2278, %v2276
        %v2777 = vpack.c.b16 %v2281, %v2279
        %v2778 = vpack.c.b16 %v2282, %v2280
        %v2779 = vpack.c.b16 %v2285, %v2283
        %v2780 = vpack.c.b16 %v2286, %v2284
        %v2781 = vpack.c.b16 %v2289, %v2287
        %v2782 = vpack.c.b16 %v2290, %v2288
        %v2783 = vpack.c.b16 %v2293, %v2291
        %v2784 = vpack.c.b16 %v2294, %v2292
        %v2785 = vpack.c.b16 %v2297, %v2295
        %v2786 = vpack.c.b16 %v2298, %v2296
        %v2787 = vpack.c.b16 %v2301, %v2299
        %v2788 = vpack.c.b16 %v2302, %v2300
        %v2789 = vpack.c.b16 %v2305, %v2303
        %v2790 = vpack.c.b16 %v2306, %v2304
        %v2791 = vpack.c.b16 %v2309, %v2307
        %v2792 = vpack.c.b16 %v2310, %v2308
        %v2793 = vpack.c.b16 %v2313, %v2311
        %v2794 = vpack.c.b16 %v2314, %v2312
        %v2795 = vpack.c.b16 %v2317, %v2315
        %v2796 = vpack.c.b16 %v2318, %v2316
        %v2797 = vpack.c.b16 %v2321, %v2319
        %v2798 = vpack.c.b16 %v2322, %v2320
        %v2799 = vpack.c.b16 %v2325, %v2323
        %v2800 = vpack.c.b16 %v2326, %v2324
        %v2801 = vpack.c.b16 %v2329, %v2327
        %v2802 = vpack.c.b16 %v2330, %v2328
        %v2803 = vpack.c.b16 %v2333, %v2331
        %v2804 = vpack.c.b16 %v2334, %v2332
        %v2805 = vpack.c.b16 %v2337, %v2335
        %v2806 = vpack.c.b16 %v2338, %v2336
        %v2807 = vpack.c.b16 %v2341, %v2339
        %v2808 = vpack.c.b16 %v2342, %v2340
        %v2809 = vpack.c.b16 %v2345, %v2343
        %v2810 = vpack.c.b16 %v2346, %v2344
        %v2811 = vpack.c.b16 %v2349, %v2347
        %v2812 = vpack.c.b16 %v2350, %v2348
        %v2813 = vpack.c.b16 %v2353, %v2351
        %v2814 = vpack.c.b16 %v2354, %v2352
        %v2815 = vpack.c.b16 %v2357, %v2355
        %v2816 = vpack.c.b16 %v2358, %v2356
        %v2817 = vpack.c.b16 %v2361, %v2359
        %v2818 = vpack.c.b16 %v2362, %v2360
        %v2819 = vpack.c.b16 %v2365, %v2363
        %v2820 = vpack.c.b16 %v2366, %v2364
        %v2821 = vpack.c.b16 %v2369, %v2367
        %v2822 = vpack.c.b16 %v2370, %v2368
        %v2823 = vpack.c.b16 %v2373, %v2371
        %v2824 = vpack.c.b16 %v2374, %v2372
        %v2825 = vpack.c.b16 %v2377, %v2375
        %v2826 = vpack.c.b16 %v2378, %v2376
        %v2827 = vpack.c.b16 %v2381, %v2379
        %v2828 = vpack.c.b16 %v2382, %v2380
        %v2829 = vpack.c.b16 %v2385, %v2383
        %v2830 = vpack.c.b16 %v2386, %v2384
        %v2831 = vpack.c.b16 %v2389, %v2387
        %v2832 = vpack.c.b16 %v2390, %v2388
        %v2833 = vpack.c.b16 %v2393, %v2391
        %v2834 = vpack.c.b16 %v2394, %v2392
        %v2835 = vpack.c.b16 %v2397, %v2395
        %v2836 = vpack.c.b16 %v2398, %v2396
        %v2837 = vpack.c.b16 %v2401, %v2399
        %v2838 = vpack.c.b16 %v2402, %v2400
        %v2839 = vpack.c.b16 %v2405, %v2403
        %v2840 = vpack.c.b16 %v2406, %v2404
        %v2841 = vpack.c.b16 %v2409, %v2407
        %v2842 = vpack.c.b16 %v2410, %v2408
        %v2843 = vpack.c.b16 %v2413, %v2411
        %v2844 = vpack.c.b16 %v2414, %v2412
        %v2845 = vpack.c.b16 %v2417, %v2415
        %v2846 = vpack.c.b16 %v2418, %v2416
        %v2847 = vpack.c.b16 %v2421, %v2419
        %v2848 = vpack.c.b16 %v2422, %v2420
        %v2849 = vpack.c.b16 %v2425, %v2423
        %v2850 = vpack.c.b16 %v2426, %v2424
        %v2851 = vpack.c.b16 %v2429, %v2427
        %v2852 = vpack.c.b16 %v2430, %v2428
        %v2853 = vpack.c.b16 %v2433, %v2431
        %v2854 = vpack.c.b16 %v2434, %v2432
        %v2855 = vpack.c.b16 %v2437, %v2435
        %v2856 = vpack.c.b16 %v2438, %v2436
        %v2857 = vpack.c.b16 %v2441, %v2439
        %v2858 = vpack.c.b16 %v2442, %v2440
        %v2859 = vpack.c.b16 %v2445, %v2443
        %v2860 = vpack.c.b16 %v2446, %v2444
        %v2861 = vpack.c.b16 %v2449, %v2447
        %v2862 = vpack.c.b16 %v2450, %v2448
        %v2863 = vpack.c.b16 %v2453, %v2451
        %v2864 = vpack.c.b16 %v2454, %v2452
        %v2865 = vpack.c.b16 %v2457, %v2455
        %v2866 = vpack.c.b16 %v2458, %v2456
        %v2867 = vpack.c.b16 %v2461, %v2459
        %v2868 = vpack.c.b16 %v2462, %v2460
        %v2869 = vpack.c.b16 %v2465, %v2463
        %v2870 = vpack.c.b16 %v2466, %v2464
        %v2871 = vpack.c.b16 %v2469, %v2467
        %v2872 = vpack.c.b16 %v2470, %v2468
        %v2873 = vpack.c.b16 %v2473, %v2471
        %v2874 = vpack.c.b16 %v2474, %v2472
        %v2875 = vpack.c.b16 %v2477, %v2475
        %v2876 = vpack.c.b16 %v2478, %v2476
        %v2877 = vpack.c.b16 %v2481, %v2479
        %v2878 = vpack.c.b16 %v2482, %v2480
        %v2879 = vpack.c.b16 %v2485, %v2483
        %v2880 = vpack.c.b16 %v2486, %v2484
        %v2881 = vpack.c.b16 %v2489, %v2487
        %v2882 = vpack.c.b16 %v2490, %v2488
        %v2883 = vpack.c.b16 %v2493, %v2491
        %v2884 = vpack.c.b16 %v2494, %v2492
        %v2885 = vpack.c.b16 %v2497, %v2495
        %v2886 = vpack.c.b16 %v2498, %v2496
        %v2887 = vpack.c.b16 %v2501, %v2499
        %v2888 = vpack.c.b16 %v2502, %v2500
        %v2889 = vpack.c.b16 %v2505, %v2503
        %v2890 = vpack.c.b16 %v2506, %v2504
        %v2891 = vpack.c.b16 %v2509, %v2507
        %v2892 = vpack.c.b16 %v2510, %v2508
        %v2893 = vpack.c.b16 %v2513, %v2511
        %v2894 = vpack.c.b16 %v2514, %v2512
        %v2895 = vpack.c.b16 %v2517, %v2515
        %v2896 = vpack.c.b16 %v2518, %v2516
        %v2897 = vpack.c.b16 %v2521, %v2519
        %v2898 = vpack.c.b16 %v2522, %v2520
        %v2899 = vpack.c.b16 %v2525, %v2523
        %v2900 = vpack.c.b16 %v2526, %v2524
        %v2901 = vpack.c.b16 %v2529, %v2527
        %v2902 = vpack.c.b16 %v2530, %v2528
        %v2903 = vpack.c.b16 %v2533, %v2531
        %v2904 = vpack.c.b16 %v2534, %v2532
        %v2905 = vpack.c.b16 %v2537, %v2535
        %v2906 = vpack.c.b16 %v2538, %v2536
        %v2907 = vpack.c.b16 %v2541, %v2539
        %v2908 = vpack.c.b16 %v2542, %v2540
        %v2909 = vpack.c.b16 %v2545, %v2543
        %v2910 = vpack.c.b16 %v2546, %v2544
        %v2911 = vpack.c.b16 %v2549, %v2547
        %v2912 = vpack.c.b16 %v2550, %v2548
        %v2913 = vpack.c.b16 %v2553, %v2551
        %v2914 = vpack.c.b16 %v2554, %v2552
        %v2915 = vpack.c.b16 %v2557, %v2555
        %v2916 = vpack.c.b16 %v2558, %v2556
        %v2917 = vpack.c.b16 %v2561, %v2559
        %v2918 = vpack.c.b16 %v2562, %v2560
        %v2919 = vpack.c.b16 %v2565, %v2563
        %v2920 = vpack.c.b16 %v2566, %v2564
        %v2921 = vpack.c.b16 %v2569, %v2567
        %v2922 = vpack.c.b16 %v2570, %v2568
        %v2923 = vpack.c.b16 %v2573, %v2571
        %v2924 = vpack.c.b16 %v2574, %v2572
        %v2925 = vpack.c.b16 %v2577, %v2575
        %v2926 = vpack.c.b16 %v2578, %v2576
        %v2927 = vpack.c.b16 %v2581, %v2579
        %v2928 = vpack.c.b16 %v2582, %v2580
        %v2929 = vpack.c.b16 %v2585, %v2583
        %v2930 = vpack.c.b16 %v2586, %v2584
        %v2931 = vpack.c.b16 %v2589, %v2587
        %v2932 = vpack.c.b16 %v2590, %v2588
        %v2933 = vpack.c.b16 %v2593, %v2591
        %v2934 = vpack.c.b16 %v2594, %v2592
        %v2935 = vpack.c.b16 %v2597, %v2595
        %v2936 = vpack.c.b16 %v2598, %v2596
        %v2937 = vpack.c.b16 %v2601, %v2599
        %v2938 = vpack.c.b16 %v2602, %v2600
        %v2939 = vpack.c.b16 %v2605, %v2603
        %v2940 = vpack.c.b16 %v2606, %v2604
        %v2941 = vpack.c.b16 %v2609, %v2607
        %v2942 = vpack.c.b16 %v2610, %v2608
        %v2943 = vpack.c.b16 %v2613, %v2611
        %v2944 = vpack.c.b16 %v2614, %v2612
        %v2945 = vpack.c.b16 %v2617, %v2615
        %v2946 = vpack.c.b16 %v2618, %v2616
        %v2947 = vpack.c.b16 %v2621, %v2619
        %v2948 = vpack.c.b16 %v2622, %v2620
        %v2949 = vpack.c.b16 %v2625, %v2623
        %v2950 = vpack.c.b16 %v2626, %v2624
        %v2951 = vpack.c.b16 %v2629, %v2627
        %v2952 = vpack.c.b16 %v2630, %v2628
        %v2953 = vpack.c.b16 %v2633, %v2631
        %v2954 = vpack.c.b16 %v2634, %v2632
        %v2955 = vpack.c.b16 %v2637, %v2635
        %v2956 = vpack.c.b16 %v2638, %v2636
        %v2957 = vpack.c.b16 %v2641, %v2639
        %v2958 = vpack.c.b16 %v2642, %v2640
        %v2959 = vpack.c.b16 %v2645, %v2643
        %v2960 = vpack.c.b16 %v2646, %v2644
        %v2961 = vpack.c.b16 %v2649, %v2647
        %v2962 = vpack.c.b16 %v2650, %v2648
        %v2963 = vpack.c.b16 %v2653, %v2651
        %v2964 = vpack.c.b16 %v2654, %v2652
        %v2965 = vpack.c.b16 %v2657, %v2655
        %v2966 = vpack.c.b16 %v2658, %v2656
        %v2967 = vpack.c.b16 %v2661, %v2659
        %v2968 = vpack.c.b16 %v2662, %v2660
        %v2969 = vpack.c.b16 %v2665, %v2663
        %v2970 = vpack.c.b16 %v2666, %v2664
        %v2971 = vpack.c.b16 %v2669, %v2667
        %v2972 = vpack.c.b16 %v2670, %v2668
        %v2973 = vpack.c.b16 %v2673, %v2671
        %v2974 = vpack.c.b16 %v2674, %v2672
        %v2975 = vpack.c.b16 %v2677, %v2675
        %v2976 = vpack.c.b16 %v2678, %v2676
        %v2977 = vpack.c.b16 %v2681, %v2679
        %v2978 = vpack.c.b16 %v2682, %v2680
        %v2979 = vpack.c.b16 %v2685, %v2683
        %v2980 = vpack.c.b16 %v2686, %v2684
        %v2981 = vpack.c.b16 %v2689, %v2687
        %v2982 = vpack.c.b16 %v2690, %v2688
        %v2983 = vpack.c.b16 %v2693, %v2691
        %v2984 = vpack.c.b16 %v2694, %v2692
        %v2985 = vpack.c.b16 %v2697, %v2695
        %v2986 = vpack.c.b16 %v2698, %v2696
        %3275 = vmatprep.subr.bf16.mxu0 %v2700
        %3276 = vmatpush1.bf16.msra.mxu0 %v2699
        %3277 = vmatprep.subr.bf16.mxu0 %v2702
        %3278 = vmatpush1.bf16.msra.mxu0 %v2701
        %3279 = vmatprep.subr.bf16.mxu0 %v2704
        %3280 = vmatpush1.bf16.msra.mxu0 %v2703
        %3281 = vmatprep.subr.bf16.mxu0 %v2706
        %3282 = vmatpush1.bf16.msra.mxu0 %v2705
        %3283 = vmatprep.subr.bf16.mxu0 %v2708
        %3284 = vmatpush1.bf16.msra.mxu0 %v2707
        %3285 = vmatprep.subr.bf16.mxu0 %v2710
        %3286 = vmatpush1.bf16.msra.mxu0 %v2709
        %3287 = vmatprep.subr.bf16.mxu0 %v2712
        %3288 = vmatpush1.bf16.msra.mxu0 %v2711
        %3289 = vmatprep.subr.bf16.mxu0 %v2714
        %3290 = vmatpush1.bf16.msra.mxu0 %v2713
        %3291 = vmatprep.subr.bf16.mxu0 %v2716
        %3292 = vmatpush1.bf16.msra.mxu0 %v2715
        %3293 = vmatprep.subr.bf16.mxu0 %v2718
        %3294 = vmatpush1.bf16.msra.mxu0 %v2717
        %3295 = vmatprep.subr.bf16.mxu0 %v2720
        %3296 = vmatpush1.bf16.msra.mxu0 %v2719
        %3297 = vmatprep.subr.bf16.mxu0 %v2722
        %3298 = vmatpush1.bf16.msra.mxu0 %v2721
        %3299 = vmatprep.subr.bf16.mxu0 %v2724
        %3300 = vmatpush1.bf16.msra.mxu0 %v2723
        %3301 = vmatprep.subr.bf16.mxu0 %v2726
        %3302 = vmatpush1.bf16.msra.mxu0 %v2725
        %3303 = vmatprep.subr.bf16.mxu0 %v2728
        %3304 = vmatpush1.bf16.msra.mxu0 %v2727
        %3305 = vmatprep.subr.bf16.mxu0 %v2730
        %3306 = vmatpush1.bf16.msra.mxu0 %v2729
        %3307 = vmatprep.mubr.bf16.mxu0 %v1800
        %3308 = vmatmul.mubr.bf16.gmra.mrb[0].mxu0 %v1799
        %v3309 = vpop.f32.mrb[0].mxu0
        %v3310 = vadd.f32 %v1765, %v3309
        %v3311 = vpop.f32.mrb[0].mxu0
        %v3312 = vadd.f32 %v1769, %v3311
        %v3313 = vpop.f32.mrb[0].mxu0
        %v3314 = vpop.f32.mrb[0].mxu0
        %3315 = vdwg.mxu0
        %3316 = vmatprep.subr.bf16.mxu0 %v2732
        %3317 = vmatpush1.bf16.msra.mxu0 %v2731
        %3318 = vmatprep.subr.bf16.mxu0 %v2734
        %3319 = vmatpush1.bf16.msra.mxu0 %v2733
        %3320 = vmatprep.subr.bf16.mxu0 %v2736
        %3321 = vmatpush1.bf16.msra.mxu0 %v2735
        %3322 = vmatprep.subr.bf16.mxu0 %v2738
        %3323 = vmatpush1.bf16.msra.mxu0 %v2737
        %3324 = vmatprep.subr.bf16.mxu0 %v2740
        %3325 = vmatpush1.bf16.msra.mxu0 %v2739
        %3326 = vmatprep.subr.bf16.mxu0 %v2742
        %3327 = vmatpush1.bf16.msra.mxu0 %v2741
        %3328 = vmatprep.subr.bf16.mxu0 %v2744
        %3329 = vmatpush1.bf16.msra.mxu0 %v2743
        %3330 = vmatprep.subr.bf16.mxu0 %v2746
        %3331 = vmatpush1.bf16.msra.mxu0 %v2745
        %3332 = vmatprep.subr.bf16.mxu0 %v2748
        %3333 = vmatpush1.bf16.msra.mxu0 %v2747
        %3334 = vmatprep.subr.bf16.mxu0 %v2750
        %3335 = vmatpush1.bf16.msra.mxu0 %v2749
        %3336 = vmatprep.subr.bf16.mxu0 %v2752
        %3337 = vmatpush1.bf16.msra.mxu0 %v2751
        %3338 = vmatprep.subr.bf16.mxu0 %v2754
        %3339 = vmatpush1.bf16.msra.mxu0 %v2753
        %3340 = vmatprep.subr.bf16.mxu0 %v2756
        %3341 = vmatpush1.bf16.msra.mxu0 %v2755
        %3342 = vmatprep.subr.bf16.mxu0 %v2758
        %3343 = vmatpush1.bf16.msra.mxu0 %v2757
        %3344 = vmatprep.subr.bf16.mxu0 %v2760
        %3345 = vmatpush1.bf16.msra.mxu0 %v2759
        %3346 = vmatprep.subr.bf16.mxu0 %v2762
        %3347 = vmatpush1.bf16.msra.mxu0 %v2761
        %3348 = vmatprep.mubr.bf16.mxu0 %v1802
        %3349 = vmatmul.mubr.bf16.gmra.mrb[0].mxu0 %v1801
        %v3350 = vpop.f32.mrb[0].mxu0
        %v3351 = vadd.f32 %v3310, %v3350
        %v3352 = vpop.f32.mrb[0].mxu0
        %v3353 = vadd.f32 %v3312, %v3352
        %v3354 = vpop.f32.mrb[0].mxu0
        %v3355 = vpop.f32.mrb[0].mxu0
        %3356 = vdwg.mxu0
        %3357 = vmatprep.subr.bf16.mxu0 %v2764
        %3358 = vmatpush1.bf16.msra.mxu0 %v2763
        %3359 = vmatprep.subr.bf16.mxu0 %v2766
        %3360 = vmatpush1.bf16.msra.mxu0 %v2765
        %3361 = vmatprep.subr.bf16.mxu0 %v2768
        %3362 = vmatpush1.bf16.msra.mxu0 %v2767
        %3363 = vmatprep.subr.bf16.mxu0 %v2770
        %3364 = vmatpush1.bf16.msra.mxu0 %v2769
        %3365 = vmatprep.subr.bf16.mxu0 %v2772
        %3366 = vmatpush1.bf16.msra.mxu0 %v2771
        %3367 = vmatprep.subr.bf16.mxu0 %v2774
        %3368 = vmatpush1.bf16.msra.mxu0 %v2773
        %3369 = vmatprep.subr.bf16.mxu0 %v2776
        %3370 = vmatpush1.bf16.msra.mxu0 %v2775
        %3371 = vmatprep.subr.bf16.mxu0 %v2778
        %3372 = vmatpush1.bf16.msra.mxu0 %v2777
        %3373 = vmatprep.subr.bf16.mxu0 %v2780
        %3374 = vmatpush1.bf16.msra.mxu0 %v2779
        %3375 = vmatprep.subr.bf16.mxu0 %v2782
        %3376 = vmatpush1.bf16.msra.mxu0 %v2781
        %3377 = vmatprep.subr.bf16.mxu0 %v2784
        %3378 = vmatpush1.bf16.msra.mxu0 %v2783
        %3379 = vmatprep.subr.bf16.mxu0 %v2786
        %3380 = vmatpush1.bf16.msra.mxu0 %v2785
        %3381 = vmatprep.subr.bf16.mxu0 %v2788
        %3382 = vmatpush1.bf16.msra.mxu0 %v2787
        %3383 = vmatprep.subr.bf16.mxu0 %v2790
        %3384 = vmatpush1.bf16.msra.mxu0 %v2789
        %3385 = vmatprep.subr.bf16.mxu0 %v2792
        %3386 = vmatpush1.bf16.msra.mxu0 %v2791
        %3387 = vmatprep.subr.bf16.mxu0 %v2794
        %3388 = vmatpush1.bf16.msra.mxu0 %v2793
        %3389 = vmatprep.mubr.bf16.mxu0 %v1804
        %3390 = vmatmul.mubr.bf16.gmra.mrb[0].mxu0 %v1803
        %v3391 = vpop.f32.mrb[0].mxu0
        %v3392 = vadd.f32 %v3351, %v3391
        %v3393 = vpop.f32.mrb[0].mxu0
        %v3394 = vadd.f32 %v3353, %v3393
        %v3395 = vpop.f32.mrb[0].mxu0
        %v3396 = vpop.f32.mrb[0].mxu0
        %3397 = vdwg.mxu0
        %3398 = vmatprep.subr.bf16.mxu0 %v2796
        %3399 = vmatpush1.bf16.msra.mxu0 %v2795
        %3400 = vmatprep.subr.bf16.mxu0 %v2798
        %3401 = vmatpush1.bf16.msra.mxu0 %v2797
        %3402 = vmatprep.subr.bf16.mxu0 %v2800
        %3403 = vmatpush1.bf16.msra.mxu0 %v2799
        %3404 = vmatprep.subr.bf16.mxu0 %v2802
        %3405 = vmatpush1.bf16.msra.mxu0 %v2801
        %3406 = vmatprep.subr.bf16.mxu0 %v2804
        %3407 = vmatpush1.bf16.msra.mxu0 %v2803
        %3408 = vmatprep.subr.bf16.mxu0 %v2806
        %3409 = vmatpush1.bf16.msra.mxu0 %v2805
        %3410 = vmatprep.subr.bf16.mxu0 %v2808
        %3411 = vmatpush1.bf16.msra.mxu0 %v2807
        %3412 = vmatprep.subr.bf16.mxu0 %v2810
        %3413 = vmatpush1.bf16.msra.mxu0 %v2809
        %3414 = vmatprep.subr.bf16.mxu0 %v2812
        %3415 = vmatpush1.bf16.msra.mxu0 %v2811
        %3416 = vmatprep.subr.bf16.mxu0 %v2814
        %3417 = vmatpush1.bf16.msra.mxu0 %v2813
        %3418 = vmatprep.subr.bf16.mxu0 %v2816
        %3419 = vmatpush1.bf16.msra.mxu0 %v2815
        %3420 = vmatprep.subr.bf16.mxu0 %v2818
        %3421 = vmatpush1.bf16.msra.mxu0 %v2817
        %3422 = vmatprep.subr.bf16.mxu0 %v2820
        %3423 = vmatpush1.bf16.msra.mxu0 %v2819
        %3424 = vmatprep.subr.bf16.mxu0 %v2822
        %3425 = vmatpush1.bf16.msra.mxu0 %v2821
        %3426 = vmatprep.subr.bf16.mxu0 %v2824
        %3427 = vmatpush1.bf16.msra.mxu0 %v2823
        %3428 = vmatprep.subr.bf16.mxu0 %v2826
        %3429 = vmatpush1.bf16.msra.mxu0 %v2825
        %3430 = vmatprep.mubr.bf16.mxu0 %v1806
        %3431 = vmatmul.mubr.bf16.gmra.mrb[0].mxu0 %v1805
        %v3432 = vpop.f32.mrb[0].mxu0
        %v3433 = vadd.f32 %v3392, %v3432
        %v3434 = vpop.f32.mrb[0].mxu0
        %v3435 = vadd.f32 %v3394, %v3434
        %v3436 = vpop.f32.mrb[0].mxu0
        %v3437 = vpop.f32.mrb[0].mxu0
        %3438 = vdwg.mxu0
        %3439 = vmatprep.subr.bf16.mxu0 %v2828
        %3440 = vmatpush1.bf16.msra.mxu0 %v2827
        %3441 = vmatprep.subr.bf16.mxu0 %v2830
        %3442 = vmatpush1.bf16.msra.mxu0 %v2829
        %3443 = vmatprep.subr.bf16.mxu0 %v2832
        %3444 = vmatpush1.bf16.msra.mxu0 %v2831
        %3445 = vmatprep.subr.bf16.mxu0 %v2834
        %3446 = vmatpush1.bf16.msra.mxu0 %v2833
        %3447 = vmatprep.subr.bf16.mxu0 %v2836
        %3448 = vmatpush1.bf16.msra.mxu0 %v2835
        %3449 = vmatprep.subr.bf16.mxu0 %v2838
        %3450 = vmatpush1.bf16.msra.mxu0 %v2837
        %3451 = vmatprep.subr.bf16.mxu0 %v2840
        %3452 = vmatpush1.bf16.msra.mxu0 %v2839
        %3453 = vmatprep.subr.bf16.mxu0 %v2842
        %3454 = vmatpush1.bf16.msra.mxu0 %v2841
        %3455 = vmatprep.subr.bf16.mxu0 %v2844
        %3456 = vmatpush1.bf16.msra.mxu0 %v2843
        %3457 = vmatprep.subr.bf16.mxu0 %v2846
        %3458 = vmatpush1.bf16.msra.mxu0 %v2845
        %3459 = vmatprep.subr.bf16.mxu0 %v2848
        %3460 = vmatpush1.bf16.msra.mxu0 %v2847
        %3461 = vmatprep.subr.bf16.mxu0 %v2850
        %3462 = vmatpush1.bf16.msra.mxu0 %v2849
        %3463 = vmatprep.subr.bf16.mxu0 %v2852
        %3464 = vmatpush1.bf16.msra.mxu0 %v2851
        %3465 = vmatprep.subr.bf16.mxu0 %v2854
        %3466 = vmatpush1.bf16.msra.mxu0 %v2853
        %3467 = vmatprep.subr.bf16.mxu0 %v2856
        %3468 = vmatpush1.bf16.msra.mxu0 %v2855
        %3469 = vmatprep.subr.bf16.mxu0 %v2858
        %3470 = vmatpush1.bf16.msra.mxu0 %v2857
        %3471 = vmatprep.mubr.bf16.mxu0 %v1808
        %3472 = vmatmul.mubr.bf16.gmra.mrb[0].mxu0 %v1807
        %v3473 = vpop.f32.mrb[0].mxu0
        %v3474 = vadd.f32 %v3433, %v3473
        %v3475 = vpop.f32.mrb[0].mxu0
        %v3476 = vadd.f32 %v3435, %v3475
        %v3477 = vpop.f32.mrb[0].mxu0
        %v3478 = vpop.f32.mrb[0].mxu0
        %3479 = vdwg.mxu0
        %3480 = vmatprep.subr.bf16.mxu0 %v2860
        %3481 = vmatpush1.bf16.msra.mxu0 %v2859
        %3482 = vmatprep.subr.bf16.mxu0 %v2862
        %3483 = vmatpush1.bf16.msra.mxu0 %v2861
        %3484 = vmatprep.subr.bf16.mxu0 %v2864
        %3485 = vmatpush1.bf16.msra.mxu0 %v2863
        %3486 = vmatprep.subr.bf16.mxu0 %v2866
        %3487 = vmatpush1.bf16.msra.mxu0 %v2865
        %3488 = vmatprep.subr.bf16.mxu0 %v2868
        %3489 = vmatpush1.bf16.msra.mxu0 %v2867
        %3490 = vmatprep.subr.bf16.mxu0 %v2870
        %3491 = vmatpush1.bf16.msra.mxu0 %v2869
        %3492 = vmatprep.subr.bf16.mxu0 %v2872
        %3493 = vmatpush1.bf16.msra.mxu0 %v2871
        %3494 = vmatprep.subr.bf16.mxu0 %v2874
        %3495 = vmatpush1.bf16.msra.mxu0 %v2873
        %3496 = vmatprep.subr.bf16.mxu0 %v2876
        %3497 = vmatpush1.bf16.msra.mxu0 %v2875
        %3498 = vmatprep.subr.bf16.mxu0 %v2878
        %3499 = vmatpush1.bf16.msra.mxu0 %v2877
        %3500 = vmatprep.subr.bf16.mxu0 %v2880
        %3501 = vmatpush1.bf16.msra.mxu0 %v2879
        %3502 = vmatprep.subr.bf16.mxu0 %v2882
        %3503 = vmatpush1.bf16.msra.mxu0 %v2881
        %3504 = vmatprep.subr.bf16.mxu0 %v2884
        %3505 = vmatpush1.bf16.msra.mxu0 %v2883
        %3506 = vmatprep.subr.bf16.mxu0 %v2886
        %3507 = vmatpush1.bf16.msra.mxu0 %v2885
        %3508 = vmatprep.subr.bf16.mxu0 %v2888
        %3509 = vmatpush1.bf16.msra.mxu0 %v2887
        %3510 = vmatprep.subr.bf16.mxu0 %v2890
        %3511 = vmatpush1.bf16.msra.mxu0 %v2889
        %3512 = vmatprep.mubr.bf16.mxu0 %v1810
        %3513 = vmatmul.mubr.bf16.gmra.mrb[0].mxu0 %v1809
        %v3514 = vpop.f32.mrb[0].mxu0
        %v3515 = vadd.f32 %v3474, %v3514
        %v3516 = vpop.f32.mrb[0].mxu0
        %v3517 = vadd.f32 %v3476, %v3516
        %v3518 = vpop.f32.mrb[0].mxu0
        %v3519 = vpop.f32.mrb[0].mxu0
        %3520 = vdwg.mxu0
        %3521 = vmatprep.subr.bf16.mxu0 %v2892
        %3522 = vmatpush1.bf16.msra.mxu0 %v2891
        %3523 = vmatprep.subr.bf16.mxu0 %v2894
        %3524 = vmatpush1.bf16.msra.mxu0 %v2893
        %3525 = vmatprep.subr.bf16.mxu0 %v2896
        %3526 = vmatpush1.bf16.msra.mxu0 %v2895
        %3527 = vmatprep.subr.bf16.mxu0 %v2898
        %3528 = vmatpush1.bf16.msra.mxu0 %v2897
        %3529 = vmatprep.subr.bf16.mxu0 %v2900
        %3530 = vmatpush1.bf16.msra.mxu0 %v2899
        %3531 = vmatprep.subr.bf16.mxu0 %v2902
        %3532 = vmatpush1.bf16.msra.mxu0 %v2901
        %3533 = vmatprep.subr.bf16.mxu0 %v2904
        %3534 = vmatpush1.bf16.msra.mxu0 %v2903
        %3535 = vmatprep.subr.bf16.mxu0 %v2906
        %3536 = vmatpush1.bf16.msra.mxu0 %v2905
        %3537 = vmatprep.subr.bf16.mxu0 %v2908
        %3538 = vmatpush1.bf16.msra.mxu0 %v2907
        %3539 = vmatprep.subr.bf16.mxu0 %v2910
        %3540 = vmatpush1.bf16.msra.mxu0 %v2909
        %3541 = vmatprep.subr.bf16.mxu0 %v2912
        %3542 = vmatpush1.bf16.msra.mxu0 %v2911
        %3543 = vmatprep.subr.bf16.mxu0 %v2914
        %3544 = vmatpush1.bf16.msra.mxu0 %v2913
        %3545 = vmatprep.subr.bf16.mxu0 %v2916
        %3546 = vmatpush1.bf16.msra.mxu0 %v2915
        %3547 = vmatprep.subr.bf16.mxu0 %v2918
        %3548 = vmatpush1.bf16.msra.mxu0 %v2917
        %3549 = vmatprep.subr.bf16.mxu0 %v2920
        %3550 = vmatpush1.bf16.msra.mxu0 %v2919
        %3551 = vmatprep.subr.bf16.mxu0 %v2922
        %3552 = vmatpush1.bf16.msra.mxu0 %v2921
        %3553 = vmatprep.mubr.bf16.mxu0 %v1812
        %3554 = vmatmul.mubr.bf16.gmra.mrb[0].mxu0 %v1811
        %v3555 = vpop.f32.mrb[0].mxu0
        %v3556 = vadd.f32 %v3515, %v3555
        %v3557 = vpop.f32.mrb[0].mxu0
        %v3558 = vadd.f32 %v3517, %v3557
        %v3559 = vpop.f32.mrb[0].mxu0
        %v3560 = vpop.f32.mrb[0].mxu0
        %3561 = vdwg.mxu0
        %3562 = vmatprep.subr.bf16.mxu0 %v2924
        %3563 = vmatpush1.bf16.msra.mxu0 %v2923
        %3564 = vmatprep.subr.bf16.mxu0 %v2926
        %3565 = vmatpush1.bf16.msra.mxu0 %v2925
        %3566 = vmatprep.subr.bf16.mxu0 %v2928
        %3567 = vmatpush1.bf16.msra.mxu0 %v2927
        %3568 = vmatprep.subr.bf16.mxu0 %v2930
        %3569 = vmatpush1.bf16.msra.mxu0 %v2929
        %3570 = vmatprep.subr.bf16.mxu0 %v2932
        %3571 = vmatpush1.bf16.msra.mxu0 %v2931
        %3572 = vmatprep.subr.bf16.mxu0 %v2934
        %3573 = vmatpush1.bf16.msra.mxu0 %v2933
        %3574 = vmatprep.subr.bf16.mxu0 %v2936
        %3575 = vmatpush1.bf16.msra.mxu0 %v2935
        %3576 = vmatprep.subr.bf16.mxu0 %v2938
        %3577 = vmatpush1.bf16.msra.mxu0 %v2937
        %3578 = vmatprep.subr.bf16.mxu0 %v2940
        %3579 = vmatpush1.bf16.msra.mxu0 %v2939
        %3580 = vmatprep.subr.bf16.mxu0 %v2942
        %3581 = vmatpush1.bf16.msra.mxu0 %v2941
        %3582 = vmatprep.subr.bf16.mxu0 %v2944
        %3583 = vmatpush1.bf16.msra.mxu0 %v2943
        %3584 = vmatprep.subr.bf16.mxu0 %v2946
        %3585 = vmatpush1.bf16.msra.mxu0 %v2945
        %3586 = vmatprep.subr.bf16.mxu0 %v2948
        %3587 = vmatpush1.bf16.msra.mxu0 %v2947
        %3588 = vmatprep.subr.bf16.mxu0 %v2950
        %3589 = vmatpush1.bf16.msra.mxu0 %v2949
        %3590 = vmatprep.subr.bf16.mxu0 %v2952
        %3591 = vmatpush1.bf16.msra.mxu0 %v2951
        %3592 = vmatprep.subr.bf16.mxu0 %v2954
        %3593 = vmatpush1.bf16.msra.mxu0 %v2953
        %3594 = vmatprep.mubr.bf16.mxu0 %v1814
        %3595 = vmatmul.mubr.bf16.gmra.mrb[0].mxu0 %v1813
        %v3596 = vpop.f32.mrb[0].mxu0
        %v3597 = vadd.f32 %v3556, %v3596
        %v3598 = vpop.f32.mrb[0].mxu0
        %v3599 = vadd.f32 %v3558, %v3598
        %v3600 = vpop.f32.mrb[0].mxu0
        %v3601 = vpop.f32.mrb[0].mxu0
        %3602 = vdwg.mxu0
        %3603 = vmatprep.subr.bf16.mxu0 %v2956
        %3604 = vmatpush1.bf16.msra.mxu0 %v2955
        %3605 = vmatprep.subr.bf16.mxu0 %v2958
        %3606 = vmatpush1.bf16.msra.mxu0 %v2957
        %3607 = vmatprep.subr.bf16.mxu0 %v2960
        %3608 = vmatpush1.bf16.msra.mxu0 %v2959
        %3609 = vmatprep.subr.bf16.mxu0 %v2962
        %3610 = vmatpush1.bf16.msra.mxu0 %v2961
        %3611 = vmatprep.subr.bf16.mxu0 %v2964
        %3612 = vmatpush1.bf16.msra.mxu0 %v2963
        %3613 = vmatprep.subr.bf16.mxu0 %v2966
        %3614 = vmatpush1.bf16.msra.mxu0 %v2965
        %3615 = vmatprep.subr.bf16.mxu0 %v2968
        %3616 = vmatpush1.bf16.msra.mxu0 %v2967
        %3617 = vmatprep.subr.bf16.mxu0 %v2970
        %3618 = vmatpush1.bf16.msra.mxu0 %v2969
        %3619 = vmatprep.subr.bf16.mxu0 %v2972
        %3620 = vmatpush1.bf16.msra.mxu0 %v2971
        %3621 = vmatprep.subr.bf16.mxu0 %v2974
        %3622 = vmatpush1.bf16.msra.mxu0 %v2973
        %3623 = vmatprep.subr.bf16.mxu0 %v2976
        %3624 = vmatpush1.bf16.msra.mxu0 %v2975
        %3625 = vmatprep.subr.bf16.mxu0 %v2978
        %3626 = vmatpush1.bf16.msra.mxu0 %v2977
        %3627 = vmatprep.subr.bf16.mxu0 %v2980
        %3628 = vmatpush1.bf16.msra.mxu0 %v2979
        %3629 = vmatprep.subr.bf16.mxu0 %v2982
        %3630 = vmatpush1.bf16.msra.mxu0 %v2981
        %3631 = vmatprep.subr.bf16.mxu0 %v2984
        %3632 = vmatpush1.bf16.msra.mxu0 %v2983
        %3633 = vmatprep.subr.bf16.mxu0 %v2986
        %3634 = vmatpush1.bf16.msra.mxu0 %v2985
        %3635 = vmatprep.mubr.bf16.mxu0 %v1816
        %3636 = vmatmul.mubr.bf16.gmra.mrb[0].mxu0 %v1815
        %v3637 = vpop.f32.mrb[0].mxu0
        %v3638 = vadd.f32 %v3597, %v3637
        %v3639 = vpop.f32.mrb[0].mxu0
        %v3640 = vadd.f32 %v3599, %v3639
        %v3641 = vpop.f32.mrb[0].mxu0
        %v3642 = vpop.f32.mrb[0].mxu0
        %3643 = vdwg.mxu0
        %v3644 = vld [vmem:[%s1451] sm:$0x3]
        %vm3645 = vcmp.ge.f32.partialorder %v3638, 0.0
        %vm3646 = vcmp.ge.f32.partialorder %v3640, 0.0
        %v3648 = vlaneseq
        %v3649 = vshrl.u32 %v3648, 7
        %v3650 = vsub.s32 0, %v3649
        %v3651 = vrot.slane %v3644, %v3650
        %v3652 = vlaneseq
        %v3653 = vshrl.u32 %v3652, 7
        %v3654 = vsub.s32 1, %v3653
        %v3655 = vrot.slane %v3644, %v3654
        %v3658 = vmul.f32 %v3651, %v3638
        %v3659 = vmul.f32 %v3655, %v3640
        %v3660 = vsel %vm3645, %v3638, %v3658
        %v3661 = vsel %vm3646, %v3640, %v3659
        %v3662 = vpack.c.bf16 %v3660, %v3660
        %v3663 = vpack.c.bf16 %v3661, %v3661
        %v3666 = vunpack.c.l.b16 %v3662
        %v3667 = vunpack.c.l.b16 %v3663
        %v3668 = vpack.c.b16 %v3667, %v3666
        %3670 = vst [vmem:[%s1461] sm:$0xff] %v3668
        %s3671 = smul.u32 2, %s20
        %p3672 = scmp.lt.s32.totalorder %s19, 0
        %s3673 = scalar_select %p3672, %s19, 0
        %p3674 = scmp.lt.s32.totalorder %s3671, 3
        %s3675 = scalar_select %p3674, %s3671, 3
        %s3676 = smul.addr %s3673, 4
        %s3677 = sadd.s32 %s3675, %s3676
        %s3678 = smul.addr %s3677, 4
        %s3679 = scalar_lea.vmem %s4, %s3678
        // Predicated region
        $region75: #{sphereface_forward.8} parent=69 // pred_check
          %p3680 = pneg %p151
        $region76: #{sphereface_forward.8} parent=69 // pred_check_branch
          %3682 = sbr.rel (%p3680) target = $region78
        $region77: #{sphereface_forward.8} parent=69 // pred_region
          %s3683 = smul.u32 2, %s20
        $region78: #{sphereface_forward.8} parent=69 // pred_fallthru
          _
      $region70: #{sphereface_forward.8} parent=5 // pred_fallthru
        _
      %p3684 = scmp.le.s32.totalorder 2, %s10
      // Predicated region
      $region79: #{sphereface_forward.8} parent=5 // pred_check
        %p3685 = pneg %p3684
      $region80: #{sphereface_forward.8} parent=5 // pred_check_branch
        %3687 = sbr.rel (%p3685) target = $region82
      $region81: #{sphereface_forward.8} parent=5 // pred_region
        %s3688 = ssub.s32 %s10, 2
        // Predicated region
        $region83: #{sphereface_forward.8} parent=81 // pred_check
          %p3689 = pneg %p157
        $region84: #{sphereface_forward.8} parent=81 // pred_check_branch
          %3691 = sbr.rel (%p3689) target = $region86
        $region85: #{sphereface_forward.8} parent=81 // pred_region
          %s3692 = smul.u32 2, %s22
          %p3693 = scmp.lt.s32.totalorder %s21, 0
          %s3694 = scalar_select %p3693, %s21, 0
          %p3695 = scmp.lt.s32.totalorder %s3692, 3
          %s3696 = scalar_select %p3695, %s3692, 3
          %s3697 = smul.addr %s3694, 4
          %s3698 = sadd.s32 %s3696, %s3697
          %s3699 = smul.addr %s3698, 4
          %s3700 = scalar_lea.vmem %s4, %s3699
        $region86: #{sphereface_forward.8} parent=81 // pred_fallthru
          _
      $region82: #{sphereface_forward.8} parent=5 // pred_fallthru
        _
    $region6: #{sphereface_forward.8} parent=1 // loop_footer
      %s14 = sadd.s32 1, %s10
    $region7: #{sphereface_forward.8} parent=1 // loop_footer_branch
      %9 = sbr.rel target = $region3
    $region8: #{sphereface_forward.8} parent=1 // loop_exit
      _

// kernel: sphereface_forward.9
$region0: #{sphereface_forward.9}
  #allocation0 [shape = 'u32[]', space=smem, size = 0x4, offset = 0x4, fixed_abs, tag = 'smem constant byte address 0x4 - core index']
  #allocation1 [shape = 'u32[144,128]{1,0:T(1,128)}', space=vmem, size = 0x12000, scoped, tag = 'internal scratch']
  %s0 = inlined_call_operand.vmem [shape: bf16[2,2048], index: 0, kind: input, shape index: {}]
  %s1 = inlined_call_operand.vmem [shape: bf16[2048,512], index: 1, kind: input, shape index: {}]
  %s2 = inlined_call_operand.vmem [shape: f32[1,512], index: 2, kind: input, shape index: {}]
  %s3 = inlined_call_operand.vmem [shape: bf16[512,128], index: 3, kind: input, shape index: {}]
  %s4 = inlined_call_operand.hbm [shape: f32[2,512], index: 4, kind: output, shape index: {0}]
  %s5 = inlined_call_operand.hbm [shape: f32[2,128], index: 5, kind: output, shape index: {1}]
  %6 = xla_tuple %s4, %s5
  %s7 = sld [smem:[#allocation0]]
  $region34: #{sphereface_forward.9} parent=0
    _
  %s9 = ssub.s32 1, %s7
  %s10 = scalar_select 0, %s9, %s7
  $region1: #{sphereface_forward.9} parent=0
    #allocation2 [shape = 'u8[4096]{0}', space=vmem, size = 0x1000, scoped, tag = 'output window, operand 0, single buffered']
    #allocation3 [shape = 's32[1]{0}', space=sflag, size = 0x4, scoped, tag = 'scoped memory for sphereface_forward.9']
    #allocation4 [shape = 'u8[1024]{0}', space=vmem, size = 0x400, scoped, tag = 'output window, operand 1, single buffered']
    #allocation5 [shape = 's32[1]{0}', space=sflag, size = 0x4, scoped, tag = 'scoped memory for sphereface_forward.9']
    %11 = vsyncpa [#allocation3], 0
    %12 = vsyncpa [#allocation5], 0
    // Predicated region
    $region2: #{sphereface_forward.9} parent=1 // pred_check
      _
    $region3: #{sphereface_forward.9} parent=1 // pred_check_branch
      %14 = sbr.rel (0) target = $region5
    $region4: #{sphereface_forward.9} parent=1 // pred_region
      _
    $region5: #{sphereface_forward.9} parent=1 // pred_fallthru
      _
    // Predicated region
    $region6: #{sphereface_forward.9} parent=1 // pred_check
      _
    $region7: #{sphereface_forward.9} parent=1 // pred_check_branch
      %16 = sbr.rel (0) target = $region9
    $region8: #{sphereface_forward.9} parent=1 // pred_region
      _
    $region9: #{sphereface_forward.9} parent=1 // pred_fallthru
      _
    // Predicated region
    $region10: #{sphereface_forward.9} parent=1 // pred_check
      _
    $region11: #{sphereface_forward.9} parent=1 // pred_check_branch
      %18 = sbr.rel (0) target = $region13
    $region12: #{sphereface_forward.9} parent=1 // pred_region
      _
    $region13: #{sphereface_forward.9} parent=1 // pred_fallthru
      _
    // Predicated region
    $region14: #{sphereface_forward.9} parent=1 // pred_check
      _
    $region15: #{sphereface_forward.9} parent=1 // pred_check_branch
      %20 = sbr.rel (0) target = $region17
    $region16: #{sphereface_forward.9} parent=1 // pred_region
      _
    $region17: #{sphereface_forward.9} parent=1 // pred_fallthru
      _
    %v22 = vld [vmem:[%s0] sm:$0xff]
    %v23 = vld [vmem:[%s0 + $0x8] sm:$0xff]
    %v24 = vld [vmem:[%s1] sm:$0xff]
    %v25 = vld [vmem:[%s1 + $0x8] sm:$0xff]
    %v26 = vld [vmem:[%s1 + $0x10] sm:$0xff]
    %v27 = vld [vmem:[%s1 + $0x18] sm:$0xff]
    %v28 = vld [vmem:[%s1 + $0x20] sm:$0xff]
    %v29 = vld [vmem:[%s1 + $0x28] sm:$0xff]
    %v30 = vld [vmem:[%s1 + $0x30] sm:$0xff]
    %v31 = vld [vmem:[%s1 + $0x38] sm:$0xff]
    %v32 = vld [vmem:[%s1 + $0x40] sm:$0xff]
    %v33 = vld [vmem:[%s1 + $0x48] sm:$0xff]
    %v34 = vld [vmem:[%s1 + $0x50] sm:$0xff]
    %v35 = vld [vmem:[%s1 + $0x58] sm:$0xff]
    %v36 = vld [vmem:[%s1 + $0x60] sm:$0xff]
    %v37 = vld [vmem:[%s1 + $0x68] sm:$0xff]
    %v38 = vld [vmem:[%s1 + $0x70] sm:$0xff]
    %v39 = vld [vmem:[%s1 + $0x78] sm:$0xff]
    %v40 = vld [vmem:[%s1 + $0x80] sm:$0xff]
    %v41 = vld [vmem:[%s1 + $0x88] sm:$0xff]
    %v42 = vld [vmem:[%s1 + $0x90] sm:$0xff]
    %v43 = vld [vmem:[%s1 + $0x98] sm:$0xff]
    %v44 = vld [vmem:[%s1 + $0xa0] sm:$0xff]
    %v45 = vld [vmem:[%s1 + $0xa8] sm:$0xff]
    %v46 = vld [vmem:[%s1 + $0xb0] sm:$0xff]
    %v47 = vld [vmem:[%s1 + $0xb8] sm:$0xff]
    %v48 = vld [vmem:[%s1 + $0xc0] sm:$0xff]
    %v49 = vld [vmem:[%s1 + $0xc8] sm:$0xff]
    %v50 = vld [vmem:[%s1 + $0xd0] sm:$0xff]
    %v51 = vld [vmem:[%s1 + $0xd8] sm:$0xff]
    %v52 = vld [vmem:[%s1 + $0xe0] sm:$0xff]
    %v53 = vld [vmem:[%s1 + $0xe8] sm:$0xff]
    %v54 = vld [vmem:[%s1 + $0xf0] sm:$0xff]
    %v55 = vld [vmem:[%s1 + $0xf8] sm:$0xff]
    %v56 = vld [vmem:[%s1 + $0x100] sm:$0xff]
    %v57 = vld [vmem:[%s1 + $0x108] sm:$0xff]
    %v58 = vld [vmem:[%s1 + $0x110] sm:$0xff]
    %v59 = vld [vmem:[%s1 + $0x118] sm:$0xff]
    %v60 = vld [vmem:[%s1 + $0x120] sm:$0xff]
    %v61 = vld [vmem:[%s1 + $0x128] sm:$0xff]
    %v62 = vld [vmem:[%s1 + $0x130] sm:$0xff]
    %v63 = vld [vmem:[%s1 + $0x138] sm:$0xff]
    %v64 = vld [vmem:[%s1 + $0x140] sm:$0xff]
    %v65 = vld [vmem:[%s1 + $0x148] sm:$0xff]
    %v66 = vld [vmem:[%s1 + $0x150] sm:$0xff]
    %v67 = vld [vmem:[%s1 + $0x158] sm:$0xff]
    %v68 = vld [vmem:[%s1 + $0x160] sm:$0xff]
    %v69 = vld [vmem:[%s1 + $0x168] sm:$0xff]
    %v70 = vld [vmem:[%s1 + $0x170] sm:$0xff]
    %v71 = vld [vmem:[%s1 + $0x178] sm:$0xff]
    %v72 = vld [vmem:[%s1 + $0x180] sm:$0xff]
    %v73 = vld [vmem:[%s1 + $0x188] sm:$0xff]
    %v74 = vld [vmem:[%s1 + $0x190] sm:$0xff]
    %v75 = vld [vmem:[%s1 + $0x198] sm:$0xff]
    %v76 = vld [vmem:[%s1 + $0x1a0] sm:$0xff]
    %v77 = vld [vmem:[%s1 + $0x1a8] sm:$0xff]
    %v78 = vld [vmem:[%s1 + $0x1b0] sm:$0xff]
    %v79 = vld [vmem:[%s1 + $0x1b8] sm:$0xff]
    %v80 = vld [vmem:[%s1 + $0x1c0] sm:$0xff]
    %v81 = vld [vmem:[%s1 + $0x1c8] sm:$0xff]
    %v82 = vld [vmem:[%s1 + $0x1d0] sm:$0xff]
    %v83 = vld [vmem:[%s1 + $0x1d8] sm:$0xff]
    %v84 = vld [vmem:[%s1 + $0x1e0] sm:$0xff]
    %v85 = vld [vmem:[%s1 + $0x1e8] sm:$0xff]
    %v86 = vld [vmem:[%s1 + $0x1f0] sm:$0xff]
    %v87 = vld [vmem:[%s1 + $0x1f8] sm:$0xff]
    %v88 = vld [vmem:[%s1 + $0x200] sm:$0xff]
    %v89 = vld [vmem:[%s1 + $0x208] sm:$0xff]
    %v90 = vld [vmem:[%s1 + $0x210] sm:$0xff]
    %v91 = vld [vmem:[%s1 + $0x218] sm:$0xff]
    %v92 = vld [vmem:[%s1 + $0x220] sm:$0xff]
    %v93 = vld [vmem:[%s1 + $0x228] sm:$0xff]
    %v94 = vld [vmem:[%s1 + $0x230] sm:$0xff]
    %v95 = vld [vmem:[%s1 + $0x238] sm:$0xff]
    %v96 = vld [vmem:[%s1 + $0x240] sm:$0xff]
    %v97 = vld [vmem:[%s1 + $0x248] sm:$0xff]
    %v98 = vld [vmem:[%s1 + $0x250] sm:$0xff]
    %v99 = vld [vmem:[%s1 + $0x258] sm:$0xff]
    %v100 = vld [vmem:[%s1 + $0x260] sm:$0xff]
    %v101 = vld [vmem:[%s1 + $0x268] sm:$0xff]
    %v102 = vld [vmem:[%s1 + $0x270] sm:$0xff]
    %v103 = vld [vmem:[%s1 + $0x278] sm:$0xff]
    %v104 = vld [vmem:[%s1 + $0x280] sm:$0xff]
    %v105 = vld [vmem:[%s1 + $0x288] sm:$0xff]
    %v106 = vld [vmem:[%s1 + $0x290] sm:$0xff]
    %v107 = vld [vmem:[%s1 + $0x298] sm:$0xff]
    %v108 = vld [vmem:[%s1 + $0x2a0] sm:$0xff]
    %v109 = vld [vmem:[%s1 + $0x2a8] sm:$0xff]
    %v110 = vld [vmem:[%s1 + $0x2b0] sm:$0xff]
    %v111 = vld [vmem:[%s1 + $0x2b8] sm:$0xff]
    %v112 = vld [vmem:[%s1 + $0x2c0] sm:$0xff]
    %v113 = vld [vmem:[%s1 + $0x2c8] sm:$0xff]
    %v114 = vld [vmem:[%s1 + $0x2d0] sm:$0xff]
    %v115 = vld [vmem:[%s1 + $0x2d8] sm:$0xff]
    %v116 = vld [vmem:[%s1 + $0x2e0] sm:$0xff]
    %v117 = vld [vmem:[%s1 + $0x2e8] sm:$0xff]
    %v118 = vld [vmem:[%s1 + $0x2f0] sm:$0xff]
    %v119 = vld [vmem:[%s1 + $0x2f8] sm:$0xff]
    %v120 = vld [vmem:[%s1 + $0x300] sm:$0xff]
    %v121 = vld [vmem:[%s1 + $0x308] sm:$0xff]
    %v122 = vld [vmem:[%s1 + $0x310] sm:$0xff]
    %v123 = vld [vmem:[%s1 + $0x318] sm:$0xff]
    %v124 = vld [vmem:[%s1 + $0x320] sm:$0xff]
    %v125 = vld [vmem:[%s1 + $0x328] sm:$0xff]
    %v126 = vld [vmem:[%s1 + $0x330] sm:$0xff]
    %v127 = vld [vmem:[%s1 + $0x338] sm:$0xff]
    %v128 = vld [vmem:[%s1 + $0x340] sm:$0xff]
    %v129 = vld [vmem:[%s1 + $0x348] sm:$0xff]
    %v130 = vld [vmem:[%s1 + $0x350] sm:$0xff]
    %v131 = vld [vmem:[%s1 + $0x358] sm:$0xff]
    %v132 = vld [vmem:[%s1 + $0x360] sm:$0xff]
    %v133 = vld [vmem:[%s1 + $0x368] sm:$0xff]
    %v134 = vld [vmem:[%s1 + $0x370] sm:$0xff]
    %v135 = vld [vmem:[%s1 + $0x378] sm:$0xff]
    %v136 = vld [vmem:[%s1 + $0x380] sm:$0xff]
    %v137 = vld [vmem:[%s1 + $0x388] sm:$0xff]
    %v138 = vld [vmem:[%s1 + $0x390] sm:$0xff]
    %v139 = vld [vmem:[%s1 + $0x398] sm:$0xff]
    %v140 = vld [vmem:[%s1 + $0x3a0] sm:$0xff]
    %v141 = vld [vmem:[%s1 + $0x3a8] sm:$0xff]
    %v142 = vld [vmem:[%s1 + $0x3b0] sm:$0xff]
    %v143 = vld [vmem:[%s1 + $0x3b8] sm:$0xff]
    %v144 = vld [vmem:[%s1 + $0x3c0] sm:$0xff]
    %v145 = vld [vmem:[%s1 + $0x3c8] sm:$0xff]
    %v146 = vld [vmem:[%s1 + $0x3d0] sm:$0xff]
    %v147 = vld [vmem:[%s1 + $0x3d8] sm:$0xff]
    %v148 = vld [vmem:[%s1 + $0x3e0] sm:$0xff]
    %v149 = vld [vmem:[%s1 + $0x3e8] sm:$0xff]
    %v150 = vld [vmem:[%s1 + $0x3f0] sm:$0xff]
    %v151 = vld [vmem:[%s1 + $0x3f8] sm:$0xff]
    %v152 = vld [vmem:[%s1 + $0x400] sm:$0xff]
    %v153 = vld [vmem:[%s1 + $0x408] sm:$0xff]
    %v154 = vld [vmem:[%s1 + $0x410] sm:$0xff]
    %v155 = vld [vmem:[%s1 + $0x418] sm:$0xff]
    %v156 = vld [vmem:[%s1 + $0x420] sm:$0xff]
    %v157 = vld [vmem:[%s1 + $0x428] sm:$0xff]
    %v158 = vld [vmem:[%s1 + $0x430] sm:$0xff]
    %v159 = vld [vmem:[%s1 + $0x438] sm:$0xff]
    %v160 = vld [vmem:[%s1 + $0x440] sm:$0xff]
    %v161 = vld [vmem:[%s1 + $0x448] sm:$0xff]
    %v162 = vld [vmem:[%s1 + $0x450] sm:$0xff]
    %v163 = vld [vmem:[%s1 + $0x458] sm:$0xff]
    %v164 = vld [vmem:[%s1 + $0x460] sm:$0xff]
    %v165 = vld [vmem:[%s1 + $0x468] sm:$0xff]
    %v166 = vld [vmem:[%s1 + $0x470] sm:$0xff]
    %v167 = vld [vmem:[%s1 + $0x478] sm:$0xff]
    %v168 = vld [vmem:[%s1 + $0x480] sm:$0xff]
    %v169 = vld [vmem:[%s1 + $0x488] sm:$0xff]
    %v170 = vld [vmem:[%s1 + $0x490] sm:$0xff]
    %v171 = vld [vmem:[%s1 + $0x498] sm:$0xff]
    %v172 = vld [vmem:[%s1 + $0x4a0] sm:$0xff]
    %v173 = vld [vmem:[%s1 + $0x4a8] sm:$0xff]
    %v174 = vld [vmem:[%s1 + $0x4b0] sm:$0xff]
    %v175 = vld [vmem:[%s1 + $0x4b8] sm:$0xff]
    %v176 = vld [vmem:[%s1 + $0x4c0] sm:$0xff]
    %v177 = vld [vmem:[%s1 + $0x4c8] sm:$0xff]
    %v178 = vld [vmem:[%s1 + $0x4d0] sm:$0xff]
    %v179 = vld [vmem:[%s1 + $0x4d8] sm:$0xff]
    %v180 = vld [vmem:[%s1 + $0x4e0] sm:$0xff]
    %v181 = vld [vmem:[%s1 + $0x4e8] sm:$0xff]
    %v182 = vld [vmem:[%s1 + $0x4f0] sm:$0xff]
    %v183 = vld [vmem:[%s1 + $0x4f8] sm:$0xff]
    %v184 = vld [vmem:[%s1 + $0x500] sm:$0xff]
    %v185 = vld [vmem:[%s1 + $0x508] sm:$0xff]
    %v186 = vld [vmem:[%s1 + $0x510] sm:$0xff]
    %v187 = vld [vmem:[%s1 + $0x518] sm:$0xff]
    %v188 = vld [vmem:[%s1 + $0x520] sm:$0xff]
    %v189 = vld [vmem:[%s1 + $0x528] sm:$0xff]
    %v190 = vld [vmem:[%s1 + $0x530] sm:$0xff]
    %v191 = vld [vmem:[%s1 + $0x538] sm:$0xff]
    %v192 = vld [vmem:[%s1 + $0x540] sm:$0xff]
    %v193 = vld [vmem:[%s1 + $0x548] sm:$0xff]
    %v194 = vld [vmem:[%s1 + $0x550] sm:$0xff]
    %v195 = vld [vmem:[%s1 + $0x558] sm:$0xff]
    %v196 = vld [vmem:[%s1 + $0x560] sm:$0xff]
    %v197 = vld [vmem:[%s1 + $0x568] sm:$0xff]
    %v198 = vld [vmem:[%s1 + $0x570] sm:$0xff]
    %v199 = vld [vmem:[%s1 + $0x578] sm:$0xff]
    %v200 = vld [vmem:[%s1 + $0x580] sm:$0xff]
    %v201 = vld [vmem:[%s1 + $0x588] sm:$0xff]
    %v202 = vld [vmem:[%s1 + $0x590] sm:$0xff]
    %v203 = vld [vmem:[%s1 + $0x598] sm:$0xff]
    %v204 = vld [vmem:[%s1 + $0x5a0] sm:$0xff]
    %v205 = vld [vmem:[%s1 + $0x5a8] sm:$0xff]
    %v206 = vld [vmem:[%s1 + $0x5b0] sm:$0xff]
    %v207 = vld [vmem:[%s1 + $0x5b8] sm:$0xff]
    %v208 = vld [vmem:[%s1 + $0x5c0] sm:$0xff]
    %v209 = vld [vmem:[%s1 + $0x5c8] sm:$0xff]
    %v210 = vld [vmem:[%s1 + $0x5d0] sm:$0xff]
    %v211 = vld [vmem:[%s1 + $0x5d8] sm:$0xff]
    %v212 = vld [vmem:[%s1 + $0x5e0] sm:$0xff]
    %v213 = vld [vmem:[%s1 + $0x5e8] sm:$0xff]
    %v214 = vld [vmem:[%s1 + $0x5f0] sm:$0xff]
    %v215 = vld [vmem:[%s1 + $0x5f8] sm:$0xff]
    %v216 = vld [vmem:[%s1 + $0x600] sm:$0xff]
    %v217 = vld [vmem:[%s1 + $0x608] sm:$0xff]
    %v218 = vld [vmem:[%s1 + $0x610] sm:$0xff]
    %v219 = vld [vmem:[%s1 + $0x618] sm:$0xff]
    %v220 = vld [vmem:[%s1 + $0x620] sm:$0xff]
    %v221 = vld [vmem:[%s1 + $0x628] sm:$0xff]
    %v222 = vld [vmem:[%s1 + $0x630] sm:$0xff]
    %v223 = vld [vmem:[%s1 + $0x638] sm:$0xff]
    %v224 = vld [vmem:[%s1 + $0x640] sm:$0xff]
    %v225 = vld [vmem:[%s1 + $0x648] sm:$0xff]
    %v226 = vld [vmem:[%s1 + $0x650] sm:$0xff]
    %v227 = vld [vmem:[%s1 + $0x658] sm:$0xff]
    %v228 = vld [vmem:[%s1 + $0x660] sm:$0xff]
    %v229 = vld [vmem:[%s1 + $0x668] sm:$0xff]
    %v230 = vld [vmem:[%s1 + $0x670] sm:$0xff]
    %v231 = vld [vmem:[%s1 + $0x678] sm:$0xff]
    %v232 = vld [vmem:[%s1 + $0x680] sm:$0xff]
    %v233 = vld [vmem:[%s1 + $0x688] sm:$0xff]
    %v234 = vld [vmem:[%s1 + $0x690] sm:$0xff]
    %v235 = vld [vmem:[%s1 + $0x698] sm:$0xff]
    %v236 = vld [vmem:[%s1 + $0x6a0] sm:$0xff]
    %v237 = vld [vmem:[%s1 + $0x6a8] sm:$0xff]
    %v238 = vld [vmem:[%s1 + $0x6b0] sm:$0xff]
    %v239 = vld [vmem:[%s1 + $0x6b8] sm:$0xff]
    %v240 = vld [vmem:[%s1 + $0x6c0] sm:$0xff]
    %v241 = vld [vmem:[%s1 + $0x6c8] sm:$0xff]
    %v242 = vld [vmem:[%s1 + $0x6d0] sm:$0xff]
    %v243 = vld [vmem:[%s1 + $0x6d8] sm:$0xff]
    %v244 = vld [vmem:[%s1 + $0x6e0] sm:$0xff]
    %v245 = vld [vmem:[%s1 + $0x6e8] sm:$0xff]
    %v246 = vld [vmem:[%s1 + $0x6f0] sm:$0xff]
    %v247 = vld [vmem:[%s1 + $0x6f8] sm:$0xff]
    %v248 = vld [vmem:[%s1 + $0x700] sm:$0xff]
    %v249 = vld [vmem:[%s1 + $0x708] sm:$0xff]
    %v250 = vld [vmem:[%s1 + $0x710] sm:$0xff]
    %v251 = vld [vmem:[%s1 + $0x718] sm:$0xff]
    %v252 = vld [vmem:[%s1 + $0x720] sm:$0xff]
    %v253 = vld [vmem:[%s1 + $0x728] sm:$0xff]
    %v254 = vld [vmem:[%s1 + $0x730] sm:$0xff]
    %v255 = vld [vmem:[%s1 + $0x738] sm:$0xff]
    %v256 = vld [vmem:[%s1 + $0x740] sm:$0xff]
    %v257 = vld [vmem:[%s1 + $0x748] sm:$0xff]
    %v258 = vld [vmem:[%s1 + $0x750] sm:$0xff]
    %v259 = vld [vmem:[%s1 + $0x758] sm:$0xff]
    %v260 = vld [vmem:[%s1 + $0x760] sm:$0xff]
    %v261 = vld [vmem:[%s1 + $0x768] sm:$0xff]
    %v262 = vld [vmem:[%s1 + $0x770] sm:$0xff]
    %v263 = vld [vmem:[%s1 + $0x778] sm:$0xff]
    %v264 = vld [vmem:[%s1 + $0x780] sm:$0xff]
    %v265 = vld [vmem:[%s1 + $0x788] sm:$0xff]
    %v266 = vld [vmem:[%s1 + $0x790] sm:$0xff]
    %v267 = vld [vmem:[%s1 + $0x798] sm:$0xff]
    %v268 = vld [vmem:[%s1 + $0x7a0] sm:$0xff]
    %v269 = vld [vmem:[%s1 + $0x7a8] sm:$0xff]
    %v270 = vld [vmem:[%s1 + $0x7b0] sm:$0xff]
    %v271 = vld [vmem:[%s1 + $0x7b8] sm:$0xff]
    %v272 = vld [vmem:[%s1 + $0x7c0] sm:$0xff]
    %v273 = vld [vmem:[%s1 + $0x7c8] sm:$0xff]
    %v274 = vld [vmem:[%s1 + $0x7d0] sm:$0xff]
    %v275 = vld [vmem:[%s1 + $0x7d8] sm:$0xff]
    %v276 = vld [vmem:[%s1 + $0x7e0] sm:$0xff]
    %v277 = vld [vmem:[%s1 + $0x7e8] sm:$0xff]
    %v278 = vld [vmem:[%s1 + $0x7f0] sm:$0xff]
    %v279 = vld [vmem:[%s1 + $0x7f8] sm:$0xff]
    %v280 = vld [vmem:[%s1 + $0x800] sm:$0xff]
    %v281 = vld [vmem:[%s1 + $0x808] sm:$0xff]
    %v282 = vld [vmem:[%s1 + $0x810] sm:$0xff]
    %v283 = vld [vmem:[%s1 + $0x818] sm:$0xff]
    %v284 = vld [vmem:[%s1 + $0x820] sm:$0xff]
    %v285 = vld [vmem:[%s1 + $0x828] sm:$0xff]
    %v286 = vld [vmem:[%s1 + $0x830] sm:$0xff]
    %v287 = vld [vmem:[%s1 + $0x838] sm:$0xff]
    %v288 = vld [vmem:[%s1 + $0x840] sm:$0xff]
    %v289 = vld [vmem:[%s1 + $0x848] sm:$0xff]
    %v290 = vld [vmem:[%s1 + $0x850] sm:$0xff]
    %v291 = vld [vmem:[%s1 + $0x858] sm:$0xff]
    %v292 = vld [vmem:[%s1 + $0x860] sm:$0xff]
    %v293 = vld [vmem:[%s1 + $0x868] sm:$0xff]
    %v294 = vld [vmem:[%s1 + $0x870] sm:$0xff]
    %v295 = vld [vmem:[%s1 + $0x878] sm:$0xff]
    %v296 = vld [vmem:[%s1 + $0x880] sm:$0xff]
    %v297 = vld [vmem:[%s1 + $0x888] sm:$0xff]
    %v298 = vld [vmem:[%s1 + $0x890] sm:$0xff]
    %v299 = vld [vmem:[%s1 + $0x898] sm:$0xff]
    %v300 = vld [vmem:[%s1 + $0x8a0] sm:$0xff]
    %v301 = vld [vmem:[%s1 + $0x8a8] sm:$0xff]
    %v302 = vld [vmem:[%s1 + $0x8b0] sm:$0xff]
    %v303 = vld [vmem:[%s1 + $0x8b8] sm:$0xff]
    %v304 = vld [vmem:[%s1 + $0x8c0] sm:$0xff]
    %v305 = vld [vmem:[%s1 + $0x8c8] sm:$0xff]
    %v306 = vld [vmem:[%s1 + $0x8d0] sm:$0xff]
    %v307 = vld [vmem:[%s1 + $0x8d8] sm:$0xff]
    %v308 = vld [vmem:[%s1 + $0x8e0] sm:$0xff]
    %v309 = vld [vmem:[%s1 + $0x8e8] sm:$0xff]
    %v310 = vld [vmem:[%s1 + $0x8f0] sm:$0xff]
    %v311 = vld [vmem:[%s1 + $0x8f8] sm:$0xff]
    %v312 = vld [vmem:[%s1 + $0x900] sm:$0xff]
    %v313 = vld [vmem:[%s1 + $0x908] sm:$0xff]
    %v314 = vld [vmem:[%s1 + $0x910] sm:$0xff]
    %v315 = vld [vmem:[%s1 + $0x918] sm:$0xff]
    %v316 = vld [vmem:[%s1 + $0x920] sm:$0xff]
    %v317 = vld [vmem:[%s1 + $0x928] sm:$0xff]
    %v318 = vld [vmem:[%s1 + $0x930] sm:$0xff]
    %v319 = vld [vmem:[%s1 + $0x938] sm:$0xff]
    %v320 = vld [vmem:[%s1 + $0x940] sm:$0xff]
    %v321 = vld [vmem:[%s1 + $0x948] sm:$0xff]
    %v322 = vld [vmem:[%s1 + $0x950] sm:$0xff]
    %v323 = vld [vmem:[%s1 + $0x958] sm:$0xff]
    %v324 = vld [vmem:[%s1 + $0x960] sm:$0xff]
    %v325 = vld [vmem:[%s1 + $0x968] sm:$0xff]
    %v326 = vld [vmem:[%s1 + $0x970] sm:$0xff]
    %v327 = vld [vmem:[%s1 + $0x978] sm:$0xff]
    %v328 = vld [vmem:[%s1 + $0x980] sm:$0xff]
    %v329 = vld [vmem:[%s1 + $0x988] sm:$0xff]
    %v330 = vld [vmem:[%s1 + $0x990] sm:$0xff]
    %v331 = vld [vmem:[%s1 + $0x998] sm:$0xff]
    %v332 = vld [vmem:[%s1 + $0x9a0] sm:$0xff]
    %v333 = vld [vmem:[%s1 + $0x9a8] sm:$0xff]
    %v334 = vld [vmem:[%s1 + $0x9b0] sm:$0xff]
    %v335 = vld [vmem:[%s1 + $0x9b8] sm:$0xff]
    %v336 = vld [vmem:[%s1 + $0x9c0] sm:$0xff]
    %v337 = vld [vmem:[%s1 + $0x9c8] sm:$0xff]
    %v338 = vld [vmem:[%s1 + $0x9d0] sm:$0xff]
    %v339 = vld [vmem:[%s1 + $0x9d8] sm:$0xff]
    %v340 = vld [vmem:[%s1 + $0x9e0] sm:$0xff]
    %v341 = vld [vmem:[%s1 + $0x9e8] sm:$0xff]
    %v342 = vld [vmem:[%s1 + $0x9f0] sm:$0xff]
    %v343 = vld [vmem:[%s1 + $0x9f8] sm:$0xff]
    %v344 = vld [vmem:[%s1 + $0xa00] sm:$0xff]
    %v345 = vld [vmem:[%s1 + $0xa08] sm:$0xff]
    %v346 = vld [vmem:[%s1 + $0xa10] sm:$0xff]
    %v347 = vld [vmem:[%s1 + $0xa18] sm:$0xff]
    %v348 = vld [vmem:[%s1 + $0xa20] sm:$0xff]
    %v349 = vld [vmem:[%s1 + $0xa28] sm:$0xff]
    %v350 = vld [vmem:[%s1 + $0xa30] sm:$0xff]
    %v351 = vld [vmem:[%s1 + $0xa38] sm:$0xff]
    %v352 = vld [vmem:[%s1 + $0xa40] sm:$0xff]
    %v353 = vld [vmem:[%s1 + $0xa48] sm:$0xff]
    %v354 = vld [vmem:[%s1 + $0xa50] sm:$0xff]
    %v355 = vld [vmem:[%s1 + $0xa58] sm:$0xff]
    %v356 = vld [vmem:[%s1 + $0xa60] sm:$0xff]
    %v357 = vld [vmem:[%s1 + $0xa68] sm:$0xff]
    %v358 = vld [vmem:[%s1 + $0xa70] sm:$0xff]
    %v359 = vld [vmem:[%s1 + $0xa78] sm:$0xff]
    %v360 = vld [vmem:[%s1 + $0xa80] sm:$0xff]
    %v361 = vld [vmem:[%s1 + $0xa88] sm:$0xff]
    %v362 = vld [vmem:[%s1 + $0xa90] sm:$0xff]
    %v363 = vld [vmem:[%s1 + $0xa98] sm:$0xff]
    %v364 = vld [vmem:[%s1 + $0xaa0] sm:$0xff]
    %v365 = vld [vmem:[%s1 + $0xaa8] sm:$0xff]
    %v366 = vld [vmem:[%s1 + $0xab0] sm:$0xff]
    %v367 = vld [vmem:[%s1 + $0xab8] sm:$0xff]
    %v368 = vld [vmem:[%s1 + $0xac0] sm:$0xff]
    %v369 = vld [vmem:[%s1 + $0xac8] sm:$0xff]
    %v370 = vld [vmem:[%s1 + $0xad0] sm:$0xff]
    %v371 = vld [vmem:[%s1 + $0xad8] sm:$0xff]
    %v372 = vld [vmem:[%s1 + $0xae0] sm:$0xff]
    %v373 = vld [vmem:[%s1 + $0xae8] sm:$0xff]
    %v374 = vld [vmem:[%s1 + $0xaf0] sm:$0xff]
    %v375 = vld [vmem:[%s1 + $0xaf8] sm:$0xff]
    %v376 = vld [vmem:[%s1 + $0xb00] sm:$0xff]
    %v377 = vld [vmem:[%s1 + $0xb08] sm:$0xff]
    %v378 = vld [vmem:[%s1 + $0xb10] sm:$0xff]
    %v379 = vld [vmem:[%s1 + $0xb18] sm:$0xff]
    %v380 = vld [vmem:[%s1 + $0xb20] sm:$0xff]
    %v381 = vld [vmem:[%s1 + $0xb28] sm:$0xff]
    %v382 = vld [vmem:[%s1 + $0xb30] sm:$0xff]
    %v383 = vld [vmem:[%s1 + $0xb38] sm:$0xff]
    %v384 = vld [vmem:[%s1 + $0xb40] sm:$0xff]
    %v385 = vld [vmem:[%s1 + $0xb48] sm:$0xff]
    %v386 = vld [vmem:[%s1 + $0xb50] sm:$0xff]
    %v387 = vld [vmem:[%s1 + $0xb58] sm:$0xff]
    %v388 = vld [vmem:[%s1 + $0xb60] sm:$0xff]
    %v389 = vld [vmem:[%s1 + $0xb68] sm:$0xff]
    %v390 = vld [vmem:[%s1 + $0xb70] sm:$0xff]
    %v391 = vld [vmem:[%s1 + $0xb78] sm:$0xff]
    %v392 = vld [vmem:[%s1 + $0xb80] sm:$0xff]
    %v393 = vld [vmem:[%s1 + $0xb88] sm:$0xff]
    %v394 = vld [vmem:[%s1 + $0xb90] sm:$0xff]
    %v395 = vld [vmem:[%s1 + $0xb98] sm:$0xff]
    %v396 = vld [vmem:[%s1 + $0xba0] sm:$0xff]
    %v397 = vld [vmem:[%s1 + $0xba8] sm:$0xff]
    %v398 = vld [vmem:[%s1 + $0xbb0] sm:$0xff]
    %v399 = vld [vmem:[%s1 + $0xbb8] sm:$0xff]
    %v400 = vld [vmem:[%s1 + $0xbc0] sm:$0xff]
    %v401 = vld [vmem:[%s1 + $0xbc8] sm:$0xff]
    %v402 = vld [vmem:[%s1 + $0xbd0] sm:$0xff]
    %v403 = vld [vmem:[%s1 + $0xbd8] sm:$0xff]
    %v404 = vld [vmem:[%s1 + $0xbe0] sm:$0xff]
    %v405 = vld [vmem:[%s1 + $0xbe8] sm:$0xff]
    %v406 = vld [vmem:[%s1 + $0xbf0] sm:$0xff]
    %v407 = vld [vmem:[%s1 + $0xbf8] sm:$0xff]
    %v408 = vld [vmem:[%s1 + $0xc00] sm:$0xff]
    %v409 = vld [vmem:[%s1 + $0xc08] sm:$0xff]
    %v410 = vld [vmem:[%s1 + $0xc10] sm:$0xff]
    %v411 = vld [vmem:[%s1 + $0xc18] sm:$0xff]
    %v412 = vld [vmem:[%s1 + $0xc20] sm:$0xff]
    %v413 = vld [vmem:[%s1 + $0xc28] sm:$0xff]
    %v414 = vld [vmem:[%s1 + $0xc30] sm:$0xff]
    %v415 = vld [vmem:[%s1 + $0xc38] sm:$0xff]
    %v416 = vld [vmem:[%s1 + $0xc40] sm:$0xff]
    %v417 = vld [vmem:[%s1 + $0xc48] sm:$0xff]
    %v418 = vld [vmem:[%s1 + $0xc50] sm:$0xff]
    %v419 = vld [vmem:[%s1 + $0xc58] sm:$0xff]
    %v420 = vld [vmem:[%s1 + $0xc60] sm:$0xff]
    %v421 = vld [vmem:[%s1 + $0xc68] sm:$0xff]
    %v422 = vld [vmem:[%s1 + $0xc70] sm:$0xff]
    %v423 = vld [vmem:[%s1 + $0xc78] sm:$0xff]
    %v424 = vld [vmem:[%s1 + $0xc80] sm:$0xff]
    %v425 = vld [vmem:[%s1 + $0xc88] sm:$0xff]
    %v426 = vld [vmem:[%s1 + $0xc90] sm:$0xff]
    %v427 = vld [vmem:[%s1 + $0xc98] sm:$0xff]
    %v428 = vld [vmem:[%s1 + $0xca0] sm:$0xff]
    %v429 = vld [vmem:[%s1 + $0xca8] sm:$0xff]
    %v430 = vld [vmem:[%s1 + $0xcb0] sm:$0xff]
    %v431 = vld [vmem:[%s1 + $0xcb8] sm:$0xff]
    %v432 = vld [vmem:[%s1 + $0xcc0] sm:$0xff]
    %v433 = vld [vmem:[%s1 + $0xcc8] sm:$0xff]
    %v434 = vld [vmem:[%s1 + $0xcd0] sm:$0xff]
    %v435 = vld [vmem:[%s1 + $0xcd8] sm:$0xff]
    %v436 = vld [vmem:[%s1 + $0xce0] sm:$0xff]
    %v437 = vld [vmem:[%s1 + $0xce8] sm:$0xff]
    %v438 = vld [vmem:[%s1 + $0xcf0] sm:$0xff]
    %v439 = vld [vmem:[%s1 + $0xcf8] sm:$0xff]
    %v440 = vld [vmem:[%s1 + $0xd00] sm:$0xff]
    %v441 = vld [vmem:[%s1 + $0xd08] sm:$0xff]
    %v442 = vld [vmem:[%s1 + $0xd10] sm:$0xff]
    %v443 = vld [vmem:[%s1 + $0xd18] sm:$0xff]
    %v444 = vld [vmem:[%s1 + $0xd20] sm:$0xff]
    %v445 = vld [vmem:[%s1 + $0xd28] sm:$0xff]
    %v446 = vld [vmem:[%s1 + $0xd30] sm:$0xff]
    %v447 = vld [vmem:[%s1 + $0xd38] sm:$0xff]
    %v448 = vld [vmem:[%s1 + $0xd40] sm:$0xff]
    %v449 = vld [vmem:[%s1 + $0xd48] sm:$0xff]
    %v450 = vld [vmem:[%s1 + $0xd50] sm:$0xff]
    %v451 = vld [vmem:[%s1 + $0xd58] sm:$0xff]
    %v452 = vld [vmem:[%s1 + $0xd60] sm:$0xff]
    %v453 = vld [vmem:[%s1 + $0xd68] sm:$0xff]
    %v454 = vld [vmem:[%s1 + $0xd70] sm:$0xff]
    %v455 = vld [vmem:[%s1 + $0xd78] sm:$0xff]
    %v456 = vld [vmem:[%s1 + $0xd80] sm:$0xff]
    %v457 = vld [vmem:[%s1 + $0xd88] sm:$0xff]
    %v458 = vld [vmem:[%s1 + $0xd90] sm:$0xff]
    %v459 = vld [vmem:[%s1 + $0xd98] sm:$0xff]
    %v460 = vld [vmem:[%s1 + $0xda0] sm:$0xff]
    %v461 = vld [vmem:[%s1 + $0xda8] sm:$0xff]
    %v462 = vld [vmem:[%s1 + $0xdb0] sm:$0xff]
    %v463 = vld [vmem:[%s1 + $0xdb8] sm:$0xff]
    %v464 = vld [vmem:[%s1 + $0xdc0] sm:$0xff]
    %v465 = vld [vmem:[%s1 + $0xdc8] sm:$0xff]
    %v466 = vld [vmem:[%s1 + $0xdd0] sm:$0xff]
    %v467 = vld [vmem:[%s1 + $0xdd8] sm:$0xff]
    %v468 = vld [vmem:[%s1 + $0xde0] sm:$0xff]
    %v469 = vld [vmem:[%s1 + $0xde8] sm:$0xff]
    %v470 = vld [vmem:[%s1 + $0xdf0] sm:$0xff]
    %v471 = vld [vmem:[%s1 + $0xdf8] sm:$0xff]
    %v472 = vld [vmem:[%s1 + $0xe00] sm:$0xff]
    %v473 = vld [vmem:[%s1 + $0xe08] sm:$0xff]
    %v474 = vld [vmem:[%s1 + $0xe10] sm:$0xff]
    %v475 = vld [vmem:[%s1 + $0xe18] sm:$0xff]
    %v476 = vld [vmem:[%s1 + $0xe20] sm:$0xff]
    %v477 = vld [vmem:[%s1 + $0xe28] sm:$0xff]
    %v478 = vld [vmem:[%s1 + $0xe30] sm:$0xff]
    %v479 = vld [vmem:[%s1 + $0xe38] sm:$0xff]
    %v480 = vld [vmem:[%s1 + $0xe40] sm:$0xff]
    %v481 = vld [vmem:[%s1 + $0xe48] sm:$0xff]
    %v482 = vld [vmem:[%s1 + $0xe50] sm:$0xff]
    %v483 = vld [vmem:[%s1 + $0xe58] sm:$0xff]
    %v484 = vld [vmem:[%s1 + $0xe60] sm:$0xff]
    %v485 = vld [vmem:[%s1 + $0xe68] sm:$0xff]
    %v486 = vld [vmem:[%s1 + $0xe70] sm:$0xff]
    %v487 = vld [vmem:[%s1 + $0xe78] sm:$0xff]
    %v488 = vld [vmem:[%s1 + $0xe80] sm:$0xff]
    %v489 = vld [vmem:[%s1 + $0xe88] sm:$0xff]
    %v490 = vld [vmem:[%s1 + $0xe90] sm:$0xff]
    %v491 = vld [vmem:[%s1 + $0xe98] sm:$0xff]
    %v492 = vld [vmem:[%s1 + $0xea0] sm:$0xff]
    %v493 = vld [vmem:[%s1 + $0xea8] sm:$0xff]
    %v494 = vld [vmem:[%s1 + $0xeb0] sm:$0xff]
    %v495 = vld [vmem:[%s1 + $0xeb8] sm:$0xff]
    %v496 = vld [vmem:[%s1 + $0xec0] sm:$0xff]
    %v497 = vld [vmem:[%s1 + $0xec8] sm:$0xff]
    %v498 = vld [vmem:[%s1 + $0xed0] sm:$0xff]
    %v499 = vld [vmem:[%s1 + $0xed8] sm:$0xff]
    %v500 = vld [vmem:[%s1 + $0xee0] sm:$0xff]
    %v501 = vld [vmem:[%s1 + $0xee8] sm:$0xff]
    %v502 = vld [vmem:[%s1 + $0xef0] sm:$0xff]
    %v503 = vld [vmem:[%s1 + $0xef8] sm:$0xff]
    %v504 = vld [vmem:[%s1 + $0xf00] sm:$0xff]
    %v505 = vld [vmem:[%s1 + $0xf08] sm:$0xff]
    %v506 = vld [vmem:[%s1 + $0xf10] sm:$0xff]
    %v507 = vld [vmem:[%s1 + $0xf18] sm:$0xff]
    %v508 = vld [vmem:[%s1 + $0xf20] sm:$0xff]
    %v509 = vld [vmem:[%s1 + $0xf28] sm:$0xff]
    %v510 = vld [vmem:[%s1 + $0xf30] sm:$0xff]
    %v511 = vld [vmem:[%s1 + $0xf38] sm:$0xff]
    %v512 = vld [vmem:[%s1 + $0xf40] sm:$0xff]
    %v513 = vld [vmem:[%s1 + $0xf48] sm:$0xff]
    %v514 = vld [vmem:[%s1 + $0xf50] sm:$0xff]
    %v515 = vld [vmem:[%s1 + $0xf58] sm:$0xff]
    %v516 = vld [vmem:[%s1 + $0xf60] sm:$0xff]
    %v517 = vld [vmem:[%s1 + $0xf68] sm:$0xff]
    %v518 = vld [vmem:[%s1 + $0xf70] sm:$0xff]
    %v519 = vld [vmem:[%s1 + $0xf78] sm:$0xff]
    %v520 = vld [vmem:[%s1 + $0xf80] sm:$0xff]
    %v521 = vld [vmem:[%s1 + $0xf88] sm:$0xff]
    %v522 = vld [vmem:[%s1 + $0xf90] sm:$0xff]
    %v523 = vld [vmem:[%s1 + $0xf98] sm:$0xff]
    %v524 = vld [vmem:[%s1 + $0xfa0] sm:$0xff]
    %v525 = vld [vmem:[%s1 + $0xfa8] sm:$0xff]
    %v526 = vld [vmem:[%s1 + $0xfb0] sm:$0xff]
    %v527 = vld [vmem:[%s1 + $0xfb8] sm:$0xff]
    %v528 = vld [vmem:[%s1 + $0xfc0] sm:$0xff]
    %v529 = vld [vmem:[%s1 + $0xfc8] sm:$0xff]
    %v530 = vld [vmem:[%s1 + $0xfd0] sm:$0xff]
    %v531 = vld [vmem:[%s1 + $0xfd8] sm:$0xff]
    %v532 = vld [vmem:[%s1 + $0xfe0] sm:$0xff]
    %v533 = vld [vmem:[%s1 + $0xfe8] sm:$0xff]
    %v534 = vld [vmem:[%s1 + $0xff0] sm:$0xff]
    %v535 = vld [vmem:[%s1 + $0xff8] sm:$0xff]
    %v536 = vld [vmem:[%s2] sm:$0xf]
    %v538 = vlaneseq
    %v539 = vshrl.u32 %v538, 7
    %v540 = vsub.s32 0, %v539
    %v541 = vrot.slane %v536, %v540
    %v542 = vlaneseq
    %v543 = vshrl.u32 %v542, 7
    %v544 = vsub.s32 1, %v543
    %v545 = vrot.slane %v536, %v544
    %v546 = vlaneseq
    %v547 = vshrl.u32 %v546, 7
    %v548 = vsub.s32 2, %v547
    %v549 = vrot.slane %v536, %v548
    %v550 = vlaneseq
    %v551 = vshrl.u32 %v550, 7
    %v552 = vsub.s32 3, %v551
    %v553 = vrot.slane %v536, %v552
    %v560 = vcombine.high %v22, %v22
    %v562 = vunpack.c.l.s4 1966171168
    %v563 = vunpack.c.0.s8 %v562
    %v564 = vlaneseq
    %v565 = vshrl.u32 %v564, 7
    %v566 = vsub.s32 %v563, %v565
    %v567 = vrot.slane %v22, %v566
    %v569 = vunpack.c.l.s4 1966171168
    %v570 = vunpack.c.0.s8 %v569
    %v571 = vlaneseq
    %v572 = vshrl.u32 %v571, 7
    %v573 = vsub.s32 %v570, %v572
    %v574 = vrot.slane %v560, %v573
    %v575 = vcombine.high %v567, %v567
    %v576 = vcombine.high %v574, %v574
    %v578 = vunpack.c.l.s4 1966171168
    %v579 = vunpack.c.0.s8 %v578
    %v580 = vlaneseq
    %v581 = vshrl.u32 %v580, 7
    %v582 = vsub.s32 %v579, %v581
    %v583 = vrot.slane %v567, %v582
    %v585 = vunpack.c.l.s4 1966171168
    %v586 = vunpack.c.0.s8 %v585
    %v587 = vlaneseq
    %v588 = vshrl.u32 %v587, 7
    %v589 = vsub.s32 %v586, %v588
    %v590 = vrot.slane %v574, %v589
    %v592 = vunpack.c.l.s4 1966171168
    %v593 = vunpack.c.0.s8 %v592
    %v594 = vlaneseq
    %v595 = vshrl.u32 %v594, 7
    %v596 = vsub.s32 %v593, %v595
    %v597 = vrot.slane %v575, %v596
    %v599 = vunpack.c.l.s4 1966171168
    %v600 = vunpack.c.0.s8 %v599
    %v601 = vlaneseq
    %v602 = vshrl.u32 %v601, 7
    %v603 = vsub.s32 %v600, %v602
    %v604 = vrot.slane %v576, %v603
    %v605 = vcombine.high %v583, %v583
    %v606 = vcombine.high %v590, %v590
    %v607 = vcombine.high %v597, %v597
    %v608 = vcombine.high %v604, %v604
    %v609 = vcombine.high %v23, %v23
    %v611 = vunpack.c.l.s4 1966171168
    %v612 = vunpack.c.0.s8 %v611
    %v613 = vlaneseq
    %v614 = vshrl.u32 %v613, 7
    %v615 = vsub.s32 %v612, %v614
    %v616 = vrot.slane %v23, %v615
    %v618 = vunpack.c.l.s4 1966171168
    %v619 = vunpack.c.0.s8 %v618
    %v620 = vlaneseq
    %v621 = vshrl.u32 %v620, 7
    %v622 = vsub.s32 %v619, %v621
    %v623 = vrot.slane %v609, %v622
    %v624 = vcombine.high %v616, %v616
    %v625 = vcombine.high %v623, %v623
    %v627 = vunpack.c.l.s4 1966171168
    %v628 = vunpack.c.0.s8 %v627
    %v629 = vlaneseq
    %v630 = vshrl.u32 %v629, 7
    %v631 = vsub.s32 %v628, %v630
    %v632 = vrot.slane %v616, %v631
    %v634 = vunpack.c.l.s4 1966171168
    %v635 = vunpack.c.0.s8 %v634
    %v636 = vlaneseq
    %v637 = vshrl.u32 %v636, 7
    %v638 = vsub.s32 %v635, %v637
    %v639 = vrot.slane %v623, %v638
    %v641 = vunpack.c.l.s4 1966171168
    %v642 = vunpack.c.0.s8 %v641
    %v643 = vlaneseq
    %v644 = vshrl.u32 %v643, 7
    %v645 = vsub.s32 %v642, %v644
    %v646 = vrot.slane %v624, %v645
    %v648 = vunpack.c.l.s4 1966171168
    %v649 = vunpack.c.0.s8 %v648
    %v650 = vlaneseq
    %v651 = vshrl.u32 %v650, 7
    %v652 = vsub.s32 %v649, %v651
    %v653 = vrot.slane %v625, %v652
    %v654 = vcombine.high %v632, %v632
    %v655 = vcombine.high %v639, %v639
    %v656 = vcombine.high %v646, %v646
    %v657 = vcombine.high %v653, %v653
    %v1186 = vunpack.c.l.b16 %v24
    %v1187 = vunpack.c.h.b16 %v24
    %v1188 = vunpack.c.l.b16 %v25
    %v1189 = vunpack.c.h.b16 %v25
    %v1190 = vunpack.c.l.b16 %v26
    %v1191 = vunpack.c.h.b16 %v26
    %v1192 = vunpack.c.l.b16 %v27
    %v1193 = vunpack.c.h.b16 %v27
    %v1194 = vunpack.c.l.b16 %v28
    %v1195 = vunpack.c.h.b16 %v28
    %v1196 = vunpack.c.l.b16 %v29
    %v1197 = vunpack.c.h.b16 %v29
    %v1198 = vunpack.c.l.b16 %v30
    %v1199 = vunpack.c.h.b16 %v30
    %v1200 = vunpack.c.l.b16 %v31
    %v1201 = vunpack.c.h.b16 %v31
    %v1202 = vunpack.c.l.b16 %v32
    %v1203 = vunpack.c.h.b16 %v32
    %v1204 = vunpack.c.l.b16 %v33
    %v1205 = vunpack.c.h.b16 %v33
    %v1206 = vunpack.c.l.b16 %v34
    %v1207 = vunpack.c.h.b16 %v34
    %v1208 = vunpack.c.l.b16 %v35
    %v1209 = vunpack.c.h.b16 %v35
    %v1210 = vunpack.c.l.b16 %v36
    %v1211 = vunpack.c.h.b16 %v36
    %v1212 = vunpack.c.l.b16 %v37
    %v1213 = vunpack.c.h.b16 %v37
    %v1214 = vunpack.c.l.b16 %v38
    %v1215 = vunpack.c.h.b16 %v38
    %v1216 = vunpack.c.l.b16 %v39
    %v1217 = vunpack.c.h.b16 %v39
    %v1218 = vunpack.c.l.b16 %v40
    %v1219 = vunpack.c.h.b16 %v40
    %v1220 = vunpack.c.l.b16 %v41
    %v1221 = vunpack.c.h.b16 %v41
    %v1222 = vunpack.c.l.b16 %v42
    %v1223 = vunpack.c.h.b16 %v42
    %v1224 = vunpack.c.l.b16 %v43
    %v1225 = vunpack.c.h.b16 %v43
    %v1226 = vunpack.c.l.b16 %v44
    %v1227 = vunpack.c.h.b16 %v44
    %v1228 = vunpack.c.l.b16 %v45
    %v1229 = vunpack.c.h.b16 %v45
    %v1230 = vunpack.c.l.b16 %v46
    %v1231 = vunpack.c.h.b16 %v46
    %v1232 = vunpack.c.l.b16 %v47
    %v1233 = vunpack.c.h.b16 %v47
    %v1234 = vunpack.c.l.b16 %v48
    %v1235 = vunpack.c.h.b16 %v48
    %v1236 = vunpack.c.l.b16 %v49
    %v1237 = vunpack.c.h.b16 %v49
    %v1238 = vunpack.c.l.b16 %v50
    %v1239 = vunpack.c.h.b16 %v50
    %v1240 = vunpack.c.l.b16 %v51
    %v1241 = vunpack.c.h.b16 %v51
    %v1242 = vunpack.c.l.b16 %v52
    %v1243 = vunpack.c.h.b16 %v52
    %v1244 = vunpack.c.l.b16 %v53
    %v1245 = vunpack.c.h.b16 %v53
    %v1246 = vunpack.c.l.b16 %v54
    %v1247 = vunpack.c.h.b16 %v54
    %v1248 = vunpack.c.l.b16 %v55
    %v1249 = vunpack.c.h.b16 %v55
    %v1250 = vunpack.c.l.b16 %v56
    %v1251 = vunpack.c.h.b16 %v56
    %v1252 = vunpack.c.l.b16 %v57
    %v1253 = vunpack.c.h.b16 %v57
    %v1254 = vunpack.c.l.b16 %v58
    %v1255 = vunpack.c.h.b16 %v58
    %v1256 = vunpack.c.l.b16 %v59
    %v1257 = vunpack.c.h.b16 %v59
    %v1258 = vunpack.c.l.b16 %v60
    %v1259 = vunpack.c.h.b16 %v60
    %v1260 = vunpack.c.l.b16 %v61
    %v1261 = vunpack.c.h.b16 %v61
    %v1262 = vunpack.c.l.b16 %v62
    %v1263 = vunpack.c.h.b16 %v62
    %v1264 = vunpack.c.l.b16 %v63
    %v1265 = vunpack.c.h.b16 %v63
    %v1266 = vunpack.c.l.b16 %v64
    %v1267 = vunpack.c.h.b16 %v64
    %v1268 = vunpack.c.l.b16 %v65
    %v1269 = vunpack.c.h.b16 %v65
    %v1270 = vunpack.c.l.b16 %v66
    %v1271 = vunpack.c.h.b16 %v66
    %v1272 = vunpack.c.l.b16 %v67
    %v1273 = vunpack.c.h.b16 %v67
    %v1274 = vunpack.c.l.b16 %v68
    %v1275 = vunpack.c.h.b16 %v68
    %v1276 = vunpack.c.l.b16 %v69
    %v1277 = vunpack.c.h.b16 %v69
    %v1278 = vunpack.c.l.b16 %v70
    %v1279 = vunpack.c.h.b16 %v70
    %v1280 = vunpack.c.l.b16 %v71
    %v1281 = vunpack.c.h.b16 %v71
    %v1282 = vunpack.c.l.b16 %v72
    %v1283 = vunpack.c.h.b16 %v72
    %v1284 = vunpack.c.l.b16 %v73
    %v1285 = vunpack.c.h.b16 %v73
    %v1286 = vunpack.c.l.b16 %v74
    %v1287 = vunpack.c.h.b16 %v74
    %v1288 = vunpack.c.l.b16 %v75
    %v1289 = vunpack.c.h.b16 %v75
    %v1290 = vunpack.c.l.b16 %v76
    %v1291 = vunpack.c.h.b16 %v76
    %v1292 = vunpack.c.l.b16 %v77
    %v1293 = vunpack.c.h.b16 %v77
    %v1294 = vunpack.c.l.b16 %v78
    %v1295 = vunpack.c.h.b16 %v78
    %v1296 = vunpack.c.l.b16 %v79
    %v1297 = vunpack.c.h.b16 %v79
    %v1298 = vunpack.c.l.b16 %v80
    %v1299 = vunpack.c.h.b16 %v80
    %v1300 = vunpack.c.l.b16 %v81
    %v1301 = vunpack.c.h.b16 %v81
    %v1302 = vunpack.c.l.b16 %v82
    %v1303 = vunpack.c.h.b16 %v82
    %v1304 = vunpack.c.l.b16 %v83
    %v1305 = vunpack.c.h.b16 %v83
    %v1306 = vunpack.c.l.b16 %v84
    %v1307 = vunpack.c.h.b16 %v84
    %v1308 = vunpack.c.l.b16 %v85
    %v1309 = vunpack.c.h.b16 %v85
    %v1310 = vunpack.c.l.b16 %v86
    %v1311 = vunpack.c.h.b16 %v86
    %v1312 = vunpack.c.l.b16 %v87
    %v1313 = vunpack.c.h.b16 %v87
    %v1314 = vunpack.c.l.b16 %v88
    %v1315 = vunpack.c.h.b16 %v88
    %v1316 = vunpack.c.l.b16 %v89
    %v1317 = vunpack.c.h.b16 %v89
    %v1318 = vunpack.c.l.b16 %v90
    %v1319 = vunpack.c.h.b16 %v90
    %v1320 = vunpack.c.l.b16 %v91
    %v1321 = vunpack.c.h.b16 %v91
    %v1322 = vunpack.c.l.b16 %v92
    %v1323 = vunpack.c.h.b16 %v92
    %v1324 = vunpack.c.l.b16 %v93
    %v1325 = vunpack.c.h.b16 %v93
    %v1326 = vunpack.c.l.b16 %v94
    %v1327 = vunpack.c.h.b16 %v94
    %v1328 = vunpack.c.l.b16 %v95
    %v1329 = vunpack.c.h.b16 %v95
    %v1330 = vunpack.c.l.b16 %v96
    %v1331 = vunpack.c.h.b16 %v96
    %v1332 = vunpack.c.l.b16 %v97
    %v1333 = vunpack.c.h.b16 %v97
    %v1334 = vunpack.c.l.b16 %v98
    %v1335 = vunpack.c.h.b16 %v98
    %v1336 = vunpack.c.l.b16 %v99
    %v1337 = vunpack.c.h.b16 %v99
    %v1338 = vunpack.c.l.b16 %v100
    %v1339 = vunpack.c.h.b16 %v100
    %v1340 = vunpack.c.l.b16 %v101
    %v1341 = vunpack.c.h.b16 %v101
    %v1342 = vunpack.c.l.b16 %v102
    %v1343 = vunpack.c.h.b16 %v102
    %v1344 = vunpack.c.l.b16 %v103
    %v1345 = vunpack.c.h.b16 %v103
    %v1346 = vunpack.c.l.b16 %v104
    %v1347 = vunpack.c.h.b16 %v104
    %v1348 = vunpack.c.l.b16 %v105
    %v1349 = vunpack.c.h.b16 %v105
    %v1350 = vunpack.c.l.b16 %v106
    %v1351 = vunpack.c.h.b16 %v106
    %v1352 = vunpack.c.l.b16 %v107
    %v1353 = vunpack.c.h.b16 %v107
    %v1354 = vunpack.c.l.b16 %v108
    %v1355 = vunpack.c.h.b16 %v108
    %v1356 = vunpack.c.l.b16 %v109
    %v1357 = vunpack.c.h.b16 %v109
    %v1358 = vunpack.c.l.b16 %v110
    %v1359 = vunpack.c.h.b16 %v110
    %v1360 = vunpack.c.l.b16 %v111
    %v1361 = vunpack.c.h.b16 %v111
    %v1362 = vunpack.c.l.b16 %v112
    %v1363 = vunpack.c.h.b16 %v112
    %v1364 = vunpack.c.l.b16 %v113
    %v1365 = vunpack.c.h.b16 %v113
    %v1366 = vunpack.c.l.b16 %v114
    %v1367 = vunpack.c.h.b16 %v114
    %v1368 = vunpack.c.l.b16 %v115
    %v1369 = vunpack.c.h.b16 %v115
    %v1370 = vunpack.c.l.b16 %v116
    %v1371 = vunpack.c.h.b16 %v116
    %v1372 = vunpack.c.l.b16 %v117
    %v1373 = vunpack.c.h.b16 %v117
    %v1374 = vunpack.c.l.b16 %v118
    %v1375 = vunpack.c.h.b16 %v118
    %v1376 = vunpack.c.l.b16 %v119
    %v1377 = vunpack.c.h.b16 %v119
    %v1378 = vunpack.c.l.b16 %v120
    %v1379 = vunpack.c.h.b16 %v120
    %v1380 = vunpack.c.l.b16 %v121
    %v1381 = vunpack.c.h.b16 %v121
    %v1382 = vunpack.c.l.b16 %v122
    %v1383 = vunpack.c.h.b16 %v122
    %v1384 = vunpack.c.l.b16 %v123
    %v1385 = vunpack.c.h.b16 %v123
    %v1386 = vunpack.c.l.b16 %v124
    %v1387 = vunpack.c.h.b16 %v124
    %v1388 = vunpack.c.l.b16 %v125
    %v1389 = vunpack.c.h.b16 %v125
    %v1390 = vunpack.c.l.b16 %v126
    %v1391 = vunpack.c.h.b16 %v126
    %v1392 = vunpack.c.l.b16 %v127
    %v1393 = vunpack.c.h.b16 %v127
    %v1394 = vunpack.c.l.b16 %v128
    %v1395 = vunpack.c.h.b16 %v128
    %v1396 = vunpack.c.l.b16 %v129
    %v1397 = vunpack.c.h.b16 %v129
    %v1398 = vunpack.c.l.b16 %v130
    %v1399 = vunpack.c.h.b16 %v130
    %v1400 = vunpack.c.l.b16 %v131
    %v1401 = vunpack.c.h.b16 %v131
    %v1402 = vunpack.c.l.b16 %v132
    %v1403 = vunpack.c.h.b16 %v132
    %v1404 = vunpack.c.l.b16 %v133
    %v1405 = vunpack.c.h.b16 %v133
    %v1406 = vunpack.c.l.b16 %v134
    %v1407 = vunpack.c.h.b16 %v134
    %v1408 = vunpack.c.l.b16 %v135
    %v1409 = vunpack.c.h.b16 %v135
    %v1410 = vunpack.c.l.b16 %v136
    %v1411 = vunpack.c.h.b16 %v136
    %v1412 = vunpack.c.l.b16 %v137
    %v1413 = vunpack.c.h.b16 %v137
    %v1414 = vunpack.c.l.b16 %v138
    %v1415 = vunpack.c.h.b16 %v138
    %v1416 = vunpack.c.l.b16 %v139
    %v1417 = vunpack.c.h.b16 %v139
    %v1418 = vunpack.c.l.b16 %v140
    %v1419 = vunpack.c.h.b16 %v140
    %v1420 = vunpack.c.l.b16 %v141
    %v1421 = vunpack.c.h.b16 %v141
    %v1422 = vunpack.c.l.b16 %v142
    %v1423 = vunpack.c.h.b16 %v142
    %v1424 = vunpack.c.l.b16 %v143
    %v1425 = vunpack.c.h.b16 %v143
    %v1426 = vunpack.c.l.b16 %v144
    %v1427 = vunpack.c.h.b16 %v144
    %v1428 = vunpack.c.l.b16 %v145
    %v1429 = vunpack.c.h.b16 %v145
    %v1430 = vunpack.c.l.b16 %v146
    %v1431 = vunpack.c.h.b16 %v146
    %v1432 = vunpack.c.l.b16 %v147
    %v1433 = vunpack.c.h.b16 %v147
    %v1434 = vunpack.c.l.b16 %v148
    %v1435 = vunpack.c.h.b16 %v148
    %v1436 = vunpack.c.l.b16 %v149
    %v1437 = vunpack.c.h.b16 %v149
    %v1438 = vunpack.c.l.b16 %v150
    %v1439 = vunpack.c.h.b16 %v150
    %v1440 = vunpack.c.l.b16 %v151
    %v1441 = vunpack.c.h.b16 %v151
    %v1442 = vunpack.c.l.b16 %v152
    %v1443 = vunpack.c.h.b16 %v152
    %v1444 = vunpack.c.l.b16 %v153
    %v1445 = vunpack.c.h.b16 %v153
    %v1446 = vunpack.c.l.b16 %v154
    %v1447 = vunpack.c.h.b16 %v154
    %v1448 = vunpack.c.l.b16 %v155
    %v1449 = vunpack.c.h.b16 %v155
    %v1450 = vunpack.c.l.b16 %v156
    %v1451 = vunpack.c.h.b16 %v156
    %v1452 = vunpack.c.l.b16 %v157
    %v1453 = vunpack.c.h.b16 %v157
    %v1454 = vunpack.c.l.b16 %v158
    %v1455 = vunpack.c.h.b16 %v158
    %v1456 = vunpack.c.l.b16 %v159
    %v1457 = vunpack.c.h.b16 %v159
    %v1458 = vunpack.c.l.b16 %v160
    %v1459 = vunpack.c.h.b16 %v160
    %v1460 = vunpack.c.l.b16 %v161
    %v1461 = vunpack.c.h.b16 %v161
    %v1462 = vunpack.c.l.b16 %v162
    %v1463 = vunpack.c.h.b16 %v162
    %v1464 = vunpack.c.l.b16 %v163
    %v1465 = vunpack.c.h.b16 %v163
    %v1466 = vunpack.c.l.b16 %v164
    %v1467 = vunpack.c.h.b16 %v164
    %v1468 = vunpack.c.l.b16 %v165
    %v1469 = vunpack.c.h.b16 %v165
    %v1470 = vunpack.c.l.b16 %v166
    %v1471 = vunpack.c.h.b16 %v166
    %v1472 = vunpack.c.l.b16 %v167
    %v1473 = vunpack.c.h.b16 %v167
    %v1474 = vunpack.c.l.b16 %v168
    %v1475 = vunpack.c.h.b16 %v168
    %v1476 = vunpack.c.l.b16 %v169
    %v1477 = vunpack.c.h.b16 %v169
    %v1478 = vunpack.c.l.b16 %v170
    %v1479 = vunpack.c.h.b16 %v170
    %v1480 = vunpack.c.l.b16 %v171
    %v1481 = vunpack.c.h.b16 %v171
    %v1482 = vunpack.c.l.b16 %v172
    %v1483 = vunpack.c.h.b16 %v172
    %v1484 = vunpack.c.l.b16 %v173
    %v1485 = vunpack.c.h.b16 %v173
    %v1486 = vunpack.c.l.b16 %v174
    %v1487 = vunpack.c.h.b16 %v174
    %v1488 = vunpack.c.l.b16 %v175
    %v1489 = vunpack.c.h.b16 %v175
    %v1490 = vunpack.c.l.b16 %v176
    %v1491 = vunpack.c.h.b16 %v176
    %v1492 = vunpack.c.l.b16 %v177
    %v1493 = vunpack.c.h.b16 %v177
    %v1494 = vunpack.c.l.b16 %v178
    %v1495 = vunpack.c.h.b16 %v178
    %v1496 = vunpack.c.l.b16 %v179
    %v1497 = vunpack.c.h.b16 %v179
    %v1498 = vunpack.c.l.b16 %v180
    %v1499 = vunpack.c.h.b16 %v180
    %v1500 = vunpack.c.l.b16 %v181
    %v1501 = vunpack.c.h.b16 %v181
    %v1502 = vunpack.c.l.b16 %v182
    %v1503 = vunpack.c.h.b16 %v182
    %v1504 = vunpack.c.l.b16 %v183
    %v1505 = vunpack.c.h.b16 %v183
    %v1506 = vunpack.c.l.b16 %v184
    %v1507 = vunpack.c.h.b16 %v184
    %v1508 = vunpack.c.l.b16 %v185
    %v1509 = vunpack.c.h.b16 %v185
    %v1510 = vunpack.c.l.b16 %v186
    %v1511 = vunpack.c.h.b16 %v186
    %v1512 = vunpack.c.l.b16 %v187
    %v1513 = vunpack.c.h.b16 %v187
    %v1514 = vunpack.c.l.b16 %v188
    %v1515 = vunpack.c.h.b16 %v188
    %v1516 = vunpack.c.l.b16 %v189
    %v1517 = vunpack.c.h.b16 %v189
    %v1518 = vunpack.c.l.b16 %v190
    %v1519 = vunpack.c.h.b16 %v190
    %v1520 = vunpack.c.l.b16 %v191
    %v1521 = vunpack.c.h.b16 %v191
    %v1522 = vunpack.c.l.b16 %v192
    %v1523 = vunpack.c.h.b16 %v192
    %v1524 = vunpack.c.l.b16 %v193
    %v1525 = vunpack.c.h.b16 %v193
    %v1526 = vunpack.c.l.b16 %v194
    %v1527 = vunpack.c.h.b16 %v194
    %v1528 = vunpack.c.l.b16 %v195
    %v1529 = vunpack.c.h.b16 %v195
    %v1530 = vunpack.c.l.b16 %v196
    %v1531 = vunpack.c.h.b16 %v196
    %v1532 = vunpack.c.l.b16 %v197
    %v1533 = vunpack.c.h.b16 %v197
    %v1534 = vunpack.c.l.b16 %v198
    %v1535 = vunpack.c.h.b16 %v198
    %v1536 = vunpack.c.l.b16 %v199
    %v1537 = vunpack.c.h.b16 %v199
    %v1538 = vunpack.c.l.b16 %v200
    %v1539 = vunpack.c.h.b16 %v200
    %v1540 = vunpack.c.l.b16 %v201
    %v1541 = vunpack.c.h.b16 %v201
    %v1542 = vunpack.c.l.b16 %v202
    %v1543 = vunpack.c.h.b16 %v202
    %v1544 = vunpack.c.l.b16 %v203
    %v1545 = vunpack.c.h.b16 %v203
    %v1546 = vunpack.c.l.b16 %v204
    %v1547 = vunpack.c.h.b16 %v204
    %v1548 = vunpack.c.l.b16 %v205
    %v1549 = vunpack.c.h.b16 %v205
    %v1550 = vunpack.c.l.b16 %v206
    %v1551 = vunpack.c.h.b16 %v206
    %v1552 = vunpack.c.l.b16 %v207
    %v1553 = vunpack.c.h.b16 %v207
    %v1554 = vunpack.c.l.b16 %v208
    %v1555 = vunpack.c.h.b16 %v208
    %v1556 = vunpack.c.l.b16 %v209
    %v1557 = vunpack.c.h.b16 %v209
    %v1558 = vunpack.c.l.b16 %v210
    %v1559 = vunpack.c.h.b16 %v210
    %v1560 = vunpack.c.l.b16 %v211
    %v1561 = vunpack.c.h.b16 %v211
    %v1562 = vunpack.c.l.b16 %v212
    %v1563 = vunpack.c.h.b16 %v212
    %v1564 = vunpack.c.l.b16 %v213
    %v1565 = vunpack.c.h.b16 %v213
    %v1566 = vunpack.c.l.b16 %v214
    %v1567 = vunpack.c.h.b16 %v214
    %v1568 = vunpack.c.l.b16 %v215
    %v1569 = vunpack.c.h.b16 %v215
    %v1570 = vunpack.c.l.b16 %v216
    %v1571 = vunpack.c.h.b16 %v216
    %v1572 = vunpack.c.l.b16 %v217
    %v1573 = vunpack.c.h.b16 %v217
    %v1574 = vunpack.c.l.b16 %v218
    %v1575 = vunpack.c.h.b16 %v218
    %v1576 = vunpack.c.l.b16 %v219
    %v1577 = vunpack.c.h.b16 %v219
    %v1578 = vunpack.c.l.b16 %v220
    %v1579 = vunpack.c.h.b16 %v220
    %v1580 = vunpack.c.l.b16 %v221
    %v1581 = vunpack.c.h.b16 %v221
    %v1582 = vunpack.c.l.b16 %v222
    %v1583 = vunpack.c.h.b16 %v222
    %v1584 = vunpack.c.l.b16 %v223
    %v1585 = vunpack.c.h.b16 %v223
    %v1586 = vunpack.c.l.b16 %v224
    %v1587 = vunpack.c.h.b16 %v224
    %v1588 = vunpack.c.l.b16 %v225
    %v1589 = vunpack.c.h.b16 %v225
    %v1590 = vunpack.c.l.b16 %v226
    %v1591 = vunpack.c.h.b16 %v226
    %v1592 = vunpack.c.l.b16 %v227
    %v1593 = vunpack.c.h.b16 %v227
    %v1594 = vunpack.c.l.b16 %v228
    %v1595 = vunpack.c.h.b16 %v228
    %v1596 = vunpack.c.l.b16 %v229
    %v1597 = vunpack.c.h.b16 %v229
    %v1598 = vunpack.c.l.b16 %v230
    %v1599 = vunpack.c.h.b16 %v230
    %v1600 = vunpack.c.l.b16 %v231
    %v1601 = vunpack.c.h.b16 %v231
    %v1602 = vunpack.c.l.b16 %v232
    %v1603 = vunpack.c.h.b16 %v232
    %v1604 = vunpack.c.l.b16 %v233
    %v1605 = vunpack.c.h.b16 %v233
    %v1606 = vunpack.c.l.b16 %v234
    %v1607 = vunpack.c.h.b16 %v234
    %v1608 = vunpack.c.l.b16 %v235
    %v1609 = vunpack.c.h.b16 %v235
    %v1610 = vunpack.c.l.b16 %v236
    %v1611 = vunpack.c.h.b16 %v236
    %v1612 = vunpack.c.l.b16 %v237
    %v1613 = vunpack.c.h.b16 %v237
    %v1614 = vunpack.c.l.b16 %v238
    %v1615 = vunpack.c.h.b16 %v238
    %v1616 = vunpack.c.l.b16 %v239
    %v1617 = vunpack.c.h.b16 %v239
    %v1618 = vunpack.c.l.b16 %v240
    %v1619 = vunpack.c.h.b16 %v240
    %v1620 = vunpack.c.l.b16 %v241
    %v1621 = vunpack.c.h.b16 %v241
    %v1622 = vunpack.c.l.b16 %v242
    %v1623 = vunpack.c.h.b16 %v242
    %v1624 = vunpack.c.l.b16 %v243
    %v1625 = vunpack.c.h.b16 %v243
    %v1626 = vunpack.c.l.b16 %v244
    %v1627 = vunpack.c.h.b16 %v244
    %v1628 = vunpack.c.l.b16 %v245
    %v1629 = vunpack.c.h.b16 %v245
    %v1630 = vunpack.c.l.b16 %v246
    %v1631 = vunpack.c.h.b16 %v246
    %v1632 = vunpack.c.l.b16 %v247
    %v1633 = vunpack.c.h.b16 %v247
    %v1634 = vunpack.c.l.b16 %v248
    %v1635 = vunpack.c.h.b16 %v248
    %v1636 = vunpack.c.l.b16 %v249
    %v1637 = vunpack.c.h.b16 %v249
    %v1638 = vunpack.c.l.b16 %v250
    %v1639 = vunpack.c.h.b16 %v250
    %v1640 = vunpack.c.l.b16 %v251
    %v1641 = vunpack.c.h.b16 %v251
    %v1642 = vunpack.c.l.b16 %v252
    %v1643 = vunpack.c.h.b16 %v252
    %v1644 = vunpack.c.l.b16 %v253
    %v1645 = vunpack.c.h.b16 %v253
    %v1646 = vunpack.c.l.b16 %v254
    %v1647 = vunpack.c.h.b16 %v254
    %v1648 = vunpack.c.l.b16 %v255
    %v1649 = vunpack.c.h.b16 %v255
    %v1650 = vunpack.c.l.b16 %v256
    %v1651 = vunpack.c.h.b16 %v256
    %v1652 = vunpack.c.l.b16 %v257
    %v1653 = vunpack.c.h.b16 %v257
    %v1654 = vunpack.c.l.b16 %v258
    %v1655 = vunpack.c.h.b16 %v258
    %v1656 = vunpack.c.l.b16 %v259
    %v1657 = vunpack.c.h.b16 %v259
    %v1658 = vunpack.c.l.b16 %v260
    %v1659 = vunpack.c.h.b16 %v260
    %v1660 = vunpack.c.l.b16 %v261
    %v1661 = vunpack.c.h.b16 %v261
    %v1662 = vunpack.c.l.b16 %v262
    %v1663 = vunpack.c.h.b16 %v262
    %v1664 = vunpack.c.l.b16 %v263
    %v1665 = vunpack.c.h.b16 %v263
    %v1666 = vunpack.c.l.b16 %v264
    %v1667 = vunpack.c.h.b16 %v264
    %v1668 = vunpack.c.l.b16 %v265
    %v1669 = vunpack.c.h.b16 %v265
    %v1670 = vunpack.c.l.b16 %v266
    %v1671 = vunpack.c.h.b16 %v266
    %v1672 = vunpack.c.l.b16 %v267
    %v1673 = vunpack.c.h.b16 %v267
    %v1674 = vunpack.c.l.b16 %v268
    %v1675 = vunpack.c.h.b16 %v268
    %v1676 = vunpack.c.l.b16 %v269
    %v1677 = vunpack.c.h.b16 %v269
    %v1678 = vunpack.c.l.b16 %v270
    %v1679 = vunpack.c.h.b16 %v270
    %v1680 = vunpack.c.l.b16 %v271
    %v1681 = vunpack.c.h.b16 %v271
    %v1682 = vunpack.c.l.b16 %v272
    %v1683 = vunpack.c.h.b16 %v272
    %v1684 = vunpack.c.l.b16 %v273
    %v1685 = vunpack.c.h.b16 %v273
    %v1686 = vunpack.c.l.b16 %v274
    %v1687 = vunpack.c.h.b16 %v274
    %v1688 = vunpack.c.l.b16 %v275
    %v1689 = vunpack.c.h.b16 %v275
    %v1690 = vunpack.c.l.b16 %v276
    %v1691 = vunpack.c.h.b16 %v276
    %v1692 = vunpack.c.l.b16 %v277
    %v1693 = vunpack.c.h.b16 %v277
    %v1694 = vunpack.c.l.b16 %v278
    %v1695 = vunpack.c.h.b16 %v278
    %v1696 = vunpack.c.l.b16 %v279
    %v1697 = vunpack.c.h.b16 %v279
    %v1698 = vunpack.c.l.b16 %v280
    %v1699 = vunpack.c.h.b16 %v280
    %v1700 = vunpack.c.l.b16 %v281
    %v1701 = vunpack.c.h.b16 %v281
    %v1702 = vunpack.c.l.b16 %v282
    %v1703 = vunpack.c.h.b16 %v282
    %v1704 = vunpack.c.l.b16 %v283
    %v1705 = vunpack.c.h.b16 %v283
    %v1706 = vunpack.c.l.b16 %v284
    %v1707 = vunpack.c.h.b16 %v284
    %v1708 = vunpack.c.l.b16 %v285
    %v1709 = vunpack.c.h.b16 %v285
    %v1710 = vunpack.c.l.b16 %v286
    %v1711 = vunpack.c.h.b16 %v286
    %v1712 = vunpack.c.l.b16 %v287
    %v1713 = vunpack.c.h.b16 %v287
    %v1714 = vunpack.c.l.b16 %v288
    %v1715 = vunpack.c.h.b16 %v288
    %v1716 = vunpack.c.l.b16 %v289
    %v1717 = vunpack.c.h.b16 %v289
    %v1718 = vunpack.c.l.b16 %v290
    %v1719 = vunpack.c.h.b16 %v290
    %v1720 = vunpack.c.l.b16 %v291
    %v1721 = vunpack.c.h.b16 %v291
    %v1722 = vunpack.c.l.b16 %v292
    %v1723 = vunpack.c.h.b16 %v292
    %v1724 = vunpack.c.l.b16 %v293
    %v1725 = vunpack.c.h.b16 %v293
    %v1726 = vunpack.c.l.b16 %v294
    %v1727 = vunpack.c.h.b16 %v294
    %v1728 = vunpack.c.l.b16 %v295
    %v1729 = vunpack.c.h.b16 %v295
    %v1730 = vunpack.c.l.b16 %v296
    %v1731 = vunpack.c.h.b16 %v296
    %v1732 = vunpack.c.l.b16 %v297
    %v1733 = vunpack.c.h.b16 %v297
    %v1734 = vunpack.c.l.b16 %v298
    %v1735 = vunpack.c.h.b16 %v298
    %v1736 = vunpack.c.l.b16 %v299
    %v1737 = vunpack.c.h.b16 %v299
    %v1738 = vunpack.c.l.b16 %v300
    %v1739 = vunpack.c.h.b16 %v300
    %v1740 = vunpack.c.l.b16 %v301
    %v1741 = vunpack.c.h.b16 %v301
    %v1742 = vunpack.c.l.b16 %v302
    %v1743 = vunpack.c.h.b16 %v302
    %v1744 = vunpack.c.l.b16 %v303
    %v1745 = vunpack.c.h.b16 %v303
    %v1746 = vunpack.c.l.b16 %v304
    %v1747 = vunpack.c.h.b16 %v304
    %v1748 = vunpack.c.l.b16 %v305
    %v1749 = vunpack.c.h.b16 %v305
    %v1750 = vunpack.c.l.b16 %v306
    %v1751 = vunpack.c.h.b16 %v306
    %v1752 = vunpack.c.l.b16 %v307
    %v1753 = vunpack.c.h.b16 %v307
    %v1754 = vunpack.c.l.b16 %v308
    %v1755 = vunpack.c.h.b16 %v308
    %v1756 = vunpack.c.l.b16 %v309
    %v1757 = vunpack.c.h.b16 %v309
    %v1758 = vunpack.c.l.b16 %v310
    %v1759 = vunpack.c.h.b16 %v310
    %v1760 = vunpack.c.l.b16 %v311
    %v1761 = vunpack.c.h.b16 %v311
    %v1762 = vunpack.c.l.b16 %v312
    %v1763 = vunpack.c.h.b16 %v312
    %v1764 = vunpack.c.l.b16 %v313
    %v1765 = vunpack.c.h.b16 %v313
    %v1766 = vunpack.c.l.b16 %v314
    %v1767 = vunpack.c.h.b16 %v314
    %v1768 = vunpack.c.l.b16 %v315
    %v1769 = vunpack.c.h.b16 %v315
    %v1770 = vunpack.c.l.b16 %v316
    %v1771 = vunpack.c.h.b16 %v316
    %v1772 = vunpack.c.l.b16 %v317
    %v1773 = vunpack.c.h.b16 %v317
    %v1774 = vunpack.c.l.b16 %v318
    %v1775 = vunpack.c.h.b16 %v318
    %v1776 = vunpack.c.l.b16 %v319
    %v1777 = vunpack.c.h.b16 %v319
    %v1778 = vunpack.c.l.b16 %v320
    %v1779 = vunpack.c.h.b16 %v320
    %v1780 = vunpack.c.l.b16 %v321
    %v1781 = vunpack.c.h.b16 %v321
    %v1782 = vunpack.c.l.b16 %v322
    %v1783 = vunpack.c.h.b16 %v322
    %v1784 = vunpack.c.l.b16 %v323
    %v1785 = vunpack.c.h.b16 %v323
    %v1786 = vunpack.c.l.b16 %v324
    %v1787 = vunpack.c.h.b16 %v324
    %v1788 = vunpack.c.l.b16 %v325
    %v1789 = vunpack.c.h.b16 %v325
    %v1790 = vunpack.c.l.b16 %v326
    %v1791 = vunpack.c.h.b16 %v326
    %v1792 = vunpack.c.l.b16 %v327
    %v1793 = vunpack.c.h.b16 %v327
    %v1794 = vunpack.c.l.b16 %v328
    %v1795 = vunpack.c.h.b16 %v328
    %v1796 = vunpack.c.l.b16 %v329
    %v1797 = vunpack.c.h.b16 %v329
    %v1798 = vunpack.c.l.b16 %v330
    %v1799 = vunpack.c.h.b16 %v330
    %v1800 = vunpack.c.l.b16 %v331
    %v1801 = vunpack.c.h.b16 %v331
    %v1802 = vunpack.c.l.b16 %v332
    %v1803 = vunpack.c.h.b16 %v332
    %v1804 = vunpack.c.l.b16 %v333
    %v1805 = vunpack.c.h.b16 %v333
    %v1806 = vunpack.c.l.b16 %v334
    %v1807 = vunpack.c.h.b16 %v334
    %v1808 = vunpack.c.l.b16 %v335
    %v1809 = vunpack.c.h.b16 %v335
    %v1810 = vunpack.c.l.b16 %v336
    %v1811 = vunpack.c.h.b16 %v336
    %v1812 = vunpack.c.l.b16 %v337
    %v1813 = vunpack.c.h.b16 %v337
    %v1814 = vunpack.c.l.b16 %v338
    %v1815 = vunpack.c.h.b16 %v338
    %v1816 = vunpack.c.l.b16 %v339
    %v1817 = vunpack.c.h.b16 %v339
    %v1818 = vunpack.c.l.b16 %v340
    %v1819 = vunpack.c.h.b16 %v340
    %v1820 = vunpack.c.l.b16 %v341
    %v1821 = vunpack.c.h.b16 %v341
    %v1822 = vunpack.c.l.b16 %v342
    %v1823 = vunpack.c.h.b16 %v342
    %v1824 = vunpack.c.l.b16 %v343
    %v1825 = vunpack.c.h.b16 %v343
    %v1826 = vunpack.c.l.b16 %v344
    %v1827 = vunpack.c.h.b16 %v344
    %v1828 = vunpack.c.l.b16 %v345
    %v1829 = vunpack.c.h.b16 %v345
    %v1830 = vunpack.c.l.b16 %v346
    %v1831 = vunpack.c.h.b16 %v346
    %v1832 = vunpack.c.l.b16 %v347
    %v1833 = vunpack.c.h.b16 %v347
    %v1834 = vunpack.c.l.b16 %v348
    %v1835 = vunpack.c.h.b16 %v348
    %v1836 = vunpack.c.l.b16 %v349
    %v1837 = vunpack.c.h.b16 %v349
    %v1838 = vunpack.c.l.b16 %v350
    %v1839 = vunpack.c.h.b16 %v350
    %v1840 = vunpack.c.l.b16 %v351
    %v1841 = vunpack.c.h.b16 %v351
    %v1842 = vunpack.c.l.b16 %v352
    %v1843 = vunpack.c.h.b16 %v352
    %v1844 = vunpack.c.l.b16 %v353
    %v1845 = vunpack.c.h.b16 %v353
    %v1846 = vunpack.c.l.b16 %v354
    %v1847 = vunpack.c.h.b16 %v354
    %v1848 = vunpack.c.l.b16 %v355
    %v1849 = vunpack.c.h.b16 %v355
    %v1850 = vunpack.c.l.b16 %v356
    %v1851 = vunpack.c.h.b16 %v356
    %v1852 = vunpack.c.l.b16 %v357
    %v1853 = vunpack.c.h.b16 %v357
    %v1854 = vunpack.c.l.b16 %v358
    %v1855 = vunpack.c.h.b16 %v358
    %v1856 = vunpack.c.l.b16 %v359
    %v1857 = vunpack.c.h.b16 %v359
    %v1858 = vunpack.c.l.b16 %v360
    %v1859 = vunpack.c.h.b16 %v360
    %v1860 = vunpack.c.l.b16 %v361
    %v1861 = vunpack.c.h.b16 %v361
    %v1862 = vunpack.c.l.b16 %v362
    %v1863 = vunpack.c.h.b16 %v362
    %v1864 = vunpack.c.l.b16 %v363
    %v1865 = vunpack.c.h.b16 %v363
    %v1866 = vunpack.c.l.b16 %v364
    %v1867 = vunpack.c.h.b16 %v364
    %v1868 = vunpack.c.l.b16 %v365
    %v1869 = vunpack.c.h.b16 %v365
    %v1870 = vunpack.c.l.b16 %v366
    %v1871 = vunpack.c.h.b16 %v366
    %v1872 = vunpack.c.l.b16 %v367
    %v1873 = vunpack.c.h.b16 %v367
    %v1874 = vunpack.c.l.b16 %v368
    %v1875 = vunpack.c.h.b16 %v368
    %v1876 = vunpack.c.l.b16 %v369
    %v1877 = vunpack.c.h.b16 %v369
    %v1878 = vunpack.c.l.b16 %v370
    %v1879 = vunpack.c.h.b16 %v370
    %v1880 = vunpack.c.l.b16 %v371
    %v1881 = vunpack.c.h.b16 %v371
    %v1882 = vunpack.c.l.b16 %v372
    %v1883 = vunpack.c.h.b16 %v372
    %v1884 = vunpack.c.l.b16 %v373
    %v1885 = vunpack.c.h.b16 %v373
    %v1886 = vunpack.c.l.b16 %v374
    %v1887 = vunpack.c.h.b16 %v374
    %v1888 = vunpack.c.l.b16 %v375
    %v1889 = vunpack.c.h.b16 %v375
    %v1890 = vunpack.c.l.b16 %v376
    %v1891 = vunpack.c.h.b16 %v376
    %v1892 = vunpack.c.l.b16 %v377
    %v1893 = vunpack.c.h.b16 %v377
    %v1894 = vunpack.c.l.b16 %v378
    %v1895 = vunpack.c.h.b16 %v378
    %v1896 = vunpack.c.l.b16 %v379
    %v1897 = vunpack.c.h.b16 %v379
    %v1898 = vunpack.c.l.b16 %v380
    %v1899 = vunpack.c.h.b16 %v380
    %v1900 = vunpack.c.l.b16 %v381
    %v1901 = vunpack.c.h.b16 %v381
    %v1902 = vunpack.c.l.b16 %v382
    %v1903 = vunpack.c.h.b16 %v382
    %v1904 = vunpack.c.l.b16 %v383
    %v1905 = vunpack.c.h.b16 %v383
    %v1906 = vunpack.c.l.b16 %v384
    %v1907 = vunpack.c.h.b16 %v384
    %v1908 = vunpack.c.l.b16 %v385
    %v1909 = vunpack.c.h.b16 %v385
    %v1910 = vunpack.c.l.b16 %v386
    %v1911 = vunpack.c.h.b16 %v386
    %v1912 = vunpack.c.l.b16 %v387
    %v1913 = vunpack.c.h.b16 %v387
    %v1914 = vunpack.c.l.b16 %v388
    %v1915 = vunpack.c.h.b16 %v388
    %v1916 = vunpack.c.l.b16 %v389
    %v1917 = vunpack.c.h.b16 %v389
    %v1918 = vunpack.c.l.b16 %v390
    %v1919 = vunpack.c.h.b16 %v390
    %v1920 = vunpack.c.l.b16 %v391
    %v1921 = vunpack.c.h.b16 %v391
    %v1922 = vunpack.c.l.b16 %v392
    %v1923 = vunpack.c.h.b16 %v392
    %v1924 = vunpack.c.l.b16 %v393
    %v1925 = vunpack.c.h.b16 %v393
    %v1926 = vunpack.c.l.b16 %v394
    %v1927 = vunpack.c.h.b16 %v394
    %v1928 = vunpack.c.l.b16 %v395
    %v1929 = vunpack.c.h.b16 %v395
    %v1930 = vunpack.c.l.b16 %v396
    %v1931 = vunpack.c.h.b16 %v396
    %v1932 = vunpack.c.l.b16 %v397
    %v1933 = vunpack.c.h.b16 %v397
    %v1934 = vunpack.c.l.b16 %v398
    %v1935 = vunpack.c.h.b16 %v398
    %v1936 = vunpack.c.l.b16 %v399
    %v1937 = vunpack.c.h.b16 %v399
    %v1938 = vunpack.c.l.b16 %v400
    %v1939 = vunpack.c.h.b16 %v400
    %v1940 = vunpack.c.l.b16 %v401
    %v1941 = vunpack.c.h.b16 %v401
    %v1942 = vunpack.c.l.b16 %v402
    %v1943 = vunpack.c.h.b16 %v402
    %v1944 = vunpack.c.l.b16 %v403
    %v1945 = vunpack.c.h.b16 %v403
    %v1946 = vunpack.c.l.b16 %v404
    %v1947 = vunpack.c.h.b16 %v404
    %v1948 = vunpack.c.l.b16 %v405
    %v1949 = vunpack.c.h.b16 %v405
    %v1950 = vunpack.c.l.b16 %v406
    %v1951 = vunpack.c.h.b16 %v406
    %v1952 = vunpack.c.l.b16 %v407
    %v1953 = vunpack.c.h.b16 %v407
    %v1954 = vunpack.c.l.b16 %v408
    %v1955 = vunpack.c.h.b16 %v408
    %v1956 = vunpack.c.l.b16 %v409
    %v1957 = vunpack.c.h.b16 %v409
    %v1958 = vunpack.c.l.b16 %v410
    %v1959 = vunpack.c.h.b16 %v410
    %v1960 = vunpack.c.l.b16 %v411
    %v1961 = vunpack.c.h.b16 %v411
    %v1962 = vunpack.c.l.b16 %v412
    %v1963 = vunpack.c.h.b16 %v412
    %v1964 = vunpack.c.l.b16 %v413
    %v1965 = vunpack.c.h.b16 %v413
    %v1966 = vunpack.c.l.b16 %v414
    %v1967 = vunpack.c.h.b16 %v414
    %v1968 = vunpack.c.l.b16 %v415
    %v1969 = vunpack.c.h.b16 %v415
    %v1970 = vunpack.c.l.b16 %v416
    %v1971 = vunpack.c.h.b16 %v416
    %v1972 = vunpack.c.l.b16 %v417
    %v1973 = vunpack.c.h.b16 %v417
    %v1974 = vunpack.c.l.b16 %v418
    %v1975 = vunpack.c.h.b16 %v418
    %v1976 = vunpack.c.l.b16 %v419
    %v1977 = vunpack.c.h.b16 %v419
    %v1978 = vunpack.c.l.b16 %v420
    %v1979 = vunpack.c.h.b16 %v420
    %v1980 = vunpack.c.l.b16 %v421
    %v1981 = vunpack.c.h.b16 %v421
    %v1982 = vunpack.c.l.b16 %v422
    %v1983 = vunpack.c.h.b16 %v422
    %v1984 = vunpack.c.l.b16 %v423
    %v1985 = vunpack.c.h.b16 %v423
    %v1986 = vunpack.c.l.b16 %v424
    %v1987 = vunpack.c.h.b16 %v424
    %v1988 = vunpack.c.l.b16 %v425
    %v1989 = vunpack.c.h.b16 %v425
    %v1990 = vunpack.c.l.b16 %v426
    %v1991 = vunpack.c.h.b16 %v426
    %v1992 = vunpack.c.l.b16 %v427
    %v1993 = vunpack.c.h.b16 %v427
    %v1994 = vunpack.c.l.b16 %v428
    %v1995 = vunpack.c.h.b16 %v428
    %v1996 = vunpack.c.l.b16 %v429
    %v1997 = vunpack.c.h.b16 %v429
    %v1998 = vunpack.c.l.b16 %v430
    %v1999 = vunpack.c.h.b16 %v430
    %v2000 = vunpack.c.l.b16 %v431
    %v2001 = vunpack.c.h.b16 %v431
    %v2002 = vunpack.c.l.b16 %v432
    %v2003 = vunpack.c.h.b16 %v432
    %v2004 = vunpack.c.l.b16 %v433
    %v2005 = vunpack.c.h.b16 %v433
    %v2006 = vunpack.c.l.b16 %v434
    %v2007 = vunpack.c.h.b16 %v434
    %v2008 = vunpack.c.l.b16 %v435
    %v2009 = vunpack.c.h.b16 %v435
    %v2010 = vunpack.c.l.b16 %v436
    %v2011 = vunpack.c.h.b16 %v436
    %v2012 = vunpack.c.l.b16 %v437
    %v2013 = vunpack.c.h.b16 %v437
    %v2014 = vunpack.c.l.b16 %v438
    %v2015 = vunpack.c.h.b16 %v438
    %v2016 = vunpack.c.l.b16 %v439
    %v2017 = vunpack.c.h.b16 %v439
    %v2018 = vunpack.c.l.b16 %v440
    %v2019 = vunpack.c.h.b16 %v440
    %v2020 = vunpack.c.l.b16 %v441
    %v2021 = vunpack.c.h.b16 %v441
    %v2022 = vunpack.c.l.b16 %v442
    %v2023 = vunpack.c.h.b16 %v442
    %v2024 = vunpack.c.l.b16 %v443
    %v2025 = vunpack.c.h.b16 %v443
    %v2026 = vunpack.c.l.b16 %v444
    %v2027 = vunpack.c.h.b16 %v444
    %v2028 = vunpack.c.l.b16 %v445
    %v2029 = vunpack.c.h.b16 %v445
    %v2030 = vunpack.c.l.b16 %v446
    %v2031 = vunpack.c.h.b16 %v446
    %v2032 = vunpack.c.l.b16 %v447
    %v2033 = vunpack.c.h.b16 %v447
    %v2034 = vunpack.c.l.b16 %v448
    %v2035 = vunpack.c.h.b16 %v448
    %v2036 = vunpack.c.l.b16 %v449
    %v2037 = vunpack.c.h.b16 %v449
    %v2038 = vunpack.c.l.b16 %v450
    %v2039 = vunpack.c.h.b16 %v450
    %v2040 = vunpack.c.l.b16 %v451
    %v2041 = vunpack.c.h.b16 %v451
    %v2042 = vunpack.c.l.b16 %v452
    %v2043 = vunpack.c.h.b16 %v452
    %v2044 = vunpack.c.l.b16 %v453
    %v2045 = vunpack.c.h.b16 %v453
    %v2046 = vunpack.c.l.b16 %v454
    %v2047 = vunpack.c.h.b16 %v454
    %v2048 = vunpack.c.l.b16 %v455
    %v2049 = vunpack.c.h.b16 %v455
    %v2050 = vunpack.c.l.b16 %v456
    %v2051 = vunpack.c.h.b16 %v456
    %v2052 = vunpack.c.l.b16 %v457
    %v2053 = vunpack.c.h.b16 %v457
    %v2054 = vunpack.c.l.b16 %v458
    %v2055 = vunpack.c.h.b16 %v458
    %v2056 = vunpack.c.l.b16 %v459
    %v2057 = vunpack.c.h.b16 %v459
    %v2058 = vunpack.c.l.b16 %v460
    %v2059 = vunpack.c.h.b16 %v460
    %v2060 = vunpack.c.l.b16 %v461
    %v2061 = vunpack.c.h.b16 %v461
    %v2062 = vunpack.c.l.b16 %v462
    %v2063 = vunpack.c.h.b16 %v462
    %v2064 = vunpack.c.l.b16 %v463
    %v2065 = vunpack.c.h.b16 %v463
    %v2066 = vunpack.c.l.b16 %v464
    %v2067 = vunpack.c.h.b16 %v464
    %v2068 = vunpack.c.l.b16 %v465
    %v2069 = vunpack.c.h.b16 %v465
    %v2070 = vunpack.c.l.b16 %v466
    %v2071 = vunpack.c.h.b16 %v466
    %v2072 = vunpack.c.l.b16 %v467
    %v2073 = vunpack.c.h.b16 %v467
    %v2074 = vunpack.c.l.b16 %v468
    %v2075 = vunpack.c.h.b16 %v468
    %v2076 = vunpack.c.l.b16 %v469
    %v2077 = vunpack.c.h.b16 %v469
    %v2078 = vunpack.c.l.b16 %v470
    %v2079 = vunpack.c.h.b16 %v470
    %v2080 = vunpack.c.l.b16 %v471
    %v2081 = vunpack.c.h.b16 %v471
    %v2082 = vunpack.c.l.b16 %v472
    %v2083 = vunpack.c.h.b16 %v472
    %v2084 = vunpack.c.l.b16 %v473
    %v2085 = vunpack.c.h.b16 %v473
    %v2086 = vunpack.c.l.b16 %v474
    %v2087 = vunpack.c.h.b16 %v474
    %v2088 = vunpack.c.l.b16 %v475
    %v2089 = vunpack.c.h.b16 %v475
    %v2090 = vunpack.c.l.b16 %v476
    %v2091 = vunpack.c.h.b16 %v476
    %v2092 = vunpack.c.l.b16 %v477
    %v2093 = vunpack.c.h.b16 %v477
    %v2094 = vunpack.c.l.b16 %v478
    %v2095 = vunpack.c.h.b16 %v478
    %v2096 = vunpack.c.l.b16 %v479
    %v2097 = vunpack.c.h.b16 %v479
    %v2098 = vunpack.c.l.b16 %v480
    %v2099 = vunpack.c.h.b16 %v480
    %v2100 = vunpack.c.l.b16 %v481
    %v2101 = vunpack.c.h.b16 %v481
    %v2102 = vunpack.c.l.b16 %v482
    %v2103 = vunpack.c.h.b16 %v482
    %v2104 = vunpack.c.l.b16 %v483
    %v2105 = vunpack.c.h.b16 %v483
    %v2106 = vunpack.c.l.b16 %v484
    %v2107 = vunpack.c.h.b16 %v484
    %v2108 = vunpack.c.l.b16 %v485
    %v2109 = vunpack.c.h.b16 %v485
    %v2110 = vunpack.c.l.b16 %v486
    %v2111 = vunpack.c.h.b16 %v486
    %v2112 = vunpack.c.l.b16 %v487
    %v2113 = vunpack.c.h.b16 %v487
    %v2114 = vunpack.c.l.b16 %v488
    %v2115 = vunpack.c.h.b16 %v488
    %v2116 = vunpack.c.l.b16 %v489
    %v2117 = vunpack.c.h.b16 %v489
    %v2118 = vunpack.c.l.b16 %v490
    %v2119 = vunpack.c.h.b16 %v490
    %v2120 = vunpack.c.l.b16 %v491
    %v2121 = vunpack.c.h.b16 %v491
    %v2122 = vunpack.c.l.b16 %v492
    %v2123 = vunpack.c.h.b16 %v492
    %v2124 = vunpack.c.l.b16 %v493
    %v2125 = vunpack.c.h.b16 %v493
    %v2126 = vunpack.c.l.b16 %v494
    %v2127 = vunpack.c.h.b16 %v494
    %v2128 = vunpack.c.l.b16 %v495
    %v2129 = vunpack.c.h.b16 %v495
    %v2130 = vunpack.c.l.b16 %v496
    %v2131 = vunpack.c.h.b16 %v496
    %v2132 = vunpack.c.l.b16 %v497
    %v2133 = vunpack.c.h.b16 %v497
    %v2134 = vunpack.c.l.b16 %v498
    %v2135 = vunpack.c.h.b16 %v498
    %v2136 = vunpack.c.l.b16 %v499
    %v2137 = vunpack.c.h.b16 %v499
    %v2138 = vunpack.c.l.b16 %v500
    %v2139 = vunpack.c.h.b16 %v500
    %v2140 = vunpack.c.l.b16 %v501
    %v2141 = vunpack.c.h.b16 %v501
    %v2142 = vunpack.c.l.b16 %v502
    %v2143 = vunpack.c.h.b16 %v502
    %v2144 = vunpack.c.l.b16 %v503
    %v2145 = vunpack.c.h.b16 %v503
    %v2146 = vunpack.c.l.b16 %v504
    %v2147 = vunpack.c.h.b16 %v504
    %v2148 = vunpack.c.l.b16 %v505
    %v2149 = vunpack.c.h.b16 %v505
    %v2150 = vunpack.c.l.b16 %v506
    %v2151 = vunpack.c.h.b16 %v506
    %v2152 = vunpack.c.l.b16 %v507
    %v2153 = vunpack.c.h.b16 %v507
    %v2154 = vunpack.c.l.b16 %v508
    %v2155 = vunpack.c.h.b16 %v508
    %v2156 = vunpack.c.l.b16 %v509
    %v2157 = vunpack.c.h.b16 %v509
    %v2158 = vunpack.c.l.b16 %v510
    %v2159 = vunpack.c.h.b16 %v510
    %v2160 = vunpack.c.l.b16 %v511
    %v2161 = vunpack.c.h.b16 %v511
    %v2162 = vunpack.c.l.b16 %v512
    %v2163 = vunpack.c.h.b16 %v512
    %v2164 = vunpack.c.l.b16 %v513
    %v2165 = vunpack.c.h.b16 %v513
    %v2166 = vunpack.c.l.b16 %v514
    %v2167 = vunpack.c.h.b16 %v514
    %v2168 = vunpack.c.l.b16 %v515
    %v2169 = vunpack.c.h.b16 %v515
    %v2170 = vunpack.c.l.b16 %v516
    %v2171 = vunpack.c.h.b16 %v516
    %v2172 = vunpack.c.l.b16 %v517
    %v2173 = vunpack.c.h.b16 %v517
    %v2174 = vunpack.c.l.b16 %v518
    %v2175 = vunpack.c.h.b16 %v518
    %v2176 = vunpack.c.l.b16 %v519
    %v2177 = vunpack.c.h.b16 %v519
    %v2178 = vunpack.c.l.b16 %v520
    %v2179 = vunpack.c.h.b16 %v520
    %v2180 = vunpack.c.l.b16 %v521
    %v2181 = vunpack.c.h.b16 %v521
    %v2182 = vunpack.c.l.b16 %v522
    %v2183 = vunpack.c.h.b16 %v522
    %v2184 = vunpack.c.l.b16 %v523
    %v2185 = vunpack.c.h.b16 %v523
    %v2186 = vunpack.c.l.b16 %v524
    %v2187 = vunpack.c.h.b16 %v524
    %v2188 = vunpack.c.l.b16 %v525
    %v2189 = vunpack.c.h.b16 %v525
    %v2190 = vunpack.c.l.b16 %v526
    %v2191 = vunpack.c.h.b16 %v526
    %v2192 = vunpack.c.l.b16 %v527
    %v2193 = vunpack.c.h.b16 %v527
    %v2194 = vunpack.c.l.b16 %v528
    %v2195 = vunpack.c.h.b16 %v528
    %v2196 = vunpack.c.l.b16 %v529
    %v2197 = vunpack.c.h.b16 %v529
    %v2198 = vunpack.c.l.b16 %v530
    %v2199 = vunpack.c.h.b16 %v530
    %v2200 = vunpack.c.l.b16 %v531
    %v2201 = vunpack.c.h.b16 %v531
    %v2202 = vunpack.c.l.b16 %v532
    %v2203 = vunpack.c.h.b16 %v532
    %v2204 = vunpack.c.l.b16 %v533
    %v2205 = vunpack.c.h.b16 %v533
    %v2206 = vunpack.c.l.b16 %v534
    %v2207 = vunpack.c.h.b16 %v534
    %v2208 = vunpack.c.l.b16 %v535
    %v2209 = vunpack.c.h.b16 %v535
    %v2210 = vpack.c.b16 %v1190, %v1186
    %v2211 = vpack.c.b16 %v1191, %v1187
    %v2212 = vpack.c.b16 %v1192, %v1188
    %v2213 = vpack.c.b16 %v1193, %v1189
    %v2214 = vpack.c.b16 %v1198, %v1194
    %v2215 = vpack.c.b16 %v1199, %v1195
    %v2216 = vpack.c.b16 %v1200, %v1196
    %v2217 = vpack.c.b16 %v1201, %v1197
    %v2218 = vpack.c.b16 %v1206, %v1202
    %v2219 = vpack.c.b16 %v1207, %v1203
    %v2220 = vpack.c.b16 %v1208, %v1204
    %v2221 = vpack.c.b16 %v1209, %v1205
    %v2222 = vpack.c.b16 %v1214, %v1210
    %v2223 = vpack.c.b16 %v1215, %v1211
    %v2224 = vpack.c.b16 %v1216, %v1212
    %v2225 = vpack.c.b16 %v1217, %v1213
    %v2226 = vpack.c.b16 %v1222, %v1218
    %v2227 = vpack.c.b16 %v1223, %v1219
    %v2228 = vpack.c.b16 %v1224, %v1220
    %v2229 = vpack.c.b16 %v1225, %v1221
    %v2230 = vpack.c.b16 %v1230, %v1226
    %v2231 = vpack.c.b16 %v1231, %v1227
    %v2232 = vpack.c.b16 %v1232, %v1228
    %v2233 = vpack.c.b16 %v1233, %v1229
    %v2234 = vpack.c.b16 %v1238, %v1234
    %v2235 = vpack.c.b16 %v1239, %v1235
    %v2236 = vpack.c.b16 %v1240, %v1236
    %v2237 = vpack.c.b16 %v1241, %v1237
    %v2238 = vpack.c.b16 %v1246, %v1242
    %v2239 = vpack.c.b16 %v1247, %v1243
    %v2240 = vpack.c.b16 %v1248, %v1244
    %v2241 = vpack.c.b16 %v1249, %v1245
    %v2242 = vpack.c.b16 %v1254, %v1250
    %v2243 = vpack.c.b16 %v1255, %v1251
    %v2244 = vpack.c.b16 %v1256, %v1252
    %v2245 = vpack.c.b16 %v1257, %v1253
    %v2246 = vpack.c.b16 %v1262, %v1258
    %v2247 = vpack.c.b16 %v1263, %v1259
    %v2248 = vpack.c.b16 %v1264, %v1260
    %v2249 = vpack.c.b16 %v1265, %v1261
    %v2250 = vpack.c.b16 %v1270, %v1266
    %v2251 = vpack.c.b16 %v1271, %v1267
    %v2252 = vpack.c.b16 %v1272, %v1268
    %v2253 = vpack.c.b16 %v1273, %v1269
    %v2254 = vpack.c.b16 %v1278, %v1274
    %v2255 = vpack.c.b16 %v1279, %v1275
    %v2256 = vpack.c.b16 %v1280, %v1276
    %v2257 = vpack.c.b16 %v1281, %v1277
    %v2258 = vpack.c.b16 %v1286, %v1282
    %v2259 = vpack.c.b16 %v1287, %v1283
    %v2260 = vpack.c.b16 %v1288, %v1284
    %v2261 = vpack.c.b16 %v1289, %v1285
    %v2262 = vpack.c.b16 %v1294, %v1290
    %v2263 = vpack.c.b16 %v1295, %v1291
    %v2264 = vpack.c.b16 %v1296, %v1292
    %v2265 = vpack.c.b16 %v1297, %v1293
    %v2266 = vpack.c.b16 %v1302, %v1298
    %v2267 = vpack.c.b16 %v1303, %v1299
    %v2268 = vpack.c.b16 %v1304, %v1300
    %v2269 = vpack.c.b16 %v1305, %v1301
    %v2270 = vpack.c.b16 %v1310, %v1306
    %v2271 = vpack.c.b16 %v1311, %v1307
    %v2272 = vpack.c.b16 %v1312, %v1308
    %v2273 = vpack.c.b16 %v1313, %v1309
    %v2274 = vpack.c.b16 %v1318, %v1314
    %v2275 = vpack.c.b16 %v1319, %v1315
    %v2276 = vpack.c.b16 %v1320, %v1316
    %v2277 = vpack.c.b16 %v1321, %v1317
    %v2278 = vpack.c.b16 %v1326, %v1322
    %v2279 = vpack.c.b16 %v1327, %v1323
    %v2280 = vpack.c.b16 %v1328, %v1324
    %v2281 = vpack.c.b16 %v1329, %v1325
    %v2282 = vpack.c.b16 %v1334, %v1330
    %v2283 = vpack.c.b16 %v1335, %v1331
    %v2284 = vpack.c.b16 %v1336, %v1332
    %v2285 = vpack.c.b16 %v1337, %v1333
    %v2286 = vpack.c.b16 %v1342, %v1338
    %v2287 = vpack.c.b16 %v1343, %v1339
    %v2288 = vpack.c.b16 %v1344, %v1340
    %v2289 = vpack.c.b16 %v1345, %v1341
    %v2290 = vpack.c.b16 %v1350, %v1346
    %v2291 = vpack.c.b16 %v1351, %v1347
    %v2292 = vpack.c.b16 %v1352, %v1348
    %v2293 = vpack.c.b16 %v1353, %v1349
    %v2294 = vpack.c.b16 %v1358, %v1354
    %v2295 = vpack.c.b16 %v1359, %v1355
    %v2296 = vpack.c.b16 %v1360, %v1356
    %v2297 = vpack.c.b16 %v1361, %v1357
    %v2298 = vpack.c.b16 %v1366, %v1362
    %v2299 = vpack.c.b16 %v1367, %v1363
    %v2300 = vpack.c.b16 %v1368, %v1364
    %v2301 = vpack.c.b16 %v1369, %v1365
    %v2302 = vpack.c.b16 %v1374, %v1370
    %v2303 = vpack.c.b16 %v1375, %v1371
    %v2304 = vpack.c.b16 %v1376, %v1372
    %v2305 = vpack.c.b16 %v1377, %v1373
    %v2306 = vpack.c.b16 %v1382, %v1378
    %v2307 = vpack.c.b16 %v1383, %v1379
    %v2308 = vpack.c.b16 %v1384, %v1380
    %v2309 = vpack.c.b16 %v1385, %v1381
    %v2310 = vpack.c.b16 %v1390, %v1386
    %v2311 = vpack.c.b16 %v1391, %v1387
    %v2312 = vpack.c.b16 %v1392, %v1388
    %v2313 = vpack.c.b16 %v1393, %v1389
    %v2314 = vpack.c.b16 %v1398, %v1394
    %v2315 = vpack.c.b16 %v1399, %v1395
    %v2316 = vpack.c.b16 %v1400, %v1396
    %v2317 = vpack.c.b16 %v1401, %v1397
    %v2318 = vpack.c.b16 %v1406, %v1402
    %v2319 = vpack.c.b16 %v1407, %v1403
    %v2320 = vpack.c.b16 %v1408, %v1404
    %v2321 = vpack.c.b16 %v1409, %v1405
    %v2322 = vpack.c.b16 %v1414, %v1410
    %v2323 = vpack.c.b16 %v1415, %v1411
    %v2324 = vpack.c.b16 %v1416, %v1412
    %v2325 = vpack.c.b16 %v1417, %v1413
    %v2326 = vpack.c.b16 %v1422, %v1418
    %v2327 = vpack.c.b16 %v1423, %v1419
    %v2328 = vpack.c.b16 %v1424, %v1420
    %v2329 = vpack.c.b16 %v1425, %v1421
    %v2330 = vpack.c.b16 %v1430, %v1426
    %v2331 = vpack.c.b16 %v1431, %v1427
    %v2332 = vpack.c.b16 %v1432, %v1428
    %v2333 = vpack.c.b16 %v1433, %v1429
    %v2334 = vpack.c.b16 %v1438, %v1434
    %v2335 = vpack.c.b16 %v1439, %v1435
    %v2336 = vpack.c.b16 %v1440, %v1436
    %v2337 = vpack.c.b16 %v1441, %v1437
    %v2338 = vpack.c.b16 %v1446, %v1442
    %v2339 = vpack.c.b16 %v1447, %v1443
    %v2340 = vpack.c.b16 %v1448, %v1444
    %v2341 = vpack.c.b16 %v1449, %v1445
    %v2342 = vpack.c.b16 %v1454, %v1450
    %v2343 = vpack.c.b16 %v1455, %v1451
    %v2344 = vpack.c.b16 %v1456, %v1452
    %v2345 = vpack.c.b16 %v1457, %v1453
    %v2346 = vpack.c.b16 %v1462, %v1458
    %v2347 = vpack.c.b16 %v1463, %v1459
    %v2348 = vpack.c.b16 %v1464, %v1460
    %v2349 = vpack.c.b16 %v1465, %v1461
    %v2350 = vpack.c.b16 %v1470, %v1466
    %v2351 = vpack.c.b16 %v1471, %v1467
    %v2352 = vpack.c.b16 %v1472, %v1468
    %v2353 = vpack.c.b16 %v1473, %v1469
    %v2354 = vpack.c.b16 %v1478, %v1474
    %v2355 = vpack.c.b16 %v1479, %v1475
    %v2356 = vpack.c.b16 %v1480, %v1476
    %v2357 = vpack.c.b16 %v1481, %v1477
    %v2358 = vpack.c.b16 %v1486, %v1482
    %v2359 = vpack.c.b16 %v1487, %v1483
    %v2360 = vpack.c.b16 %v1488, %v1484
    %v2361 = vpack.c.b16 %v1489, %v1485
    %v2362 = vpack.c.b16 %v1494, %v1490
    %v2363 = vpack.c.b16 %v1495, %v1491
    %v2364 = vpack.c.b16 %v1496, %v1492
    %v2365 = vpack.c.b16 %v1497, %v1493
    %v2366 = vpack.c.b16 %v1502, %v1498
    %v2367 = vpack.c.b16 %v1503, %v1499
    %v2368 = vpack.c.b16 %v1504, %v1500
    %v2369 = vpack.c.b16 %v1505, %v1501
    %v2370 = vpack.c.b16 %v1510, %v1506
    %v2371 = vpack.c.b16 %v1511, %v1507
    %v2372 = vpack.c.b16 %v1512, %v1508
    %v2373 = vpack.c.b16 %v1513, %v1509
    %v2374 = vpack.c.b16 %v1518, %v1514
    %v2375 = vpack.c.b16 %v1519, %v1515
    %v2376 = vpack.c.b16 %v1520, %v1516
    %v2377 = vpack.c.b16 %v1521, %v1517
    %v2378 = vpack.c.b16 %v1526, %v1522
    %v2379 = vpack.c.b16 %v1527, %v1523
    %v2380 = vpack.c.b16 %v1528, %v1524
    %v2381 = vpack.c.b16 %v1529, %v1525
    %v2382 = vpack.c.b16 %v1534, %v1530
    %v2383 = vpack.c.b16 %v1535, %v1531
    %v2384 = vpack.c.b16 %v1536, %v1532
    %v2385 = vpack.c.b16 %v1537, %v1533
    %v2386 = vpack.c.b16 %v1542, %v1538
    %v2387 = vpack.c.b16 %v1543, %v1539
    %v2388 = vpack.c.b16 %v1544, %v1540
    %v2389 = vpack.c.b16 %v1545, %v1541
    %v2390 = vpack.c.b16 %v1550, %v1546
    %v2391 = vpack.c.b16 %v1551, %v1547
    %v2392 = vpack.c.b16 %v1552, %v1548
    %v2393 = vpack.c.b16 %v1553, %v1549
    %v2394 = vpack.c.b16 %v1558, %v1554
    %v2395 = vpack.c.b16 %v1559, %v1555
    %v2396 = vpack.c.b16 %v1560, %v1556
    %v2397 = vpack.c.b16 %v1561, %v1557
    %v2398 = vpack.c.b16 %v1566, %v1562
    %v2399 = vpack.c.b16 %v1567, %v1563
    %v2400 = vpack.c.b16 %v1568, %v1564
    %v2401 = vpack.c.b16 %v1569, %v1565
    %v2402 = vpack.c.b16 %v1574, %v1570
    %v2403 = vpack.c.b16 %v1575, %v1571
    %v2404 = vpack.c.b16 %v1576, %v1572
    %v2405 = vpack.c.b16 %v1577, %v1573
    %v2406 = vpack.c.b16 %v1582, %v1578
    %v2407 = vpack.c.b16 %v1583, %v1579
    %v2408 = vpack.c.b16 %v1584, %v1580
    %v2409 = vpack.c.b16 %v1585, %v1581
    %v2410 = vpack.c.b16 %v1590, %v1586
    %v2411 = vpack.c.b16 %v1591, %v1587
    %v2412 = vpack.c.b16 %v1592, %v1588
    %v2413 = vpack.c.b16 %v1593, %v1589
    %v2414 = vpack.c.b16 %v1598, %v1594
    %v2415 = vpack.c.b16 %v1599, %v1595
    %v2416 = vpack.c.b16 %v1600, %v1596
    %v2417 = vpack.c.b16 %v1601, %v1597
    %v2418 = vpack.c.b16 %v1606, %v1602
    %v2419 = vpack.c.b16 %v1607, %v1603
    %v2420 = vpack.c.b16 %v1608, %v1604
    %v2421 = vpack.c.b16 %v1609, %v1605
    %v2422 = vpack.c.b16 %v1614, %v1610
    %v2423 = vpack.c.b16 %v1615, %v1611
    %v2424 = vpack.c.b16 %v1616, %v1612
    %v2425 = vpack.c.b16 %v1617, %v1613
    %v2426 = vpack.c.b16 %v1622, %v1618
    %v2427 = vpack.c.b16 %v1623, %v1619
    %v2428 = vpack.c.b16 %v1624, %v1620
    %v2429 = vpack.c.b16 %v1625, %v1621
    %v2430 = vpack.c.b16 %v1630, %v1626
    %v2431 = vpack.c.b16 %v1631, %v1627
    %v2432 = vpack.c.b16 %v1632, %v1628
    %v2433 = vpack.c.b16 %v1633, %v1629
    %v2434 = vpack.c.b16 %v1638, %v1634
    %v2435 = vpack.c.b16 %v1639, %v1635
    %v2436 = vpack.c.b16 %v1640, %v1636
    %v2437 = vpack.c.b16 %v1641, %v1637
    %v2438 = vpack.c.b16 %v1646, %v1642
    %v2439 = vpack.c.b16 %v1647, %v1643
    %v2440 = vpack.c.b16 %v1648, %v1644
    %v2441 = vpack.c.b16 %v1649, %v1645
    %v2442 = vpack.c.b16 %v1654, %v1650
    %v2443 = vpack.c.b16 %v1655, %v1651
    %v2444 = vpack.c.b16 %v1656, %v1652
    %v2445 = vpack.c.b16 %v1657, %v1653
    %v2446 = vpack.c.b16 %v1662, %v1658
    %v2447 = vpack.c.b16 %v1663, %v1659
    %v2448 = vpack.c.b16 %v1664, %v1660
    %v2449 = vpack.c.b16 %v1665, %v1661
    %v2450 = vpack.c.b16 %v1670, %v1666
    %v2451 = vpack.c.b16 %v1671, %v1667
    %v2452 = vpack.c.b16 %v1672, %v1668
    %v2453 = vpack.c.b16 %v1673, %v1669
    %v2454 = vpack.c.b16 %v1678, %v1674
    %v2455 = vpack.c.b16 %v1679, %v1675
    %v2456 = vpack.c.b16 %v1680, %v1676
    %v2457 = vpack.c.b16 %v1681, %v1677
    %v2458 = vpack.c.b16 %v1686, %v1682
    %v2459 = vpack.c.b16 %v1687, %v1683
    %v2460 = vpack.c.b16 %v1688, %v1684
    %v2461 = vpack.c.b16 %v1689, %v1685
    %v2462 = vpack.c.b16 %v1694, %v1690
    %v2463 = vpack.c.b16 %v1695, %v1691
    %v2464 = vpack.c.b16 %v1696, %v1692
    %v2465 = vpack.c.b16 %v1697, %v1693
    %v2466 = vpack.c.b16 %v1702, %v1698
    %v2467 = vpack.c.b16 %v1703, %v1699
    %v2468 = vpack.c.b16 %v1704, %v1700
    %v2469 = vpack.c.b16 %v1705, %v1701
    %v2470 = vpack.c.b16 %v1710, %v1706
    %v2471 = vpack.c.b16 %v1711, %v1707
    %v2472 = vpack.c.b16 %v1712, %v1708
    %v2473 = vpack.c.b16 %v1713, %v1709
    %v2474 = vpack.c.b16 %v1718, %v1714
    %v2475 = vpack.c.b16 %v1719, %v1715
    %v2476 = vpack.c.b16 %v1720, %v1716
    %v2477 = vpack.c.b16 %v1721, %v1717
    %v2478 = vpack.c.b16 %v1726, %v1722
    %v2479 = vpack.c.b16 %v1727, %v1723
    %v2480 = vpack.c.b16 %v1728, %v1724
    %v2481 = vpack.c.b16 %v1729, %v1725
    %v2482 = vpack.c.b16 %v1734, %v1730
    %v2483 = vpack.c.b16 %v1735, %v1731
    %v2484 = vpack.c.b16 %v1736, %v1732
    %v2485 = vpack.c.b16 %v1737, %v1733
    %v2486 = vpack.c.b16 %v1742, %v1738
    %v2487 = vpack.c.b16 %v1743, %v1739
    %v2488 = vpack.c.b16 %v1744, %v1740
    %v2489 = vpack.c.b16 %v1745, %v1741
    %v2490 = vpack.c.b16 %v1750, %v1746
    %v2491 = vpack.c.b16 %v1751, %v1747
    %v2492 = vpack.c.b16 %v1752, %v1748
    %v2493 = vpack.c.b16 %v1753, %v1749
    %v2494 = vpack.c.b16 %v1758, %v1754
    %v2495 = vpack.c.b16 %v1759, %v1755
    %v2496 = vpack.c.b16 %v1760, %v1756
    %v2497 = vpack.c.b16 %v1761, %v1757
    %v2498 = vpack.c.b16 %v1766, %v1762
    %v2499 = vpack.c.b16 %v1767, %v1763
    %v2500 = vpack.c.b16 %v1768, %v1764
    %v2501 = vpack.c.b16 %v1769, %v1765
    %v2502 = vpack.c.b16 %v1774, %v1770
    %v2503 = vpack.c.b16 %v1775, %v1771
    %v2504 = vpack.c.b16 %v1776, %v1772
    %v2505 = vpack.c.b16 %v1777, %v1773
    %v2506 = vpack.c.b16 %v1782, %v1778
    %v2507 = vpack.c.b16 %v1783, %v1779
    %v2508 = vpack.c.b16 %v1784, %v1780
    %v2509 = vpack.c.b16 %v1785, %v1781
    %v2510 = vpack.c.b16 %v1790, %v1786
    %v2511 = vpack.c.b16 %v1791, %v1787
    %v2512 = vpack.c.b16 %v1792, %v1788
    %v2513 = vpack.c.b16 %v1793, %v1789
    %v2514 = vpack.c.b16 %v1798, %v1794
    %v2515 = vpack.c.b16 %v1799, %v1795
    %v2516 = vpack.c.b16 %v1800, %v1796
    %v2517 = vpack.c.b16 %v1801, %v1797
    %v2518 = vpack.c.b16 %v1806, %v1802
    %v2519 = vpack.c.b16 %v1807, %v1803
    %v2520 = vpack.c.b16 %v1808, %v1804
    %v2521 = vpack.c.b16 %v1809, %v1805
    %v2522 = vpack.c.b16 %v1814, %v1810
    %v2523 = vpack.c.b16 %v1815, %v1811
    %v2524 = vpack.c.b16 %v1816, %v1812
    %v2525 = vpack.c.b16 %v1817, %v1813
    %v2526 = vpack.c.b16 %v1822, %v1818
    %v2527 = vpack.c.b16 %v1823, %v1819
    %v2528 = vpack.c.b16 %v1824, %v1820
    %v2529 = vpack.c.b16 %v1825, %v1821
    %v2530 = vpack.c.b16 %v1830, %v1826
    %v2531 = vpack.c.b16 %v1831, %v1827
    %v2532 = vpack.c.b16 %v1832, %v1828
    %v2533 = vpack.c.b16 %v1833, %v1829
    %v2534 = vpack.c.b16 %v1838, %v1834
    %v2535 = vpack.c.b16 %v1839, %v1835
    %v2536 = vpack.c.b16 %v1840, %v1836
    %v2537 = vpack.c.b16 %v1841, %v1837
    %v2538 = vpack.c.b16 %v1846, %v1842
    %v2539 = vpack.c.b16 %v1847, %v1843
    %v2540 = vpack.c.b16 %v1848, %v1844
    %v2541 = vpack.c.b16 %v1849, %v1845
    %v2542 = vpack.c.b16 %v1854, %v1850
    %v2543 = vpack.c.b16 %v1855, %v1851
    %v2544 = vpack.c.b16 %v1856, %v1852
    %v2545 = vpack.c.b16 %v1857, %v1853
    %v2546 = vpack.c.b16 %v1862, %v1858
    %v2547 = vpack.c.b16 %v1863, %v1859
    %v2548 = vpack.c.b16 %v1864, %v1860
    %v2549 = vpack.c.b16 %v1865, %v1861
    %v2550 = vpack.c.b16 %v1870, %v1866
    %v2551 = vpack.c.b16 %v1871, %v1867
    %v2552 = vpack.c.b16 %v1872, %v1868
    %v2553 = vpack.c.b16 %v1873, %v1869
    %v2554 = vpack.c.b16 %v1878, %v1874
    %v2555 = vpack.c.b16 %v1879, %v1875
    %v2556 = vpack.c.b16 %v1880, %v1876
    %v2557 = vpack.c.b16 %v1881, %v1877
    %v2558 = vpack.c.b16 %v1886, %v1882
    %v2559 = vpack.c.b16 %v1887, %v1883
    %v2560 = vpack.c.b16 %v1888, %v1884
    %v2561 = vpack.c.b16 %v1889, %v1885
    %v2562 = vpack.c.b16 %v1894, %v1890
    %v2563 = vpack.c.b16 %v1895, %v1891
    %v2564 = vpack.c.b16 %v1896, %v1892
    %v2565 = vpack.c.b16 %v1897, %v1893
    %v2566 = vpack.c.b16 %v1902, %v1898
    %v2567 = vpack.c.b16 %v1903, %v1899
    %v2568 = vpack.c.b16 %v1904, %v1900
    %v2569 = vpack.c.b16 %v1905, %v1901
    %v2570 = vpack.c.b16 %v1910, %v1906
    %v2571 = vpack.c.b16 %v1911, %v1907
    %v2572 = vpack.c.b16 %v1912, %v1908
    %v2573 = vpack.c.b16 %v1913, %v1909
    %v2574 = vpack.c.b16 %v1918, %v1914
    %v2575 = vpack.c.b16 %v1919, %v1915
    %v2576 = vpack.c.b16 %v1920, %v1916
    %v2577 = vpack.c.b16 %v1921, %v1917
    %v2578 = vpack.c.b16 %v1926, %v1922
    %v2579 = vpack.c.b16 %v1927, %v1923
    %v2580 = vpack.c.b16 %v1928, %v1924
    %v2581 = vpack.c.b16 %v1929, %v1925
    %v2582 = vpack.c.b16 %v1934, %v1930
    %v2583 = vpack.c.b16 %v1935, %v1931
    %v2584 = vpack.c.b16 %v1936, %v1932
    %v2585 = vpack.c.b16 %v1937, %v1933
    %v2586 = vpack.c.b16 %v1942, %v1938
    %v2587 = vpack.c.b16 %v1943, %v1939
    %v2588 = vpack.c.b16 %v1944, %v1940
    %v2589 = vpack.c.b16 %v1945, %v1941
    %v2590 = vpack.c.b16 %v1950, %v1946
    %v2591 = vpack.c.b16 %v1951, %v1947
    %v2592 = vpack.c.b16 %v1952, %v1948
    %v2593 = vpack.c.b16 %v1953, %v1949
    %v2594 = vpack.c.b16 %v1958, %v1954
    %v2595 = vpack.c.b16 %v1959, %v1955
    %v2596 = vpack.c.b16 %v1960, %v1956
    %v2597 = vpack.c.b16 %v1961, %v1957
    %v2598 = vpack.c.b16 %v1966, %v1962
    %v2599 = vpack.c.b16 %v1967, %v1963
    %v2600 = vpack.c.b16 %v1968, %v1964
    %v2601 = vpack.c.b16 %v1969, %v1965
    %v2602 = vpack.c.b16 %v1974, %v1970
    %v2603 = vpack.c.b16 %v1975, %v1971
    %v2604 = vpack.c.b16 %v1976, %v1972
    %v2605 = vpack.c.b16 %v1977, %v1973
    %v2606 = vpack.c.b16 %v1982, %v1978
    %v2607 = vpack.c.b16 %v1983, %v1979
    %v2608 = vpack.c.b16 %v1984, %v1980
    %v2609 = vpack.c.b16 %v1985, %v1981
    %v2610 = vpack.c.b16 %v1990, %v1986
    %v2611 = vpack.c.b16 %v1991, %v1987
    %v2612 = vpack.c.b16 %v1992, %v1988
    %v2613 = vpack.c.b16 %v1993, %v1989
    %v2614 = vpack.c.b16 %v1998, %v1994
    %v2615 = vpack.c.b16 %v1999, %v1995
    %v2616 = vpack.c.b16 %v2000, %v1996
    %v2617 = vpack.c.b16 %v2001, %v1997
    %v2618 = vpack.c.b16 %v2006, %v2002
    %v2619 = vpack.c.b16 %v2007, %v2003
    %v2620 = vpack.c.b16 %v2008, %v2004
    %v2621 = vpack.c.b16 %v2009, %v2005
    %v2622 = vpack.c.b16 %v2014, %v2010
    %v2623 = vpack.c.b16 %v2015, %v2011
    %v2624 = vpack.c.b16 %v2016, %v2012
    %v2625 = vpack.c.b16 %v2017, %v2013
    %v2626 = vpack.c.b16 %v2022, %v2018
    %v2627 = vpack.c.b16 %v2023, %v2019
    %v2628 = vpack.c.b16 %v2024, %v2020
    %v2629 = vpack.c.b16 %v2025, %v2021
    %v2630 = vpack.c.b16 %v2030, %v2026
    %v2631 = vpack.c.b16 %v2031, %v2027
    %v2632 = vpack.c.b16 %v2032, %v2028
    %v2633 = vpack.c.b16 %v2033, %v2029
    %v2634 = vpack.c.b16 %v2038, %v2034
    %v2635 = vpack.c.b16 %v2039, %v2035
    %v2636 = vpack.c.b16 %v2040, %v2036
    %v2637 = vpack.c.b16 %v2041, %v2037
    %v2638 = vpack.c.b16 %v2046, %v2042
    %v2639 = vpack.c.b16 %v2047, %v2043
    %v2640 = vpack.c.b16 %v2048, %v2044
    %v2641 = vpack.c.b16 %v2049, %v2045
    %v2642 = vpack.c.b16 %v2054, %v2050
    %v2643 = vpack.c.b16 %v2055, %v2051
    %v2644 = vpack.c.b16 %v2056, %v2052
    %v2645 = vpack.c.b16 %v2057, %v2053
    %v2646 = vpack.c.b16 %v2062, %v2058
    %v2647 = vpack.c.b16 %v2063, %v2059
    %v2648 = vpack.c.b16 %v2064, %v2060
    %v2649 = vpack.c.b16 %v2065, %v2061
    %v2650 = vpack.c.b16 %v2070, %v2066
    %v2651 = vpack.c.b16 %v2071, %v2067
    %v2652 = vpack.c.b16 %v2072, %v2068
    %v2653 = vpack.c.b16 %v2073, %v2069
    %v2654 = vpack.c.b16 %v2078, %v2074
    %v2655 = vpack.c.b16 %v2079, %v2075
    %v2656 = vpack.c.b16 %v2080, %v2076
    %v2657 = vpack.c.b16 %v2081, %v2077
    %v2658 = vpack.c.b16 %v2086, %v2082
    %v2659 = vpack.c.b16 %v2087, %v2083
    %v2660 = vpack.c.b16 %v2088, %v2084
    %v2661 = vpack.c.b16 %v2089, %v2085
    %v2662 = vpack.c.b16 %v2094, %v2090
    %v2663 = vpack.c.b16 %v2095, %v2091
    %v2664 = vpack.c.b16 %v2096, %v2092
    %v2665 = vpack.c.b16 %v2097, %v2093
    %v2666 = vpack.c.b16 %v2102, %v2098
    %v2667 = vpack.c.b16 %v2103, %v2099
    %v2668 = vpack.c.b16 %v2104, %v2100
    %v2669 = vpack.c.b16 %v2105, %v2101
    %v2670 = vpack.c.b16 %v2110, %v2106
    %v2671 = vpack.c.b16 %v2111, %v2107
    %v2672 = vpack.c.b16 %v2112, %v2108
    %v2673 = vpack.c.b16 %v2113, %v2109
    %v2674 = vpack.c.b16 %v2118, %v2114
    %v2675 = vpack.c.b16 %v2119, %v2115
    %v2676 = vpack.c.b16 %v2120, %v2116
    %v2677 = vpack.c.b16 %v2121, %v2117
    %v2678 = vpack.c.b16 %v2126, %v2122
    %v2679 = vpack.c.b16 %v2127, %v2123
    %v2680 = vpack.c.b16 %v2128, %v2124
    %v2681 = vpack.c.b16 %v2129, %v2125
    %v2682 = vpack.c.b16 %v2134, %v2130
    %v2683 = vpack.c.b16 %v2135, %v2131
    %v2684 = vpack.c.b16 %v2136, %v2132
    %v2685 = vpack.c.b16 %v2137, %v2133
    %v2686 = vpack.c.b16 %v2142, %v2138
    %v2687 = vpack.c.b16 %v2143, %v2139
    %v2688 = vpack.c.b16 %v2144, %v2140
    %v2689 = vpack.c.b16 %v2145, %v2141
    %v2690 = vpack.c.b16 %v2150, %v2146
    %v2691 = vpack.c.b16 %v2151, %v2147
    %v2692 = vpack.c.b16 %v2152, %v2148
    %v2693 = vpack.c.b16 %v2153, %v2149
    %v2694 = vpack.c.b16 %v2158, %v2154
    %v2695 = vpack.c.b16 %v2159, %v2155
    %v2696 = vpack.c.b16 %v2160, %v2156
    %v2697 = vpack.c.b16 %v2161, %v2157
    %v2698 = vpack.c.b16 %v2166, %v2162
    %v2699 = vpack.c.b16 %v2167, %v2163
    %v2700 = vpack.c.b16 %v2168, %v2164
    %v2701 = vpack.c.b16 %v2169, %v2165
    %v2702 = vpack.c.b16 %v2174, %v2170
    %v2703 = vpack.c.b16 %v2175, %v2171
    %v2704 = vpack.c.b16 %v2176, %v2172
    %v2705 = vpack.c.b16 %v2177, %v2173
    %v2706 = vpack.c.b16 %v2182, %v2178
    %v2707 = vpack.c.b16 %v2183, %v2179
    %v2708 = vpack.c.b16 %v2184, %v2180
    %v2709 = vpack.c.b16 %v2185, %v2181
    %v2710 = vpack.c.b16 %v2190, %v2186
    %v2711 = vpack.c.b16 %v2191, %v2187
    %v2712 = vpack.c.b16 %v2192, %v2188
    %v2713 = vpack.c.b16 %v2193, %v2189
    %v2714 = vpack.c.b16 %v2198, %v2194
    %v2715 = vpack.c.b16 %v2199, %v2195
    %v2716 = vpack.c.b16 %v2200, %v2196
    %v2717 = vpack.c.b16 %v2201, %v2197
    %v2718 = vpack.c.b16 %v2206, %v2202
    %v2719 = vpack.c.b16 %v2207, %v2203
    %v2720 = vpack.c.b16 %v2208, %v2204
    %v2721 = vpack.c.b16 %v2209, %v2205
    %3234 = vmatprep.subr.bf16.mxu0 %v2211
    %3235 = vmatpush1.bf16.msra.mxu0 %v2210
    %3236 = vmatprep.subr.bf16.mxu0 %v2215
    %3237 = vmatpush1.bf16.msra.mxu0 %v2214
    %3238 = vmatprep.subr.bf16.mxu0 %v2219
    %3239 = vmatpush1.bf16.msra.mxu0 %v2218
    %3240 = vmatprep.subr.bf16.mxu0 %v2223
    %3241 = vmatpush1.bf16.msra.mxu0 %v2222
    %3242 = vmatprep.subr.bf16.mxu0 %v2227
    %3243 = vmatpush1.bf16.msra.mxu0 %v2226
    %3244 = vmatprep.subr.bf16.mxu0 %v2231
    %3245 = vmatpush1.bf16.msra.mxu0 %v2230
    %3246 = vmatprep.subr.bf16.mxu0 %v2235
    %3247 = vmatpush1.bf16.msra.mxu0 %v2234
    %3248 = vmatprep.subr.bf16.mxu0 %v2239
    %3249 = vmatpush1.bf16.msra.mxu0 %v2238
    %3250 = vmatprep.subr.bf16.mxu0 %v2243
    %3251 = vmatpush1.bf16.msra.mxu0 %v2242
    %3252 = vmatprep.subr.bf16.mxu0 %v2247
    %3253 = vmatpush1.bf16.msra.mxu0 %v2246
    %3254 = vmatprep.subr.bf16.mxu0 %v2251
    %3255 = vmatpush1.bf16.msra.mxu0 %v2250
    %3256 = vmatprep.subr.bf16.mxu0 %v2255
    %3257 = vmatpush1.bf16.msra.mxu0 %v2254
    %3258 = vmatprep.subr.bf16.mxu0 %v2259
    %3259 = vmatpush1.bf16.msra.mxu0 %v2258
    %3260 = vmatprep.subr.bf16.mxu0 %v2263
    %3261 = vmatpush1.bf16.msra.mxu0 %v2262
    %3262 = vmatprep.subr.bf16.mxu0 %v2267
    %3263 = vmatpush1.bf16.msra.mxu0 %v2266
    %3264 = vmatprep.subr.bf16.mxu0 %v2271
    %3265 = vmatpush1.bf16.msra.mxu0 %v2270
    %3266 = vmatprep.mubr.bf16.mxu0 %v597
    %3267 = vmatmul.mubr.bf16.gmra.mrb[0].mxu0 %v583
    %v3268 = vpop.f32.mrb[0].mxu0
    %v3269 = vadd.f32 %v541, %v3268
    %v3270 = vpop.f32.mrb[0].mxu0
    %v3271 = vadd.f32 %v545, %v3270
    %v3272 = vpop.f32.mrb[0].mxu0
    %v3273 = vpop.f32.mrb[0].mxu0
    %3274 = vdwg.mxu0
    %3275 = vmatprep.subr.bf16.mxu0 %v2275
    %3276 = vmatpush1.bf16.msra.mxu0 %v2274
    %3277 = vmatprep.subr.bf16.mxu0 %v2279
    %3278 = vmatpush1.bf16.msra.mxu0 %v2278
    %3279 = vmatprep.subr.bf16.mxu0 %v2283
    %3280 = vmatpush1.bf16.msra.mxu0 %v2282
    %3281 = vmatprep.subr.bf16.mxu0 %v2287
    %3282 = vmatpush1.bf16.msra.mxu0 %v2286
    %3283 = vmatprep.subr.bf16.mxu0 %v2291
    %3284 = vmatpush1.bf16.msra.mxu0 %v2290
    %3285 = vmatprep.subr.bf16.mxu0 %v2295
    %3286 = vmatpush1.bf16.msra.mxu0 %v2294
    %3287 = vmatprep.subr.bf16.mxu0 %v2299
    %3288 = vmatpush1.bf16.msra.mxu0 %v2298
    %3289 = vmatprep.subr.bf16.mxu0 %v2303
    %3290 = vmatpush1.bf16.msra.mxu0 %v2302
    %3291 = vmatprep.subr.bf16.mxu0 %v2307
    %3292 = vmatpush1.bf16.msra.mxu0 %v2306
    %3293 = vmatprep.subr.bf16.mxu0 %v2311
    %3294 = vmatpush1.bf16.msra.mxu0 %v2310
    %3295 = vmatprep.subr.bf16.mxu0 %v2315
    %3296 = vmatpush1.bf16.msra.mxu0 %v2314
    %3297 = vmatprep.subr.bf16.mxu0 %v2319
    %3298 = vmatpush1.bf16.msra.mxu0 %v2318
    %3299 = vmatprep.subr.bf16.mxu0 %v2323
    %3300 = vmatpush1.bf16.msra.mxu0 %v2322
    %3301 = vmatprep.subr.bf16.mxu0 %v2327
    %3302 = vmatpush1.bf16.msra.mxu0 %v2326
    %3303 = vmatprep.subr.bf16.mxu0 %v2331
    %3304 = vmatpush1.bf16.msra.mxu0 %v2330
    %3305 = vmatprep.subr.bf16.mxu0 %v2335
    %3306 = vmatpush1.bf16.msra.mxu0 %v2334
    %3307 = vmatprep.mubr.bf16.mxu0 %v607
    %3308 = vmatmul.mubr.bf16.gmra.mrb[0].mxu0 %v605
    %v3309 = vpop.f32.mrb[0].mxu0
    %v3310 = vadd.f32 %v3269, %v3309
    %v3311 = vpop.f32.mrb[0].mxu0
    %v3312 = vadd.f32 %v3271, %v3311
    %v3313 = vpop.f32.mrb[0].mxu0
    %v3314 = vpop.f32.mrb[0].mxu0
    %3315 = vdwg.mxu0
    %3316 = vmatprep.subr.bf16.mxu0 %v2339
    %3317 = vmatpush1.bf16.msra.mxu0 %v2338
    %3318 = vmatprep.subr.bf16.mxu0 %v2343
    %3319 = vmatpush1.bf16.msra.mxu0 %v2342
    %3320 = vmatprep.subr.bf16.mxu0 %v2347
    %3321 = vmatpush1.bf16.msra.mxu0 %v2346
    %3322 = vmatprep.subr.bf16.mxu0 %v2351
    %3323 = vmatpush1.bf16.msra.mxu0 %v2350
    %3324 = vmatprep.subr.bf16.mxu0 %v2355
    %3325 = vmatpush1.bf16.msra.mxu0 %v2354
    %3326 = vmatprep.subr.bf16.mxu0 %v2359
    %3327 = vmatpush1.bf16.msra.mxu0 %v2358
    %3328 = vmatprep.subr.bf16.mxu0 %v2363
    %3329 = vmatpush1.bf16.msra.mxu0 %v2362
    %3330 = vmatprep.subr.bf16.mxu0 %v2367
    %3331 = vmatpush1.bf16.msra.mxu0 %v2366
    %3332 = vmatprep.subr.bf16.mxu0 %v2371
    %3333 = vmatpush1.bf16.msra.mxu0 %v2370
    %3334 = vmatprep.subr.bf16.mxu0 %v2375
    %3335 = vmatpush1.bf16.msra.mxu0 %v2374
    %3336 = vmatprep.subr.bf16.mxu0 %v2379
    %3337 = vmatpush1.bf16.msra.mxu0 %v2378
    %3338 = vmatprep.subr.bf16.mxu0 %v2383
    %3339 = vmatpush1.bf16.msra.mxu0 %v2382
    %3340 = vmatprep.subr.bf16.mxu0 %v2387
    %3341 = vmatpush1.bf16.msra.mxu0 %v2386
    %3342 = vmatprep.subr.bf16.mxu0 %v2391
    %3343 = vmatpush1.bf16.msra.mxu0 %v2390
    %3344 = vmatprep.subr.bf16.mxu0 %v2395
    %3345 = vmatpush1.bf16.msra.mxu0 %v2394
    %3346 = vmatprep.subr.bf16.mxu0 %v2399
    %3347 = vmatpush1.bf16.msra.mxu0 %v2398
    %3348 = vmatprep.mubr.bf16.mxu0 %v604
    %3349 = vmatmul.mubr.bf16.gmra.mrb[0].mxu0 %v590
    %v3350 = vpop.f32.mrb[0].mxu0
    %v3351 = vadd.f32 %v3310, %v3350
    %v3352 = vpop.f32.mrb[0].mxu0
    %v3353 = vadd.f32 %v3312, %v3352
    %v3354 = vpop.f32.mrb[0].mxu0
    %v3355 = vpop.f32.mrb[0].mxu0
    %3356 = vdwg.mxu0
    %3357 = vmatprep.subr.bf16.mxu0 %v2403
    %3358 = vmatpush1.bf16.msra.mxu0 %v2402
    %3359 = vmatprep.subr.bf16.mxu0 %v2407
    %3360 = vmatpush1.bf16.msra.mxu0 %v2406
    %3361 = vmatprep.subr.bf16.mxu0 %v2411
    %3362 = vmatpush1.bf16.msra.mxu0 %v2410
    %3363 = vmatprep.subr.bf16.mxu0 %v2415
    %3364 = vmatpush1.bf16.msra.mxu0 %v2414
    %3365 = vmatprep.subr.bf16.mxu0 %v2419
    %3366 = vmatpush1.bf16.msra.mxu0 %v2418
    %3367 = vmatprep.subr.bf16.mxu0 %v2423
    %3368 = vmatpush1.bf16.msra.mxu0 %v2422
    %3369 = vmatprep.subr.bf16.mxu0 %v2427
    %3370 = vmatpush1.bf16.msra.mxu0 %v2426
    %3371 = vmatprep.subr.bf16.mxu0 %v2431
    %3372 = vmatpush1.bf16.msra.mxu0 %v2430
    %3373 = vmatprep.subr.bf16.mxu0 %v2435
    %3374 = vmatpush1.bf16.msra.mxu0 %v2434
    %3375 = vmatprep.subr.bf16.mxu0 %v2439
    %3376 = vmatpush1.bf16.msra.mxu0 %v2438
    %3377 = vmatprep.subr.bf16.mxu0 %v2443
    %3378 = vmatpush1.bf16.msra.mxu0 %v2442
    %3379 = vmatprep.subr.bf16.mxu0 %v2447
    %3380 = vmatpush1.bf16.msra.mxu0 %v2446
    %3381 = vmatprep.subr.bf16.mxu0 %v2451
    %3382 = vmatpush1.bf16.msra.mxu0 %v2450
    %3383 = vmatprep.subr.bf16.mxu0 %v2455
    %3384 = vmatpush1.bf16.msra.mxu0 %v2454
    %3385 = vmatprep.subr.bf16.mxu0 %v2459
    %3386 = vmatpush1.bf16.msra.mxu0 %v2458
    %3387 = vmatprep.subr.bf16.mxu0 %v2463
    %3388 = vmatpush1.bf16.msra.mxu0 %v2462
    %3389 = vmatprep.mubr.bf16.mxu0 %v608
    %3390 = vmatmul.mubr.bf16.gmra.mrb[0].mxu0 %v606
    %v3391 = vpop.f32.mrb[0].mxu0
    %v3392 = vadd.f32 %v3351, %v3391
    %v3393 = vpop.f32.mrb[0].mxu0
    %v3394 = vadd.f32 %v3353, %v3393
    %v3395 = vpop.f32.mrb[0].mxu0
    %v3396 = vpop.f32.mrb[0].mxu0
    %3397 = vdwg.mxu0
    %3398 = vmatprep.subr.bf16.mxu0 %v2467
    %3399 = vmatpush1.bf16.msra.mxu0 %v2466
    %3400 = vmatprep.subr.bf16.mxu0 %v2471
    %3401 = vmatpush1.bf16.msra.mxu0 %v2470
    %3402 = vmatprep.subr.bf16.mxu0 %v2475
    %3403 = vmatpush1.bf16.msra.mxu0 %v2474
    %3404 = vmatprep.subr.bf16.mxu0 %v2479
    %3405 = vmatpush1.bf16.msra.mxu0 %v2478
    %3406 = vmatprep.subr.bf16.mxu0 %v2483
    %3407 = vmatpush1.bf16.msra.mxu0 %v2482
    %3408 = vmatprep.subr.bf16.mxu0 %v2487
    %3409 = vmatpush1.bf16.msra.mxu0 %v2486
    %3410 = vmatprep.subr.bf16.mxu0 %v2491
    %3411 = vmatpush1.bf16.msra.mxu0 %v2490
    %3412 = vmatprep.subr.bf16.mxu0 %v2495
    %3413 = vmatpush1.bf16.msra.mxu0 %v2494
    %3414 = vmatprep.subr.bf16.mxu0 %v2499
    %3415 = vmatpush1.bf16.msra.mxu0 %v2498
    %3416 = vmatprep.subr.bf16.mxu0 %v2503
    %3417 = vmatpush1.bf16.msra.mxu0 %v2502
    %3418 = vmatprep.subr.bf16.mxu0 %v2507
    %3419 = vmatpush1.bf16.msra.mxu0 %v2506
    %3420 = vmatprep.subr.bf16.mxu0 %v2511
    %3421 = vmatpush1.bf16.msra.mxu0 %v2510
    %3422 = vmatprep.subr.bf16.mxu0 %v2515
    %3423 = vmatpush1.bf16.msra.mxu0 %v2514
    %3424 = vmatprep.subr.bf16.mxu0 %v2519
    %3425 = vmatpush1.bf16.msra.mxu0 %v2518
    %3426 = vmatprep.subr.bf16.mxu0 %v2523
    %3427 = vmatpush1.bf16.msra.mxu0 %v2522
    %3428 = vmatprep.subr.bf16.mxu0 %v2527
    %3429 = vmatpush1.bf16.msra.mxu0 %v2526
    %3430 = vmatprep.mubr.bf16.mxu0 %v646
    %3431 = vmatmul.mubr.bf16.gmra.mrb[0].mxu0 %v632
    %v3432 = vpop.f32.mrb[0].mxu0
    %v3433 = vadd.f32 %v3392, %v3432
    %v3434 = vpop.f32.mrb[0].mxu0
    %v3435 = vadd.f32 %v3394, %v3434
    %v3436 = vpop.f32.mrb[0].mxu0
    %v3437 = vpop.f32.mrb[0].mxu0
    %3438 = vdwg.mxu0
    %3439 = vmatprep.subr.bf16.mxu0 %v2531
    %3440 = vmatpush1.bf16.msra.mxu0 %v2530
    %3441 = vmatprep.subr.bf16.mxu0 %v2535
    %3442 = vmatpush1.bf16.msra.mxu0 %v2534
    %3443 = vmatprep.subr.bf16.mxu0 %v2539
    %3444 = vmatpush1.bf16.msra.mxu0 %v2538
    %3445 = vmatprep.subr.bf16.mxu0 %v2543
    %3446 = vmatpush1.bf16.msra.mxu0 %v2542
    %3447 = vmatprep.subr.bf16.mxu0 %v2547
    %3448 = vmatpush1.bf16.msra.mxu0 %v2546
    %3449 = vmatprep.subr.bf16.mxu0 %v2551
    %3450 = vmatpush1.bf16.msra.mxu0 %v2550
    %3451 = vmatprep.subr.bf16.mxu0 %v2555
    %3452 = vmatpush1.bf16.msra.mxu0 %v2554
    %3453 = vmatprep.subr.bf16.mxu0 %v2559
    %3454 = vmatpush1.bf16.msra.mxu0 %v2558
    %3455 = vmatprep.subr.bf16.mxu0 %v2563
    %3456 = vmatpush1.bf16.msra.mxu0 %v2562
    %3457 = vmatprep.subr.bf16.mxu0 %v2567
    %3458 = vmatpush1.bf16.msra.mxu0 %v2566
    %3459 = vmatprep.subr.bf16.mxu0 %v2571
    %3460 = vmatpush1.bf16.msra.mxu0 %v2570
    %3461 = vmatprep.subr.bf16.mxu0 %v2575
    %3462 = vmatpush1.bf16.msra.mxu0 %v2574
    %3463 = vmatprep.subr.bf16.mxu0 %v2579
    %3464 = vmatpush1.bf16.msra.mxu0 %v2578
    %3465 = vmatprep.subr.bf16.mxu0 %v2583
    %3466 = vmatpush1.bf16.msra.mxu0 %v2582
    %3467 = vmatprep.subr.bf16.mxu0 %v2587
    %3468 = vmatpush1.bf16.msra.mxu0 %v2586
    %3469 = vmatprep.subr.bf16.mxu0 %v2591
    %3470 = vmatpush1.bf16.msra.mxu0 %v2590
    %3471 = vmatprep.mubr.bf16.mxu0 %v656
    %3472 = vmatmul.mubr.bf16.gmra.mrb[0].mxu0 %v654
    %v3473 = vpop.f32.mrb[0].mxu0
    %v3474 = vadd.f32 %v3433, %v3473
    %v3475 = vpop.f32.mrb[0].mxu0
    %v3476 = vadd.f32 %v3435, %v3475
    %v3477 = vpop.f32.mrb[0].mxu0
    %v3478 = vpop.f32.mrb[0].mxu0
    %3479 = vdwg.mxu0
    %3480 = vmatprep.subr.bf16.mxu0 %v2595
    %3481 = vmatpush1.bf16.msra.mxu0 %v2594
    %3482 = vmatprep.subr.bf16.mxu0 %v2599
    %3483 = vmatpush1.bf16.msra.mxu0 %v2598
    %3484 = vmatprep.subr.bf16.mxu0 %v2603
    %3485 = vmatpush1.bf16.msra.mxu0 %v2602
    %3486 = vmatprep.subr.bf16.mxu0 %v2607
    %3487 = vmatpush1.bf16.msra.mxu0 %v2606
    %3488 = vmatprep.subr.bf16.mxu0 %v2611
    %3489 = vmatpush1.bf16.msra.mxu0 %v2610
    %3490 = vmatprep.subr.bf16.mxu0 %v2615
    %3491 = vmatpush1.bf16.msra.mxu0 %v2614
    %3492 = vmatprep.subr.bf16.mxu0 %v2619
    %3493 = vmatpush1.bf16.msra.mxu0 %v2618
    %3494 = vmatprep.subr.bf16.mxu0 %v2623
    %3495 = vmatpush1.bf16.msra.mxu0 %v2622
    %3496 = vmatprep.subr.bf16.mxu0 %v2627
    %3497 = vmatpush1.bf16.msra.mxu0 %v2626
    %3498 = vmatprep.subr.bf16.mxu0 %v2631
    %3499 = vmatpush1.bf16.msra.mxu0 %v2630
    %3500 = vmatprep.subr.bf16.mxu0 %v2635
    %3501 = vmatpush1.bf16.msra.mxu0 %v2634
    %3502 = vmatprep.subr.bf16.mxu0 %v2639
    %3503 = vmatpush1.bf16.msra.mxu0 %v2638
    %3504 = vmatprep.subr.bf16.mxu0 %v2643
    %3505 = vmatpush1.bf16.msra.mxu0 %v2642
    %3506 = vmatprep.subr.bf16.mxu0 %v2647
    %3507 = vmatpush1.bf16.msra.mxu0 %v2646
    %3508 = vmatprep.subr.bf16.mxu0 %v2651
    %3509 = vmatpush1.bf16.msra.mxu0 %v2650
    %3510 = vmatprep.subr.bf16.mxu0 %v2655
    %3511 = vmatpush1.bf16.msra.mxu0 %v2654
    %3512 = vmatprep.mubr.bf16.mxu0 %v653
    %3513 = vmatmul.mubr.bf16.gmra.mrb[0].mxu0 %v639
    %v3514 = vpop.f32.mrb[0].mxu0
    %v3515 = vadd.f32 %v3474, %v3514
    %v3516 = vpop.f32.mrb[0].mxu0
    %v3517 = vadd.f32 %v3476, %v3516
    %v3518 = vpop.f32.mrb[0].mxu0
    %v3519 = vpop.f32.mrb[0].mxu0
    %3520 = vdwg.mxu0
    %3521 = vmatprep.subr.bf16.mxu0 %v2659
    %3522 = vmatpush1.bf16.msra.mxu0 %v2658
    %3523 = vmatprep.subr.bf16.mxu0 %v2663
    %3524 = vmatpush1.bf16.msra.mxu0 %v2662
    %3525 = vmatprep.subr.bf16.mxu0 %v2667
    %3526 = vmatpush1.bf16.msra.mxu0 %v2666
    %3527 = vmatprep.subr.bf16.mxu0 %v2671
    %3528 = vmatpush1.bf16.msra.mxu0 %v2670
    %3529 = vmatprep.subr.bf16.mxu0 %v2675
    %3530 = vmatpush1.bf16.msra.mxu0 %v2674
    %3531 = vmatprep.subr.bf16.mxu0 %v2679
    %3532 = vmatpush1.bf16.msra.mxu0 %v2678
    %3533 = vmatprep.subr.bf16.mxu0 %v2683
    %3534 = vmatpush1.bf16.msra.mxu0 %v2682
    %3535 = vmatprep.subr.bf16.mxu0 %v2687
    %3536 = vmatpush1.bf16.msra.mxu0 %v2686
    %3537 = vmatprep.subr.bf16.mxu0 %v2691
    %3538 = vmatpush1.bf16.msra.mxu0 %v2690
    %3539 = vmatprep.subr.bf16.mxu0 %v2695
    %3540 = vmatpush1.bf16.msra.mxu0 %v2694
    %3541 = vmatprep.subr.bf16.mxu0 %v2699
    %3542 = vmatpush1.bf16.msra.mxu0 %v2698
    %3543 = vmatprep.subr.bf16.mxu0 %v2703
    %3544 = vmatpush1.bf16.msra.mxu0 %v2702
    %3545 = vmatprep.subr.bf16.mxu0 %v2707
    %3546 = vmatpush1.bf16.msra.mxu0 %v2706
    %3547 = vmatprep.subr.bf16.mxu0 %v2711
    %3548 = vmatpush1.bf16.msra.mxu0 %v2710
    %3549 = vmatprep.subr.bf16.mxu0 %v2715
    %3550 = vmatpush1.bf16.msra.mxu0 %v2714
    %3551 = vmatprep.subr.bf16.mxu0 %v2719
    %3552 = vmatpush1.bf16.msra.mxu0 %v2718
    %3553 = vmatprep.mubr.bf16.mxu0 %v657
    %3554 = vmatmul.mubr.bf16.gmra.mrb[0].mxu0 %v655
    %v3555 = vpop.f32.mrb[0].mxu0
    %v3556 = vadd.f32 %v3515, %v3555
    %v3557 = vpop.f32.mrb[0].mxu0
    %v3558 = vadd.f32 %v3517, %v3557
    %v3559 = vpop.f32.mrb[0].mxu0
    %v3560 = vpop.f32.mrb[0].mxu0
    %3561 = vdwg.mxu0
    %3562 = vmatprep.subr.bf16.mxu0 %v2213
    %3563 = vmatpush1.bf16.msra.mxu0 %v2212
    %3564 = vmatprep.subr.bf16.mxu0 %v2217
    %3565 = vmatpush1.bf16.msra.mxu0 %v2216
    %3566 = vmatprep.subr.bf16.mxu0 %v2221
    %3567 = vmatpush1.bf16.msra.mxu0 %v2220
    %3568 = vmatprep.subr.bf16.mxu0 %v2225
    %3569 = vmatpush1.bf16.msra.mxu0 %v2224
    %3570 = vmatprep.subr.bf16.mxu0 %v2229
    %3571 = vmatpush1.bf16.msra.mxu0 %v2228
    %3572 = vmatprep.subr.bf16.mxu0 %v2233
    %3573 = vmatpush1.bf16.msra.mxu0 %v2232
    %3574 = vmatprep.subr.bf16.mxu0 %v2237
    %3575 = vmatpush1.bf16.msra.mxu0 %v2236
    %3576 = vmatprep.subr.bf16.mxu0 %v2241
    %3577 = vmatpush1.bf16.msra.mxu0 %v2240
    %3578 = vmatprep.subr.bf16.mxu0 %v2245
    %3579 = vmatpush1.bf16.msra.mxu0 %v2244
    %3580 = vmatprep.subr.bf16.mxu0 %v2249
    %3581 = vmatpush1.bf16.msra.mxu0 %v2248
    %3582 = vmatprep.subr.bf16.mxu0 %v2253
    %3583 = vmatpush1.bf16.msra.mxu0 %v2252
    %3584 = vmatprep.subr.bf16.mxu0 %v2257
    %3585 = vmatpush1.bf16.msra.mxu0 %v2256
    %3586 = vmatprep.subr.bf16.mxu0 %v2261
    %3587 = vmatpush1.bf16.msra.mxu0 %v2260
    %3588 = vmatprep.subr.bf16.mxu0 %v2265
    %3589 = vmatpush1.bf16.msra.mxu0 %v2264
    %3590 = vmatprep.subr.bf16.mxu0 %v2269
    %3591 = vmatpush1.bf16.msra.mxu0 %v2268
    %3592 = vmatprep.subr.bf16.mxu0 %v2273
    %3593 = vmatpush1.bf16.msra.mxu0 %v2272
    %3594 = vmatprep.mubr.bf16.mxu0 %v597
    %3595 = vmatmul.mubr.bf16.gmra.mrb[0].mxu0 %v583
    %v3596 = vpop.f32.mrb[0].mxu0
    %v3597 = vadd.f32 %v549, %v3596
    %v3598 = vpop.f32.mrb[0].mxu0
    %v3599 = vadd.f32 %v553, %v3598
    %v3600 = vpop.f32.mrb[0].mxu0
    %v3601 = vpop.f32.mrb[0].mxu0
    %3602 = vdwg.mxu0
    %3603 = vmatprep.subr.bf16.mxu0 %v2277
    %3604 = vmatpush1.bf16.msra.mxu0 %v2276
    %3605 = vmatprep.subr.bf16.mxu0 %v2281
    %3606 = vmatpush1.bf16.msra.mxu0 %v2280
    %3607 = vmatprep.subr.bf16.mxu0 %v2285
    %3608 = vmatpush1.bf16.msra.mxu0 %v2284
    %3609 = vmatprep.subr.bf16.mxu0 %v2289
    %3610 = vmatpush1.bf16.msra.mxu0 %v2288
    %3611 = vmatprep.subr.bf16.mxu0 %v2293
    %3612 = vmatpush1.bf16.msra.mxu0 %v2292
    %3613 = vmatprep.subr.bf16.mxu0 %v2297
    %3614 = vmatpush1.bf16.msra.mxu0 %v2296
    %3615 = vmatprep.subr.bf16.mxu0 %v2301
    %3616 = vmatpush1.bf16.msra.mxu0 %v2300
    %3617 = vmatprep.subr.bf16.mxu0 %v2305
    %3618 = vmatpush1.bf16.msra.mxu0 %v2304
    %3619 = vmatprep.subr.bf16.mxu0 %v2309
    %3620 = vmatpush1.bf16.msra.mxu0 %v2308
    %3621 = vmatprep.subr.bf16.mxu0 %v2313
    %3622 = vmatpush1.bf16.msra.mxu0 %v2312
    %3623 = vmatprep.subr.bf16.mxu0 %v2317
    %3624 = vmatpush1.bf16.msra.mxu0 %v2316
    %3625 = vmatprep.subr.bf16.mxu0 %v2321
    %3626 = vmatpush1.bf16.msra.mxu0 %v2320
    %3627 = vmatprep.subr.bf16.mxu0 %v2325
    %3628 = vmatpush1.bf16.msra.mxu0 %v2324
    %3629 = vmatprep.subr.bf16.mxu0 %v2329
    %3630 = vmatpush1.bf16.msra.mxu0 %v2328
    %3631 = vmatprep.subr.bf16.mxu0 %v2333
    %3632 = vmatpush1.bf16.msra.mxu0 %v2332
    %3633 = vmatprep.subr.bf16.mxu0 %v2337
    %3634 = vmatpush1.bf16.msra.mxu0 %v2336
    %3635 = vmatprep.mubr.bf16.mxu0 %v607
    %3636 = vmatmul.mubr.bf16.gmra.mrb[0].mxu0 %v605
    %v3637 = vpop.f32.mrb[0].mxu0
    %v3638 = vadd.f32 %v3597, %v3637
    %v3639 = vpop.f32.mrb[0].mxu0
    %v3640 = vadd.f32 %v3599, %v3639
    %v3641 = vpop.f32.mrb[0].mxu0
    %v3642 = vpop.f32.mrb[0].mxu0
    %3643 = vdwg.mxu0
    %3644 = vmatprep.subr.bf16.mxu0 %v2341
    %3645 = vmatpush1.bf16.msra.mxu0 %v2340
    %3646 = vmatprep.subr.bf16.mxu0 %v2345
    %3647 = vmatpush1.bf16.msra.mxu0 %v2344
    %3648 = vmatprep.subr.bf16.mxu0 %v2349
    %3649 = vmatpush1.bf16.msra.mxu0 %v2348
    %3650 = vmatprep.subr.bf16.mxu0 %v2353
    %3651 = vmatpush1.bf16.msra.mxu0 %v2352
    %3652 = vmatprep.subr.bf16.mxu0 %v2357
    %3653 = vmatpush1.bf16.msra.mxu0 %v2356
    %3654 = vmatprep.subr.bf16.mxu0 %v2361
    %3655 = vmatpush1.bf16.msra.mxu0 %v2360
    %3656 = vmatprep.subr.bf16.mxu0 %v2365
    %3657 = vmatpush1.bf16.msra.mxu0 %v2364
    %3658 = vmatprep.subr.bf16.mxu0 %v2369
    %3659 = vmatpush1.bf16.msra.mxu0 %v2368
    %3660 = vmatprep.subr.bf16.mxu0 %v2373
    %3661 = vmatpush1.bf16.msra.mxu0 %v2372
    %3662 = vmatprep.subr.bf16.mxu0 %v2377
    %3663 = vmatpush1.bf16.msra.mxu0 %v2376
    %3664 = vmatprep.subr.bf16.mxu0 %v2381
    %3665 = vmatpush1.bf16.msra.mxu0 %v2380
    %3666 = vmatprep.subr.bf16.mxu0 %v2385
    %3667 = vmatpush1.bf16.msra.mxu0 %v2384
    %3668 = vmatprep.subr.bf16.mxu0 %v2389
    %3669 = vmatpush1.bf16.msra.mxu0 %v2388
    %3670 = vmatprep.subr.bf16.mxu0 %v2393
    %3671 = vmatpush1.bf16.msra.mxu0 %v2392
    %3672 = vmatprep.subr.bf16.mxu0 %v2397
    %3673 = vmatpush1.bf16.msra.mxu0 %v2396
    %3674 = vmatprep.subr.bf16.mxu0 %v2401
    %3675 = vmatpush1.bf16.msra.mxu0 %v2400
    %3676 = vmatprep.mubr.bf16.mxu0 %v604
    %3677 = vmatmul.mubr.bf16.gmra.mrb[0].mxu0 %v590
    %v3678 = vpop.f32.mrb[0].mxu0
    %v3679 = vadd.f32 %v3638, %v3678
    %v3680 = vpop.f32.mrb[0].mxu0
    %v3681 = vadd.f32 %v3640, %v3680
    %v3682 = vpop.f32.mrb[0].mxu0
    %v3683 = vpop.f32.mrb[0].mxu0
    %3684 = vdwg.mxu0
    %3685 = vmatprep.subr.bf16.mxu0 %v2405
    %3686 = vmatpush1.bf16.msra.mxu0 %v2404
    %3687 = vmatprep.subr.bf16.mxu0 %v2409
    %3688 = vmatpush1.bf16.msra.mxu0 %v2408
    %3689 = vmatprep.subr.bf16.mxu0 %v2413
    %3690 = vmatpush1.bf16.msra.mxu0 %v2412
    %3691 = vmatprep.subr.bf16.mxu0 %v2417
    %3692 = vmatpush1.bf16.msra.mxu0 %v2416
    %3693 = vmatprep.subr.bf16.mxu0 %v2421
    %3694 = vmatpush1.bf16.msra.mxu0 %v2420
    %3695 = vmatprep.subr.bf16.mxu0 %v2425
    %3696 = vmatpush1.bf16.msra.mxu0 %v2424
    %3697 = vmatprep.subr.bf16.mxu0 %v2429
    %3698 = vmatpush1.bf16.msra.mxu0 %v2428
    %3699 = vmatprep.subr.bf16.mxu0 %v2433
    %3700 = vmatpush1.bf16.msra.mxu0 %v2432
    %3701 = vmatprep.subr.bf16.mxu0 %v2437
    %3702 = vmatpush1.bf16.msra.mxu0 %v2436
    %3703 = vmatprep.subr.bf16.mxu0 %v2441
    %3704 = vmatpush1.bf16.msra.mxu0 %v2440
    %3705 = vmatprep.subr.bf16.mxu0 %v2445
    %3706 = vmatpush1.bf16.msra.mxu0 %v2444
    %3707 = vmatprep.subr.bf16.mxu0 %v2449
    %3708 = vmatpush1.bf16.msra.mxu0 %v2448
    %3709 = vmatprep.subr.bf16.mxu0 %v2453
    %3710 = vmatpush1.bf16.msra.mxu0 %v2452
    %3711 = vmatprep.subr.bf16.mxu0 %v2457
    %3712 = vmatpush1.bf16.msra.mxu0 %v2456
    %3713 = vmatprep.subr.bf16.mxu0 %v2461
    %3714 = vmatpush1.bf16.msra.mxu0 %v2460
    %3715 = vmatprep.subr.bf16.mxu0 %v2465
    %3716 = vmatpush1.bf16.msra.mxu0 %v2464
    %3717 = vmatprep.mubr.bf16.mxu0 %v608
    %3718 = vmatmul.mubr.bf16.gmra.mrb[0].mxu0 %v606
    %v3719 = vpop.f32.mrb[0].mxu0
    %v3720 = vadd.f32 %v3679, %v3719
    %v3721 = vpop.f32.mrb[0].mxu0
    %v3722 = vadd.f32 %v3681, %v3721
    %v3723 = vpop.f32.mrb[0].mxu0
    %v3724 = vpop.f32.mrb[0].mxu0
    %3725 = vdwg.mxu0
    %3726 = vmatprep.subr.bf16.mxu0 %v2469
    %3727 = vmatpush1.bf16.msra.mxu0 %v2468
    %3728 = vmatprep.subr.bf16.mxu0 %v2473
    %3729 = vmatpush1.bf16.msra.mxu0 %v2472
    %3730 = vmatprep.subr.bf16.mxu0 %v2477
    %3731 = vmatpush1.bf16.msra.mxu0 %v2476
    %3732 = vmatprep.subr.bf16.mxu0 %v2481
    %3733 = vmatpush1.bf16.msra.mxu0 %v2480
    %3734 = vmatprep.subr.bf16.mxu0 %v2485
    %3735 = vmatpush1.bf16.msra.mxu0 %v2484
    %3736 = vmatprep.subr.bf16.mxu0 %v2489
    %3737 = vmatpush1.bf16.msra.mxu0 %v2488
    %3738 = vmatprep.subr.bf16.mxu0 %v2493
    %3739 = vmatpush1.bf16.msra.mxu0 %v2492
    %3740 = vmatprep.subr.bf16.mxu0 %v2497
    %3741 = vmatpush1.bf16.msra.mxu0 %v2496
    %3742 = vmatprep.subr.bf16.mxu0 %v2501
    %3743 = vmatpush1.bf16.msra.mxu0 %v2500
    %3744 = vmatprep.subr.bf16.mxu0 %v2505
    %3745 = vmatpush1.bf16.msra.mxu0 %v2504
    %3746 = vmatprep.subr.bf16.mxu0 %v2509
    %3747 = vmatpush1.bf16.msra.mxu0 %v2508
    %3748 = vmatprep.subr.bf16.mxu0 %v2513
    %3749 = vmatpush1.bf16.msra.mxu0 %v2512
    %3750 = vmatprep.subr.bf16.mxu0 %v2517
    %3751 = vmatpush1.bf16.msra.mxu0 %v2516
    %3752 = vmatprep.subr.bf16.mxu0 %v2521
    %3753 = vmatpush1.bf16.msra.mxu0 %v2520
    %3754 = vmatprep.subr.bf16.mxu0 %v2525
    %3755 = vmatpush1.bf16.msra.mxu0 %v2524
    %3756 = vmatprep.subr.bf16.mxu0 %v2529
    %3757 = vmatpush1.bf16.msra.mxu0 %v2528
    %3758 = vmatprep.mubr.bf16.mxu0 %v646
    %3759 = vmatmul.mubr.bf16.gmra.mrb[0].mxu0 %v632
    %v3760 = vpop.f32.mrb[0].mxu0
    %v3761 = vadd.f32 %v3720, %v3760
    %v3762 = vpop.f32.mrb[0].mxu0
    %v3763 = vadd.f32 %v3722, %v3762
    %v3764 = vpop.f32.mrb[0].mxu0
    %v3765 = vpop.f32.mrb[0].mxu0
    %3766 = vdwg.mxu0
    %3767 = vmatprep.subr.bf16.mxu0 %v2533
    %3768 = vmatpush1.bf16.msra.mxu0 %v2532
    %3769 = vmatprep.subr.bf16.mxu0 %v2537
    %3770 = vmatpush1.bf16.msra.mxu0 %v2536
    %3771 = vmatprep.subr.bf16.mxu0 %v2541
    %3772 = vmatpush1.bf16.msra.mxu0 %v2540
    %3773 = vmatprep.subr.bf16.mxu0 %v2545
    %3774 = vmatpush1.bf16.msra.mxu0 %v2544
    %3775 = vmatprep.subr.bf16.mxu0 %v2549
    %3776 = vmatpush1.bf16.msra.mxu0 %v2548
    %3777 = vmatprep.subr.bf16.mxu0 %v2553
    %3778 = vmatpush1.bf16.msra.mxu0 %v2552
    %3779 = vmatprep.subr.bf16.mxu0 %v2557
    %3780 = vmatpush1.bf16.msra.mxu0 %v2556
    %3781 = vmatprep.subr.bf16.mxu0 %v2561
    %3782 = vmatpush1.bf16.msra.mxu0 %v2560
    %3783 = vmatprep.subr.bf16.mxu0 %v2565
    %3784 = vmatpush1.bf16.msra.mxu0 %v2564
    %3785 = vmatprep.subr.bf16.mxu0 %v2569
    %3786 = vmatpush1.bf16.msra.mxu0 %v2568
    %3787 = vmatprep.subr.bf16.mxu0 %v2573
    %3788 = vmatpush1.bf16.msra.mxu0 %v2572
    %3789 = vmatprep.subr.bf16.mxu0 %v2577
    %3790 = vmatpush1.bf16.msra.mxu0 %v2576
    %3791 = vmatprep.subr.bf16.mxu0 %v2581
    %3792 = vmatpush1.bf16.msra.mxu0 %v2580
    %3793 = vmatprep.subr.bf16.mxu0 %v2585
    %3794 = vmatpush1.bf16.msra.mxu0 %v2584
    %3795 = vmatprep.subr.bf16.mxu0 %v2589
    %3796 = vmatpush1.bf16.msra.mxu0 %v2588
    %3797 = vmatprep.subr.bf16.mxu0 %v2593
    %3798 = vmatpush1.bf16.msra.mxu0 %v2592
    %3799 = vmatprep.mubr.bf16.mxu0 %v656
    %3800 = vmatmul.mubr.bf16.gmra.mrb[0].mxu0 %v654
    %v3801 = vpop.f32.mrb[0].mxu0
    %v3802 = vadd.f32 %v3761, %v3801
    %v3803 = vpop.f32.mrb[0].mxu0
    %v3804 = vadd.f32 %v3763, %v3803
    %v3805 = vpop.f32.mrb[0].mxu0
    %v3806 = vpop.f32.mrb[0].mxu0
    %3807 = vdwg.mxu0
    %3808 = vmatprep.subr.bf16.mxu0 %v2597
    %3809 = vmatpush1.bf16.msra.mxu0 %v2596
    %3810 = vmatprep.subr.bf16.mxu0 %v2601
    %3811 = vmatpush1.bf16.msra.mxu0 %v2600
    %3812 = vmatprep.subr.bf16.mxu0 %v2605
    %3813 = vmatpush1.bf16.msra.mxu0 %v2604
    %3814 = vmatprep.subr.bf16.mxu0 %v2609
    %3815 = vmatpush1.bf16.msra.mxu0 %v2608
    %3816 = vmatprep.subr.bf16.mxu0 %v2613
    %3817 = vmatpush1.bf16.msra.mxu0 %v2612
    %3818 = vmatprep.subr.bf16.mxu0 %v2617
    %3819 = vmatpush1.bf16.msra.mxu0 %v2616
    %3820 = vmatprep.subr.bf16.mxu0 %v2621
    %3821 = vmatpush1.bf16.msra.mxu0 %v2620
    %3822 = vmatprep.subr.bf16.mxu0 %v2625
    %3823 = vmatpush1.bf16.msra.mxu0 %v2624
    %3824 = vmatprep.subr.bf16.mxu0 %v2629
    %3825 = vmatpush1.bf16.msra.mxu0 %v2628
    %3826 = vmatprep.subr.bf16.mxu0 %v2633
    %3827 = vmatpush1.bf16.msra.mxu0 %v2632
    %3828 = vmatprep.subr.bf16.mxu0 %v2637
    %3829 = vmatpush1.bf16.msra.mxu0 %v2636
    %3830 = vmatprep.subr.bf16.mxu0 %v2641
    %3831 = vmatpush1.bf16.msra.mxu0 %v2640
    %3832 = vmatprep.subr.bf16.mxu0 %v2645
    %3833 = vmatpush1.bf16.msra.mxu0 %v2644
    %3834 = vmatprep.subr.bf16.mxu0 %v2649
    %3835 = vmatpush1.bf16.msra.mxu0 %v2648
    %3836 = vmatprep.subr.bf16.mxu0 %v2653
    %3837 = vmatpush1.bf16.msra.mxu0 %v2652
    %3838 = vmatprep.subr.bf16.mxu0 %v2657
    %3839 = vmatpush1.bf16.msra.mxu0 %v2656
    %3840 = vmatprep.mubr.bf16.mxu0 %v653
    %3841 = vmatmul.mubr.bf16.gmra.mrb[0].mxu0 %v639
    %v3842 = vpop.f32.mrb[0].mxu0
    %v3843 = vadd.f32 %v3802, %v3842
    %v3844 = vpop.f32.mrb[0].mxu0
    %v3845 = vadd.f32 %v3804, %v3844
    %v3846 = vpop.f32.mrb[0].mxu0
    %v3847 = vpop.f32.mrb[0].mxu0
    %3848 = vdwg.mxu0
    %3849 = vmatprep.subr.bf16.mxu0 %v2661
    %3850 = vmatpush1.bf16.msra.mxu0 %v2660
    %3851 = vmatprep.subr.bf16.mxu0 %v2665
    %3852 = vmatpush1.bf16.msra.mxu0 %v2664
    %3853 = vmatprep.subr.bf16.mxu0 %v2669
    %3854 = vmatpush1.bf16.msra.mxu0 %v2668
    %3855 = vmatprep.subr.bf16.mxu0 %v2673
    %3856 = vmatpush1.bf16.msra.mxu0 %v2672
    %3857 = vmatprep.subr.bf16.mxu0 %v2677
    %3858 = vmatpush1.bf16.msra.mxu0 %v2676
    %3859 = vmatprep.subr.bf16.mxu0 %v2681
    %3860 = vmatpush1.bf16.msra.mxu0 %v2680
    %3861 = vmatprep.subr.bf16.mxu0 %v2685
    %3862 = vmatpush1.bf16.msra.mxu0 %v2684
    %3863 = vmatprep.subr.bf16.mxu0 %v2689
    %3864 = vmatpush1.bf16.msra.mxu0 %v2688
    %3865 = vmatprep.subr.bf16.mxu0 %v2693
    %3866 = vmatpush1.bf16.msra.mxu0 %v2692
    %3867 = vmatprep.subr.bf16.mxu0 %v2697
    %3868 = vmatpush1.bf16.msra.mxu0 %v2696
    %3869 = vmatprep.subr.bf16.mxu0 %v2701
    %3870 = vmatpush1.bf16.msra.mxu0 %v2700
    %3871 = vmatprep.subr.bf16.mxu0 %v2705
    %3872 = vmatpush1.bf16.msra.mxu0 %v2704
    %3873 = vmatprep.subr.bf16.mxu0 %v2709
    %3874 = vmatpush1.bf16.msra.mxu0 %v2708
    %3875 = vmatprep.subr.bf16.mxu0 %v2713
    %3876 = vmatpush1.bf16.msra.mxu0 %v2712
    %3877 = vmatprep.subr.bf16.mxu0 %v2717
    %3878 = vmatpush1.bf16.msra.mxu0 %v2716
    %3879 = vmatprep.subr.bf16.mxu0 %v2721
    %3880 = vmatpush1.bf16.msra.mxu0 %v2720
    %3881 = vmatprep.mubr.bf16.mxu0 %v657
    %3882 = vmatmul.mubr.bf16.gmra.mrb[0].mxu0 %v655
    %v3883 = vpop.f32.mrb[0].mxu0
    %v3884 = vadd.f32 %v3843, %v3883
    %v3885 = vpop.f32.mrb[0].mxu0
    %v3886 = vadd.f32 %v3845, %v3885
    %v3887 = vpop.f32.mrb[0].mxu0
    %v3888 = vpop.f32.mrb[0].mxu0
    %3889 = vdwg.mxu0
    %v3894 = vcombine.low %v3556, %v3558
    %v3895 = vcombine.low %v3884, %v3886
    %v3897 = vunpack.c.l.s4 1983009808
    %v3898 = vunpack.c.0.s8 %v3897
    %v3899 = vlaneseq
    %v3900 = vshrl.u32 %v3899, 7
    %v3901 = vsub.s32 %v3898, %v3900
    %v3902 = vrot.slane %v3894, %v3901
    %v3904 = vunpack.c.l.s4 1983009808
    %v3905 = vunpack.c.0.s8 %v3904
    %v3906 = vlaneseq
    %v3907 = vshrl.u32 %v3906, 7
    %v3908 = vsub.s32 %v3905, %v3907
    %v3909 = vrot.slane %v3895, %v3908
    %v3910 = vcombine.low %v3902, %v3909
    %3912 = vst [vmem:[#allocation2] sm:$0xff] %v3910
    %v3913 = vmul.f32 %v3556, %v3556
    %v3914 = vmul.f32 %v3558, %v3558
    %v3915 = vmul.f32 %v3884, %v3884
    %v3916 = vmul.f32 %v3886, %v3886
    %vm3917 = vcmask 1041408
    %v3918 = vsel %vm3917, %v3913, 0.0
    %v3919 = vsel %vm3917, %v3914, 0.0
    %v3920 = vadd.f32 %v3918, %v3919
    %v3921 = vsel %vm3917, %v3915, 0.0
    %v3922 = vadd.f32 %v3920, %v3921
    %v3923 = vsel %vm3917, %v3916, 0.0
    %v3924 = vadd.f32 %v3922, %v3923
    %3925 = vadd.xlane.f32.xlu0 %v3924
    %v3926 = vpop.xlane.xlu0 %3925
    %v3927 = vadd.f32 %v3926, 1e-12
    %v3928 = vrsqrt.pop %v3927
    %v3929 = vmul.f32 %v3556, %v3928
    %v3930 = vmul.f32 %v3558, %v3928
    %v3931 = vmul.f32 %v3884, %v3928
    %v3932 = vmul.f32 %v3886, %v3928
    %v3933 = vpack.c.bf16 %v3929, %v3929
    %v3934 = vpack.c.bf16 %v3930, %v3930
    %v3935 = vpack.c.bf16 %v3931, %v3931
    %v3936 = vpack.c.bf16 %v3932, %v3932
    %v3937 = vld [vmem:[%s3] sm:$0xf]
    %v3938 = vld [vmem:[%s3 + $0x4] sm:$0xf]
    %v3939 = vld [vmem:[%s3 + $0x8] sm:$0xf]
    %v3940 = vld [vmem:[%s3 + $0xc] sm:$0xf]
    %v3941 = vld [vmem:[%s3 + $0x10] sm:$0xf]
    %v3942 = vld [vmem:[%s3 + $0x14] sm:$0xf]
    %v3943 = vld [vmem:[%s3 + $0x18] sm:$0xf]
    %v3944 = vld [vmem:[%s3 + $0x1c] sm:$0xf]
    %v3945 = vld [vmem:[%s3 + $0x20] sm:$0xf]
    %v3946 = vld [vmem:[%s3 + $0x24] sm:$0xf]
    %v3947 = vld [vmem:[%s3 + $0x28] sm:$0xf]
    %v3948 = vld [vmem:[%s3 + $0x2c] sm:$0xf]
    %v3949 = vld [vmem:[%s3 + $0x30] sm:$0xf]
    %v3950 = vld [vmem:[%s3 + $0x34] sm:$0xf]
    %v3951 = vld [vmem:[%s3 + $0x38] sm:$0xf]
    %v3952 = vld [vmem:[%s3 + $0x3c] sm:$0xf]
    %v3953 = vld [vmem:[%s3 + $0x40] sm:$0xf]
    %v3954 = vld [vmem:[%s3 + $0x44] sm:$0xf]
    %v3955 = vld [vmem:[%s3 + $0x48] sm:$0xf]
    %v3956 = vld [vmem:[%s3 + $0x4c] sm:$0xf]
    %v3957 = vld [vmem:[%s3 + $0x50] sm:$0xf]
    %v3958 = vld [vmem:[%s3 + $0x54] sm:$0xf]
    %v3959 = vld [vmem:[%s3 + $0x58] sm:$0xf]
    %v3960 = vld [vmem:[%s3 + $0x5c] sm:$0xf]
    %v3961 = vld [vmem:[%s3 + $0x60] sm:$0xf]
    %v3962 = vld [vmem:[%s3 + $0x64] sm:$0xf]
    %v3963 = vld [vmem:[%s3 + $0x68] sm:$0xf]
    %v3964 = vld [vmem:[%s3 + $0x6c] sm:$0xf]
    %v3965 = vld [vmem:[%s3 + $0x70] sm:$0xf]
    %v3966 = vld [vmem:[%s3 + $0x74] sm:$0xf]
    %v3967 = vld [vmem:[%s3 + $0x78] sm:$0xf]
    %v3968 = vld [vmem:[%s3 + $0x7c] sm:$0xf]
    %v3969 = vld [vmem:[%s3 + $0x80] sm:$0xf]
    %v3970 = vld [vmem:[%s3 + $0x84] sm:$0xf]
    %v3971 = vld [vmem:[%s3 + $0x88] sm:$0xf]
    %v3972 = vld [vmem:[%s3 + $0x8c] sm:$0xf]
    %v3973 = vld [vmem:[%s3 + $0x90] sm:$0xf]
    %v3974 = vld [vmem:[%s3 + $0x94] sm:$0xf]
    %v3975 = vld [vmem:[%s3 + $0x98] sm:$0xf]
    %v3976 = vld [vmem:[%s3 + $0x9c] sm:$0xf]
    %v3977 = vld [vmem:[%s3 + $0xa0] sm:$0xf]
    %v3978 = vld [vmem:[%s3 + $0xa4] sm:$0xf]
    %v3979 = vld [vmem:[%s3 + $0xa8] sm:$0xf]
    %v3980 = vld [vmem:[%s3 + $0xac] sm:$0xf]
    %v3981 = vld [vmem:[%s3 + $0xb0] sm:$0xf]
    %v3982 = vld [vmem:[%s3 + $0xb4] sm:$0xf]
    %v3983 = vld [vmem:[%s3 + $0xb8] sm:$0xf]
    %v3984 = vld [vmem:[%s3 + $0xbc] sm:$0xf]
    %v3985 = vld [vmem:[%s3 + $0xc0] sm:$0xf]
    %v3986 = vld [vmem:[%s3 + $0xc4] sm:$0xf]
    %v3987 = vld [vmem:[%s3 + $0xc8] sm:$0xf]
    %v3988 = vld [vmem:[%s3 + $0xcc] sm:$0xf]
    %v3989 = vld [vmem:[%s3 + $0xd0] sm:$0xf]
    %v3990 = vld [vmem:[%s3 + $0xd4] sm:$0xf]
    %v3991 = vld [vmem:[%s3 + $0xd8] sm:$0xf]
    %v3992 = vld [vmem:[%s3 + $0xdc] sm:$0xf]
    %v3993 = vld [vmem:[%s3 + $0xe0] sm:$0xf]
    %v3994 = vld [vmem:[%s3 + $0xe4] sm:$0xf]
    %v3995 = vld [vmem:[%s3 + $0xe8] sm:$0xf]
    %v3996 = vld [vmem:[%s3 + $0xec] sm:$0xf]
    %v3997 = vld [vmem:[%s3 + $0xf0] sm:$0xf]
    %v3998 = vld [vmem:[%s3 + $0xf4] sm:$0xf]
    %v3999 = vld [vmem:[%s3 + $0xf8] sm:$0xf]
    %v4000 = vld [vmem:[%s3 + $0xfc] sm:$0xf]
    %v4065 = vunpack.c.l.b16 %v3937
    %v4066 = vunpack.c.l.b16 %v3938
    %v4067 = vunpack.c.l.b16 %v3939
    %v4068 = vunpack.c.l.b16 %v3940
    %v4069 = vunpack.c.l.b16 %v3941
    %v4070 = vunpack.c.l.b16 %v3942
    %v4071 = vunpack.c.l.b16 %v3943
    %v4072 = vunpack.c.l.b16 %v3944
    %v4073 = vunpack.c.l.b16 %v3945
    %v4074 = vunpack.c.l.b16 %v3946
    %v4075 = vunpack.c.l.b16 %v3947
    %v4076 = vunpack.c.l.b16 %v3948
    %v4077 = vunpack.c.l.b16 %v3949
    %v4078 = vunpack.c.l.b16 %v3950
    %v4079 = vunpack.c.l.b16 %v3951
    %v4080 = vunpack.c.l.b16 %v3952
    %v4081 = vunpack.c.l.b16 %v3953
    %v4082 = vunpack.c.l.b16 %v3954
    %v4083 = vunpack.c.l.b16 %v3955
    %v4084 = vunpack.c.l.b16 %v3956
    %v4085 = vunpack.c.l.b16 %v3957
    %v4086 = vunpack.c.l.b16 %v3958
    %v4087 = vunpack.c.l.b16 %v3959
    %v4088 = vunpack.c.l.b16 %v3960
    %v4089 = vunpack.c.l.b16 %v3961
    %v4090 = vunpack.c.l.b16 %v3962
    %v4091 = vunpack.c.l.b16 %v3963
    %v4092 = vunpack.c.l.b16 %v3964
    %v4093 = vunpack.c.l.b16 %v3965
    %v4094 = vunpack.c.l.b16 %v3966
    %v4095 = vunpack.c.l.b16 %v3967
    %v4096 = vunpack.c.l.b16 %v3968
    %v4097 = vunpack.c.l.b16 %v3969
    %v4098 = vunpack.c.l.b16 %v3970
    %v4099 = vunpack.c.l.b16 %v3971
    %v4100 = vunpack.c.l.b16 %v3972
    %v4101 = vunpack.c.l.b16 %v3973
    %v4102 = vunpack.c.l.b16 %v3974
    %v4103 = vunpack.c.l.b16 %v3975
    %v4104 = vunpack.c.l.b16 %v3976
    %v4105 = vunpack.c.l.b16 %v3977
    %v4106 = vunpack.c.l.b16 %v3978
    %v4107 = vunpack.c.l.b16 %v3979
    %v4108 = vunpack.c.l.b16 %v3980
    %v4109 = vunpack.c.l.b16 %v3981
    %v4110 = vunpack.c.l.b16 %v3982
    %v4111 = vunpack.c.l.b16 %v3983
    %v4112 = vunpack.c.l.b16 %v3984
    %v4113 = vunpack.c.l.b16 %v3985
    %v4114 = vunpack.c.l.b16 %v3986
    %v4115 = vunpack.c.l.b16 %v3987
    %v4116 = vunpack.c.l.b16 %v3988
    %v4117 = vunpack.c.l.b16 %v3989
    %v4118 = vunpack.c.l.b16 %v3990
    %v4119 = vunpack.c.l.b16 %v3991
    %v4120 = vunpack.c.l.b16 %v3992
    %v4121 = vunpack.c.l.b16 %v3993
    %v4122 = vunpack.c.l.b16 %v3994
    %v4123 = vunpack.c.l.b16 %v3995
    %v4124 = vunpack.c.l.b16 %v3996
    %v4125 = vunpack.c.l.b16 %v3997
    %v4126 = vunpack.c.l.b16 %v3998
    %v4127 = vunpack.c.l.b16 %v3999
    %v4128 = vunpack.c.l.b16 %v4000
    %v4129 = vpack.c.b16 %v4066, %v4065
    %v4130 = vpack.c.b16 %v4068, %v4067
    %v4131 = vpack.c.b16 %v4070, %v4069
    %v4132 = vpack.c.b16 %v4072, %v4071
    %v4133 = vpack.c.b16 %v4074, %v4073
    %v4134 = vpack.c.b16 %v4076, %v4075
    %v4135 = vpack.c.b16 %v4078, %v4077
    %v4136 = vpack.c.b16 %v4080, %v4079
    %v4137 = vpack.c.b16 %v4082, %v4081
    %v4138 = vpack.c.b16 %v4084, %v4083
    %v4139 = vpack.c.b16 %v4086, %v4085
    %v4140 = vpack.c.b16 %v4088, %v4087
    %v4141 = vpack.c.b16 %v4090, %v4089
    %v4142 = vpack.c.b16 %v4092, %v4091
    %v4143 = vpack.c.b16 %v4094, %v4093
    %v4144 = vpack.c.b16 %v4096, %v4095
    %v4145 = vpack.c.b16 %v4098, %v4097
    %v4146 = vpack.c.b16 %v4100, %v4099
    %v4147 = vpack.c.b16 %v4102, %v4101
    %v4148 = vpack.c.b16 %v4104, %v4103
    %v4149 = vpack.c.b16 %v4106, %v4105
    %v4150 = vpack.c.b16 %v4108, %v4107
    %v4151 = vpack.c.b16 %v4110, %v4109
    %v4152 = vpack.c.b16 %v4112, %v4111
    %v4153 = vpack.c.b16 %v4114, %v4113
    %v4154 = vpack.c.b16 %v4116, %v4115
    %v4155 = vpack.c.b16 %v4118, %v4117
    %v4156 = vpack.c.b16 %v4120, %v4119
    %v4157 = vpack.c.b16 %v4122, %v4121
    %v4158 = vpack.c.b16 %v4124, %v4123
    %v4159 = vpack.c.b16 %v4126, %v4125
    %v4160 = vpack.c.b16 %v4128, %v4127
    %4193 = vmatprep.subr.bf16.mxu0 0
    %4194 = vmatpush1.bf16.msra.mxu0 %v4129
    %4195 = vmatprep.subr.bf16.mxu0 0
    %4196 = vmatpush1.bf16.msra.mxu0 %v4130
    %4197 = vmatprep.subr.bf16.mxu0 0
    %4198 = vmatpush1.bf16.msra.mxu0 %v4131
    %4199 = vmatprep.subr.bf16.mxu0 0
    %4200 = vmatpush1.bf16.msra.mxu0 %v4132
    %4201 = vmatprep.subr.bf16.mxu0 0
    %4202 = vmatpush1.bf16.msra.mxu0 %v4133
    %4203 = vmatprep.subr.bf16.mxu0 0
    %4204 = vmatpush1.bf16.msra.mxu0 %v4134
    %4205 = vmatprep.subr.bf16.mxu0 0
    %4206 = vmatpush1.bf16.msra.mxu0 %v4135
    %4207 = vmatprep.subr.bf16.mxu0 0
    %4208 = vmatpush1.bf16.msra.mxu0 %v4136
    %4209 = vmatprep.subr.bf16.mxu0 0
    %4210 = vmatpush1.bf16.msra.mxu0 %v4137
    %4211 = vmatprep.subr.bf16.mxu0 0
    %4212 = vmatpush1.bf16.msra.mxu0 %v4138
    %4213 = vmatprep.subr.bf16.mxu0 0
    %4214 = vmatpush1.bf16.msra.mxu0 %v4139
    %4215 = vmatprep.subr.bf16.mxu0 0
    %4216 = vmatpush1.bf16.msra.mxu0 %v4140
    %4217 = vmatprep.subr.bf16.mxu0 0
    %4218 = vmatpush1.bf16.msra.mxu0 %v4141
    %4219 = vmatprep.subr.bf16.mxu0 0
    %4220 = vmatpush1.bf16.msra.mxu0 %v4142
    %4221 = vmatprep.subr.bf16.mxu0 0
    %4222 = vmatpush1.bf16.msra.mxu0 %v4143
    %4223 = vmatprep.subr.bf16.mxu0 0
    %4224 = vmatpush1.bf16.msra.mxu0 %v4144
    %4225 = vmatprep.mubr.bf16.mxu0 %v3934
    %4226 = vmatmul.mubr.bf16.gmra.mrb[0].mxu0 %v3933
    %v4227 = vpop.f32.mrb[0].mxu0
    %v4228 = vadd.f32 0.0, %v4227
    %v4229 = vpop.f32.mrb[0].mxu0
    %v4230 = vpop.f32.mrb[0].mxu0
    %v4231 = vpop.f32.mrb[0].mxu0
    %4232 = vdwg.mxu0
    %4233 = vmatprep.subr.bf16.mxu0 0
    %4234 = vmatpush1.bf16.msra.mxu0 %v4145
    %4235 = vmatprep.subr.bf16.mxu0 0
    %4236 = vmatpush1.bf16.msra.mxu0 %v4146
    %4237 = vmatprep.subr.bf16.mxu0 0
    %4238 = vmatpush1.bf16.msra.mxu0 %v4147
    %4239 = vmatprep.subr.bf16.mxu0 0
    %4240 = vmatpush1.bf16.msra.mxu0 %v4148
    %4241 = vmatprep.subr.bf16.mxu0 0
    %4242 = vmatpush1.bf16.msra.mxu0 %v4149
    %4243 = vmatprep.subr.bf16.mxu0 0
    %4244 = vmatpush1.bf16.msra.mxu0 %v4150
    %4245 = vmatprep.subr.bf16.mxu0 0
    %4246 = vmatpush1.bf16.msra.mxu0 %v4151
    %4247 = vmatprep.subr.bf16.mxu0 0
    %4248 = vmatpush1.bf16.msra.mxu0 %v4152
    %4249 = vmatprep.subr.bf16.mxu0 0
    %4250 = vmatpush1.bf16.msra.mxu0 %v4153
    %4251 = vmatprep.subr.bf16.mxu0 0
    %4252 = vmatpush1.bf16.msra.mxu0 %v4154
    %4253 = vmatprep.subr.bf16.mxu0 0
    %4254 = vmatpush1.bf16.msra.mxu0 %v4155
    %4255 = vmatprep.subr.bf16.mxu0 0
    %4256 = vmatpush1.bf16.msra.mxu0 %v4156
    %4257 = vmatprep.subr.bf16.mxu0 0
    %4258 = vmatpush1.bf16.msra.mxu0 %v4157
    %4259 = vmatprep.subr.bf16.mxu0 0
    %4260 = vmatpush1.bf16.msra.mxu0 %v4158
    %4261 = vmatprep.subr.bf16.mxu0 0
    %4262 = vmatpush1.bf16.msra.mxu0 %v4159
    %4263 = vmatprep.subr.bf16.mxu0 0
    %4264 = vmatpush1.bf16.msra.mxu0 %v4160
    %4265 = vmatprep.mubr.bf16.mxu0 %v3936
    %4266 = vmatmul.mubr.bf16.gmra.mrb[0].mxu0 %v3935
    %v4267 = vpop.f32.mrb[0].mxu0
    %v4268 = vadd.f32 %v4228, %v4267
    %v4269 = vpop.f32.mrb[0].mxu0
    %v4270 = vpop.f32.mrb[0].mxu0
    %v4271 = vpop.f32.mrb[0].mxu0
    %4272 = vdwg.mxu0
    %v4273 = vmax.f32 %v4268, -1.0
    %v4274 = vmin.f32 %v4273, 1.0
    %4275 = vst [vmem:[#allocation4] sm:$0x3] %v4274
    // Predicated region
    $region18: #{sphereface_forward.9} parent=1 // pred_check
      _
    $region19: #{sphereface_forward.9} parent=1 // pred_check_branch
      %4277 = sbr.rel (0) target = $region21
    $region20: #{sphereface_forward.9} parent=1 // pred_region
      %s4279 = ssub.s32 128, 128
      %4280 = vsyncadd [#allocation3], %s4279
      %s4282 = sshll.u32 [#allocation2], 4
      %s4283 = int_to_ptr.vmem [resolvable:$true] %s4282
      %4285 = dma.vmem_to_hbm [thread:$0]  %s4283, 128, %s4, [#allocation3]
    $region21: #{sphereface_forward.9} parent=1 // pred_fallthru
      _
    // Predicated region
    $region22: #{sphereface_forward.9} parent=1 // pred_check
      _
    $region23: #{sphereface_forward.9} parent=1 // pred_check_branch
      %4287 = sbr.rel (0) target = $region25
    $region24: #{sphereface_forward.9} parent=1 // pred_region
      %s4289 = ssub.s32 32, 32
      %4290 = vsyncadd [#allocation5], %s4289
      %s4292 = sshll.u32 [#allocation4], 4
      %s4293 = int_to_ptr.vmem [resolvable:$true] %s4292
      %4295 = dma.vmem_to_hbm [thread:$0]  %s4293, 32, %s5, [#allocation5]
    $region25: #{sphereface_forward.9} parent=1 // pred_fallthru
      _
    // Predicated region
    $region26: #{sphereface_forward.9} parent=1 // pred_check
      _
    $region27: #{sphereface_forward.9} parent=1 // pred_check_branch
      %4297 = sbr.rel (0) target = $region29
    $region28: #{sphereface_forward.9} parent=1 // pred_region
      %4298 = dma.done [#allocation3], 128
    $region29: #{sphereface_forward.9} parent=1 // pred_fallthru
      _
    // Predicated region
    $region30: #{sphereface_forward.9} parent=1 // pred_check
      _
    $region31: #{sphereface_forward.9} parent=1 // pred_check_branch
      %4300 = sbr.rel (0) target = $region33
    $region32: #{sphereface_forward.9} parent=1 // pred_region
      %4301 = dma.done [#allocation5], 32
    $region33: #{sphereface_forward.9} parent=1 // pred_fallthru
      _
    %4302 = vsyncpa [#allocation3], 1
    %4303 = vsyncpa [#allocation5], 1

</llo_original>
